<compile_context>
chip_gen: v5e
topology: v5e:2x2
jax: 0.10.0
libtpu: 0.0.40
codegen_flags: <defaults>
</compile_context>

<pallas_src>
import functools

import jax
import jax.numpy as jnp
from jax.experimental import pallas as pl
from jax.experimental.pallas import tpu as pltpu

CONV_CHANNELS = (1, 16, 32, 64)    # reduced GrnnNet backbone channel counts
HIDDEN = 64                        # GRU hidden size == embedding dim


# ---------------------------------------------------------------------------
# In-kernel helpers (traced inline; all loop bounds are static Python ints).
# ---------------------------------------------------------------------------
def _zero_halo(pb, Hc, Wc):
    """Zero only the 1-pixel halo of a flattened ((Hc+2)*(Wc+2), C) buffer."""
    Wp = Wc + 2
    C = pb.shape[1]
    # top padded row + left pad of the first interior row
    pb[pl.ds(0, Wp + 1), :] = jnp.zeros((Wp + 1, C), jnp.float32)
    # right pad of interior row r + left pad of interior row r+1 (contiguous)
    for r in range(1, Hc):
        pb[pl.ds(r * Wp + Wc + 1, 2), :] = jnp.zeros((2, C), jnp.float32)
    # right pad of the last interior row + bottom padded row
    pb[pl.ds(Hc * Wp + Wc + 1, Wp + 1), :] = jnp.zeros((Wp + 1, C), jnp.float32)


def _conv_relu_pool(pb, s, vb, w_ref, b_ref, Hc, Wc):
    """3x3 conv (stride 1, pad 1) + bias + ReLU + 2x2/2 maxpool.

    pb : ((Hc+2)*(Wc+2), Cin) zero-halo padded input, flattened row-major.
    s  : ((Hc-1)*(Wc+2)+Wc, Cout) scratch for the conv output (padded layout).
    vb : ((Hc//2)*Wc, Cout) scratch holding the vertical pair-max rows.
    Returns the pooled map as a (Hc//2 * Wc//2, Cout) value, row-major.
    """
    Wp = Wc + 2
    L = (Hc - 1) * Wp + Wc                 # rows of the padded-layout output
    Cin = w_ref.shape[1]
    Cout = b_ref.shape[1]

    # conv: 9 shifted-slab accumulations; output row (h*Wp + w) = pixel (h, w).
    acc = jnp.zeros((L, Cout), jnp.float32)
    for dh in range(3):
        for dw in range(3):
            slab = pb[pl.ds(dh * Wp + dw, L), :]          # contiguous rows
            w_tap = w_ref[dh * 3 + dw]                    # (Cin, Cout)
            if Cin == 1:
                acc = acc + slab * w_tap                  # VPU stencil tap
            else:
                acc = acc + jnp.dot(slab, w_tap,
                                    preferred_element_type=jnp.float32)
    s[...] = jnp.maximum(acc + b_ref[...], 0.0)           # bias + ReLU

    # 2x2 maxpool: vertical pair-max (contiguous reads), then a single
    # stride-2 horizontal compaction over all pooled rows at once.
    Hn, Wn = Hc // 2, Wc // 2
    for hp in range(Hn):
        r0 = s[pl.ds((2 * hp) * Wp, Wc), :]
        r1 = s[pl.ds((2 * hp + 1) * Wp, Wc), :]
        vb[pl.ds(hp * Wc, Wc), :] = jnp.maximum(r0, r1)
    return jnp.maximum(vb[pl.ds(0, Hn * Wn, stride=2), :],
                       vb[pl.ds(1, Hn * Wn, stride=2), :])   # (Hn*Wn, Cout)


def _scatter_interior(pooled, pb_next, Hn, Wn):
    """Write a compact (Hn*Wn, C) map into the next padded buffer's interior."""
    Wpn = Wn + 2
    for hp in range(Hn):
        pb_next[pl.ds((1 + hp) * Wpn + 1, Wn), :] = \
            pooled[hp * Wn:(hp + 1) * Wn, :]


# ---------------------------------------------------------------------------
# Fused per-image kernel: CNN backbone + column mean + GR-GRU head.
# ---------------------------------------------------------------------------
def _grnn_embed_kernel(x_ref, w1_ref, b1_ref, w2_ref, b2_ref, w3_ref, b3_ref,
                       wih_ref, whh_ref, bih_ref, bhh_ref,
                       o_ref,
                       pb1, pb2, pb3, s1, s2, s3, vb1, vb2, vb3,
                       *, H, W):
    H1, W1 = H, W
    H2, W2 = H // 2, W // 2
    H3, W3 = H // 4, W // 4
    Hf, Wf = H // 8, W // 8
    Wp1 = W1 + 2

    # halos only (interiors are fully rewritten below, every grid step)
    _zero_halo(pb1, H1, W1)
    _zero_halo(pb2, H2, W2)
    _zero_halo(pb3, H3, W3)

    # raw image -> pb1 interior (single real channel; no 128x host padding)
    for h in range(H1):
        pb1[pl.ds((1 + h) * Wp1 + 1, W1), :] = x_ref[0, pl.ds(h * W1, W1), :]

    # CNN backbone, entirely in VMEM
    p1 = _conv_relu_pool(pb1, s1, vb1, w1_ref, b1_ref, H1, W1)
    _scatter_interior(p1, pb2, H2, W2)
    p2 = _conv_relu_pool(pb2, s2, vb2, w2_ref, b2_ref, H2, W2)
    _scatter_interior(p2, pb3, H3, W3)
    p3 = _conv_relu_pool(pb3, s3, vb3, w3_ref, b3_ref, H3, W3)   # (Hf*Wf, C3)

    # vertical-fragment (feature-map column) mean over the feature-map height
    C3 = b3_ref.shape[1]
    cols = jnp.zeros((Wf, C3), jnp.float32)
    for hf in range(Hf):
        cols = cols + p3[hf * Wf:(hf + 1) * Wf, :]
    cols = cols * (1.0 / Hf)

    # global-context-residual GRU over the Wf column descriptors (fused gates)
    Dh = whh_ref.shape[0]
    g = jnp.zeros((1, C3), jnp.float32)
    for t in range(Wf):
        g = g + cols[t:t + 1, :]
    g = g * (1.0 / Wf)
    xres = g - cols                                              # (Wf, C3)
    gi = jnp.dot(xres, wih_ref[...],
                 preferred_element_type=jnp.float32) + bih_ref[...]   # (Wf,3Dh)
    h = jnp.zeros((1, Dh), jnp.float32)
    for t in range(Wf):                    # Wf is tiny & static -> unrolled
        gh = jnp.dot(h, whh_ref[...],
                     preferred_element_type=jnp.float32) + bhh_ref[...]
        i_r = gi[t:t + 1, 0:Dh]
        i_z = gi[t:t + 1, Dh:2 * Dh]
        i_n = gi[t:t + 1, 2 * Dh:3 * Dh]
        h_r, h_z, h_n = gh[:, 0:Dh], gh[:, Dh:2 * Dh], gh[:, 2 * Dh:3 * Dh]
        r = jax.nn.sigmoid(i_r + h_r)
        z = jax.nn.sigmoid(i_z + h_z)
        n = jnp.tanh(i_n + r * h_n)
        h = (1.0 - z) * n + z * h
    o_ref[...] = h.reshape(1, 1, Dh)       # classifier == Identity -> embedding


# ---------------------------------------------------------------------------
# Host wrapper
# ---------------------------------------------------------------------------
def _full_spec(arr):
    zeros = (0,) * arr.ndim
    return pl.BlockSpec(arr.shape, lambda n: zeros)


def embedding_model_forward(x_nchw, params):
    N, Cin, H, W = x_nchw.shape
    assert Cin == 1 and H % 8 == 0 and W % 8 == 0, (Cin, H, W)
    C1, C2, C3 = CONV_CHANNELS[1:]
    Dh = HIDDEN
    (w1, b1), (w2, b2), (w3, b3) = params["convs"]

    # raw image, flattened spatially; channel stays 1-wide (opt: no 128x pad)
    x_flat = x_nchw[:, 0].astype(jnp.float32).reshape(N, H * W, 1)

    out = pl.pallas_call(
        functools.partial(_grnn_embed_kernel, H=H, W=W),
        grid=(N,),
        in_specs=[
            pl.BlockSpec((1, H * W, 1), lambda n: (n, 0, 0)),
            _full_spec(w1), _full_spec(b1),
            _full_spec(w2), _full_spec(b2),
            _full_spec(w3), _full_spec(b3),
            _full_spec(params["w_ih"]), _full_spec(params["w_hh"]),
            _full_spec(params["b_ih"]), _full_spec(params["b_hh"]),
        ],
        out_specs=pl.BlockSpec((1, 1, Dh), lambda n: (n, 0, 0)),
        out_shape=jax.ShapeDtypeStruct((N, 1, Dh), jnp.float32),
        scratch_shapes=[
            # zero-halo padded activation buffers (flattened, real channels)
            pltpu.VMEM(((H + 2) * (W + 2), 1), jnp.float32),                # pb1
            pltpu.VMEM(((H // 2 + 2) * (W // 2 + 2), C1), jnp.float32),     # pb2
            pltpu.VMEM(((H // 4 + 2) * (W // 4 + 2), C2), jnp.float32),     # pb3
            # conv outputs in padded-grid row layout
            pltpu.VMEM(((H - 1) * (W + 2) + W, C1), jnp.float32),           # s1
            pltpu.VMEM(((H // 2 - 1) * (W // 2 + 2) + W // 2, C2),
                       jnp.float32),                                        # s2
            pltpu.VMEM(((H // 4 - 1) * (W // 4 + 2) + W // 4, C3),
                       jnp.float32),                                        # s3
            # vertical pair-max rows for the 2x2 pool
            pltpu.VMEM(((H // 2) * W, C1), jnp.float32),                    # vb1
            pltpu.VMEM(((H // 4) * (W // 2), C2), jnp.float32),             # vb2
            pltpu.VMEM(((H // 8) * (W // 4), C3), jnp.float32),             # vb3
        ],
        compiler_params=pltpu.CompilerParams(
            dimension_semantics=("parallel",)),   # batch across TCs on v7x
    )(x_flat, w1, b1, w2, b2, w3, b3,
      params["w_ih"], params["w_hh"], params["b_ih"], params["b_hh"])
    return out.reshape(N, Dh)


# ---------------------------------------------------------------------------
# Parameters (deterministic synthetic init)
# ---------------------------------------------------------------------------
def init_params(key):
    params = {"convs": []}
    for i in range(len(CONV_CHANNELS) - 1):
        cin, cout = CONV_CHANNELS[i], CONV_CHANNELS[i + 1]
        key, kw = jax.random.split(key)
        scale = (2.0 / (9.0 * cin)) ** 0.5
        # tap-major weights: w[dh*3+dw, ci, co]
        w = scale * jax.random.normal(kw, (9, cin, cout), jnp.float32)
        b = jnp.zeros((1, cout), jnp.float32)
        params["convs"].append((w, b))

    c_last = CONV_CHANNELS[-1]
    key, k1, k2, k3, k4 = jax.random.split(key, 5)
    s_i = (1.0 / c_last) ** 0.5
    s_h = (1.0 / HIDDEN) ** 0.5
    # fused [r|z|n] gate weights along the output (lane) dimension
    params["w_ih"] = s_i * jax.random.normal(k1, (c_last, 3 * HIDDEN), jnp.float32)
    params["w_hh"] = s_h * jax.random.normal(k2, (HIDDEN, 3 * HIDDEN), jnp.float32)
    params["b_ih"] = 0.01 * jax.random.normal(k3, (1, 3 * HIDDEN), jnp.float32)
    params["b_hh"] = 0.01 * jax.random.normal(k4, (1, 3 * HIDDEN), jnp.float32)
    return params


# ---------------------------------------------------------------------------
# Pure-JAX reference (same math, dense layout) for a correctness check
# ---------------------------------------------------------------------------
def reference_forward(x_nchw, params):
    act = x_nchw[:, 0].astype(jnp.float32)[..., None]          # (N, H, W, 1)
    for (w, b) in params["convs"]:                              # w: (9,Cin,Cout)
        n_, hc, wc, _ = act.shape
        cout = w.shape[-1]
        pad = jnp.pad(act, ((0, 0), (1, 1), (1, 1), (0, 0)))
        out = jnp.zeros((n_, hc, wc, cout), jnp.float32)
        for dh in range(3):
            for dw in range(3):
                patch = pad[:, dh:dh + hc, dw:dw + wc, :]
                out = out + jnp.einsum("nhwc,cd->nhwd", patch, w[dh * 3 + dw])
        out = jnp.maximum(out + b[0], 0.0)
        act = out.reshape(n_, hc // 2, 2, wc // 2, 2, cout).max(axis=(2, 4))
    cols = act.mean(axis=1)                                     # (N, Wf, C3)
    g = cols.mean(axis=1, keepdims=True)
    xres = g - cols
    gi = jnp.einsum("ntc,ch->nth", xres, params["w_ih"]) + params["b_ih"]
    dh_ = params["w_hh"].shape[0]
    h = jnp.zeros((cols.shape[0], dh_), jnp.float32)
    for t in range(cols.shape[1]):
        gh = h @ params["w_hh"] + params["b_hh"]
        i_r, i_z, i_n = jnp.split(gi[:, t], 3, axis=-1)
        h_r, h_z, h_n = jnp.split(gh, 3, axis=-1)
        r = jax.nn.sigmoid(i_r + h_r)
        z = jax.nn.sigmoid(i_z + h_z)
        n = jnp.tanh(i_n + r * h_n)
        h = (1.0 - z) * n + z * h
    return h


if __name__ == "__main__":
    key = jax.random.PRNGKey(0)
    k_param, k_data = jax.random.split(key)
    params = init_params(k_param)

    # batch=2, channels=1 (grayscale handwriting patch), 16x16 spatial
    x = jax.random.normal(k_data, (2, 1, 16, 16), jnp.float32)

    fwd = jax.jit(embedding_model_forward)
    out = jax.block_until_ready(fwd(x, params))

    assert out.shape == (2, HIDDEN), out.shape
    assert bool(jnp.all(jnp.isfinite(out))), "non-finite values in embedding"

    ref = jax.block_until_ready(jax.jit(reference_forward)(x, params))
    err = float(jnp.max(jnp.abs(out - ref)))
    assert err < 5e-2, f"kernel/reference mismatch: max abs err={err}"

    print("KERNEL_OK")
</pallas_src>

<mosaic_0001>
module attributes {stable_mosaic.version = 11 : i64} {
  func.func @_grnn_embed_kernel(%arg0: i32, %arg1: memref<1x256x1xf32, #tpu.memory_space<vmem>>, %arg2: memref<9x1x16xf32, #tpu.memory_space<vmem>>, %arg3: memref<1x16xf32, #tpu.memory_space<vmem>>, %arg4: memref<9x16x32xf32, #tpu.memory_space<vmem>>, %arg5: memref<1x32xf32, #tpu.memory_space<vmem>>, %arg6: memref<9x32x64xf32, #tpu.memory_space<vmem>>, %arg7: memref<1x64xf32, #tpu.memory_space<vmem>>, %arg8: memref<64x192xf32, #tpu.memory_space<vmem>>, %arg9: memref<64x192xf32, #tpu.memory_space<vmem>>, %arg10: memref<1x192xf32, #tpu.memory_space<vmem>>, %arg11: memref<1x192xf32, #tpu.memory_space<vmem>>, %arg12: memref<1x1x64xf32, #tpu.memory_space<vmem>>, %arg13: memref<324x1xf32, #tpu.memory_space<vmem>>, %arg14: memref<100x16xf32, #tpu.memory_space<vmem>>, %arg15: memref<36x32xf32, #tpu.memory_space<vmem>>, %arg16: memref<286x16xf32, #tpu.memory_space<vmem>>, %arg17: memref<78x32xf32, #tpu.memory_space<vmem>>, %arg18: memref<22x64xf32, #tpu.memory_space<vmem>>, %arg19: memref<128x16xf32, #tpu.memory_space<vmem>>, %arg20: memref<32x32xf32, #tpu.memory_space<vmem>>, %arg21: memref<8x64xf32, #tpu.memory_space<vmem>>) attributes {dimension_semantics = [#tpu.dimension_semantics<parallel>], iteration_bounds = array<i64: 2>, scalar_prefetch = 0 : i64, scratch_operands = 9 : i64, tpu.core_type = #tpu.core_type<tc>, window_params = [{transform_indices = @transform_0, window_bounds = array<i64: 1, 256, 1>}, {pipeline_mode = #tpu.pipeline_mode<synchronous>, transform_indices = @transform_1, window_bounds = array<i64: 9, 1, 16>}, {pipeline_mode = #tpu.pipeline_mode<synchronous>, transform_indices = @transform_2, window_bounds = array<i64: 1, 16>}, {pipeline_mode = #tpu.pipeline_mode<synchronous>, transform_indices = @transform_3, window_bounds = array<i64: 9, 16, 32>}, {pipeline_mode = #tpu.pipeline_mode<synchronous>, transform_indices = @transform_4, window_bounds = array<i64: 1, 32>}, {pipeline_mode = #tpu.pipeline_mode<synchronous>, transform_indices = @transform_5, window_bounds = array<i64: 9, 32, 64>}, {pipeline_mode = #tpu.pipeline_mode<synchronous>, transform_indices = @transform_6, window_bounds = array<i64: 1, 64>}, {pipeline_mode = #tpu.pipeline_mode<synchronous>, transform_indices = @transform_7, window_bounds = array<i64: 64, 192>}, {pipeline_mode = #tpu.pipeline_mode<synchronous>, transform_indices = @transform_8, window_bounds = array<i64: 64, 192>}, {pipeline_mode = #tpu.pipeline_mode<synchronous>, transform_indices = @transform_9, window_bounds = array<i64: 1, 192>}, {pipeline_mode = #tpu.pipeline_mode<synchronous>, transform_indices = @transform_10, window_bounds = array<i64: 1, 192>}, {transform_indices = @transform_11, window_bounds = array<i64: 1, 1, 64>}]} {
    %cst = arith.constant 0.000000e+00 : f32
    %0 = vector.broadcast %cst : f32 to vector<19x1xf32>
    %c0 = arith.constant 0 : index
    %c0_0 = arith.constant 0 : index
    %1 = vector.load %arg13[%c0, %c0_0] : memref<324x1xf32, #tpu.memory_space<vmem>>, vector<19x1xf32>
    tpu.vector_store %arg13[%c0, %c0_0], %0 {strides = array<i32>} : memref<324x1xf32, #tpu.memory_space<vmem>>, vector<19x1xf32>,
    %cst_1 = arith.constant 0.000000e+00 : f32
    %2 = vector.broadcast %cst_1 : f32 to vector<2x1xf32>
    %c35 = arith.constant 35 : index
    %c0_2 = arith.constant 0 : index
    %3 = vector.load %arg13[%c35, %c0_2] : memref<324x1xf32, #tpu.memory_space<vmem>>, vector<2x1xf32>
    tpu.vector_store %arg13[%c35, %c0_2], %2 {strides = array<i32>} : memref<324x1xf32, #tpu.memory_space<vmem>>, vector<2x1xf32>,
    %cst_3 = arith.constant 0.000000e+00 : f32
    %4 = vector.broadcast %cst_3 : f32 to vector<2x1xf32>
    %c53 = arith.constant 53 : index
    %c0_4 = arith.constant 0 : index
    %5 = vector.load %arg13[%c53, %c0_4] : memref<324x1xf32, #tpu.memory_space<vmem>>, vector<2x1xf32>
    tpu.vector_store %arg13[%c53, %c0_4], %4 {strides = array<i32>} : memref<324x1xf32, #tpu.memory_space<vmem>>, vector<2x1xf32>,
    %cst_5 = arith.constant 0.000000e+00 : f32
    %6 = vector.broadcast %cst_5 : f32 to vector<2x1xf32>
    %c71 = arith.constant 71 : index
    %c0_6 = arith.constant 0 : index
    %7 = vector.load %arg13[%c71, %c0_6] : memref<324x1xf32, #tpu.memory_space<vmem>>, vector<2x1xf32>
    tpu.vector_store %arg13[%c71, %c0_6], %6 {strides = array<i32>} : memref<324x1xf32, #tpu.memory_space<vmem>>, vector<2x1xf32>,
    %cst_7 = arith.constant 0.000000e+00 : f32
    %8 = vector.broadcast %cst_7 : f32 to vector<2x1xf32>
    %c89 = arith.constant 89 : index
    %c0_8 = arith.constant 0 : index
    %9 = vector.load %arg13[%c89, %c0_8] : memref<324x1xf32, #tpu.memory_space<vmem>>, vector<2x1xf32>
    tpu.vector_store %arg13[%c89, %c0_8], %8 {strides = array<i32>} : memref<324x1xf32, #tpu.memory_space<vmem>>, vector<2x1xf32>,
    %cst_9 = arith.constant 0.000000e+00 : f32
    %10 = vector.broadcast %cst_9 : f32 to vector<2x1xf32>
    %c107 = arith.constant 107 : index
    %c0_10 = arith.constant 0 : index
    %11 = vector.load %arg13[%c107, %c0_10] : memref<324x1xf32, #tpu.memory_space<vmem>>, vector<2x1xf32>
    tpu.vector_store %arg13[%c107, %c0_10], %10 {strides = array<i32>} : memref<324x1xf32, #tpu.memory_space<vmem>>, vector<2x1xf32>,
    %cst_11 = arith.constant 0.000000e+00 : f32
    %12 = vector.broadcast %cst_11 : f32 to vector<2x1xf32>
    %c125 = arith.constant 125 : index
    %c0_12 = arith.constant 0 : index
    %13 = vector.load %arg13[%c125, %c0_12] : memref<324x1xf32, #tpu.memory_space<vmem>>, vector<2x1xf32>
    tpu.vector_store %arg13[%c125, %c0_12], %12 {strides = array<i32>} : memref<324x1xf32, #tpu.memory_space<vmem>>, vector<2x1xf32>,
    %cst_13 = arith.constant 0.000000e+00 : f32
    %14 = vector.broadcast %cst_13 : f32 to vector<2x1xf32>
    %c143 = arith.constant 143 : index
    %c0_14 = arith.constant 0 : index
    %15 = vector.load %arg13[%c143, %c0_14] : memref<324x1xf32, #tpu.memory_space<vmem>>, vector<2x1xf32>
    tpu.vector_store %arg13[%c143, %c0_14], %14 {strides = array<i32>} : memref<324x1xf32, #tpu.memory_space<vmem>>, vector<2x1xf32>,
    %cst_15 = arith.constant 0.000000e+00 : f32
    %16 = vector.broadcast %cst_15 : f32 to vector<2x1xf32>
    %c161 = arith.constant 161 : index
    %c0_16 = arith.constant 0 : index
    %17 = vector.load %arg13[%c161, %c0_16] : memref<324x1xf32, #tpu.memory_space<vmem>>, vector<2x1xf32>
    tpu.vector_store %arg13[%c161, %c0_16], %16 {strides = array<i32>} : memref<324x1xf32, #tpu.memory_space<vmem>>, vector<2x1xf32>,
    %cst_17 = arith.constant 0.000000e+00 : f32
    %18 = vector.broadcast %cst_17 : f32 to vector<2x1xf32>
    %c179 = arith.constant 179 : index
    %c0_18 = arith.constant 0 : index
    %19 = vector.load %arg13[%c179, %c0_18] : memref<324x1xf32, #tpu.memory_space<vmem>>, vector<2x1xf32>
    tpu.vector_store %arg13[%c179, %c0_18], %18 {strides = array<i32>} : memref<324x1xf32, #tpu.memory_space<vmem>>, vector<2x1xf32>,
    %cst_19 = arith.constant 0.000000e+00 : f32
    %20 = vector.broadcast %cst_19 : f32 to vector<2x1xf32>
    %c197 = arith.constant 197 : index
    %c0_20 = arith.constant 0 : index
    %21 = vector.load %arg13[%c197, %c0_20] : memref<324x1xf32, #tpu.memory_space<vmem>>, vector<2x1xf32>
    tpu.vector_store %arg13[%c197, %c0_20], %20 {strides = array<i32>} : memref<324x1xf32, #tpu.memory_space<vmem>>, vector<2x1xf32>,
    %cst_21 = arith.constant 0.000000e+00 : f32
    %22 = vector.broadcast %cst_21 : f32 to vector<2x1xf32>
    %c215 = arith.constant 215 : index
    %c0_22 = arith.constant 0 : index
    %23 = vector.load %arg13[%c215, %c0_22] : memref<324x1xf32, #tpu.memory_space<vmem>>, vector<2x1xf32>
    tpu.vector_store %arg13[%c215, %c0_22], %22 {strides = array<i32>} : memref<324x1xf32, #tpu.memory_space<vmem>>, vector<2x1xf32>,
    %cst_23 = arith.constant 0.000000e+00 : f32
    %24 = vector.broadcast %cst_23 : f32 to vector<2x1xf32>
    %c233 = arith.constant 233 : index
    %c0_24 = arith.constant 0 : index
    %25 = vector.load %arg13[%c233, %c0_24] : memref<324x1xf32, #tpu.memory_space<vmem>>, vector<2x1xf32>
    tpu.vector_store %arg13[%c233, %c0_24], %24 {strides = array<i32>} : memref<324x1xf32, #tpu.memory_space<vmem>>, vector<2x1xf32>,
    %cst_25 = arith.constant 0.000000e+00 : f32
    %26 = vector.broadcast %cst_25 : f32 to vector<2x1xf32>
    %c251 = arith.constant 251 : index
    %c0_26 = arith.constant 0 : index
    %27 = vector.load %arg13[%c251, %c0_26] : memref<324x1xf32, #tpu.memory_space<vmem>>, vector<2x1xf32>
    tpu.vector_store %arg13[%c251, %c0_26], %26 {strides = array<i32>} : memref<324x1xf32, #tpu.memory_space<vmem>>, vector<2x1xf32>,
    %cst_27 = arith.constant 0.000000e+00 : f32
    %28 = vector.broadcast %cst_27 : f32 to vector<2x1xf32>
    %c269 = arith.constant 269 : index
    %c0_28 = arith.constant 0 : index
    %29 = vector.load %arg13[%c269, %c0_28] : memref<324x1xf32, #tpu.memory_space<vmem>>, vector<2x1xf32>
    tpu.vector_store %arg13[%c269, %c0_28], %28 {strides = array<i32>} : memref<324x1xf32, #tpu.memory_space<vmem>>, vector<2x1xf32>,
    %cst_29 = arith.constant 0.000000e+00 : f32
    %30 = vector.broadcast %cst_29 : f32 to vector<2x1xf32>
    %c287 = arith.constant 287 : index
    %c0_30 = arith.constant 0 : index
    %31 = vector.load %arg13[%c287, %c0_30] : memref<324x1xf32, #tpu.memory_space<vmem>>, vector<2x1xf32>
    tpu.vector_store %arg13[%c287, %c0_30], %30 {strides = array<i32>} : memref<324x1xf32, #tpu.memory_space<vmem>>, vector<2x1xf32>,
    %cst_31 = arith.constant 0.000000e+00 : f32
    %32 = vector.broadcast %cst_31 : f32 to vector<19x1xf32>
    %c305 = arith.constant 305 : index
    %c0_32 = arith.constant 0 : index
    %33 = vector.load %arg13[%c305, %c0_32] : memref<324x1xf32, #tpu.memory_space<vmem>>, vector<19x1xf32>
    tpu.vector_store %arg13[%c305, %c0_32], %32 {strides = array<i32>} : memref<324x1xf32, #tpu.memory_space<vmem>>, vector<19x1xf32>,
    %cst_33 = arith.constant 0.000000e+00 : f32
    %34 = vector.broadcast %cst_33 : f32 to vector<11x16xf32>
    %c0_34 = arith.constant 0 : index
    %c0_35 = arith.constant 0 : index
    %35 = vector.load %arg14[%c0_34, %c0_35] : memref<100x16xf32, #tpu.memory_space<vmem>>, vector<11x16xf32>
    tpu.vector_store %arg14[%c0_34, %c0_35], %34 {strides = array<i32>} : memref<100x16xf32, #tpu.memory_space<vmem>>, vector<11x16xf32>,
    %cst_36 = arith.constant 0.000000e+00 : f32
    %36 = vector.broadcast %cst_36 : f32 to vector<2x16xf32>
    %c19 = arith.constant 19 : index
    %c0_37 = arith.constant 0 : index
    %37 = vector.load %arg14[%c19, %c0_37] : memref<100x16xf32, #tpu.memory_space<vmem>>, vector<2x16xf32>
    tpu.vector_store %arg14[%c19, %c0_37], %36 {strides = array<i32>} : memref<100x16xf32, #tpu.memory_space<vmem>>, vector<2x16xf32>,
    %cst_38 = arith.constant 0.000000e+00 : f32
    %38 = vector.broadcast %cst_38 : f32 to vector<2x16xf32>
    %c29 = arith.constant 29 : index
    %c0_39 = arith.constant 0 : index
    %39 = vector.load %arg14[%c29, %c0_39] : memref<100x16xf32, #tpu.memory_space<vmem>>, vector<2x16xf32>
    tpu.vector_store %arg14[%c29, %c0_39], %38 {strides = array<i32>} : memref<100x16xf32, #tpu.memory_space<vmem>>, vector<2x16xf32>,
    %cst_40 = arith.constant 0.000000e+00 : f32
    %40 = vector.broadcast %cst_40 : f32 to vector<2x16xf32>
    %c39 = arith.constant 39 : index
    %c0_41 = arith.constant 0 : index
    %41 = vector.load %arg14[%c39, %c0_41] : memref<100x16xf32, #tpu.memory_space<vmem>>, vector<2x16xf32>
    tpu.vector_store %arg14[%c39, %c0_41], %40 {strides = array<i32>} : memref<100x16xf32, #tpu.memory_space<vmem>>, vector<2x16xf32>,
    %cst_42 = arith.constant 0.000000e+00 : f32
    %42 = vector.broadcast %cst_42 : f32 to vector<2x16xf32>
    %c49 = arith.constant 49 : index
    %c0_43 = arith.constant 0 : index
    %43 = vector.load %arg14[%c49, %c0_43] : memref<100x16xf32, #tpu.memory_space<vmem>>, vector<2x16xf32>
    tpu.vector_store %arg14[%c49, %c0_43], %42 {strides = array<i32>} : memref<100x16xf32, #tpu.memory_space<vmem>>, vector<2x16xf32>,
    %cst_44 = arith.constant 0.000000e+00 : f32
    %44 = vector.broadcast %cst_44 : f32 to vector<2x16xf32>
    %c59 = arith.constant 59 : index
    %c0_45 = arith.constant 0 : index
    %45 = vector.load %arg14[%c59, %c0_45] : memref<100x16xf32, #tpu.memory_space<vmem>>, vector<2x16xf32>
    tpu.vector_store %arg14[%c59, %c0_45], %44 {strides = array<i32>} : memref<100x16xf32, #tpu.memory_space<vmem>>, vector<2x16xf32>,
    %cst_46 = arith.constant 0.000000e+00 : f32
    %46 = vector.broadcast %cst_46 : f32 to vector<2x16xf32>
    %c69 = arith.constant 69 : index
    %c0_47 = arith.constant 0 : index
    %47 = vector.load %arg14[%c69, %c0_47] : memref<100x16xf32, #tpu.memory_space<vmem>>, vector<2x16xf32>
    tpu.vector_store %arg14[%c69, %c0_47], %46 {strides = array<i32>} : memref<100x16xf32, #tpu.memory_space<vmem>>, vector<2x16xf32>,
    %cst_48 = arith.constant 0.000000e+00 : f32
    %48 = vector.broadcast %cst_48 : f32 to vector<2x16xf32>
    %c79 = arith.constant 79 : index
    %c0_49 = arith.constant 0 : index
    %49 = vector.load %arg14[%c79, %c0_49] : memref<100x16xf32, #tpu.memory_space<vmem>>, vector<2x16xf32>
    tpu.vector_store %arg14[%c79, %c0_49], %48 {strides = array<i32>} : memref<100x16xf32, #tpu.memory_space<vmem>>, vector<2x16xf32>,
    %cst_50 = arith.constant 0.000000e+00 : f32
    %50 = vector.broadcast %cst_50 : f32 to vector<11x16xf32>
    %c89_51 = arith.constant 89 : index
    %c0_52 = arith.constant 0 : index
    %51 = vector.load %arg14[%c89_51, %c0_52] : memref<100x16xf32, #tpu.memory_space<vmem>>, vector<11x16xf32>
    tpu.vector_store %arg14[%c89_51, %c0_52], %50 {strides = array<i32>} : memref<100x16xf32, #tpu.memory_space<vmem>>, vector<11x16xf32>,
    %cst_53 = arith.constant 0.000000e+00 : f32
    %52 = vector.broadcast %cst_53 : f32 to vector<7x32xf32>
    %c0_54 = arith.constant 0 : index
    %c0_55 = arith.constant 0 : index
    %53 = vector.load %arg15[%c0_54, %c0_55] : memref<36x32xf32, #tpu.memory_space<vmem>>, vector<7x32xf32>
    tpu.vector_store %arg15[%c0_54, %c0_55], %52 {strides = array<i32>} : memref<36x32xf32, #tpu.memory_space<vmem>>, vector<7x32xf32>,
    %cst_56 = arith.constant 0.000000e+00 : f32
    %54 = vector.broadcast %cst_56 : f32 to vector<2x32xf32>
    %c11 = arith.constant 11 : index
    %c0_57 = arith.constant 0 : index
    %55 = vector.load %arg15[%c11, %c0_57] : memref<36x32xf32, #tpu.memory_space<vmem>>, vector<2x32xf32>
    tpu.vector_store %arg15[%c11, %c0_57], %54 {strides = array<i32>} : memref<36x32xf32, #tpu.memory_space<vmem>>, vector<2x32xf32>,
    %cst_58 = arith.constant 0.000000e+00 : f32
    %56 = vector.broadcast %cst_58 : f32 to vector<2x32xf32>
    %c17 = arith.constant 17 : index
    %c0_59 = arith.constant 0 : index
    %57 = vector.load %arg15[%c17, %c0_59] : memref<36x32xf32, #tpu.memory_space<vmem>>, vector<2x32xf32>
    tpu.vector_store %arg15[%c17, %c0_59], %56 {strides = array<i32>} : memref<36x32xf32, #tpu.memory_space<vmem>>, vector<2x32xf32>,
    %cst_60 = arith.constant 0.000000e+00 : f32
    %58 = vector.broadcast %cst_60 : f32 to vector<2x32xf32>
    %c23 = arith.constant 23 : index
    %c0_61 = arith.constant 0 : index
    %59 = vector.load %arg15[%c23, %c0_61] : memref<36x32xf32, #tpu.memory_space<vmem>>, vector<2x32xf32>
    tpu.vector_store %arg15[%c23, %c0_61], %58 {strides = array<i32>} : memref<36x32xf32, #tpu.memory_space<vmem>>, vector<2x32xf32>,
    %cst_62 = arith.constant 0.000000e+00 : f32
    %60 = vector.broadcast %cst_62 : f32 to vector<7x32xf32>
    %c29_63 = arith.constant 29 : index
    %c0_64 = arith.constant 0 : index
    %61 = vector.load %arg15[%c29_63, %c0_64] : memref<36x32xf32, #tpu.memory_space<vmem>>, vector<7x32xf32>
    tpu.vector_store %arg15[%c29_63, %c0_64], %60 {strides = array<i32>} : memref<36x32xf32, #tpu.memory_space<vmem>>, vector<7x32xf32>,
    %c0_65 = arith.constant 0 : index
    %c0_66 = arith.constant 0 : index
    %c0_67 = arith.constant 0 : index
    %62 = vector.load %arg1[%c0_65, %c0_66, %c0_67] : memref<1x256x1xf32, #tpu.memory_space<vmem>>, vector<1x16x1xf32>
    %63 = vector.shape_cast %62 : vector<1x16x1xf32> to vector<16x1xf32>
    %c19_68 = arith.constant 19 : index
    %c0_69 = arith.constant 0 : index
    %64 = vector.load %arg13[%c19_68, %c0_69] : memref<324x1xf32, #tpu.memory_space<vmem>>, vector<16x1xf32>
    tpu.vector_store %arg13[%c19_68, %c0_69], %63 {strides = array<i32>} : memref<324x1xf32, #tpu.memory_space<vmem>>, vector<16x1xf32>,
    %c0_70 = arith.constant 0 : index
    %c16 = arith.constant 16 : index
    %c0_71 = arith.constant 0 : index
    %65 = vector.load %arg1[%c0_70, %c16, %c0_71] : memref<1x256x1xf32, #tpu.memory_space<vmem>>, vector<1x16x1xf32>
    %66 = vector.shape_cast %65 : vector<1x16x1xf32> to vector<16x1xf32>
    %c37 = arith.constant 37 : index
    %c0_72 = arith.constant 0 : index
    %67 = vector.load %arg13[%c37, %c0_72] : memref<324x1xf32, #tpu.memory_space<vmem>>, vector<16x1xf32>
    tpu.vector_store %arg13[%c37, %c0_72], %66 {strides = array<i32>} : memref<324x1xf32, #tpu.memory_space<vmem>>, vector<16x1xf32>,
    %c0_73 = arith.constant 0 : index
    %c32 = arith.constant 32 : index
    %c0_74 = arith.constant 0 : index
    %68 = vector.load %arg1[%c0_73, %c32, %c0_74] : memref<1x256x1xf32, #tpu.memory_space<vmem>>, vector<1x16x1xf32>
    %69 = vector.shape_cast %68 : vector<1x16x1xf32> to vector<16x1xf32>
    %c55 = arith.constant 55 : index
    %c0_75 = arith.constant 0 : index
    %70 = vector.load %arg13[%c55, %c0_75] : memref<324x1xf32, #tpu.memory_space<vmem>>, vector<16x1xf32>
    tpu.vector_store %arg13[%c55, %c0_75], %69 {strides = array<i32>} : memref<324x1xf32, #tpu.memory_space<vmem>>, vector<16x1xf32>,
    %c0_76 = arith.constant 0 : index
    %c48 = arith.constant 48 : index
    %c0_77 = arith.constant 0 : index
    %71 = vector.load %arg1[%c0_76, %c48, %c0_77] : memref<1x256x1xf32, #tpu.memory_space<vmem>>, vector<1x16x1xf32>
    %72 = vector.shape_cast %71 : vector<1x16x1xf32> to vector<16x1xf32>
    %c73 = arith.constant 73 : index
    %c0_78 = arith.constant 0 : index
    %73 = vector.load %arg13[%c73, %c0_78] : memref<324x1xf32, #tpu.memory_space<vmem>>, vector<16x1xf32>
    tpu.vector_store %arg13[%c73, %c0_78], %72 {strides = array<i32>} : memref<324x1xf32, #tpu.memory_space<vmem>>, vector<16x1xf32>,
    %c0_79 = arith.constant 0 : index
    %c64 = arith.constant 64 : index
    %c0_80 = arith.constant 0 : index
    %74 = vector.load %arg1[%c0_79, %c64, %c0_80] : memref<1x256x1xf32, #tpu.memory_space<vmem>>, vector<1x16x1xf32>
    %75 = vector.shape_cast %74 : vector<1x16x1xf32> to vector<16x1xf32>
    %c91 = arith.constant 91 : index
    %c0_81 = arith.constant 0 : index
    %76 = vector.load %arg13[%c91, %c0_81] : memref<324x1xf32, #tpu.memory_space<vmem>>, vector<16x1xf32>
    tpu.vector_store %arg13[%c91, %c0_81], %75 {strides = array<i32>} : memref<324x1xf32, #tpu.memory_space<vmem>>, vector<16x1xf32>,
    %c0_82 = arith.constant 0 : index
    %c80 = arith.constant 80 : index
    %c0_83 = arith.constant 0 : index
    %77 = vector.load %arg1[%c0_82, %c80, %c0_83] : memref<1x256x1xf32, #tpu.memory_space<vmem>>, vector<1x16x1xf32>
    %78 = vector.shape_cast %77 : vector<1x16x1xf32> to vector<16x1xf32>
    %c109 = arith.constant 109 : index
    %c0_84 = arith.constant 0 : index
    %79 = vector.load %arg13[%c109, %c0_84] : memref<324x1xf32, #tpu.memory_space<vmem>>, vector<16x1xf32>
    tpu.vector_store %arg13[%c109, %c0_84], %78 {strides = array<i32>} : memref<324x1xf32, #tpu.memory_space<vmem>>, vector<16x1xf32>,
    %c0_85 = arith.constant 0 : index
    %c96 = arith.constant 96 : index
    %c0_86 = arith.constant 0 : index
    %80 = vector.load %arg1[%c0_85, %c96, %c0_86] : memref<1x256x1xf32, #tpu.memory_space<vmem>>, vector<1x16x1xf32>
    %81 = vector.shape_cast %80 : vector<1x16x1xf32> to vector<16x1xf32>
    %c127 = arith.constant 127 : index
    %c0_87 = arith.constant 0 : index
    %82 = vector.load %arg13[%c127, %c0_87] : memref<324x1xf32, #tpu.memory_space<vmem>>, vector<16x1xf32>
    tpu.vector_store %arg13[%c127, %c0_87], %81 {strides = array<i32>} : memref<324x1xf32, #tpu.memory_space<vmem>>, vector<16x1xf32>,
    %c0_88 = arith.constant 0 : index
    %c112 = arith.constant 112 : index
    %c0_89 = arith.constant 0 : index
    %83 = vector.load %arg1[%c0_88, %c112, %c0_89] : memref<1x256x1xf32, #tpu.memory_space<vmem>>, vector<1x16x1xf32>
    %84 = vector.shape_cast %83 : vector<1x16x1xf32> to vector<16x1xf32>
    %c145 = arith.constant 145 : index
    %c0_90 = arith.constant 0 : index
    %85 = vector.load %arg13[%c145, %c0_90] : memref<324x1xf32, #tpu.memory_space<vmem>>, vector<16x1xf32>
    tpu.vector_store %arg13[%c145, %c0_90], %84 {strides = array<i32>} : memref<324x1xf32, #tpu.memory_space<vmem>>, vector<16x1xf32>,
    %c0_91 = arith.constant 0 : index
    %c128 = arith.constant 128 : index
    %c0_92 = arith.constant 0 : index
    %86 = vector.load %arg1[%c0_91, %c128, %c0_92] : memref<1x256x1xf32, #tpu.memory_space<vmem>>, vector<1x16x1xf32>
    %87 = vector.shape_cast %86 : vector<1x16x1xf32> to vector<16x1xf32>
    %c163 = arith.constant 163 : index
    %c0_93 = arith.constant 0 : index
    %88 = vector.load %arg13[%c163, %c0_93] : memref<324x1xf32, #tpu.memory_space<vmem>>, vector<16x1xf32>
    tpu.vector_store %arg13[%c163, %c0_93], %87 {strides = array<i32>} : memref<324x1xf32, #tpu.memory_space<vmem>>, vector<16x1xf32>,
    %c0_94 = arith.constant 0 : index
    %c144 = arith.constant 144 : index
    %c0_95 = arith.constant 0 : index
    %89 = vector.load %arg1[%c0_94, %c144, %c0_95] : memref<1x256x1xf32, #tpu.memory_space<vmem>>, vector<1x16x1xf32>
    %90 = vector.shape_cast %89 : vector<1x16x1xf32> to vector<16x1xf32>
    %c181 = arith.constant 181 : index
    %c0_96 = arith.constant 0 : index
    %91 = vector.load %arg13[%c181, %c0_96] : memref<324x1xf32, #tpu.memory_space<vmem>>, vector<16x1xf32>
    tpu.vector_store %arg13[%c181, %c0_96], %90 {strides = array<i32>} : memref<324x1xf32, #tpu.memory_space<vmem>>, vector<16x1xf32>,
    %c0_97 = arith.constant 0 : index
    %c160 = arith.constant 160 : index
    %c0_98 = arith.constant 0 : index
    %92 = vector.load %arg1[%c0_97, %c160, %c0_98] : memref<1x256x1xf32, #tpu.memory_space<vmem>>, vector<1x16x1xf32>
    %93 = vector.shape_cast %92 : vector<1x16x1xf32> to vector<16x1xf32>
    %c199 = arith.constant 199 : index
    %c0_99 = arith.constant 0 : index
    %94 = vector.load %arg13[%c199, %c0_99] : memref<324x1xf32, #tpu.memory_space<vmem>>, vector<16x1xf32>
    tpu.vector_store %arg13[%c199, %c0_99], %93 {strides = array<i32>} : memref<324x1xf32, #tpu.memory_space<vmem>>, vector<16x1xf32>,
    %c0_100 = arith.constant 0 : index
    %c176 = arith.constant 176 : index
    %c0_101 = arith.constant 0 : index
    %95 = vector.load %arg1[%c0_100, %c176, %c0_101] : memref<1x256x1xf32, #tpu.memory_space<vmem>>, vector<1x16x1xf32>
    %96 = vector.shape_cast %95 : vector<1x16x1xf32> to vector<16x1xf32>
    %c217 = arith.constant 217 : index
    %c0_102 = arith.constant 0 : index
    %97 = vector.load %arg13[%c217, %c0_102] : memref<324x1xf32, #tpu.memory_space<vmem>>, vector<16x1xf32>
    tpu.vector_store %arg13[%c217, %c0_102], %96 {strides = array<i32>} : memref<324x1xf32, #tpu.memory_space<vmem>>, vector<16x1xf32>,
    %c0_103 = arith.constant 0 : index
    %c192 = arith.constant 192 : index
    %c0_104 = arith.constant 0 : index
    %98 = vector.load %arg1[%c0_103, %c192, %c0_104] : memref<1x256x1xf32, #tpu.memory_space<vmem>>, vector<1x16x1xf32>
    %99 = vector.shape_cast %98 : vector<1x16x1xf32> to vector<16x1xf32>
    %c235 = arith.constant 235 : index
    %c0_105 = arith.constant 0 : index
    %100 = vector.load %arg13[%c235, %c0_105] : memref<324x1xf32, #tpu.memory_space<vmem>>, vector<16x1xf32>
    tpu.vector_store %arg13[%c235, %c0_105], %99 {strides = array<i32>} : memref<324x1xf32, #tpu.memory_space<vmem>>, vector<16x1xf32>,
    %c0_106 = arith.constant 0 : index
    %c208 = arith.constant 208 : index
    %c0_107 = arith.constant 0 : index
    %101 = vector.load %arg1[%c0_106, %c208, %c0_107] : memref<1x256x1xf32, #tpu.memory_space<vmem>>, vector<1x16x1xf32>
    %102 = vector.shape_cast %101 : vector<1x16x1xf32> to vector<16x1xf32>
    %c253 = arith.constant 253 : index
    %c0_108 = arith.constant 0 : index
    %103 = vector.load %arg13[%c253, %c0_108] : memref<324x1xf32, #tpu.memory_space<vmem>>, vector<16x1xf32>
    tpu.vector_store %arg13[%c253, %c0_108], %102 {strides = array<i32>} : memref<324x1xf32, #tpu.memory_space<vmem>>, vector<16x1xf32>,
    %c0_109 = arith.constant 0 : index
    %c224 = arith.constant 224 : index
    %c0_110 = arith.constant 0 : index
    %104 = vector.load %arg1[%c0_109, %c224, %c0_110] : memref<1x256x1xf32, #tpu.memory_space<vmem>>, vector<1x16x1xf32>
    %105 = vector.shape_cast %104 : vector<1x16x1xf32> to vector<16x1xf32>
    %c271 = arith.constant 271 : index
    %c0_111 = arith.constant 0 : index
    %106 = vector.load %arg13[%c271, %c0_111] : memref<324x1xf32, #tpu.memory_space<vmem>>, vector<16x1xf32>
    tpu.vector_store %arg13[%c271, %c0_111], %105 {strides = array<i32>} : memref<324x1xf32, #tpu.memory_space<vmem>>, vector<16x1xf32>,
    %c0_112 = arith.constant 0 : index
    %c240 = arith.constant 240 : index
    %c0_113 = arith.constant 0 : index
    %107 = vector.load %arg1[%c0_112, %c240, %c0_113] : memref<1x256x1xf32, #tpu.memory_space<vmem>>, vector<1x16x1xf32>
    %108 = vector.shape_cast %107 : vector<1x16x1xf32> to vector<16x1xf32>
    %c289 = arith.constant 289 : index
    %c0_114 = arith.constant 0 : index
    %109 = vector.load %arg13[%c289, %c0_114] : memref<324x1xf32, #tpu.memory_space<vmem>>, vector<16x1xf32>
    tpu.vector_store %arg13[%c289, %c0_114], %108 {strides = array<i32>} : memref<324x1xf32, #tpu.memory_space<vmem>>, vector<16x1xf32>,
    %cst_115 = arith.constant 0.000000e+00 : f32
    %110 = vector.broadcast %cst_115 : f32 to vector<286x16xf32>
    %c0_116 = arith.constant 0 : index
    %c0_117 = arith.constant 0 : index
    %111 = vector.load %arg13[%c0_116, %c0_117] : memref<324x1xf32, #tpu.memory_space<vmem>>, vector<286x1xf32>
    %c0_118 = arith.constant 0 : index
    %c0_119 = arith.constant 0 : index
    %c0_120 = arith.constant 0 : index
    %112 = vector.load %arg2[%c0_118, %c0_119, %c0_120] : memref<9x1x16xf32, #tpu.memory_space<vmem>>, vector<1x1x16xf32>
    %113 = vector.shape_cast %112 : vector<1x1x16xf32> to vector<1x16xf32>
    %114 = vector.broadcast %111 : vector<286x1xf32> to vector<286x16xf32>
    %115 = vector.broadcast %113 : vector<1x16xf32> to vector<286x16xf32>
    %116 = arith.mulf %114, %115 : vector<286x16xf32>
    %117 = arith.addf %110, %116 : vector<286x16xf32>
    %c1 = arith.constant 1 : index
    %c0_121 = arith.constant 0 : index
    %118 = vector.load %arg13[%c1, %c0_121] : memref<324x1xf32, #tpu.memory_space<vmem>>, vector<286x1xf32>
    %c1_122 = arith.constant 1 : index
    %c0_123 = arith.constant 0 : index
    %c0_124 = arith.constant 0 : index
    %119 = vector.load %arg2[%c1_122, %c0_123, %c0_124] : memref<9x1x16xf32, #tpu.memory_space<vmem>>, vector<1x1x16xf32>
    %120 = vector.shape_cast %119 : vector<1x1x16xf32> to vector<1x16xf32>
    %121 = vector.broadcast %118 : vector<286x1xf32> to vector<286x16xf32>
    %122 = vector.broadcast %120 : vector<1x16xf32> to vector<286x16xf32>
    %123 = arith.mulf %121, %122 : vector<286x16xf32>
    %124 = arith.addf %117, %123 : vector<286x16xf32>
    %c2 = arith.constant 2 : index
    %c0_125 = arith.constant 0 : index
    %125 = vector.load %arg13[%c2, %c0_125] : memref<324x1xf32, #tpu.memory_space<vmem>>, vector<286x1xf32>
    %c2_126 = arith.constant 2 : index
    %c0_127 = arith.constant 0 : index
    %c0_128 = arith.constant 0 : index
    %126 = vector.load %arg2[%c2_126, %c0_127, %c0_128] : memref<9x1x16xf32, #tpu.memory_space<vmem>>, vector<1x1x16xf32>
    %127 = vector.shape_cast %126 : vector<1x1x16xf32> to vector<1x16xf32>
    %128 = vector.broadcast %125 : vector<286x1xf32> to vector<286x16xf32>
    %129 = vector.broadcast %127 : vector<1x16xf32> to vector<286x16xf32>
    %130 = arith.mulf %128, %129 : vector<286x16xf32>
    %131 = arith.addf %124, %130 : vector<286x16xf32>
    %c18 = arith.constant 18 : index
    %c0_129 = arith.constant 0 : index
    %132 = vector.load %arg13[%c18, %c0_129] : memref<324x1xf32, #tpu.memory_space<vmem>>, vector<286x1xf32>
    %c3 = arith.constant 3 : index
    %c0_130 = arith.constant 0 : index
    %c0_131 = arith.constant 0 : index
    %133 = vector.load %arg2[%c3, %c0_130, %c0_131] : memref<9x1x16xf32, #tpu.memory_space<vmem>>, vector<1x1x16xf32>
    %134 = vector.shape_cast %133 : vector<1x1x16xf32> to vector<1x16xf32>
    %135 = vector.broadcast %132 : vector<286x1xf32> to vector<286x16xf32>
    %136 = vector.broadcast %134 : vector<1x16xf32> to vector<286x16xf32>
    %137 = arith.mulf %135, %136 : vector<286x16xf32>
    %138 = arith.addf %131, %137 : vector<286x16xf32>
    %c19_132 = arith.constant 19 : index
    %c0_133 = arith.constant 0 : index
    %139 = vector.load %arg13[%c19_132, %c0_133] : memref<324x1xf32, #tpu.memory_space<vmem>>, vector<286x1xf32>
    %c4 = arith.constant 4 : index
    %c0_134 = arith.constant 0 : index
    %c0_135 = arith.constant 0 : index
    %140 = vector.load %arg2[%c4, %c0_134, %c0_135] : memref<9x1x16xf32, #tpu.memory_space<vmem>>, vector<1x1x16xf32>
    %141 = vector.shape_cast %140 : vector<1x1x16xf32> to vector<1x16xf32>
    %142 = vector.broadcast %139 : vector<286x1xf32> to vector<286x16xf32>
    %143 = vector.broadcast %141 : vector<1x16xf32> to vector<286x16xf32>
    %144 = arith.mulf %142, %143 : vector<286x16xf32>
    %145 = arith.addf %138, %144 : vector<286x16xf32>
    %c20 = arith.constant 20 : index
    %c0_136 = arith.constant 0 : index
    %146 = vector.load %arg13[%c20, %c0_136] : memref<324x1xf32, #tpu.memory_space<vmem>>, vector<286x1xf32>
    %c5 = arith.constant 5 : index
    %c0_137 = arith.constant 0 : index
    %c0_138 = arith.constant 0 : index
    %147 = vector.load %arg2[%c5, %c0_137, %c0_138] : memref<9x1x16xf32, #tpu.memory_space<vmem>>, vector<1x1x16xf32>
    %148 = vector.shape_cast %147 : vector<1x1x16xf32> to vector<1x16xf32>
    %149 = vector.broadcast %146 : vector<286x1xf32> to vector<286x16xf32>
    %150 = vector.broadcast %148 : vector<1x16xf32> to vector<286x16xf32>
    %151 = arith.mulf %149, %150 : vector<286x16xf32>
    %152 = arith.addf %145, %151 : vector<286x16xf32>
    %c36 = arith.constant 36 : index
    %c0_139 = arith.constant 0 : index
    %153 = vector.load %arg13[%c36, %c0_139] : memref<324x1xf32, #tpu.memory_space<vmem>>, vector<286x1xf32>
    %c6 = arith.constant 6 : index
    %c0_140 = arith.constant 0 : index
    %c0_141 = arith.constant 0 : index
    %154 = vector.load %arg2[%c6, %c0_140, %c0_141] : memref<9x1x16xf32, #tpu.memory_space<vmem>>, vector<1x1x16xf32>
    %155 = vector.shape_cast %154 : vector<1x1x16xf32> to vector<1x16xf32>
    %156 = vector.broadcast %153 : vector<286x1xf32> to vector<286x16xf32>
    %157 = vector.broadcast %155 : vector<1x16xf32> to vector<286x16xf32>
    %158 = arith.mulf %156, %157 : vector<286x16xf32>
    %159 = arith.addf %152, %158 : vector<286x16xf32>
    %c37_142 = arith.constant 37 : index
    %c0_143 = arith.constant 0 : index
    %160 = vector.load %arg13[%c37_142, %c0_143] : memref<324x1xf32, #tpu.memory_space<vmem>>, vector<286x1xf32>
    %c7 = arith.constant 7 : index
    %c0_144 = arith.constant 0 : index
    %c0_145 = arith.constant 0 : index
    %161 = vector.load %arg2[%c7, %c0_144, %c0_145] : memref<9x1x16xf32, #tpu.memory_space<vmem>>, vector<1x1x16xf32>
    %162 = vector.shape_cast %161 : vector<1x1x16xf32> to vector<1x16xf32>
    %163 = vector.broadcast %160 : vector<286x1xf32> to vector<286x16xf32>
    %164 = vector.broadcast %162 : vector<1x16xf32> to vector<286x16xf32>
    %165 = arith.mulf %163, %164 : vector<286x16xf32>
    %166 = arith.addf %159, %165 : vector<286x16xf32>
    %c38 = arith.constant 38 : index
    %c0_146 = arith.constant 0 : index
    %167 = vector.load %arg13[%c38, %c0_146] : memref<324x1xf32, #tpu.memory_space<vmem>>, vector<286x1xf32>
    %c8 = arith.constant 8 : index
    %c0_147 = arith.constant 0 : index
    %c0_148 = arith.constant 0 : index
    %168 = vector.load %arg2[%c8, %c0_147, %c0_148] : memref<9x1x16xf32, #tpu.memory_space<vmem>>, vector<1x1x16xf32>
    %169 = vector.shape_cast %168 : vector<1x1x16xf32> to vector<1x16xf32>
    %170 = vector.broadcast %167 : vector<286x1xf32> to vector<286x16xf32>
    %171 = vector.broadcast %169 : vector<1x16xf32> to vector<286x16xf32>
    %172 = arith.mulf %170, %171 : vector<286x16xf32>
    %173 = arith.addf %166, %172 : vector<286x16xf32>
    %c0_149 = arith.constant 0 : index
    %c0_150 = arith.constant 0 : index
    %174 = vector.load %arg3[%c0_149, %c0_150] : memref<1x16xf32, #tpu.memory_space<vmem>>, vector<1x16xf32>
    %175 = vector.broadcast %174 : vector<1x16xf32> to vector<286x16xf32>
    %176 = arith.addf %173, %175 : vector<286x16xf32>
    %cst_151 = arith.constant 0.000000e+00 : f32
    %177 = vector.broadcast %cst_151 : f32 to vector<286x16xf32>
    %178 = arith.maximumf %176, %177 : vector<286x16xf32>
    %c0_152 = arith.constant 0 : index
    %c0_153 = arith.constant 0 : index
    %179 = vector.load %arg16[%c0_152, %c0_153] : memref<286x16xf32, #tpu.memory_space<vmem>>, vector<286x16xf32>
    tpu.vector_store %arg16[%c0_152, %c0_153], %178 {strides = array<i32>} : memref<286x16xf32, #tpu.memory_space<vmem>>, vector<286x16xf32>,
    %c0_154 = arith.constant 0 : index
    %c0_155 = arith.constant 0 : index
    %180 = vector.load %arg16[%c0_154, %c0_155] : memref<286x16xf32, #tpu.memory_space<vmem>>, vector<16x16xf32>
    %c18_156 = arith.constant 18 : index
    %c0_157 = arith.constant 0 : index
    %181 = vector.load %arg16[%c18_156, %c0_157] : memref<286x16xf32, #tpu.memory_space<vmem>>, vector<16x16xf32>
    %182 = arith.maximumf %180, %181 : vector<16x16xf32>
    %c0_158 = arith.constant 0 : index
    %c0_159 = arith.constant 0 : index
    %183 = vector.load %arg19[%c0_158, %c0_159] : memref<128x16xf32, #tpu.memory_space<vmem>>, vector<16x16xf32>
    tpu.vector_store %arg19[%c0_158, %c0_159], %182 {strides = array<i32>} : memref<128x16xf32, #tpu.memory_space<vmem>>, vector<16x16xf32>,
    %c36_160 = arith.constant 36 : index
    %c0_161 = arith.constant 0 : index
    %184 = vector.load %arg16[%c36_160, %c0_161] : memref<286x16xf32, #tpu.memory_space<vmem>>, vector<16x16xf32>
    %c54 = arith.constant 54 : index
    %c0_162 = arith.constant 0 : index
    %185 = vector.load %arg16[%c54, %c0_162] : memref<286x16xf32, #tpu.memory_space<vmem>>, vector<16x16xf32>
    %186 = arith.maximumf %184, %185 : vector<16x16xf32>
    %c16_163 = arith.constant 16 : index
    %c0_164 = arith.constant 0 : index
    %187 = vector.load %arg19[%c16_163, %c0_164] : memref<128x16xf32, #tpu.memory_space<vmem>>, vector<16x16xf32>
    tpu.vector_store %arg19[%c16_163, %c0_164], %186 {strides = array<i32>} : memref<128x16xf32, #tpu.memory_space<vmem>>, vector<16x16xf32>,
    %c72 = arith.constant 72 : index
    %c0_165 = arith.constant 0 : index
    %188 = vector.load %arg16[%c72, %c0_165] : memref<286x16xf32, #tpu.memory_space<vmem>>, vector<16x16xf32>
    %c90 = arith.constant 90 : index
    %c0_166 = arith.constant 0 : index
    %189 = vector.load %arg16[%c90, %c0_166] : memref<286x16xf32, #tpu.memory_space<vmem>>, vector<16x16xf32>
    %190 = arith.maximumf %188, %189 : vector<16x16xf32>
    %c32_167 = arith.constant 32 : index
    %c0_168 = arith.constant 0 : index
    %191 = vector.load %arg19[%c32_167, %c0_168] : memref<128x16xf32, #tpu.memory_space<vmem>>, vector<16x16xf32>
    tpu.vector_store %arg19[%c32_167, %c0_168], %190 {strides = array<i32>} : memref<128x16xf32, #tpu.memory_space<vmem>>, vector<16x16xf32>,
    %c108 = arith.constant 108 : index
    %c0_169 = arith.constant 0 : index
    %192 = vector.load %arg16[%c108, %c0_169] : memref<286x16xf32, #tpu.memory_space<vmem>>, vector<16x16xf32>
    %c126 = arith.constant 126 : index
    %c0_170 = arith.constant 0 : index
    %193 = vector.load %arg16[%c126, %c0_170] : memref<286x16xf32, #tpu.memory_space<vmem>>, vector<16x16xf32>
    %194 = arith.maximumf %192, %193 : vector<16x16xf32>
    %c48_171 = arith.constant 48 : index
    %c0_172 = arith.constant 0 : index
    %195 = vector.load %arg19[%c48_171, %c0_172] : memref<128x16xf32, #tpu.memory_space<vmem>>, vector<16x16xf32>
    tpu.vector_store %arg19[%c48_171, %c0_172], %194 {strides = array<i32>} : memref<128x16xf32, #tpu.memory_space<vmem>>, vector<16x16xf32>,
    %c144_173 = arith.constant 144 : index
    %c0_174 = arith.constant 0 : index
    %196 = vector.load %arg16[%c144_173, %c0_174] : memref<286x16xf32, #tpu.memory_space<vmem>>, vector<16x16xf32>
    %c162 = arith.constant 162 : index
    %c0_175 = arith.constant 0 : index
    %197 = vector.load %arg16[%c162, %c0_175] : memref<286x16xf32, #tpu.memory_space<vmem>>, vector<16x16xf32>
    %198 = arith.maximumf %196, %197 : vector<16x16xf32>
    %c64_176 = arith.constant 64 : index
    %c0_177 = arith.constant 0 : index
    %199 = vector.load %arg19[%c64_176, %c0_177] : memref<128x16xf32, #tpu.memory_space<vmem>>, vector<16x16xf32>
    tpu.vector_store %arg19[%c64_176, %c0_177], %198 {strides = array<i32>} : memref<128x16xf32, #tpu.memory_space<vmem>>, vector<16x16xf32>,
    %c180 = arith.constant 180 : index
    %c0_178 = arith.constant 0 : index
    %200 = vector.load %arg16[%c180, %c0_178] : memref<286x16xf32, #tpu.memory_space<vmem>>, vector<16x16xf32>
    %c198 = arith.constant 198 : index
    %c0_179 = arith.constant 0 : index
    %201 = vector.load %arg16[%c198, %c0_179] : memref<286x16xf32, #tpu.memory_space<vmem>>, vector<16x16xf32>
    %202 = arith.maximumf %200, %201 : vector<16x16xf32>
    %c80_180 = arith.constant 80 : index
    %c0_181 = arith.constant 0 : index
    %203 = vector.load %arg19[%c80_180, %c0_181] : memref<128x16xf32, #tpu.memory_space<vmem>>, vector<16x16xf32>
    tpu.vector_store %arg19[%c80_180, %c0_181], %202 {strides = array<i32>} : memref<128x16xf32, #tpu.memory_space<vmem>>, vector<16x16xf32>,
    %c216 = arith.constant 216 : index
    %c0_182 = arith.constant 0 : index
    %204 = vector.load %arg16[%c216, %c0_182] : memref<286x16xf32, #tpu.memory_space<vmem>>, vector<16x16xf32>
    %c234 = arith.constant 234 : index
    %c0_183 = arith.constant 0 : index
    %205 = vector.load %arg16[%c234, %c0_183] : memref<286x16xf32, #tpu.memory_space<vmem>>, vector<16x16xf32>
    %206 = arith.maximumf %204, %205 : vector<16x16xf32>
    %c96_184 = arith.constant 96 : index
    %c0_185 = arith.constant 0 : index
    %207 = vector.load %arg19[%c96_184, %c0_185] : memref<128x16xf32, #tpu.memory_space<vmem>>, vector<16x16xf32>
    tpu.vector_store %arg19[%c96_184, %c0_185], %206 {strides = array<i32>} : memref<128x16xf32, #tpu.memory_space<vmem>>, vector<16x16xf32>,
    %c252 = arith.constant 252 : index
    %c0_186 = arith.constant 0 : index
    %208 = vector.load %arg16[%c252, %c0_186] : memref<286x16xf32, #tpu.memory_space<vmem>>, vector<16x16xf32>
    %c270 = arith.constant 270 : index
    %c0_187 = arith.constant 0 : index
    %209 = vector.load %arg16[%c270, %c0_187] : memref<286x16xf32, #tpu.memory_space<vmem>>, vector<16x16xf32>
    %210 = arith.maximumf %208, %209 : vector<16x16xf32>
    %c112_188 = arith.constant 112 : index
    %c0_189 = arith.constant 0 : index
    %211 = vector.load %arg19[%c112_188, %c0_189] : memref<128x16xf32, #tpu.memory_space<vmem>>, vector<16x16xf32>
    tpu.vector_store %arg19[%c112_188, %c0_189], %210 {strides = array<i32>} : memref<128x16xf32, #tpu.memory_space<vmem>>, vector<16x16xf32>,
    %c0_190 = arith.constant 0 : index
    %c0_191 = arith.constant 0 : index
    %212 = tpu.strided_load %arg19[%c0_190, %c0_191] {strides = array<i32: 2, 1>} : memref<128x16xf32, #tpu.memory_space<vmem>>, vector<64x16xf32>
    %c1_192 = arith.constant 1 : index
    %c0_193 = arith.constant 0 : index
    %213 = tpu.strided_load %arg19[%c1_192, %c0_193] {strides = array<i32: 2, 1>} : memref<128x16xf32, #tpu.memory_space<vmem>>, vector<64x16xf32>
    %214 = arith.maximumf %212, %213 : vector<64x16xf32>
    %215 = vector.extract_strided_slice %214 {offsets = [0, 0], sizes = [8, 16], strides = [1, 1]} : vector<64x16xf32> to vector<8x16xf32>
    %c11_194 = arith.constant 11 : index
    %c0_195 = arith.constant 0 : index
    %216 = vector.load %arg14[%c11_194, %c0_195] : memref<100x16xf32, #tpu.memory_space<vmem>>, vector<8x16xf32>
    tpu.vector_store %arg14[%c11_194, %c0_195], %215 {strides = array<i32>} : memref<100x16xf32, #tpu.memory_space<vmem>>, vector<8x16xf32>,
    %217 = vector.extract_strided_slice %214 {offsets = [8, 0], sizes = [8, 16], strides = [1, 1]} : vector<64x16xf32> to vector<8x16xf32>
    %c21 = arith.constant 21 : index
    %c0_196 = arith.constant 0 : index
    %218 = vector.load %arg14[%c21, %c0_196] : memref<100x16xf32, #tpu.memory_space<vmem>>, vector<8x16xf32>
    tpu.vector_store %arg14[%c21, %c0_196], %217 {strides = array<i32>} : memref<100x16xf32, #tpu.memory_space<vmem>>, vector<8x16xf32>,
    %219 = vector.extract_strided_slice %214 {offsets = [16, 0], sizes = [8, 16], strides = [1, 1]} : vector<64x16xf32> to vector<8x16xf32>
    %c31 = arith.constant 31 : index
    %c0_197 = arith.constant 0 : index
    %220 = vector.load %arg14[%c31, %c0_197] : memref<100x16xf32, #tpu.memory_space<vmem>>, vector<8x16xf32>
    tpu.vector_store %arg14[%c31, %c0_197], %219 {strides = array<i32>} : memref<100x16xf32, #tpu.memory_space<vmem>>, vector<8x16xf32>,
    %221 = vector.extract_strided_slice %214 {offsets = [24, 0], sizes = [8, 16], strides = [1, 1]} : vector<64x16xf32> to vector<8x16xf32>
    %c41 = arith.constant 41 : index
    %c0_198 = arith.constant 0 : index
    %222 = vector.load %arg14[%c41, %c0_198] : memref<100x16xf32, #tpu.memory_space<vmem>>, vector<8x16xf32>
    tpu.vector_store %arg14[%c41, %c0_198], %221 {strides = array<i32>} : memref<100x16xf32, #tpu.memory_space<vmem>>, vector<8x16xf32>,
    %223 = vector.extract_strided_slice %214 {offsets = [32, 0], sizes = [8, 16], strides = [1, 1]} : vector<64x16xf32> to vector<8x16xf32>
    %c51 = arith.constant 51 : index
    %c0_199 = arith.constant 0 : index
    %224 = vector.load %arg14[%c51, %c0_199] : memref<100x16xf32, #tpu.memory_space<vmem>>, vector<8x16xf32>
    tpu.vector_store %arg14[%c51, %c0_199], %223 {strides = array<i32>} : memref<100x16xf32, #tpu.memory_space<vmem>>, vector<8x16xf32>,
    %225 = vector.extract_strided_slice %214 {offsets = [40, 0], sizes = [8, 16], strides = [1, 1]} : vector<64x16xf32> to vector<8x16xf32>
    %c61 = arith.constant 61 : index
    %c0_200 = arith.constant 0 : index
    %226 = vector.load %arg14[%c61, %c0_200] : memref<100x16xf32, #tpu.memory_space<vmem>>, vector<8x16xf32>
    tpu.vector_store %arg14[%c61, %c0_200], %225 {strides = array<i32>} : memref<100x16xf32, #tpu.memory_space<vmem>>, vector<8x16xf32>,
    %227 = vector.extract_strided_slice %214 {offsets = [48, 0], sizes = [8, 16], strides = [1, 1]} : vector<64x16xf32> to vector<8x16xf32>
    %c71_201 = arith.constant 71 : index
    %c0_202 = arith.constant 0 : index
    %228 = vector.load %arg14[%c71_201, %c0_202] : memref<100x16xf32, #tpu.memory_space<vmem>>, vector<8x16xf32>
    tpu.vector_store %arg14[%c71_201, %c0_202], %227 {strides = array<i32>} : memref<100x16xf32, #tpu.memory_space<vmem>>, vector<8x16xf32>,
    %229 = vector.extract_strided_slice %214 {offsets = [56, 0], sizes = [8, 16], strides = [1, 1]} : vector<64x16xf32> to vector<8x16xf32>
    %c81 = arith.constant 81 : index
    %c0_203 = arith.constant 0 : index
    %230 = vector.load %arg14[%c81, %c0_203] : memref<100x16xf32, #tpu.memory_space<vmem>>, vector<8x16xf32>
    tpu.vector_store %arg14[%c81, %c0_203], %229 {strides = array<i32>} : memref<100x16xf32, #tpu.memory_space<vmem>>, vector<8x16xf32>,
    %cst_204 = arith.constant 0.000000e+00 : f32
    %231 = vector.broadcast %cst_204 : f32 to vector<78x32xf32>
    %c0_205 = arith.constant 0 : index
    %c0_206 = arith.constant 0 : index
    %232 = vector.load %arg14[%c0_205, %c0_206] : memref<100x16xf32, #tpu.memory_space<vmem>>, vector<78x16xf32>
    %c0_207 = arith.constant 0 : index
    %c0_208 = arith.constant 0 : index
    %c0_209 = arith.constant 0 : index
    %233 = vector.load %arg4[%c0_207, %c0_208, %c0_209] : memref<9x16x32xf32, #tpu.memory_space<vmem>>, vector<1x16x32xf32>
    %234 = vector.shape_cast %233 : vector<1x16x32xf32> to vector<16x32xf32>
    %cst_210 = arith.constant dense<0.000000e+00> : vector<78x32xf32>
    %235 = tpu.matmul %232, %234, %cst_210 {dimension_numbers = #tpu.dot_dimension_numbers<[1], [0], [0], [1], [0, 0, 1, 1], [], []>} : vector<78x16xf32>, vector<16x32xf32>, vector<78x32xf32> -> vector<78x32xf32>
    %236 = arith.addf %231, %235 : vector<78x32xf32>
    %c1_211 = arith.constant 1 : index
    %c0_212 = arith.constant 0 : index
    %237 = vector.load %arg14[%c1_211, %c0_212] : memref<100x16xf32, #tpu.memory_space<vmem>>, vector<78x16xf32>
    %c1_213 = arith.constant 1 : index
    %c0_214 = arith.constant 0 : index
    %c0_215 = arith.constant 0 : index
    %238 = vector.load %arg4[%c1_213, %c0_214, %c0_215] : memref<9x16x32xf32, #tpu.memory_space<vmem>>, vector<1x16x32xf32>
    %239 = vector.shape_cast %238 : vector<1x16x32xf32> to vector<16x32xf32>
    %cst_216 = arith.constant dense<0.000000e+00> : vector<78x32xf32>
    %240 = tpu.matmul %237, %239, %cst_216 {dimension_numbers = #tpu.dot_dimension_numbers<[1], [0], [0], [1], [0, 0, 1, 1], [], []>} : vector<78x16xf32>, vector<16x32xf32>, vector<78x32xf32> -> vector<78x32xf32>
    %241 = arith.addf %236, %240 : vector<78x32xf32>
    %c2_217 = arith.constant 2 : index
    %c0_218 = arith.constant 0 : index
    %242 = vector.load %arg14[%c2_217, %c0_218] : memref<100x16xf32, #tpu.memory_space<vmem>>, vector<78x16xf32>
    %c2_219 = arith.constant 2 : index
    %c0_220 = arith.constant 0 : index
    %c0_221 = arith.constant 0 : index
    %243 = vector.load %arg4[%c2_219, %c0_220, %c0_221] : memref<9x16x32xf32, #tpu.memory_space<vmem>>, vector<1x16x32xf32>
    %244 = vector.shape_cast %243 : vector<1x16x32xf32> to vector<16x32xf32>
    %cst_222 = arith.constant dense<0.000000e+00> : vector<78x32xf32>
    %245 = tpu.matmul %242, %244, %cst_222 {dimension_numbers = #tpu.dot_dimension_numbers<[1], [0], [0], [1], [0, 0, 1, 1], [], []>} : vector<78x16xf32>, vector<16x32xf32>, vector<78x32xf32> -> vector<78x32xf32>
    %246 = arith.addf %241, %245 : vector<78x32xf32>
    %c10 = arith.constant 10 : index
    %c0_223 = arith.constant 0 : index
    %247 = vector.load %arg14[%c10, %c0_223] : memref<100x16xf32, #tpu.memory_space<vmem>>, vector<78x16xf32>
    %c3_224 = arith.constant 3 : index
    %c0_225 = arith.constant 0 : index
    %c0_226 = arith.constant 0 : index
    %248 = vector.load %arg4[%c3_224, %c0_225, %c0_226] : memref<9x16x32xf32, #tpu.memory_space<vmem>>, vector<1x16x32xf32>
    %249 = vector.shape_cast %248 : vector<1x16x32xf32> to vector<16x32xf32>
    %cst_227 = arith.constant dense<0.000000e+00> : vector<78x32xf32>
    %250 = tpu.matmul %247, %249, %cst_227 {dimension_numbers = #tpu.dot_dimension_numbers<[1], [0], [0], [1], [0, 0, 1, 1], [], []>} : vector<78x16xf32>, vector<16x32xf32>, vector<78x32xf32> -> vector<78x32xf32>
    %251 = arith.addf %246, %250 : vector<78x32xf32>
    %c11_228 = arith.constant 11 : index
    %c0_229 = arith.constant 0 : index
    %252 = vector.load %arg14[%c11_228, %c0_229] : memref<100x16xf32, #tpu.memory_space<vmem>>, vector<78x16xf32>
    %c4_230 = arith.constant 4 : index
    %c0_231 = arith.constant 0 : index
    %c0_232 = arith.constant 0 : index
    %253 = vector.load %arg4[%c4_230, %c0_231, %c0_232] : memref<9x16x32xf32, #tpu.memory_space<vmem>>, vector<1x16x32xf32>
    %254 = vector.shape_cast %253 : vector<1x16x32xf32> to vector<16x32xf32>
    %cst_233 = arith.constant dense<0.000000e+00> : vector<78x32xf32>
    %255 = tpu.matmul %252, %254, %cst_233 {dimension_numbers = #tpu.dot_dimension_numbers<[1], [0], [0], [1], [0, 0, 1, 1], [], []>} : vector<78x16xf32>, vector<16x32xf32>, vector<78x32xf32> -> vector<78x32xf32>
    %256 = arith.addf %251, %255 : vector<78x32xf32>
    %c12 = arith.constant 12 : index
    %c0_234 = arith.constant 0 : index
    %257 = vector.load %arg14[%c12, %c0_234] : memref<100x16xf32, #tpu.memory_space<vmem>>, vector<78x16xf32>
    %c5_235 = arith.constant 5 : index
    %c0_236 = arith.constant 0 : index
    %c0_237 = arith.constant 0 : index
    %258 = vector.load %arg4[%c5_235, %c0_236, %c0_237] : memref<9x16x32xf32, #tpu.memory_space<vmem>>, vector<1x16x32xf32>
    %259 = vector.shape_cast %258 : vector<1x16x32xf32> to vector<16x32xf32>
    %cst_238 = arith.constant dense<0.000000e+00> : vector<78x32xf32>
    %260 = tpu.matmul %257, %259, %cst_238 {dimension_numbers = #tpu.dot_dimension_numbers<[1], [0], [0], [1], [0, 0, 1, 1], [], []>} : vector<78x16xf32>, vector<16x32xf32>, vector<78x32xf32> -> vector<78x32xf32>
    %261 = arith.addf %256, %260 : vector<78x32xf32>
    %c20_239 = arith.constant 20 : index
    %c0_240 = arith.constant 0 : index
    %262 = vector.load %arg14[%c20_239, %c0_240] : memref<100x16xf32, #tpu.memory_space<vmem>>, vector<78x16xf32>
    %c6_241 = arith.constant 6 : index
    %c0_242 = arith.constant 0 : index
    %c0_243 = arith.constant 0 : index
    %263 = vector.load %arg4[%c6_241, %c0_242, %c0_243] : memref<9x16x32xf32, #tpu.memory_space<vmem>>, vector<1x16x32xf32>
    %264 = vector.shape_cast %263 : vector<1x16x32xf32> to vector<16x32xf32>
    %cst_244 = arith.constant dense<0.000000e+00> : vector<78x32xf32>
    %265 = tpu.matmul %262, %264, %cst_244 {dimension_numbers = #tpu.dot_dimension_numbers<[1], [0], [0], [1], [0, 0, 1, 1], [], []>} : vector<78x16xf32>, vector<16x32xf32>, vector<78x32xf32> -> vector<78x32xf32>
    %266 = arith.addf %261, %265 : vector<78x32xf32>
    %c21_245 = arith.constant 21 : index
    %c0_246 = arith.constant 0 : index
    %267 = vector.load %arg14[%c21_245, %c0_246] : memref<100x16xf32, #tpu.memory_space<vmem>>, vector<78x16xf32>
    %c7_247 = arith.constant 7 : index
    %c0_248 = arith.constant 0 : index
    %c0_249 = arith.constant 0 : index
    %268 = vector.load %arg4[%c7_247, %c0_248, %c0_249] : memref<9x16x32xf32, #tpu.memory_space<vmem>>, vector<1x16x32xf32>
    %269 = vector.shape_cast %268 : vector<1x16x32xf32> to vector<16x32xf32>
    %cst_250 = arith.constant dense<0.000000e+00> : vector<78x32xf32>
    %270 = tpu.matmul %267, %269, %cst_250 {dimension_numbers = #tpu.dot_dimension_numbers<[1], [0], [0], [1], [0, 0, 1, 1], [], []>} : vector<78x16xf32>, vector<16x32xf32>, vector<78x32xf32> -> vector<78x32xf32>
    %271 = arith.addf %266, %270 : vector<78x32xf32>
    %c22 = arith.constant 22 : index
    %c0_251 = arith.constant 0 : index
    %272 = vector.load %arg14[%c22, %c0_251] : memref<100x16xf32, #tpu.memory_space<vmem>>, vector<78x16xf32>
    %c8_252 = arith.constant 8 : index
    %c0_253 = arith.constant 0 : index
    %c0_254 = arith.constant 0 : index
    %273 = vector.load %arg4[%c8_252, %c0_253, %c0_254] : memref<9x16x32xf32, #tpu.memory_space<vmem>>, vector<1x16x32xf32>
    %274 = vector.shape_cast %273 : vector<1x16x32xf32> to vector<16x32xf32>
    %cst_255 = arith.constant dense<0.000000e+00> : vector<78x32xf32>
    %275 = tpu.matmul %272, %274, %cst_255 {dimension_numbers = #tpu.dot_dimension_numbers<[1], [0], [0], [1], [0, 0, 1, 1], [], []>} : vector<78x16xf32>, vector<16x32xf32>, vector<78x32xf32> -> vector<78x32xf32>
    %276 = arith.addf %271, %275 : vector<78x32xf32>
    %c0_256 = arith.constant 0 : index
    %c0_257 = arith.constant 0 : index
    %277 = vector.load %arg5[%c0_256, %c0_257] : memref<1x32xf32, #tpu.memory_space<vmem>>, vector<1x32xf32>
    %278 = vector.broadcast %277 : vector<1x32xf32> to vector<78x32xf32>
    %279 = arith.addf %276, %278 : vector<78x32xf32>
    %cst_258 = arith.constant 0.000000e+00 : f32
    %280 = vector.broadcast %cst_258 : f32 to vector<78x32xf32>
    %281 = arith.maximumf %279, %280 : vector<78x32xf32>
    %c0_259 = arith.constant 0 : index
    %c0_260 = arith.constant 0 : index
    %282 = vector.load %arg17[%c0_259, %c0_260] : memref<78x32xf32, #tpu.memory_space<vmem>>, vector<78x32xf32>
    tpu.vector_store %arg17[%c0_259, %c0_260], %281 {strides = array<i32>} : memref<78x32xf32, #tpu.memory_space<vmem>>, vector<78x32xf32>,
    %c0_261 = arith.constant 0 : index
    %c0_262 = arith.constant 0 : index
    %283 = vector.load %arg17[%c0_261, %c0_262] : memref<78x32xf32, #tpu.memory_space<vmem>>, vector<8x32xf32>
    %c10_263 = arith.constant 10 : index
    %c0_264 = arith.constant 0 : index
    %284 = vector.load %arg17[%c10_263, %c0_264] : memref<78x32xf32, #tpu.memory_space<vmem>>, vector<8x32xf32>
    %285 = arith.maximumf %283, %284 : vector<8x32xf32>
    %c0_265 = arith.constant 0 : index
    %c0_266 = arith.constant 0 : index
    %286 = vector.load %arg20[%c0_265, %c0_266] : memref<32x32xf32, #tpu.memory_space<vmem>>, vector<8x32xf32>
    tpu.vector_store %arg20[%c0_265, %c0_266], %285 {strides = array<i32>} : memref<32x32xf32, #tpu.memory_space<vmem>>, vector<8x32xf32>,
    %c20_267 = arith.constant 20 : index
    %c0_268 = arith.constant 0 : index
    %287 = vector.load %arg17[%c20_267, %c0_268] : memref<78x32xf32, #tpu.memory_space<vmem>>, vector<8x32xf32>
    %c30 = arith.constant 30 : index
    %c0_269 = arith.constant 0 : index
    %288 = vector.load %arg17[%c30, %c0_269] : memref<78x32xf32, #tpu.memory_space<vmem>>, vector<8x32xf32>
    %289 = arith.maximumf %287, %288 : vector<8x32xf32>
    %c8_270 = arith.constant 8 : index
    %c0_271 = arith.constant 0 : index
    %290 = vector.load %arg20[%c8_270, %c0_271] : memref<32x32xf32, #tpu.memory_space<vmem>>, vector<8x32xf32>
    tpu.vector_store %arg20[%c8_270, %c0_271], %289 {strides = array<i32>} : memref<32x32xf32, #tpu.memory_space<vmem>>, vector<8x32xf32>,
    %c40 = arith.constant 40 : index
    %c0_272 = arith.constant 0 : index
    %291 = vector.load %arg17[%c40, %c0_272] : memref<78x32xf32, #tpu.memory_space<vmem>>, vector<8x32xf32>
    %c50 = arith.constant 50 : index
    %c0_273 = arith.constant 0 : index
    %292 = vector.load %arg17[%c50, %c0_273] : memref<78x32xf32, #tpu.memory_space<vmem>>, vector<8x32xf32>
    %293 = arith.maximumf %291, %292 : vector<8x32xf32>
    %c16_274 = arith.constant 16 : index
    %c0_275 = arith.constant 0 : index
    %294 = vector.load %arg20[%c16_274, %c0_275] : memref<32x32xf32, #tpu.memory_space<vmem>>, vector<8x32xf32>
    tpu.vector_store %arg20[%c16_274, %c0_275], %293 {strides = array<i32>} : memref<32x32xf32, #tpu.memory_space<vmem>>, vector<8x32xf32>,
    %c60 = arith.constant 60 : index
    %c0_276 = arith.constant 0 : index
    %295 = vector.load %arg17[%c60, %c0_276] : memref<78x32xf32, #tpu.memory_space<vmem>>, vector<8x32xf32>
    %c70 = arith.constant 70 : index
    %c0_277 = arith.constant 0 : index
    %296 = vector.load %arg17[%c70, %c0_277] : memref<78x32xf32, #tpu.memory_space<vmem>>, vector<8x32xf32>
    %297 = arith.maximumf %295, %296 : vector<8x32xf32>
    %c24 = arith.constant 24 : index
    %c0_278 = arith.constant 0 : index
    %298 = vector.load %arg20[%c24, %c0_278] : memref<32x32xf32, #tpu.memory_space<vmem>>, vector<8x32xf32>
    tpu.vector_store %arg20[%c24, %c0_278], %297 {strides = array<i32>} : memref<32x32xf32, #tpu.memory_space<vmem>>, vector<8x32xf32>,
    %c0_279 = arith.constant 0 : index
    %c0_280 = arith.constant 0 : index
    %299 = tpu.strided_load %arg20[%c0_279, %c0_280] {strides = array<i32: 2, 1>} : memref<32x32xf32, #tpu.memory_space<vmem>>, vector<16x32xf32>
    %c1_281 = arith.constant 1 : index
    %c0_282 = arith.constant 0 : index
    %300 = tpu.strided_load %arg20[%c1_281, %c0_282] {strides = array<i32: 2, 1>} : memref<32x32xf32, #tpu.memory_space<vmem>>, vector<16x32xf32>
    %301 = arith.maximumf %299, %300 : vector<16x32xf32>
    %302 = vector.extract_strided_slice %301 {offsets = [0, 0], sizes = [4, 32], strides = [1, 1]} : vector<16x32xf32> to vector<4x32xf32>
    %c7_283 = arith.constant 7 : index
    %c0_284 = arith.constant 0 : index
    %303 = vector.load %arg15[%c7_283, %c0_284] : memref<36x32xf32, #tpu.memory_space<vmem>>, vector<4x32xf32>
    tpu.vector_store %arg15[%c7_283, %c0_284], %302 {strides = array<i32>} : memref<36x32xf32, #tpu.memory_space<vmem>>, vector<4x32xf32>,
    %304 = vector.extract_strided_slice %301 {offsets = [4, 0], sizes = [4, 32], strides = [1, 1]} : vector<16x32xf32> to vector<4x32xf32>
    %c13 = arith.constant 13 : index
    %c0_285 = arith.constant 0 : index
    %305 = vector.load %arg15[%c13, %c0_285] : memref<36x32xf32, #tpu.memory_space<vmem>>, vector<4x32xf32>
    tpu.vector_store %arg15[%c13, %c0_285], %304 {strides = array<i32>} : memref<36x32xf32, #tpu.memory_space<vmem>>, vector<4x32xf32>,
    %306 = vector.extract_strided_slice %301 {offsets = [8, 0], sizes = [4, 32], strides = [1, 1]} : vector<16x32xf32> to vector<4x32xf32>
    %c19_286 = arith.constant 19 : index
    %c0_287 = arith.constant 0 : index
    %307 = vector.load %arg15[%c19_286, %c0_287] : memref<36x32xf32, #tpu.memory_space<vmem>>, vector<4x32xf32>
    tpu.vector_store %arg15[%c19_286, %c0_287], %306 {strides = array<i32>} : memref<36x32xf32, #tpu.memory_space<vmem>>, vector<4x32xf32>,
    %308 = vector.extract_strided_slice %301 {offsets = [12, 0], sizes = [4, 32], strides = [1, 1]} : vector<16x32xf32> to vector<4x32xf32>
    %c25 = arith.constant 25 : index
    %c0_288 = arith.constant 0 : index
    %309 = vector.load %arg15[%c25, %c0_288] : memref<36x32xf32, #tpu.memory_space<vmem>>, vector<4x32xf32>
    tpu.vector_store %arg15[%c25, %c0_288], %308 {strides = array<i32>} : memref<36x32xf32, #tpu.memory_space<vmem>>, vector<4x32xf32>,
    %cst_289 = arith.constant 0.000000e+00 : f32
    %310 = vector.broadcast %cst_289 : f32 to vector<22x64xf32>
    %c0_290 = arith.constant 0 : index
    %c0_291 = arith.constant 0 : index
    %311 = vector.load %arg15[%c0_290, %c0_291] : memref<36x32xf32, #tpu.memory_space<vmem>>, vector<22x32xf32>
    %c0_292 = arith.constant 0 : index
    %c0_293 = arith.constant 0 : index
    %c0_294 = arith.constant 0 : index
    %312 = vector.load %arg6[%c0_292, %c0_293, %c0_294] : memref<9x32x64xf32, #tpu.memory_space<vmem>>, vector<1x32x64xf32>
    %313 = vector.shape_cast %312 : vector<1x32x64xf32> to vector<32x64xf32>
    %cst_295 = arith.constant dense<0.000000e+00> : vector<22x64xf32>
    %314 = tpu.matmul %311, %313, %cst_295 {dimension_numbers = #tpu.dot_dimension_numbers<[1], [0], [0], [1], [0, 0, 1, 1], [], []>} : vector<22x32xf32>, vector<32x64xf32>, vector<22x64xf32> -> vector<22x64xf32>
    %315 = arith.addf %310, %314 : vector<22x64xf32>
    %c1_296 = arith.constant 1 : index
    %c0_297 = arith.constant 0 : index
    %316 = vector.load %arg15[%c1_296, %c0_297] : memref<36x32xf32, #tpu.memory_space<vmem>>, vector<22x32xf32>
    %c1_298 = arith.constant 1 : index
    %c0_299 = arith.constant 0 : index
    %c0_300 = arith.constant 0 : index
    %317 = vector.load %arg6[%c1_298, %c0_299, %c0_300] : memref<9x32x64xf32, #tpu.memory_space<vmem>>, vector<1x32x64xf32>
    %318 = vector.shape_cast %317 : vector<1x32x64xf32> to vector<32x64xf32>
    %cst_301 = arith.constant dense<0.000000e+00> : vector<22x64xf32>
    %319 = tpu.matmul %316, %318, %cst_301 {dimension_numbers = #tpu.dot_dimension_numbers<[1], [0], [0], [1], [0, 0, 1, 1], [], []>} : vector<22x32xf32>, vector<32x64xf32>, vector<22x64xf32> -> vector<22x64xf32>
    %320 = arith.addf %315, %319 : vector<22x64xf32>
    %c2_302 = arith.constant 2 : index
    %c0_303 = arith.constant 0 : index
    %321 = vector.load %arg15[%c2_302, %c0_303] : memref<36x32xf32, #tpu.memory_space<vmem>>, vector<22x32xf32>
    %c2_304 = arith.constant 2 : index
    %c0_305 = arith.constant 0 : index
    %c0_306 = arith.constant 0 : index
    %322 = vector.load %arg6[%c2_304, %c0_305, %c0_306] : memref<9x32x64xf32, #tpu.memory_space<vmem>>, vector<1x32x64xf32>
    %323 = vector.shape_cast %322 : vector<1x32x64xf32> to vector<32x64xf32>
    %cst_307 = arith.constant dense<0.000000e+00> : vector<22x64xf32>
    %324 = tpu.matmul %321, %323, %cst_307 {dimension_numbers = #tpu.dot_dimension_numbers<[1], [0], [0], [1], [0, 0, 1, 1], [], []>} : vector<22x32xf32>, vector<32x64xf32>, vector<22x64xf32> -> vector<22x64xf32>
    %325 = arith.addf %320, %324 : vector<22x64xf32>
    %c6_308 = arith.constant 6 : index
    %c0_309 = arith.constant 0 : index
    %326 = vector.load %arg15[%c6_308, %c0_309] : memref<36x32xf32, #tpu.memory_space<vmem>>, vector<22x32xf32>
    %c3_310 = arith.constant 3 : index
    %c0_311 = arith.constant 0 : index
    %c0_312 = arith.constant 0 : index
    %327 = vector.load %arg6[%c3_310, %c0_311, %c0_312] : memref<9x32x64xf32, #tpu.memory_space<vmem>>, vector<1x32x64xf32>
    %328 = vector.shape_cast %327 : vector<1x32x64xf32> to vector<32x64xf32>
    %cst_313 = arith.constant dense<0.000000e+00> : vector<22x64xf32>
    %329 = tpu.matmul %326, %328, %cst_313 {dimension_numbers = #tpu.dot_dimension_numbers<[1], [0], [0], [1], [0, 0, 1, 1], [], []>} : vector<22x32xf32>, vector<32x64xf32>, vector<22x64xf32> -> vector<22x64xf32>
    %330 = arith.addf %325, %329 : vector<22x64xf32>
    %c7_314 = arith.constant 7 : index
    %c0_315 = arith.constant 0 : index
    %331 = vector.load %arg15[%c7_314, %c0_315] : memref<36x32xf32, #tpu.memory_space<vmem>>, vector<22x32xf32>
    %c4_316 = arith.constant 4 : index
    %c0_317 = arith.constant 0 : index
    %c0_318 = arith.constant 0 : index
    %332 = vector.load %arg6[%c4_316, %c0_317, %c0_318] : memref<9x32x64xf32, #tpu.memory_space<vmem>>, vector<1x32x64xf32>
    %333 = vector.shape_cast %332 : vector<1x32x64xf32> to vector<32x64xf32>
    %cst_319 = arith.constant dense<0.000000e+00> : vector<22x64xf32>
    %334 = tpu.matmul %331, %333, %cst_319 {dimension_numbers = #tpu.dot_dimension_numbers<[1], [0], [0], [1], [0, 0, 1, 1], [], []>} : vector<22x32xf32>, vector<32x64xf32>, vector<22x64xf32> -> vector<22x64xf32>
    %335 = arith.addf %330, %334 : vector<22x64xf32>
    %c8_320 = arith.constant 8 : index
    %c0_321 = arith.constant 0 : index
    %336 = vector.load %arg15[%c8_320, %c0_321] : memref<36x32xf32, #tpu.memory_space<vmem>>, vector<22x32xf32>
    %c5_322 = arith.constant 5 : index
    %c0_323 = arith.constant 0 : index
    %c0_324 = arith.constant 0 : index
    %337 = vector.load %arg6[%c5_322, %c0_323, %c0_324] : memref<9x32x64xf32, #tpu.memory_space<vmem>>, vector<1x32x64xf32>
    %338 = vector.shape_cast %337 : vector<1x32x64xf32> to vector<32x64xf32>
    %cst_325 = arith.constant dense<0.000000e+00> : vector<22x64xf32>
    %339 = tpu.matmul %336, %338, %cst_325 {dimension_numbers = #tpu.dot_dimension_numbers<[1], [0], [0], [1], [0, 0, 1, 1], [], []>} : vector<22x32xf32>, vector<32x64xf32>, vector<22x64xf32> -> vector<22x64xf32>
    %340 = arith.addf %335, %339 : vector<22x64xf32>
    %c12_326 = arith.constant 12 : index
    %c0_327 = arith.constant 0 : index
    %341 = vector.load %arg15[%c12_326, %c0_327] : memref<36x32xf32, #tpu.memory_space<vmem>>, vector<22x32xf32>
    %c6_328 = arith.constant 6 : index
    %c0_329 = arith.constant 0 : index
    %c0_330 = arith.constant 0 : index
    %342 = vector.load %arg6[%c6_328, %c0_329, %c0_330] : memref<9x32x64xf32, #tpu.memory_space<vmem>>, vector<1x32x64xf32>
    %343 = vector.shape_cast %342 : vector<1x32x64xf32> to vector<32x64xf32>
    %cst_331 = arith.constant dense<0.000000e+00> : vector<22x64xf32>
    %344 = tpu.matmul %341, %343, %cst_331 {dimension_numbers = #tpu.dot_dimension_numbers<[1], [0], [0], [1], [0, 0, 1, 1], [], []>} : vector<22x32xf32>, vector<32x64xf32>, vector<22x64xf32> -> vector<22x64xf32>
    %345 = arith.addf %340, %344 : vector<22x64xf32>
    %c13_332 = arith.constant 13 : index
    %c0_333 = arith.constant 0 : index
    %346 = vector.load %arg15[%c13_332, %c0_333] : memref<36x32xf32, #tpu.memory_space<vmem>>, vector<22x32xf32>
    %c7_334 = arith.constant 7 : index
    %c0_335 = arith.constant 0 : index
    %c0_336 = arith.constant 0 : index
    %347 = vector.load %arg6[%c7_334, %c0_335, %c0_336] : memref<9x32x64xf32, #tpu.memory_space<vmem>>, vector<1x32x64xf32>
    %348 = vector.shape_cast %347 : vector<1x32x64xf32> to vector<32x64xf32>
    %cst_337 = arith.constant dense<0.000000e+00> : vector<22x64xf32>
    %349 = tpu.matmul %346, %348, %cst_337 {dimension_numbers = #tpu.dot_dimension_numbers<[1], [0], [0], [1], [0, 0, 1, 1], [], []>} : vector<22x32xf32>, vector<32x64xf32>, vector<22x64xf32> -> vector<22x64xf32>
    %350 = arith.addf %345, %349 : vector<22x64xf32>
    %c14 = arith.constant 14 : index
    %c0_338 = arith.constant 0 : index
    %351 = vector.load %arg15[%c14, %c0_338] : memref<36x32xf32, #tpu.memory_space<vmem>>, vector<22x32xf32>
    %c8_339 = arith.constant 8 : index
    %c0_340 = arith.constant 0 : index
    %c0_341 = arith.constant 0 : index
    %352 = vector.load %arg6[%c8_339, %c0_340, %c0_341] : memref<9x32x64xf32, #tpu.memory_space<vmem>>, vector<1x32x64xf32>
    %353 = vector.shape_cast %352 : vector<1x32x64xf32> to vector<32x64xf32>
    %cst_342 = arith.constant dense<0.000000e+00> : vector<22x64xf32>
    %354 = tpu.matmul %351, %353, %cst_342 {dimension_numbers = #tpu.dot_dimension_numbers<[1], [0], [0], [1], [0, 0, 1, 1], [], []>} : vector<22x32xf32>, vector<32x64xf32>, vector<22x64xf32> -> vector<22x64xf32>
    %355 = arith.addf %350, %354 : vector<22x64xf32>
    %c0_343 = arith.constant 0 : index
    %c0_344 = arith.constant 0 : index
    %356 = vector.load %arg7[%c0_343, %c0_344] : memref<1x64xf32, #tpu.memory_space<vmem>>, vector<1x64xf32>
    %357 = vector.broadcast %356 : vector<1x64xf32> to vector<22x64xf32>
    %358 = arith.addf %355, %357 : vector<22x64xf32>
    %cst_345 = arith.constant 0.000000e+00 : f32
    %359 = vector.broadcast %cst_345 : f32 to vector<22x64xf32>
    %360 = arith.maximumf %358, %359 : vector<22x64xf32>
    %c0_346 = arith.constant 0 : index
    %c0_347 = arith.constant 0 : index
    %361 = vector.load %arg18[%c0_346, %c0_347] : memref<22x64xf32, #tpu.memory_space<vmem>>, vector<22x64xf32>
    tpu.vector_store %arg18[%c0_346, %c0_347], %360 {strides = array<i32>} : memref<22x64xf32, #tpu.memory_space<vmem>>, vector<22x64xf32>,
    %c0_348 = arith.constant 0 : index
    %c0_349 = arith.constant 0 : index
    %362 = vector.load %arg18[%c0_348, %c0_349] : memref<22x64xf32, #tpu.memory_space<vmem>>, vector<4x64xf32>
    %c6_350 = arith.constant 6 : index
    %c0_351 = arith.constant 0 : index
    %363 = vector.load %arg18[%c6_350, %c0_351] : memref<22x64xf32, #tpu.memory_space<vmem>>, vector<4x64xf32>
    %364 = arith.maximumf %362, %363 : vector<4x64xf32>
    %c0_352 = arith.constant 0 : index
    %c0_353 = arith.constant 0 : index
    %365 = vector.load %arg21[%c0_352, %c0_353] : memref<8x64xf32, #tpu.memory_space<vmem>>, vector<4x64xf32>
    tpu.vector_store %arg21[%c0_352, %c0_353], %364 {strides = array<i32>} : memref<8x64xf32, #tpu.memory_space<vmem>>, vector<4x64xf32>,
    %c12_354 = arith.constant 12 : index
    %c0_355 = arith.constant 0 : index
    %366 = vector.load %arg18[%c12_354, %c0_355] : memref<22x64xf32, #tpu.memory_space<vmem>>, vector<4x64xf32>
    %c18_356 = arith.constant 18 : index
    %c0_357 = arith.constant 0 : index
    %367 = vector.load %arg18[%c18_356, %c0_357] : memref<22x64xf32, #tpu.memory_space<vmem>>, vector<4x64xf32>
    %368 = arith.maximumf %366, %367 : vector<4x64xf32>
    %c4_358 = arith.constant 4 : index
    %c0_359 = arith.constant 0 : index
    %369 = vector.load %arg21[%c4_358, %c0_359] : memref<8x64xf32, #tpu.memory_space<vmem>>, vector<4x64xf32>
    tpu.vector_store %arg21[%c4_358, %c0_359], %368 {strides = array<i32>} : memref<8x64xf32, #tpu.memory_space<vmem>>, vector<4x64xf32>,
    %c0_360 = arith.constant 0 : index
    %c0_361 = arith.constant 0 : index
    %370 = tpu.strided_load %arg21[%c0_360, %c0_361] {strides = array<i32: 2, 1>} : memref<8x64xf32, #tpu.memory_space<vmem>>, vector<4x64xf32>
    %c1_362 = arith.constant 1 : index
    %c0_363 = arith.constant 0 : index
    %371 = tpu.strided_load %arg21[%c1_362, %c0_363] {strides = array<i32: 2, 1>} : memref<8x64xf32, #tpu.memory_space<vmem>>, vector<4x64xf32>
    %372 = arith.maximumf %370, %371 : vector<4x64xf32>
    %cst_364 = arith.constant 0.000000e+00 : f32
    %373 = vector.broadcast %cst_364 : f32 to vector<2x64xf32>
    %374 = vector.extract_strided_slice %372 {offsets = [0, 0], sizes = [2, 64], strides = [1, 1]} : vector<4x64xf32> to vector<2x64xf32>
    %375 = arith.addf %373, %374 : vector<2x64xf32>
    %376 = vector.extract_strided_slice %372 {offsets = [2, 0], sizes = [2, 64], strides = [1, 1]} : vector<4x64xf32> to vector<2x64xf32>
    %377 = arith.addf %375, %376 : vector<2x64xf32>
    %cst_365 = arith.constant 5.000000e-01 : f32
    %378 = vector.broadcast %cst_365 : f32 to vector<2x64xf32>
    %379 = arith.mulf %377, %378 : vector<2x64xf32>
    %cst_366 = arith.constant 0.000000e+00 : f32
    %380 = vector.broadcast %cst_366 : f32 to vector<1x64xf32>
    %381 = vector.extract_strided_slice %379 {offsets = [0, 0], sizes = [1, 64], strides = [1, 1]} : vector<2x64xf32> to vector<1x64xf32>
    %382 = arith.addf %380, %381 : vector<1x64xf32>
    %383 = vector.extract_strided_slice %379 {offsets = [1, 0], sizes = [1, 64], strides = [1, 1]} : vector<2x64xf32> to vector<1x64xf32>
    %384 = arith.addf %382, %383 : vector<1x64xf32>
    %cst_367 = arith.constant 5.000000e-01 : f32
    %385 = vector.broadcast %cst_367 : f32 to vector<1x64xf32>
    %386 = arith.mulf %384, %385 : vector<1x64xf32>
    %387 = vector.broadcast %386 : vector<1x64xf32> to vector<2x64xf32>
    %388 = arith.subf %387, %379 : vector<2x64xf32>
    %c0_368 = arith.constant 0 : index
    %c0_369 = arith.constant 0 : index
    %389 = vector.load %arg8[%c0_368, %c0_369] : memref<64x192xf32, #tpu.memory_space<vmem>>, vector<64x192xf32>
    %cst_370 = arith.constant dense<0.000000e+00> : vector<2x192xf32>
    %390 = tpu.matmul %388, %389, %cst_370 {dimension_numbers = #tpu.dot_dimension_numbers<[1], [0], [0], [1], [0, 0, 1, 1], [], []>} : vector<2x64xf32>, vector<64x192xf32>, vector<2x192xf32> -> vector<2x192xf32>
    %c0_371 = arith.constant 0 : index
    %c0_372 = arith.constant 0 : index
    %391 = vector.load %arg10[%c0_371, %c0_372] : memref<1x192xf32, #tpu.memory_space<vmem>>, vector<1x192xf32>
    %392 = vector.broadcast %391 : vector<1x192xf32> to vector<2x192xf32>
    %393 = arith.addf %390, %392 : vector<2x192xf32>
    %cst_373 = arith.constant 0.000000e+00 : f32
    %394 = vector.broadcast %cst_373 : f32 to vector<1x64xf32>
    %c0_374 = arith.constant 0 : index
    %c0_375 = arith.constant 0 : index
    %395 = vector.load %arg9[%c0_374, %c0_375] : memref<64x192xf32, #tpu.memory_space<vmem>>, vector<64x192xf32>
    %cst_376 = arith.constant dense<0.000000e+00> : vector<1x192xf32>
    %396 = tpu.matmul %394, %395, %cst_376 {dimension_numbers = #tpu.dot_dimension_numbers<[1], [0], [0], [1], [0, 0, 1, 1], [], []>} : vector<1x64xf32>, vector<64x192xf32>, vector<1x192xf32> -> vector<1x192xf32>
    %c0_377 = arith.constant 0 : index
    %c0_378 = arith.constant 0 : index
    %397 = vector.load %arg11[%c0_377, %c0_378] : memref<1x192xf32, #tpu.memory_space<vmem>>, vector<1x192xf32>
    %398 = arith.addf %396, %397 : vector<1x192xf32>
    %399 = vector.extract_strided_slice %393 {offsets = [0, 0], sizes = [1, 64], strides = [1, 1]} : vector<2x192xf32> to vector<1x64xf32>
    %400 = vector.extract_strided_slice %393 {offsets = [0, 64], sizes = [1, 64], strides = [1, 1]} : vector<2x192xf32> to vector<1x64xf32>
    %401 = vector.extract_strided_slice %393 {offsets = [0, 128], sizes = [1, 64], strides = [1, 1]} : vector<2x192xf32> to vector<1x64xf32>
    %402 = vector.extract_strided_slice %398 {offsets = [0, 0], sizes = [1, 64], strides = [1, 1]} : vector<1x192xf32> to vector<1x64xf32>
    %403 = vector.extract_strided_slice %398 {offsets = [0, 64], sizes = [1, 64], strides = [1, 1]} : vector<1x192xf32> to vector<1x64xf32>
    %404 = vector.extract_strided_slice %398 {offsets = [0, 128], sizes = [1, 64], strides = [1, 1]} : vector<1x192xf32> to vector<1x64xf32>
    %405 = arith.addf %399, %402 : vector<1x64xf32>
    %406 = arith.negf %405 : vector<1x64xf32>
    %407 = math.exp %406 : vector<1x64xf32>
    %cst_379 = arith.constant 1.000000e+00 : f32
    %408 = vector.broadcast %cst_379 : f32 to vector<1x64xf32>
    %409 = arith.addf %408, %407 : vector<1x64xf32>
    %410 = arith.divf %408, %409 : vector<1x64xf32>
    %411 = arith.addf %400, %403 : vector<1x64xf32>
    %412 = arith.negf %411 : vector<1x64xf32>
    %413 = math.exp %412 : vector<1x64xf32>
    %cst_380 = arith.constant 1.000000e+00 : f32
    %414 = vector.broadcast %cst_380 : f32 to vector<1x64xf32>
    %415 = arith.addf %414, %413 : vector<1x64xf32>
    %416 = arith.divf %414, %415 : vector<1x64xf32>
    %417 = arith.mulf %410, %404 : vector<1x64xf32>
    %418 = arith.addf %401, %417 : vector<1x64xf32>
    %419 = math.tanh %418 : vector<1x64xf32>
    %cst_381 = arith.constant 1.000000e+00 : f32
    %420 = vector.broadcast %cst_381 : f32 to vector<1x64xf32>
    %421 = arith.subf %420, %416 : vector<1x64xf32>
    %422 = arith.mulf %421, %419 : vector<1x64xf32>
    %423 = arith.mulf %416, %394 : vector<1x64xf32>
    %424 = arith.addf %422, %423 : vector<1x64xf32>
    %c0_382 = arith.constant 0 : index
    %c0_383 = arith.constant 0 : index
    %425 = vector.load %arg9[%c0_382, %c0_383] : memref<64x192xf32, #tpu.memory_space<vmem>>, vector<64x192xf32>
    %cst_384 = arith.constant dense<0.000000e+00> : vector<1x192xf32>
    %426 = tpu.matmul %424, %425, %cst_384 {dimension_numbers = #tpu.dot_dimension_numbers<[1], [0], [0], [1], [0, 0, 1, 1], [], []>} : vector<1x64xf32>, vector<64x192xf32>, vector<1x192xf32> -> vector<1x192xf32>
    %c0_385 = arith.constant 0 : index
    %c0_386 = arith.constant 0 : index
    %427 = vector.load %arg11[%c0_385, %c0_386] : memref<1x192xf32, #tpu.memory_space<vmem>>, vector<1x192xf32>
    %428 = arith.addf %426, %427 : vector<1x192xf32>
    %429 = vector.extract_strided_slice %393 {offsets = [1, 0], sizes = [1, 64], strides = [1, 1]} : vector<2x192xf32> to vector<1x64xf32>
    %430 = vector.extract_strided_slice %393 {offsets = [1, 64], sizes = [1, 64], strides = [1, 1]} : vector<2x192xf32> to vector<1x64xf32>
    %431 = vector.extract_strided_slice %393 {offsets = [1, 128], sizes = [1, 64], strides = [1, 1]} : vector<2x192xf32> to vector<1x64xf32>
    %432 = vector.extract_strided_slice %428 {offsets = [0, 0], sizes = [1, 64], strides = [1, 1]} : vector<1x192xf32> to vector<1x64xf32>
    %433 = vector.extract_strided_slice %428 {offsets = [0, 64], sizes = [1, 64], strides = [1, 1]} : vector<1x192xf32> to vector<1x64xf32>
    %434 = vector.extract_strided_slice %428 {offsets = [0, 128], sizes = [1, 64], strides = [1, 1]} : vector<1x192xf32> to vector<1x64xf32>
    %435 = arith.addf %429, %432 : vector<1x64xf32>
    %436 = arith.negf %435 : vector<1x64xf32>
    %437 = math.exp %436 : vector<1x64xf32>
    %cst_387 = arith.constant 1.000000e+00 : f32
    %438 = vector.broadcast %cst_387 : f32 to vector<1x64xf32>
    %439 = arith.addf %438, %437 : vector<1x64xf32>
    %440 = arith.divf %438, %439 : vector<1x64xf32>
    %441 = arith.addf %430, %433 : vector<1x64xf32>
    %442 = arith.negf %441 : vector<1x64xf32>
    %443 = math.exp %442 : vector<1x64xf32>
    %cst_388 = arith.constant 1.000000e+00 : f32
    %444 = vector.broadcast %cst_388 : f32 to vector<1x64xf32>
    %445 = arith.addf %444, %443 : vector<1x64xf32>
    %446 = arith.divf %444, %445 : vector<1x64xf32>
    %447 = arith.mulf %440, %434 : vector<1x64xf32>
    %448 = arith.addf %431, %447 : vector<1x64xf32>
    %449 = math.tanh %448 : vector<1x64xf32>
    %cst_389 = arith.constant 1.000000e+00 : f32
    %450 = vector.broadcast %cst_389 : f32 to vector<1x64xf32>
    %451 = arith.subf %450, %446 : vector<1x64xf32>
    %452 = arith.mulf %451, %449 : vector<1x64xf32>
    %453 = arith.mulf %446, %424 : vector<1x64xf32>
    %454 = arith.addf %452, %453 : vector<1x64xf32>
    %455 = vector.shape_cast %454 : vector<1x64xf32> to vector<1x1x64xf32>
    %c0_390 = arith.constant 0 : index
    %c0_391 = arith.constant 0 : index
    %c0_392 = arith.constant 0 : index
    %456 = vector.load %arg12[%c0_390, %c0_391, %c0_392] : memref<1x1x64xf32, #tpu.memory_space<vmem>>, vector<1x1x64xf32>
    tpu.vector_store %arg12[%c0_390, %c0_391, %c0_392], %455 {strides = array<i32>} : memref<1x1x64xf32, #tpu.memory_space<vmem>>, vector<1x1x64xf32>,
    return
  }
  func.func @transform_0(%arg0: i32) -> (i32, i32, i32) {
    %c0_i32 = arith.constant 0 : i32
    %c0_i32_0 = arith.constant 0 : i32
    %c0_i32_1 = arith.constant 0 : i32
    return %arg0, %c0_i32, %c0_i32_0 : i32, i32, i32
  }
  func.func @transform_1(%arg0: i32) -> (i32, i32, i32) {
    %c0_i32 = arith.constant 0 : i32
    %c0_i32_0 = arith.constant 0 : i32
    %c0_i32_1 = arith.constant 0 : i32
    %c0_i32_2 = arith.constant 0 : i32
    return %c0_i32, %c0_i32_0, %c0_i32_1 : i32, i32, i32
  }
  func.func @transform_2(%arg0: i32) -> (i32, i32) {
    %c0_i32 = arith.constant 0 : i32
    %c0_i32_0 = arith.constant 0 : i32
    %c0_i32_1 = arith.constant 0 : i32
    return %c0_i32, %c0_i32_0 : i32, i32
  }
  func.func @transform_3(%arg0: i32) -> (i32, i32, i32) {
    %c0_i32 = arith.constant 0 : i32
    %c0_i32_0 = arith.constant 0 : i32
    %c0_i32_1 = arith.constant 0 : i32
    %c0_i32_2 = arith.constant 0 : i32
    return %c0_i32, %c0_i32_0, %c0_i32_1 : i32, i32, i32
  }
  func.func @transform_4(%arg0: i32) -> (i32, i32) {
    %c0_i32 = arith.constant 0 : i32
    %c0_i32_0 = arith.constant 0 : i32
    %c0_i32_1 = arith.constant 0 : i32
    return %c0_i32, %c0_i32_0 : i32, i32
  }
  func.func @transform_5(%arg0: i32) -> (i32, i32, i32) {
    %c0_i32 = arith.constant 0 : i32
    %c0_i32_0 = arith.constant 0 : i32
    %c0_i32_1 = arith.constant 0 : i32
    %c0_i32_2 = arith.constant 0 : i32
    return %c0_i32, %c0_i32_0, %c0_i32_1 : i32, i32, i32
  }
  func.func @transform_6(%arg0: i32) -> (i32, i32) {
    %c0_i32 = arith.constant 0 : i32
    %c0_i32_0 = arith.constant 0 : i32
    %c0_i32_1 = arith.constant 0 : i32
    return %c0_i32, %c0_i32_0 : i32, i32
  }
  func.func @transform_7(%arg0: i32) -> (i32, i32) {
    %c0_i32 = arith.constant 0 : i32
    %c0_i32_0 = arith.constant 0 : i32
    %c0_i32_1 = arith.constant 0 : i32
    return %c0_i32, %c0_i32_0 : i32, i32
  }
  func.func @transform_8(%arg0: i32) -> (i32, i32) {
    %c0_i32 = arith.constant 0 : i32
    %c0_i32_0 = arith.constant 0 : i32
    %c0_i32_1 = arith.constant 0 : i32
    return %c0_i32, %c0_i32_0 : i32, i32
  }
  func.func @transform_9(%arg0: i32) -> (i32, i32) {
    %c0_i32 = arith.constant 0 : i32
    %c0_i32_0 = arith.constant 0 : i32
    %c0_i32_1 = arith.constant 0 : i32
    return %c0_i32, %c0_i32_0 : i32, i32
  }
  func.func @transform_10(%arg0: i32) -> (i32, i32) {
    %c0_i32 = arith.constant 0 : i32
    %c0_i32_0 = arith.constant 0 : i32
    %c0_i32_1 = arith.constant 0 : i32
    return %c0_i32, %c0_i32_0 : i32, i32
  }
  func.func @transform_11(%arg0: i32) -> (i32, i32, i32) {
    %c0_i32 = arith.constant 0 : i32
    %c0_i32_0 = arith.constant 0 : i32
    %c0_i32_1 = arith.constant 0 : i32
    return %arg0, %c0_i32, %c0_i32_0 : i32, i32, i32
  }
}

</mosaic_0001>

<llo_original>
// kernel: squeeze.0
$region0: #{squeeze.0}
  %s0 = inlined_call_operand.hbm [shape: f32[2,1,16,16], index: 0, kind: input, shape index: {}]
  %s1 = inlined_call_operand.vmem [shape: f32[2,256,1], index: 1, kind: output, shape index: {}]
  $region1: #{squeeze.0} parent=0
    #allocation0 [shape = 'u8[16384]{0}', space=vmem, size = 0x4000, scoped, tag = 'operand span for operand 0']
    #allocation1 [shape = 's32[1]{0}', space=sflag, size = 0x4, scoped, tag = 'scoped memory for squeeze.0']
    %2 = vsyncpa [#allocation1], 0
    %4 = vsyncadd [#allocation1], 0
    %s6 = sshll.u32 %s0, 4
    %s7 = int_to_ptr.hbm [resolvable:$true] %s6
    %s8 = sshll.u32 [#allocation0], 4
    %s9 = int_to_ptr.vmem [resolvable:$true] %s8
    %11 = dma.hbm_to_vmem [thread:$0]  %s7, 512, %s9, [#allocation1]
    %13 = dma.done [#allocation1], 512
    %v14 = vld [vmem:[#allocation0] sm:$0xff]
    %vm15 = vcmask 7168
    %16 = vst.msk [vmem:[%s1] ss:$16 sm:$0x3] %vm15, %v14
    %17 = vst.msk [vmem:[%s1] ss:$16 sm:$0xc] %vm15, %v14
    %18 = vst.msk [vmem:[%s1] ss:$16 sm:$0x30] %vm15, %v14
    %19 = vst.msk [vmem:[%s1] ss:$16 sm:$0xc0] %vm15, %v14
    %s20 = scalar_lea.vmem [#allocation0], 8
    %v21 = vld [vmem:[%s20] sm:$0xff]
    %vm22 = vcmask 7168
    %s23 = scalar_lea.vmem %s1, 128
    %24 = vst.msk [vmem:[%s23] ss:$16 sm:$0x3] %vm22, %v21
    %s25 = scalar_lea.vmem %s1, 128
    %26 = vst.msk [vmem:[%s25] ss:$16 sm:$0xc] %vm22, %v21
    %s27 = scalar_lea.vmem %s1, 128
    %28 = vst.msk [vmem:[%s27] ss:$16 sm:$0x30] %vm22, %v21
    %s29 = scalar_lea.vmem %s1, 128
    %30 = vst.msk [vmem:[%s29] ss:$16 sm:$0xc0] %vm22, %v21
    %s31 = scalar_lea.vmem [#allocation0], 16
    %v32 = vld [vmem:[%s31] sm:$0xff]
    %vm33 = vcmask 7168
    %s34 = scalar_lea.vmem %s1, 256
    %35 = vst.msk [vmem:[%s34] ss:$16 sm:$0x3] %vm33, %v32
    %s36 = scalar_lea.vmem %s1, 256
    %37 = vst.msk [vmem:[%s36] ss:$16 sm:$0xc] %vm33, %v32
    %s38 = scalar_lea.vmem %s1, 256
    %39 = vst.msk [vmem:[%s38] ss:$16 sm:$0x30] %vm33, %v32
    %s40 = scalar_lea.vmem %s1, 256
    %41 = vst.msk [vmem:[%s40] ss:$16 sm:$0xc0] %vm33, %v32
    %s42 = scalar_lea.vmem [#allocation0], 24
    %v43 = vld [vmem:[%s42] sm:$0xff]
    %vm44 = vcmask 7168
    %s45 = scalar_lea.vmem %s1, 384
    %46 = vst.msk [vmem:[%s45] ss:$16 sm:$0x3] %vm44, %v43
    %s47 = scalar_lea.vmem %s1, 384
    %48 = vst.msk [vmem:[%s47] ss:$16 sm:$0xc] %vm44, %v43
    %s49 = scalar_lea.vmem %s1, 384
    %50 = vst.msk [vmem:[%s49] ss:$16 sm:$0x30] %vm44, %v43
    %s51 = scalar_lea.vmem %s1, 384
    %52 = vst.msk [vmem:[%s51] ss:$16 sm:$0xc0] %vm44, %v43
    %v53 = vld [vmem:[#allocation0] sm:$0xff]
    %54 = vrot.lane.b32.xlu0 %v53, 127
    %v55 = vpop.permute.xlu0 %54
    %vm56 = vcmask 7168
    %s57 = scalar_lea.vmem %s1, 1
    %58 = vst.msk [vmem:[%s57] ss:$16 sm:$0x3] %vm56, %v55
    %s59 = scalar_lea.vmem %s1, 1
    %60 = vst.msk [vmem:[%s59] ss:$16 sm:$0xc] %vm56, %v55
    %s61 = scalar_lea.vmem %s1, 1
    %62 = vst.msk [vmem:[%s61] ss:$16 sm:$0x30] %vm56, %v55
    %s63 = scalar_lea.vmem %s1, 1
    %64 = vst.msk [vmem:[%s63] ss:$16 sm:$0xc0] %vm56, %v55
    %s65 = scalar_lea.vmem [#allocation0], 8
    %v66 = vld [vmem:[%s65] sm:$0xff]
    %67 = vrot.lane.b32.xlu0 %v66, 127
    %v68 = vpop.permute.xlu0 %67
    %vm69 = vcmask 7168
    %s70 = scalar_lea.vmem %s1, 129
    %71 = vst.msk [vmem:[%s70] ss:$16 sm:$0x3] %vm69, %v68
    %s72 = scalar_lea.vmem %s1, 129
    %73 = vst.msk [vmem:[%s72] ss:$16 sm:$0xc] %vm69, %v68
    %s74 = scalar_lea.vmem %s1, 129
    %75 = vst.msk [vmem:[%s74] ss:$16 sm:$0x30] %vm69, %v68
    %s76 = scalar_lea.vmem %s1, 129
    %77 = vst.msk [vmem:[%s76] ss:$16 sm:$0xc0] %vm69, %v68
    %s78 = scalar_lea.vmem [#allocation0], 16
    %v79 = vld [vmem:[%s78] sm:$0xff]
    %80 = vrot.lane.b32.xlu0 %v79, 127
    %v81 = vpop.permute.xlu0 %80
    %vm82 = vcmask 7168
    %s83 = scalar_lea.vmem %s1, 257
    %84 = vst.msk [vmem:[%s83] ss:$16 sm:$0x3] %vm82, %v81
    %s85 = scalar_lea.vmem %s1, 257
    %86 = vst.msk [vmem:[%s85] ss:$16 sm:$0xc] %vm82, %v81
    %s87 = scalar_lea.vmem %s1, 257
    %88 = vst.msk [vmem:[%s87] ss:$16 sm:$0x30] %vm82, %v81
    %s89 = scalar_lea.vmem %s1, 257
    %90 = vst.msk [vmem:[%s89] ss:$16 sm:$0xc0] %vm82, %v81
    %s91 = scalar_lea.vmem [#allocation0], 24
    %v92 = vld [vmem:[%s91] sm:$0xff]
    %93 = vrot.lane.b32.xlu0 %v92, 127
    %v94 = vpop.permute.xlu0 %93
    %vm95 = vcmask 7168
    %s96 = scalar_lea.vmem %s1, 385
    %97 = vst.msk [vmem:[%s96] ss:$16 sm:$0x3] %vm95, %v94
    %s98 = scalar_lea.vmem %s1, 385
    %99 = vst.msk [vmem:[%s98] ss:$16 sm:$0xc] %vm95, %v94
    %s100 = scalar_lea.vmem %s1, 385
    %101 = vst.msk [vmem:[%s100] ss:$16 sm:$0x30] %vm95, %v94
    %s102 = scalar_lea.vmem %s1, 385
    %103 = vst.msk [vmem:[%s102] ss:$16 sm:$0xc0] %vm95, %v94
    %v104 = vld [vmem:[#allocation0] sm:$0xff]
    %105 = vrot.lane.b32.xlu0 %v104, 126
    %v106 = vpop.permute.xlu0 %105
    %vm107 = vcmask 7168
    %s108 = scalar_lea.vmem %s1, 2
    %109 = vst.msk [vmem:[%s108] ss:$16 sm:$0x3] %vm107, %v106
    %s110 = scalar_lea.vmem %s1, 2
    %111 = vst.msk [vmem:[%s110] ss:$16 sm:$0xc] %vm107, %v106
    %s112 = scalar_lea.vmem %s1, 2
    %113 = vst.msk [vmem:[%s112] ss:$16 sm:$0x30] %vm107, %v106
    %s114 = scalar_lea.vmem %s1, 2
    %115 = vst.msk [vmem:[%s114] ss:$16 sm:$0xc0] %vm107, %v106
    %s116 = scalar_lea.vmem [#allocation0], 8
    %v117 = vld [vmem:[%s116] sm:$0xff]
    %118 = vrot.lane.b32.xlu0 %v117, 126
    %v119 = vpop.permute.xlu0 %118
    %vm120 = vcmask 7168
    %s121 = scalar_lea.vmem %s1, 130
    %122 = vst.msk [vmem:[%s121] ss:$16 sm:$0x3] %vm120, %v119
    %s123 = scalar_lea.vmem %s1, 130
    %124 = vst.msk [vmem:[%s123] ss:$16 sm:$0xc] %vm120, %v119
    %s125 = scalar_lea.vmem %s1, 130
    %126 = vst.msk [vmem:[%s125] ss:$16 sm:$0x30] %vm120, %v119
    %s127 = scalar_lea.vmem %s1, 130
    %128 = vst.msk [vmem:[%s127] ss:$16 sm:$0xc0] %vm120, %v119
    %s129 = scalar_lea.vmem [#allocation0], 16
    %v130 = vld [vmem:[%s129] sm:$0xff]
    %131 = vrot.lane.b32.xlu0 %v130, 126
    %v132 = vpop.permute.xlu0 %131
    %vm133 = vcmask 7168
    %s134 = scalar_lea.vmem %s1, 258
    %135 = vst.msk [vmem:[%s134] ss:$16 sm:$0x3] %vm133, %v132
    %s136 = scalar_lea.vmem %s1, 258
    %137 = vst.msk [vmem:[%s136] ss:$16 sm:$0xc] %vm133, %v132
    %s138 = scalar_lea.vmem %s1, 258
    %139 = vst.msk [vmem:[%s138] ss:$16 sm:$0x30] %vm133, %v132
    %s140 = scalar_lea.vmem %s1, 258
    %141 = vst.msk [vmem:[%s140] ss:$16 sm:$0xc0] %vm133, %v132
    %s142 = scalar_lea.vmem [#allocation0], 24
    %v143 = vld [vmem:[%s142] sm:$0xff]
    %144 = vrot.lane.b32.xlu0 %v143, 126
    %v145 = vpop.permute.xlu0 %144
    %vm146 = vcmask 7168
    %s147 = scalar_lea.vmem %s1, 386
    %148 = vst.msk [vmem:[%s147] ss:$16 sm:$0x3] %vm146, %v145
    %s149 = scalar_lea.vmem %s1, 386
    %150 = vst.msk [vmem:[%s149] ss:$16 sm:$0xc] %vm146, %v145
    %s151 = scalar_lea.vmem %s1, 386
    %152 = vst.msk [vmem:[%s151] ss:$16 sm:$0x30] %vm146, %v145
    %s153 = scalar_lea.vmem %s1, 386
    %154 = vst.msk [vmem:[%s153] ss:$16 sm:$0xc0] %vm146, %v145
    %v155 = vld [vmem:[#allocation0] sm:$0xff]
    %156 = vrot.lane.b32.xlu0 %v155, 125
    %v157 = vpop.permute.xlu0 %156
    %vm158 = vcmask 7168
    %s159 = scalar_lea.vmem %s1, 3
    %160 = vst.msk [vmem:[%s159] ss:$16 sm:$0x3] %vm158, %v157
    %s161 = scalar_lea.vmem %s1, 3
    %162 = vst.msk [vmem:[%s161] ss:$16 sm:$0xc] %vm158, %v157
    %s163 = scalar_lea.vmem %s1, 3
    %164 = vst.msk [vmem:[%s163] ss:$16 sm:$0x30] %vm158, %v157
    %s165 = scalar_lea.vmem %s1, 3
    %166 = vst.msk [vmem:[%s165] ss:$16 sm:$0xc0] %vm158, %v157
    %s167 = scalar_lea.vmem [#allocation0], 8
    %v168 = vld [vmem:[%s167] sm:$0xff]
    %169 = vrot.lane.b32.xlu0 %v168, 125
    %v170 = vpop.permute.xlu0 %169
    %vm171 = vcmask 7168
    %s172 = scalar_lea.vmem %s1, 131
    %173 = vst.msk [vmem:[%s172] ss:$16 sm:$0x3] %vm171, %v170
    %s174 = scalar_lea.vmem %s1, 131
    %175 = vst.msk [vmem:[%s174] ss:$16 sm:$0xc] %vm171, %v170
    %s176 = scalar_lea.vmem %s1, 131
    %177 = vst.msk [vmem:[%s176] ss:$16 sm:$0x30] %vm171, %v170
    %s178 = scalar_lea.vmem %s1, 131
    %179 = vst.msk [vmem:[%s178] ss:$16 sm:$0xc0] %vm171, %v170
    %s180 = scalar_lea.vmem [#allocation0], 16
    %v181 = vld [vmem:[%s180] sm:$0xff]
    %182 = vrot.lane.b32.xlu0 %v181, 125
    %v183 = vpop.permute.xlu0 %182
    %vm184 = vcmask 7168
    %s185 = scalar_lea.vmem %s1, 259
    %186 = vst.msk [vmem:[%s185] ss:$16 sm:$0x3] %vm184, %v183
    %s187 = scalar_lea.vmem %s1, 259
    %188 = vst.msk [vmem:[%s187] ss:$16 sm:$0xc] %vm184, %v183
    %s189 = scalar_lea.vmem %s1, 259
    %190 = vst.msk [vmem:[%s189] ss:$16 sm:$0x30] %vm184, %v183
    %s191 = scalar_lea.vmem %s1, 259
    %192 = vst.msk [vmem:[%s191] ss:$16 sm:$0xc0] %vm184, %v183
    %s193 = scalar_lea.vmem [#allocation0], 24
    %v194 = vld [vmem:[%s193] sm:$0xff]
    %195 = vrot.lane.b32.xlu0 %v194, 125
    %v196 = vpop.permute.xlu0 %195
    %vm197 = vcmask 7168
    %s198 = scalar_lea.vmem %s1, 387
    %199 = vst.msk [vmem:[%s198] ss:$16 sm:$0x3] %vm197, %v196
    %s200 = scalar_lea.vmem %s1, 387
    %201 = vst.msk [vmem:[%s200] ss:$16 sm:$0xc] %vm197, %v196
    %s202 = scalar_lea.vmem %s1, 387
    %203 = vst.msk [vmem:[%s202] ss:$16 sm:$0x30] %vm197, %v196
    %s204 = scalar_lea.vmem %s1, 387
    %205 = vst.msk [vmem:[%s204] ss:$16 sm:$0xc0] %vm197, %v196
    %v206 = vld [vmem:[#allocation0] sm:$0xff]
    %207 = vrot.lane.b32.xlu0 %v206, 124
    %v208 = vpop.permute.xlu0 %207
    %vm209 = vcmask 7168
    %s210 = scalar_lea.vmem %s1, 4
    %211 = vst.msk [vmem:[%s210] ss:$16 sm:$0x3] %vm209, %v208
    %s212 = scalar_lea.vmem %s1, 4
    %213 = vst.msk [vmem:[%s212] ss:$16 sm:$0xc] %vm209, %v208
    %s214 = scalar_lea.vmem %s1, 4
    %215 = vst.msk [vmem:[%s214] ss:$16 sm:$0x30] %vm209, %v208
    %s216 = scalar_lea.vmem %s1, 4
    %217 = vst.msk [vmem:[%s216] ss:$16 sm:$0xc0] %vm209, %v208
    %s218 = scalar_lea.vmem [#allocation0], 8
    %v219 = vld [vmem:[%s218] sm:$0xff]
    %220 = vrot.lane.b32.xlu0 %v219, 124
    %v221 = vpop.permute.xlu0 %220
    %vm222 = vcmask 7168
    %s223 = scalar_lea.vmem %s1, 132
    %224 = vst.msk [vmem:[%s223] ss:$16 sm:$0x3] %vm222, %v221
    %s225 = scalar_lea.vmem %s1, 132
    %226 = vst.msk [vmem:[%s225] ss:$16 sm:$0xc] %vm222, %v221
    %s227 = scalar_lea.vmem %s1, 132
    %228 = vst.msk [vmem:[%s227] ss:$16 sm:$0x30] %vm222, %v221
    %s229 = scalar_lea.vmem %s1, 132
    %230 = vst.msk [vmem:[%s229] ss:$16 sm:$0xc0] %vm222, %v221
    %s231 = scalar_lea.vmem [#allocation0], 16
    %v232 = vld [vmem:[%s231] sm:$0xff]
    %233 = vrot.lane.b32.xlu0 %v232, 124
    %v234 = vpop.permute.xlu0 %233
    %vm235 = vcmask 7168
    %s236 = scalar_lea.vmem %s1, 260
    %237 = vst.msk [vmem:[%s236] ss:$16 sm:$0x3] %vm235, %v234
    %s238 = scalar_lea.vmem %s1, 260
    %239 = vst.msk [vmem:[%s238] ss:$16 sm:$0xc] %vm235, %v234
    %s240 = scalar_lea.vmem %s1, 260
    %241 = vst.msk [vmem:[%s240] ss:$16 sm:$0x30] %vm235, %v234
    %s242 = scalar_lea.vmem %s1, 260
    %243 = vst.msk [vmem:[%s242] ss:$16 sm:$0xc0] %vm235, %v234
    %s244 = scalar_lea.vmem [#allocation0], 24
    %v245 = vld [vmem:[%s244] sm:$0xff]
    %246 = vrot.lane.b32.xlu0 %v245, 124
    %v247 = vpop.permute.xlu0 %246
    %vm248 = vcmask 7168
    %s249 = scalar_lea.vmem %s1, 388
    %250 = vst.msk [vmem:[%s249] ss:$16 sm:$0x3] %vm248, %v247
    %s251 = scalar_lea.vmem %s1, 388
    %252 = vst.msk [vmem:[%s251] ss:$16 sm:$0xc] %vm248, %v247
    %s253 = scalar_lea.vmem %s1, 388
    %254 = vst.msk [vmem:[%s253] ss:$16 sm:$0x30] %vm248, %v247
    %s255 = scalar_lea.vmem %s1, 388
    %256 = vst.msk [vmem:[%s255] ss:$16 sm:$0xc0] %vm248, %v247
    %v257 = vld [vmem:[#allocation0] sm:$0xff]
    %258 = vrot.lane.b32.xlu0 %v257, 123
    %v259 = vpop.permute.xlu0 %258
    %vm260 = vcmask 7168
    %s261 = scalar_lea.vmem %s1, 5
    %262 = vst.msk [vmem:[%s261] ss:$16 sm:$0x3] %vm260, %v259
    %s263 = scalar_lea.vmem %s1, 5
    %264 = vst.msk [vmem:[%s263] ss:$16 sm:$0xc] %vm260, %v259
    %s265 = scalar_lea.vmem %s1, 5
    %266 = vst.msk [vmem:[%s265] ss:$16 sm:$0x30] %vm260, %v259
    %s267 = scalar_lea.vmem %s1, 5
    %268 = vst.msk [vmem:[%s267] ss:$16 sm:$0xc0] %vm260, %v259
    %s269 = scalar_lea.vmem [#allocation0], 8
    %v270 = vld [vmem:[%s269] sm:$0xff]
    %271 = vrot.lane.b32.xlu0 %v270, 123
    %v272 = vpop.permute.xlu0 %271
    %vm273 = vcmask 7168
    %s274 = scalar_lea.vmem %s1, 133
    %275 = vst.msk [vmem:[%s274] ss:$16 sm:$0x3] %vm273, %v272
    %s276 = scalar_lea.vmem %s1, 133
    %277 = vst.msk [vmem:[%s276] ss:$16 sm:$0xc] %vm273, %v272
    %s278 = scalar_lea.vmem %s1, 133
    %279 = vst.msk [vmem:[%s278] ss:$16 sm:$0x30] %vm273, %v272
    %s280 = scalar_lea.vmem %s1, 133
    %281 = vst.msk [vmem:[%s280] ss:$16 sm:$0xc0] %vm273, %v272
    %s282 = scalar_lea.vmem [#allocation0], 16
    %v283 = vld [vmem:[%s282] sm:$0xff]
    %284 = vrot.lane.b32.xlu0 %v283, 123
    %v285 = vpop.permute.xlu0 %284
    %vm286 = vcmask 7168
    %s287 = scalar_lea.vmem %s1, 261
    %288 = vst.msk [vmem:[%s287] ss:$16 sm:$0x3] %vm286, %v285
    %s289 = scalar_lea.vmem %s1, 261
    %290 = vst.msk [vmem:[%s289] ss:$16 sm:$0xc] %vm286, %v285
    %s291 = scalar_lea.vmem %s1, 261
    %292 = vst.msk [vmem:[%s291] ss:$16 sm:$0x30] %vm286, %v285
    %s293 = scalar_lea.vmem %s1, 261
    %294 = vst.msk [vmem:[%s293] ss:$16 sm:$0xc0] %vm286, %v285
    %s295 = scalar_lea.vmem [#allocation0], 24
    %v296 = vld [vmem:[%s295] sm:$0xff]
    %297 = vrot.lane.b32.xlu0 %v296, 123
    %v298 = vpop.permute.xlu0 %297
    %vm299 = vcmask 7168
    %s300 = scalar_lea.vmem %s1, 389
    %301 = vst.msk [vmem:[%s300] ss:$16 sm:$0x3] %vm299, %v298
    %s302 = scalar_lea.vmem %s1, 389
    %303 = vst.msk [vmem:[%s302] ss:$16 sm:$0xc] %vm299, %v298
    %s304 = scalar_lea.vmem %s1, 389
    %305 = vst.msk [vmem:[%s304] ss:$16 sm:$0x30] %vm299, %v298
    %s306 = scalar_lea.vmem %s1, 389
    %307 = vst.msk [vmem:[%s306] ss:$16 sm:$0xc0] %vm299, %v298
    %v308 = vld [vmem:[#allocation0] sm:$0xff]
    %309 = vrot.lane.b32.xlu0 %v308, 122
    %v310 = vpop.permute.xlu0 %309
    %vm311 = vcmask 7168
    %s312 = scalar_lea.vmem %s1, 6
    %313 = vst.msk [vmem:[%s312] ss:$16 sm:$0x3] %vm311, %v310
    %s314 = scalar_lea.vmem %s1, 6
    %315 = vst.msk [vmem:[%s314] ss:$16 sm:$0xc] %vm311, %v310
    %s316 = scalar_lea.vmem %s1, 6
    %317 = vst.msk [vmem:[%s316] ss:$16 sm:$0x30] %vm311, %v310
    %s318 = scalar_lea.vmem %s1, 6
    %319 = vst.msk [vmem:[%s318] ss:$16 sm:$0xc0] %vm311, %v310
    %s320 = scalar_lea.vmem [#allocation0], 8
    %v321 = vld [vmem:[%s320] sm:$0xff]
    %322 = vrot.lane.b32.xlu0 %v321, 122
    %v323 = vpop.permute.xlu0 %322
    %vm324 = vcmask 7168
    %s325 = scalar_lea.vmem %s1, 134
    %326 = vst.msk [vmem:[%s325] ss:$16 sm:$0x3] %vm324, %v323
    %s327 = scalar_lea.vmem %s1, 134
    %328 = vst.msk [vmem:[%s327] ss:$16 sm:$0xc] %vm324, %v323
    %s329 = scalar_lea.vmem %s1, 134
    %330 = vst.msk [vmem:[%s329] ss:$16 sm:$0x30] %vm324, %v323
    %s331 = scalar_lea.vmem %s1, 134
    %332 = vst.msk [vmem:[%s331] ss:$16 sm:$0xc0] %vm324, %v323
    %s333 = scalar_lea.vmem [#allocation0], 16
    %v334 = vld [vmem:[%s333] sm:$0xff]
    %335 = vrot.lane.b32.xlu0 %v334, 122
    %v336 = vpop.permute.xlu0 %335
    %vm337 = vcmask 7168
    %s338 = scalar_lea.vmem %s1, 262
    %339 = vst.msk [vmem:[%s338] ss:$16 sm:$0x3] %vm337, %v336
    %s340 = scalar_lea.vmem %s1, 262
    %341 = vst.msk [vmem:[%s340] ss:$16 sm:$0xc] %vm337, %v336
    %s342 = scalar_lea.vmem %s1, 262
    %343 = vst.msk [vmem:[%s342] ss:$16 sm:$0x30] %vm337, %v336
    %s344 = scalar_lea.vmem %s1, 262
    %345 = vst.msk [vmem:[%s344] ss:$16 sm:$0xc0] %vm337, %v336
    %s346 = scalar_lea.vmem [#allocation0], 24
    %v347 = vld [vmem:[%s346] sm:$0xff]
    %348 = vrot.lane.b32.xlu0 %v347, 122
    %v349 = vpop.permute.xlu0 %348
    %vm350 = vcmask 7168
    %s351 = scalar_lea.vmem %s1, 390
    %352 = vst.msk [vmem:[%s351] ss:$16 sm:$0x3] %vm350, %v349
    %s353 = scalar_lea.vmem %s1, 390
    %354 = vst.msk [vmem:[%s353] ss:$16 sm:$0xc] %vm350, %v349
    %s355 = scalar_lea.vmem %s1, 390
    %356 = vst.msk [vmem:[%s355] ss:$16 sm:$0x30] %vm350, %v349
    %s357 = scalar_lea.vmem %s1, 390
    %358 = vst.msk [vmem:[%s357] ss:$16 sm:$0xc0] %vm350, %v349
    %v359 = vld [vmem:[#allocation0] sm:$0xff]
    %360 = vrot.lane.b32.xlu0 %v359, 121
    %v361 = vpop.permute.xlu0 %360
    %vm362 = vcmask 7168
    %s363 = scalar_lea.vmem %s1, 7
    %364 = vst.msk [vmem:[%s363] ss:$16 sm:$0x3] %vm362, %v361
    %s365 = scalar_lea.vmem %s1, 7
    %366 = vst.msk [vmem:[%s365] ss:$16 sm:$0xc] %vm362, %v361
    %s367 = scalar_lea.vmem %s1, 7
    %368 = vst.msk [vmem:[%s367] ss:$16 sm:$0x30] %vm362, %v361
    %s369 = scalar_lea.vmem %s1, 7
    %370 = vst.msk [vmem:[%s369] ss:$16 sm:$0xc0] %vm362, %v361
    %s371 = scalar_lea.vmem [#allocation0], 8
    %v372 = vld [vmem:[%s371] sm:$0xff]
    %373 = vrot.lane.b32.xlu0 %v372, 121
    %v374 = vpop.permute.xlu0 %373
    %vm375 = vcmask 7168
    %s376 = scalar_lea.vmem %s1, 135
    %377 = vst.msk [vmem:[%s376] ss:$16 sm:$0x3] %vm375, %v374
    %s378 = scalar_lea.vmem %s1, 135
    %379 = vst.msk [vmem:[%s378] ss:$16 sm:$0xc] %vm375, %v374
    %s380 = scalar_lea.vmem %s1, 135
    %381 = vst.msk [vmem:[%s380] ss:$16 sm:$0x30] %vm375, %v374
    %s382 = scalar_lea.vmem %s1, 135
    %383 = vst.msk [vmem:[%s382] ss:$16 sm:$0xc0] %vm375, %v374
    %s384 = scalar_lea.vmem [#allocation0], 16
    %v385 = vld [vmem:[%s384] sm:$0xff]
    %386 = vrot.lane.b32.xlu0 %v385, 121
    %v387 = vpop.permute.xlu0 %386
    %vm388 = vcmask 7168
    %s389 = scalar_lea.vmem %s1, 263
    %390 = vst.msk [vmem:[%s389] ss:$16 sm:$0x3] %vm388, %v387
    %s391 = scalar_lea.vmem %s1, 263
    %392 = vst.msk [vmem:[%s391] ss:$16 sm:$0xc] %vm388, %v387
    %s393 = scalar_lea.vmem %s1, 263
    %394 = vst.msk [vmem:[%s393] ss:$16 sm:$0x30] %vm388, %v387
    %s395 = scalar_lea.vmem %s1, 263
    %396 = vst.msk [vmem:[%s395] ss:$16 sm:$0xc0] %vm388, %v387
    %s397 = scalar_lea.vmem [#allocation0], 24
    %v398 = vld [vmem:[%s397] sm:$0xff]
    %399 = vrot.lane.b32.xlu0 %v398, 121
    %v400 = vpop.permute.xlu0 %399
    %vm401 = vcmask 7168
    %s402 = scalar_lea.vmem %s1, 391
    %403 = vst.msk [vmem:[%s402] ss:$16 sm:$0x3] %vm401, %v400
    %s404 = scalar_lea.vmem %s1, 391
    %405 = vst.msk [vmem:[%s404] ss:$16 sm:$0xc] %vm401, %v400
    %s406 = scalar_lea.vmem %s1, 391
    %407 = vst.msk [vmem:[%s406] ss:$16 sm:$0x30] %vm401, %v400
    %s408 = scalar_lea.vmem %s1, 391
    %409 = vst.msk [vmem:[%s408] ss:$16 sm:$0xc0] %vm401, %v400
    %v410 = vld [vmem:[#allocation0] sm:$0xff]
    %411 = vrot.lane.b32.xlu0 %v410, 120
    %v412 = vpop.permute.xlu0 %411
    %vm413 = vcmask 7168
    %s414 = scalar_lea.vmem %s1, 8
    %415 = vst.msk [vmem:[%s414] ss:$16 sm:$0x3] %vm413, %v412
    %s416 = scalar_lea.vmem %s1, 8
    %417 = vst.msk [vmem:[%s416] ss:$16 sm:$0xc] %vm413, %v412
    %s418 = scalar_lea.vmem %s1, 8
    %419 = vst.msk [vmem:[%s418] ss:$16 sm:$0x30] %vm413, %v412
    %s420 = scalar_lea.vmem %s1, 8
    %421 = vst.msk [vmem:[%s420] ss:$16 sm:$0xc0] %vm413, %v412
    %s422 = scalar_lea.vmem [#allocation0], 8
    %v423 = vld [vmem:[%s422] sm:$0xff]
    %424 = vrot.lane.b32.xlu0 %v423, 120
    %v425 = vpop.permute.xlu0 %424
    %vm426 = vcmask 7168
    %s427 = scalar_lea.vmem %s1, 136
    %428 = vst.msk [vmem:[%s427] ss:$16 sm:$0x3] %vm426, %v425
    %s429 = scalar_lea.vmem %s1, 136
    %430 = vst.msk [vmem:[%s429] ss:$16 sm:$0xc] %vm426, %v425
    %s431 = scalar_lea.vmem %s1, 136
    %432 = vst.msk [vmem:[%s431] ss:$16 sm:$0x30] %vm426, %v425
    %s433 = scalar_lea.vmem %s1, 136
    %434 = vst.msk [vmem:[%s433] ss:$16 sm:$0xc0] %vm426, %v425
    %s435 = scalar_lea.vmem [#allocation0], 16
    %v436 = vld [vmem:[%s435] sm:$0xff]
    %437 = vrot.lane.b32.xlu0 %v436, 120
    %v438 = vpop.permute.xlu0 %437
    %vm439 = vcmask 7168
    %s440 = scalar_lea.vmem %s1, 264
    %441 = vst.msk [vmem:[%s440] ss:$16 sm:$0x3] %vm439, %v438
    %s442 = scalar_lea.vmem %s1, 264
    %443 = vst.msk [vmem:[%s442] ss:$16 sm:$0xc] %vm439, %v438
    %s444 = scalar_lea.vmem %s1, 264
    %445 = vst.msk [vmem:[%s444] ss:$16 sm:$0x30] %vm439, %v438
    %s446 = scalar_lea.vmem %s1, 264
    %447 = vst.msk [vmem:[%s446] ss:$16 sm:$0xc0] %vm439, %v438
    %s448 = scalar_lea.vmem [#allocation0], 24
    %v449 = vld [vmem:[%s448] sm:$0xff]
    %450 = vrot.lane.b32.xlu0 %v449, 120
    %v451 = vpop.permute.xlu0 %450
    %vm452 = vcmask 7168
    %s453 = scalar_lea.vmem %s1, 392
    %454 = vst.msk [vmem:[%s453] ss:$16 sm:$0x3] %vm452, %v451
    %s455 = scalar_lea.vmem %s1, 392
    %456 = vst.msk [vmem:[%s455] ss:$16 sm:$0xc] %vm452, %v451
    %s457 = scalar_lea.vmem %s1, 392
    %458 = vst.msk [vmem:[%s457] ss:$16 sm:$0x30] %vm452, %v451
    %s459 = scalar_lea.vmem %s1, 392
    %460 = vst.msk [vmem:[%s459] ss:$16 sm:$0xc0] %vm452, %v451
    %v461 = vld [vmem:[#allocation0] sm:$0xff]
    %462 = vrot.lane.b32.xlu0 %v461, 119
    %v463 = vpop.permute.xlu0 %462
    %vm464 = vcmask 7168
    %s465 = scalar_lea.vmem %s1, 9
    %466 = vst.msk [vmem:[%s465] ss:$16 sm:$0x3] %vm464, %v463
    %s467 = scalar_lea.vmem %s1, 9
    %468 = vst.msk [vmem:[%s467] ss:$16 sm:$0xc] %vm464, %v463
    %s469 = scalar_lea.vmem %s1, 9
    %470 = vst.msk [vmem:[%s469] ss:$16 sm:$0x30] %vm464, %v463
    %s471 = scalar_lea.vmem %s1, 9
    %472 = vst.msk [vmem:[%s471] ss:$16 sm:$0xc0] %vm464, %v463
    %s473 = scalar_lea.vmem [#allocation0], 8
    %v474 = vld [vmem:[%s473] sm:$0xff]
    %475 = vrot.lane.b32.xlu0 %v474, 119
    %v476 = vpop.permute.xlu0 %475
    %vm477 = vcmask 7168
    %s478 = scalar_lea.vmem %s1, 137
    %479 = vst.msk [vmem:[%s478] ss:$16 sm:$0x3] %vm477, %v476
    %s480 = scalar_lea.vmem %s1, 137
    %481 = vst.msk [vmem:[%s480] ss:$16 sm:$0xc] %vm477, %v476
    %s482 = scalar_lea.vmem %s1, 137
    %483 = vst.msk [vmem:[%s482] ss:$16 sm:$0x30] %vm477, %v476
    %s484 = scalar_lea.vmem %s1, 137
    %485 = vst.msk [vmem:[%s484] ss:$16 sm:$0xc0] %vm477, %v476
    %s486 = scalar_lea.vmem [#allocation0], 16
    %v487 = vld [vmem:[%s486] sm:$0xff]
    %488 = vrot.lane.b32.xlu0 %v487, 119
    %v489 = vpop.permute.xlu0 %488
    %vm490 = vcmask 7168
    %s491 = scalar_lea.vmem %s1, 265
    %492 = vst.msk [vmem:[%s491] ss:$16 sm:$0x3] %vm490, %v489
    %s493 = scalar_lea.vmem %s1, 265
    %494 = vst.msk [vmem:[%s493] ss:$16 sm:$0xc] %vm490, %v489
    %s495 = scalar_lea.vmem %s1, 265
    %496 = vst.msk [vmem:[%s495] ss:$16 sm:$0x30] %vm490, %v489
    %s497 = scalar_lea.vmem %s1, 265
    %498 = vst.msk [vmem:[%s497] ss:$16 sm:$0xc0] %vm490, %v489
    %s499 = scalar_lea.vmem [#allocation0], 24
    %v500 = vld [vmem:[%s499] sm:$0xff]
    %501 = vrot.lane.b32.xlu0 %v500, 119
    %v502 = vpop.permute.xlu0 %501
    %vm503 = vcmask 7168
    %s504 = scalar_lea.vmem %s1, 393
    %505 = vst.msk [vmem:[%s504] ss:$16 sm:$0x3] %vm503, %v502
    %s506 = scalar_lea.vmem %s1, 393
    %507 = vst.msk [vmem:[%s506] ss:$16 sm:$0xc] %vm503, %v502
    %s508 = scalar_lea.vmem %s1, 393
    %509 = vst.msk [vmem:[%s508] ss:$16 sm:$0x30] %vm503, %v502
    %s510 = scalar_lea.vmem %s1, 393
    %511 = vst.msk [vmem:[%s510] ss:$16 sm:$0xc0] %vm503, %v502
    %v512 = vld [vmem:[#allocation0] sm:$0xff]
    %513 = vrot.lane.b32.xlu0 %v512, 118
    %v514 = vpop.permute.xlu0 %513
    %vm515 = vcmask 7168
    %s516 = scalar_lea.vmem %s1, 10
    %517 = vst.msk [vmem:[%s516] ss:$16 sm:$0x3] %vm515, %v514
    %s518 = scalar_lea.vmem %s1, 10
    %519 = vst.msk [vmem:[%s518] ss:$16 sm:$0xc] %vm515, %v514
    %s520 = scalar_lea.vmem %s1, 10
    %521 = vst.msk [vmem:[%s520] ss:$16 sm:$0x30] %vm515, %v514
    %s522 = scalar_lea.vmem %s1, 10
    %523 = vst.msk [vmem:[%s522] ss:$16 sm:$0xc0] %vm515, %v514
    %s524 = scalar_lea.vmem [#allocation0], 8
    %v525 = vld [vmem:[%s524] sm:$0xff]
    %526 = vrot.lane.b32.xlu0 %v525, 118
    %v527 = vpop.permute.xlu0 %526
    %vm528 = vcmask 7168
    %s529 = scalar_lea.vmem %s1, 138
    %530 = vst.msk [vmem:[%s529] ss:$16 sm:$0x3] %vm528, %v527
    %s531 = scalar_lea.vmem %s1, 138
    %532 = vst.msk [vmem:[%s531] ss:$16 sm:$0xc] %vm528, %v527
    %s533 = scalar_lea.vmem %s1, 138
    %534 = vst.msk [vmem:[%s533] ss:$16 sm:$0x30] %vm528, %v527
    %s535 = scalar_lea.vmem %s1, 138
    %536 = vst.msk [vmem:[%s535] ss:$16 sm:$0xc0] %vm528, %v527
    %s537 = scalar_lea.vmem [#allocation0], 16
    %v538 = vld [vmem:[%s537] sm:$0xff]
    %539 = vrot.lane.b32.xlu0 %v538, 118
    %v540 = vpop.permute.xlu0 %539
    %vm541 = vcmask 7168
    %s542 = scalar_lea.vmem %s1, 266
    %543 = vst.msk [vmem:[%s542] ss:$16 sm:$0x3] %vm541, %v540
    %s544 = scalar_lea.vmem %s1, 266
    %545 = vst.msk [vmem:[%s544] ss:$16 sm:$0xc] %vm541, %v540
    %s546 = scalar_lea.vmem %s1, 266
    %547 = vst.msk [vmem:[%s546] ss:$16 sm:$0x30] %vm541, %v540
    %s548 = scalar_lea.vmem %s1, 266
    %549 = vst.msk [vmem:[%s548] ss:$16 sm:$0xc0] %vm541, %v540
    %s550 = scalar_lea.vmem [#allocation0], 24
    %v551 = vld [vmem:[%s550] sm:$0xff]
    %552 = vrot.lane.b32.xlu0 %v551, 118
    %v553 = vpop.permute.xlu0 %552
    %vm554 = vcmask 7168
    %s555 = scalar_lea.vmem %s1, 394
    %556 = vst.msk [vmem:[%s555] ss:$16 sm:$0x3] %vm554, %v553
    %s557 = scalar_lea.vmem %s1, 394
    %558 = vst.msk [vmem:[%s557] ss:$16 sm:$0xc] %vm554, %v553
    %s559 = scalar_lea.vmem %s1, 394
    %560 = vst.msk [vmem:[%s559] ss:$16 sm:$0x30] %vm554, %v553
    %s561 = scalar_lea.vmem %s1, 394
    %562 = vst.msk [vmem:[%s561] ss:$16 sm:$0xc0] %vm554, %v553
    %v563 = vld [vmem:[#allocation0] sm:$0xff]
    %564 = vrot.lane.b32.xlu0 %v563, 117
    %v565 = vpop.permute.xlu0 %564
    %vm566 = vcmask 7168
    %s567 = scalar_lea.vmem %s1, 11
    %568 = vst.msk [vmem:[%s567] ss:$16 sm:$0x3] %vm566, %v565
    %s569 = scalar_lea.vmem %s1, 11
    %570 = vst.msk [vmem:[%s569] ss:$16 sm:$0xc] %vm566, %v565
    %s571 = scalar_lea.vmem %s1, 11
    %572 = vst.msk [vmem:[%s571] ss:$16 sm:$0x30] %vm566, %v565
    %s573 = scalar_lea.vmem %s1, 11
    %574 = vst.msk [vmem:[%s573] ss:$16 sm:$0xc0] %vm566, %v565
    %s575 = scalar_lea.vmem [#allocation0], 8
    %v576 = vld [vmem:[%s575] sm:$0xff]
    %577 = vrot.lane.b32.xlu0 %v576, 117
    %v578 = vpop.permute.xlu0 %577
    %vm579 = vcmask 7168
    %s580 = scalar_lea.vmem %s1, 139
    %581 = vst.msk [vmem:[%s580] ss:$16 sm:$0x3] %vm579, %v578
    %s582 = scalar_lea.vmem %s1, 139
    %583 = vst.msk [vmem:[%s582] ss:$16 sm:$0xc] %vm579, %v578
    %s584 = scalar_lea.vmem %s1, 139
    %585 = vst.msk [vmem:[%s584] ss:$16 sm:$0x30] %vm579, %v578
    %s586 = scalar_lea.vmem %s1, 139
    %587 = vst.msk [vmem:[%s586] ss:$16 sm:$0xc0] %vm579, %v578
    %s588 = scalar_lea.vmem [#allocation0], 16
    %v589 = vld [vmem:[%s588] sm:$0xff]
    %590 = vrot.lane.b32.xlu0 %v589, 117
    %v591 = vpop.permute.xlu0 %590
    %vm592 = vcmask 7168
    %s593 = scalar_lea.vmem %s1, 267
    %594 = vst.msk [vmem:[%s593] ss:$16 sm:$0x3] %vm592, %v591
    %s595 = scalar_lea.vmem %s1, 267
    %596 = vst.msk [vmem:[%s595] ss:$16 sm:$0xc] %vm592, %v591
    %s597 = scalar_lea.vmem %s1, 267
    %598 = vst.msk [vmem:[%s597] ss:$16 sm:$0x30] %vm592, %v591
    %s599 = scalar_lea.vmem %s1, 267
    %600 = vst.msk [vmem:[%s599] ss:$16 sm:$0xc0] %vm592, %v591
    %s601 = scalar_lea.vmem [#allocation0], 24
    %v602 = vld [vmem:[%s601] sm:$0xff]
    %603 = vrot.lane.b32.xlu0 %v602, 117
    %v604 = vpop.permute.xlu0 %603
    %vm605 = vcmask 7168
    %s606 = scalar_lea.vmem %s1, 395
    %607 = vst.msk [vmem:[%s606] ss:$16 sm:$0x3] %vm605, %v604
    %s608 = scalar_lea.vmem %s1, 395
    %609 = vst.msk [vmem:[%s608] ss:$16 sm:$0xc] %vm605, %v604
    %s610 = scalar_lea.vmem %s1, 395
    %611 = vst.msk [vmem:[%s610] ss:$16 sm:$0x30] %vm605, %v604
    %s612 = scalar_lea.vmem %s1, 395
    %613 = vst.msk [vmem:[%s612] ss:$16 sm:$0xc0] %vm605, %v604
    %v614 = vld [vmem:[#allocation0] sm:$0xff]
    %615 = vrot.lane.b32.xlu0 %v614, 116
    %v616 = vpop.permute.xlu0 %615
    %vm617 = vcmask 7168
    %s618 = scalar_lea.vmem %s1, 12
    %619 = vst.msk [vmem:[%s618] ss:$16 sm:$0x3] %vm617, %v616
    %s620 = scalar_lea.vmem %s1, 12
    %621 = vst.msk [vmem:[%s620] ss:$16 sm:$0xc] %vm617, %v616
    %s622 = scalar_lea.vmem %s1, 12
    %623 = vst.msk [vmem:[%s622] ss:$16 sm:$0x30] %vm617, %v616
    %s624 = scalar_lea.vmem %s1, 12
    %625 = vst.msk [vmem:[%s624] ss:$16 sm:$0xc0] %vm617, %v616
    %s626 = scalar_lea.vmem [#allocation0], 8
    %v627 = vld [vmem:[%s626] sm:$0xff]
    %628 = vrot.lane.b32.xlu0 %v627, 116
    %v629 = vpop.permute.xlu0 %628
    %vm630 = vcmask 7168
    %s631 = scalar_lea.vmem %s1, 140
    %632 = vst.msk [vmem:[%s631] ss:$16 sm:$0x3] %vm630, %v629
    %s633 = scalar_lea.vmem %s1, 140
    %634 = vst.msk [vmem:[%s633] ss:$16 sm:$0xc] %vm630, %v629
    %s635 = scalar_lea.vmem %s1, 140
    %636 = vst.msk [vmem:[%s635] ss:$16 sm:$0x30] %vm630, %v629
    %s637 = scalar_lea.vmem %s1, 140
    %638 = vst.msk [vmem:[%s637] ss:$16 sm:$0xc0] %vm630, %v629
    %s639 = scalar_lea.vmem [#allocation0], 16
    %v640 = vld [vmem:[%s639] sm:$0xff]
    %641 = vrot.lane.b32.xlu0 %v640, 116
    %v642 = vpop.permute.xlu0 %641
    %vm643 = vcmask 7168
    %s644 = scalar_lea.vmem %s1, 268
    %645 = vst.msk [vmem:[%s644] ss:$16 sm:$0x3] %vm643, %v642
    %s646 = scalar_lea.vmem %s1, 268
    %647 = vst.msk [vmem:[%s646] ss:$16 sm:$0xc] %vm643, %v642
    %s648 = scalar_lea.vmem %s1, 268
    %649 = vst.msk [vmem:[%s648] ss:$16 sm:$0x30] %vm643, %v642
    %s650 = scalar_lea.vmem %s1, 268
    %651 = vst.msk [vmem:[%s650] ss:$16 sm:$0xc0] %vm643, %v642
    %s652 = scalar_lea.vmem [#allocation0], 24
    %v653 = vld [vmem:[%s652] sm:$0xff]
    %654 = vrot.lane.b32.xlu0 %v653, 116
    %v655 = vpop.permute.xlu0 %654
    %vm656 = vcmask 7168
    %s657 = scalar_lea.vmem %s1, 396
    %658 = vst.msk [vmem:[%s657] ss:$16 sm:$0x3] %vm656, %v655
    %s659 = scalar_lea.vmem %s1, 396
    %660 = vst.msk [vmem:[%s659] ss:$16 sm:$0xc] %vm656, %v655
    %s661 = scalar_lea.vmem %s1, 396
    %662 = vst.msk [vmem:[%s661] ss:$16 sm:$0x30] %vm656, %v655
    %s663 = scalar_lea.vmem %s1, 396
    %664 = vst.msk [vmem:[%s663] ss:$16 sm:$0xc0] %vm656, %v655
    %v665 = vld [vmem:[#allocation0] sm:$0xff]
    %666 = vrot.lane.b32.xlu0 %v665, 115
    %v667 = vpop.permute.xlu0 %666
    %vm668 = vcmask 7168
    %s669 = scalar_lea.vmem %s1, 13
    %670 = vst.msk [vmem:[%s669] ss:$16 sm:$0x3] %vm668, %v667
    %s671 = scalar_lea.vmem %s1, 13
    %672 = vst.msk [vmem:[%s671] ss:$16 sm:$0xc] %vm668, %v667
    %s673 = scalar_lea.vmem %s1, 13
    %674 = vst.msk [vmem:[%s673] ss:$16 sm:$0x30] %vm668, %v667
    %s675 = scalar_lea.vmem %s1, 13
    %676 = vst.msk [vmem:[%s675] ss:$16 sm:$0xc0] %vm668, %v667
    %s677 = scalar_lea.vmem [#allocation0], 8
    %v678 = vld [vmem:[%s677] sm:$0xff]
    %679 = vrot.lane.b32.xlu0 %v678, 115
    %v680 = vpop.permute.xlu0 %679
    %vm681 = vcmask 7168
    %s682 = scalar_lea.vmem %s1, 141
    %683 = vst.msk [vmem:[%s682] ss:$16 sm:$0x3] %vm681, %v680
    %s684 = scalar_lea.vmem %s1, 141
    %685 = vst.msk [vmem:[%s684] ss:$16 sm:$0xc] %vm681, %v680
    %s686 = scalar_lea.vmem %s1, 141
    %687 = vst.msk [vmem:[%s686] ss:$16 sm:$0x30] %vm681, %v680
    %s688 = scalar_lea.vmem %s1, 141
    %689 = vst.msk [vmem:[%s688] ss:$16 sm:$0xc0] %vm681, %v680
    %s690 = scalar_lea.vmem [#allocation0], 16
    %v691 = vld [vmem:[%s690] sm:$0xff]
    %692 = vrot.lane.b32.xlu0 %v691, 115
    %v693 = vpop.permute.xlu0 %692
    %vm694 = vcmask 7168
    %s695 = scalar_lea.vmem %s1, 269
    %696 = vst.msk [vmem:[%s695] ss:$16 sm:$0x3] %vm694, %v693
    %s697 = scalar_lea.vmem %s1, 269
    %698 = vst.msk [vmem:[%s697] ss:$16 sm:$0xc] %vm694, %v693
    %s699 = scalar_lea.vmem %s1, 269
    %700 = vst.msk [vmem:[%s699] ss:$16 sm:$0x30] %vm694, %v693
    %s701 = scalar_lea.vmem %s1, 269
    %702 = vst.msk [vmem:[%s701] ss:$16 sm:$0xc0] %vm694, %v693
    %s703 = scalar_lea.vmem [#allocation0], 24
    %v704 = vld [vmem:[%s703] sm:$0xff]
    %705 = vrot.lane.b32.xlu0 %v704, 115
    %v706 = vpop.permute.xlu0 %705
    %vm707 = vcmask 7168
    %s708 = scalar_lea.vmem %s1, 397
    %709 = vst.msk [vmem:[%s708] ss:$16 sm:$0x3] %vm707, %v706
    %s710 = scalar_lea.vmem %s1, 397
    %711 = vst.msk [vmem:[%s710] ss:$16 sm:$0xc] %vm707, %v706
    %s712 = scalar_lea.vmem %s1, 397
    %713 = vst.msk [vmem:[%s712] ss:$16 sm:$0x30] %vm707, %v706
    %s714 = scalar_lea.vmem %s1, 397
    %715 = vst.msk [vmem:[%s714] ss:$16 sm:$0xc0] %vm707, %v706
    %v716 = vld [vmem:[#allocation0] sm:$0xff]
    %717 = vrot.lane.b32.xlu0 %v716, 114
    %v718 = vpop.permute.xlu0 %717
    %vm719 = vcmask 7168
    %s720 = scalar_lea.vmem %s1, 14
    %721 = vst.msk [vmem:[%s720] ss:$16 sm:$0x3] %vm719, %v718
    %s722 = scalar_lea.vmem %s1, 14
    %723 = vst.msk [vmem:[%s722] ss:$16 sm:$0xc] %vm719, %v718
    %s724 = scalar_lea.vmem %s1, 14
    %725 = vst.msk [vmem:[%s724] ss:$16 sm:$0x30] %vm719, %v718
    %s726 = scalar_lea.vmem %s1, 14
    %727 = vst.msk [vmem:[%s726] ss:$16 sm:$0xc0] %vm719, %v718
    %s728 = scalar_lea.vmem [#allocation0], 8
    %v729 = vld [vmem:[%s728] sm:$0xff]
    %730 = vrot.lane.b32.xlu0 %v729, 114
    %v731 = vpop.permute.xlu0 %730
    %vm732 = vcmask 7168
    %s733 = scalar_lea.vmem %s1, 142
    %734 = vst.msk [vmem:[%s733] ss:$16 sm:$0x3] %vm732, %v731
    %s735 = scalar_lea.vmem %s1, 142
    %736 = vst.msk [vmem:[%s735] ss:$16 sm:$0xc] %vm732, %v731
    %s737 = scalar_lea.vmem %s1, 142
    %738 = vst.msk [vmem:[%s737] ss:$16 sm:$0x30] %vm732, %v731
    %s739 = scalar_lea.vmem %s1, 142
    %740 = vst.msk [vmem:[%s739] ss:$16 sm:$0xc0] %vm732, %v731
    %s741 = scalar_lea.vmem [#allocation0], 16
    %v742 = vld [vmem:[%s741] sm:$0xff]
    %743 = vrot.lane.b32.xlu0 %v742, 114
    %v744 = vpop.permute.xlu0 %743
    %vm745 = vcmask 7168
    %s746 = scalar_lea.vmem %s1, 270
    %747 = vst.msk [vmem:[%s746] ss:$16 sm:$0x3] %vm745, %v744
    %s748 = scalar_lea.vmem %s1, 270
    %749 = vst.msk [vmem:[%s748] ss:$16 sm:$0xc] %vm745, %v744
    %s750 = scalar_lea.vmem %s1, 270
    %751 = vst.msk [vmem:[%s750] ss:$16 sm:$0x30] %vm745, %v744
    %s752 = scalar_lea.vmem %s1, 270
    %753 = vst.msk [vmem:[%s752] ss:$16 sm:$0xc0] %vm745, %v744
    %s754 = scalar_lea.vmem [#allocation0], 24
    %v755 = vld [vmem:[%s754] sm:$0xff]
    %756 = vrot.lane.b32.xlu0 %v755, 114
    %v757 = vpop.permute.xlu0 %756
    %vm758 = vcmask 7168
    %s759 = scalar_lea.vmem %s1, 398
    %760 = vst.msk [vmem:[%s759] ss:$16 sm:$0x3] %vm758, %v757
    %s761 = scalar_lea.vmem %s1, 398
    %762 = vst.msk [vmem:[%s761] ss:$16 sm:$0xc] %vm758, %v757
    %s763 = scalar_lea.vmem %s1, 398
    %764 = vst.msk [vmem:[%s763] ss:$16 sm:$0x30] %vm758, %v757
    %s765 = scalar_lea.vmem %s1, 398
    %766 = vst.msk [vmem:[%s765] ss:$16 sm:$0xc0] %vm758, %v757
    %v767 = vld [vmem:[#allocation0] sm:$0xff]
    %768 = vrot.lane.b32.xlu0 %v767, 113
    %v769 = vpop.permute.xlu0 %768
    %vm770 = vcmask 7168
    %s771 = scalar_lea.vmem %s1, 15
    %772 = vst.msk [vmem:[%s771] ss:$16 sm:$0x3] %vm770, %v769
    %s773 = scalar_lea.vmem %s1, 15
    %774 = vst.msk [vmem:[%s773] ss:$16 sm:$0xc] %vm770, %v769
    %s775 = scalar_lea.vmem %s1, 15
    %776 = vst.msk [vmem:[%s775] ss:$16 sm:$0x30] %vm770, %v769
    %s777 = scalar_lea.vmem %s1, 15
    %778 = vst.msk [vmem:[%s777] ss:$16 sm:$0xc0] %vm770, %v769
    %s779 = scalar_lea.vmem [#allocation0], 8
    %v780 = vld [vmem:[%s779] sm:$0xff]
    %781 = vrot.lane.b32.xlu0 %v780, 113
    %v782 = vpop.permute.xlu0 %781
    %vm783 = vcmask 7168
    %s784 = scalar_lea.vmem %s1, 143
    %785 = vst.msk [vmem:[%s784] ss:$16 sm:$0x3] %vm783, %v782
    %s786 = scalar_lea.vmem %s1, 143
    %787 = vst.msk [vmem:[%s786] ss:$16 sm:$0xc] %vm783, %v782
    %s788 = scalar_lea.vmem %s1, 143
    %789 = vst.msk [vmem:[%s788] ss:$16 sm:$0x30] %vm783, %v782
    %s790 = scalar_lea.vmem %s1, 143
    %791 = vst.msk [vmem:[%s790] ss:$16 sm:$0xc0] %vm783, %v782
    %s792 = scalar_lea.vmem [#allocation0], 16
    %v793 = vld [vmem:[%s792] sm:$0xff]
    %794 = vrot.lane.b32.xlu0 %v793, 113
    %v795 = vpop.permute.xlu0 %794
    %vm796 = vcmask 7168
    %s797 = scalar_lea.vmem %s1, 271
    %798 = vst.msk [vmem:[%s797] ss:$16 sm:$0x3] %vm796, %v795
    %s799 = scalar_lea.vmem %s1, 271
    %800 = vst.msk [vmem:[%s799] ss:$16 sm:$0xc] %vm796, %v795
    %s801 = scalar_lea.vmem %s1, 271
    %802 = vst.msk [vmem:[%s801] ss:$16 sm:$0x30] %vm796, %v795
    %s803 = scalar_lea.vmem %s1, 271
    %804 = vst.msk [vmem:[%s803] ss:$16 sm:$0xc0] %vm796, %v795
    %s805 = scalar_lea.vmem [#allocation0], 24
    %v806 = vld [vmem:[%s805] sm:$0xff]
    %807 = vrot.lane.b32.xlu0 %v806, 113
    %v808 = vpop.permute.xlu0 %807
    %vm809 = vcmask 7168
    %s810 = scalar_lea.vmem %s1, 399
    %811 = vst.msk [vmem:[%s810] ss:$16 sm:$0x3] %vm809, %v808
    %s812 = scalar_lea.vmem %s1, 399
    %813 = vst.msk [vmem:[%s812] ss:$16 sm:$0xc] %vm809, %v808
    %s814 = scalar_lea.vmem %s1, 399
    %815 = vst.msk [vmem:[%s814] ss:$16 sm:$0x30] %vm809, %v808
    %s816 = scalar_lea.vmem %s1, 399
    %817 = vst.msk [vmem:[%s816] ss:$16 sm:$0xc0] %vm809, %v808
    %818 = vsyncpa [#allocation1], 1

// kernel: embedding_model_forward.1
$region0: #{embedding_model_forward.1}
  #allocation0 [shape = 'u32[]', space=smem, size = 0x4, offset = 0x4, fixed_abs, tag = 'smem constant byte address 0x4 - core index']
  #allocation1 [shape = 'u32[72,128]{1,0:T(1,128)}', space=vmem, size = 0x9000, scoped, tag = 'internal scratch']
  #allocation2 [shape = 'f32[324,1]{1,0:T(8,128)}', space=vmem, size = 0x29000, scoped, tag = 'scratch operand']
  #allocation3 [shape = 'f32[100,16]{1,0:T(8,128)}', space=vmem, size = 0xd000, scoped, tag = 'scratch operand']
  #allocation4 [shape = 'f32[36,32]{1,0:T(8,128)}', space=vmem, size = 0x5000, scoped, tag = 'scratch operand']
  #allocation5 [shape = 'f32[286,16]{1,0:T(8,128)}', space=vmem, size = 0x24000, scoped, tag = 'scratch operand']
  #allocation6 [shape = 'f32[78,32]{1,0:T(8,128)}', space=vmem, size = 0xa000, scoped, tag = 'scratch operand']
  #allocation7 [shape = 'f32[22,64]{1,0:T(8,128)}', space=vmem, size = 0x3000, scoped, tag = 'scratch operand']
  #allocation8 [shape = 'f32[128,16]{1,0:T(8,128)}', space=vmem, size = 0x10000, scoped, tag = 'scratch operand']
  #allocation9 [shape = 'f32[32,32]{1,0:T(8,128)}', space=vmem, size = 0x4000, scoped, tag = 'scratch operand']
  #allocation10 [shape = 'f32[8,64]{1,0:T(8,128)}', space=vmem, size = 0x1000, scoped, tag = 'scratch operand']
  %s0 = inlined_call_operand.vmem [shape: f32[2,256,1], index: 0, kind: input, shape index: {}]
  %s1 = inlined_call_operand.vmem [shape: f32[9,1,16], index: 1, kind: input, shape index: {}]
  %s2 = inlined_call_operand.vmem [shape: f32[1,16], index: 2, kind: input, shape index: {}]
  %s3 = inlined_call_operand.vmem [shape: f32[9,16,32], index: 3, kind: input, shape index: {}]
  %s4 = inlined_call_operand.vmem [shape: f32[1,32], index: 4, kind: input, shape index: {}]
  %s5 = inlined_call_operand.vmem [shape: f32[9,32,64], index: 5, kind: input, shape index: {}]
  %s6 = inlined_call_operand.vmem [shape: f32[1,64], index: 6, kind: input, shape index: {}]
  %s7 = inlined_call_operand.hbm [shape: f32[64,192], index: 7, kind: input, shape index: {}]
  %s8 = inlined_call_operand.hbm [shape: f32[64,192], index: 8, kind: input, shape index: {}]
  %s9 = inlined_call_operand.vmem [shape: f32[1,192], index: 9, kind: input, shape index: {}]
  %s10 = inlined_call_operand.vmem [shape: f32[1,192], index: 10, kind: input, shape index: {}]
  %s11 = inlined_call_operand.hbm [shape: f32[2,1,64], index: 11, kind: output, shape index: {}]
  %s12 = sld [smem:[#allocation0]]
  $region85: #{embedding_model_forward.1} parent=0
    _
  %s14 = ssub.s32 1, %s12
  %s15 = scalar_select 0, %s14, %s12
  $region1: #{embedding_model_forward.1} parent=0
    #allocation11 [shape = 'u8[65536]{0}', space=vmem, size = 0x10000, scoped, tag = 'input window, operand 7, single buffered']
    #allocation12 [shape = 's32[2]{0}', space=sflag, size = 0x8, scoped, tag = 'scoped memory for embedding_model_forward.1']
    #allocation13 [shape = 's32[2]{0}', space=sflag, size = 0x8, scoped, tag = 'scoped memory for embedding_model_forward.1']
    #allocation14 [shape = 'u8[65536]{0}', space=vmem, size = 0x10000, scoped, tag = 'input window, operand 8, single buffered']
    #allocation15 [shape = 's32[1]{0}', space=sflag, size = 0x4, scoped, tag = 'scoped memory for embedding_model_forward.1']
    #allocation16 [shape = 'u8[1024]{0}', space=vmem, size = 0x400, scoped, tag = 'output window, operand 0']
    %16 = vsyncpa [#allocation12], 0
    %17 = vsyncpa [#allocation15], 0
    %18 = vsyncpa [#allocation13], 0
    %s19 = scalar_lea.sflag [#allocation13], 1
    %20 = vsyncpa %s19, 0
    loop: start=0, step=1, limit=4
    $region2: #{embedding_model_forward.1} parent=1 // loop_pre_header
      _
    $region3: #{embedding_model_forward.1} parent=1 // loop_header
      %s22 = sphi 0, %s26
      %p23 = scmp.ge.s32.totalorder %s22, 4
      %s32 = sphi 0, %s34
      %s35 = sphi 0, %s32
      %s36 = sphi 0, %s35
      %s52 = sphi 0, %s36
      %s56 = sphi 0, %s56
      %s58 = sphi 0, %s56
      %s59 = sphi 0, %s58
      %s73 = sphi 0, %s59
      %s77 = sphi 0, %s77
      %s79 = sphi 0, %s77
      %s80 = sphi 0, %s79
      %s94 = sphi 0, %s80
      %s98 = sphi 0, %s98
      %s100 = sphi 0, %s98
      %s101 = sphi 0, %s100
      %s115 = sphi 0, %s101
      %s119 = sphi 0, %s119
      %s121 = sphi 0, %s119
      %s122 = sphi 0, %s121
      %s136 = sphi 0, %s122
      %s140 = sphi 0, %s140
      %s142 = sphi 0, %s140
      %s143 = sphi 0, %s142
      %s157 = sphi 0, %s143
      %s161 = sphi 0, %s161
      %s163 = sphi 0, %s161
      %s164 = sphi 0, %s163
      %s178 = sphi 0, %s164
      %s182 = sphi 0, %s182
      %s184 = sphi 0, %s182
      %s185 = sphi 0, %s184
      %s199 = sphi 0, %s185
      %s203 = sphi 0, %s203
      %s205 = sphi 0, %s203
      %s206 = sphi 0, %s205
      %s220 = sphi 0, %s206
      %s224 = sphi 0, %s224
      %s226 = sphi 0, %s224
      %s227 = sphi 0, %s226
      %s241 = sphi 0, %s227
      %s245 = sphi 0, %s245
      %s247 = sphi 0, %s245
      %s248 = sphi 0, %s247
      %s262 = sphi 0, %s248
      %s268 = sphi 0, %s270
      %s271 = sphi 0, %s268
      %s272 = sphi 0, %s271
      %s288 = sphi 0, %s272
    $region4: #{embedding_model_forward.1} parent=1 // loop_header_branch
      %25 = sbr.rel (%p23) target = $region8
    $region5: #{embedding_model_forward.1} parent=1 // loop_body
      %s27 = ssub.s32 %s22, 1
      %s28 = ssub.s32 %s22, 2
      %s29 = sadd.s32 %s22, 1
      %s30 = ssub.s32 %s22, %s29
      %p31 = scmp.eq.s32.totalorder %s30, 0
      %s33 = sadd.s32 %s32, 1
      %s34 = scalar_select %p31, %s32, %s33
      %p37 = pneg %p31
      %p38 = scmp.eq.s32.totalorder %s22, 1
      %p39 = por %p37, %p38
      %p40 = scmp.ne.s32.totalorder %s32, %s35
      %p41 = scmp.eq.s32.totalorder %s22, 0
      %p42 = por %p40, %p41
      %p43 = scmp.ne.s32.totalorder %s32, %s35
      %p44 = scmp.eq.s32.totalorder %s27, 1
      %p45 = por %p43, %p44
      %p46 = scmp.ne.s32.totalorder %s35, %s36
      %p47 = scmp.eq.s32.totalorder %s27, 0
      %p48 = por %p46, %p47
      %p49 = scmp.ne.s32.totalorder %s35, %s36
      %p50 = scmp.eq.s32.totalorder %s28, 1
      %p51 = por %p49, %p50
      %p53 = scmp.ne.s32.totalorder %s36, %s52
      %p54 = scmp.eq.s32.totalorder %s28, 0
      %p55 = por %p53, %p54
      %s57 = sadd.s32 %s56, 1
      %p60 = scmp.eq.s32.totalorder %s22, 1
      %p61 = scmp.ne.s32.totalorder %s56, %s58
      %p62 = scmp.eq.s32.totalorder %s22, 0
      %p63 = por %p61, %p62
      %p64 = scmp.ne.s32.totalorder %s56, %s58
      %p65 = scmp.eq.s32.totalorder %s27, 1
      %p66 = por %p64, %p65
      %p67 = scmp.ne.s32.totalorder %s58, %s59
      %p68 = scmp.eq.s32.totalorder %s27, 0
      %p69 = por %p67, %p68
      %p70 = scmp.ne.s32.totalorder %s58, %s59
      %p71 = scmp.eq.s32.totalorder %s28, 1
      %p72 = por %p70, %p71
      %p74 = scmp.ne.s32.totalorder %s59, %s73
      %p75 = scmp.eq.s32.totalorder %s28, 0
      %p76 = por %p74, %p75
      %s78 = sadd.s32 %s77, 1
      %p81 = scmp.eq.s32.totalorder %s22, 1
      %p82 = scmp.ne.s32.totalorder %s77, %s79
      %p83 = scmp.eq.s32.totalorder %s22, 0
      %p84 = por %p82, %p83
      %p85 = scmp.ne.s32.totalorder %s77, %s79
      %p86 = scmp.eq.s32.totalorder %s27, 1
      %p87 = por %p85, %p86
      %p88 = scmp.ne.s32.totalorder %s79, %s80
      %p89 = scmp.eq.s32.totalorder %s27, 0
      %p90 = por %p88, %p89
      %p91 = scmp.ne.s32.totalorder %s79, %s80
      %p92 = scmp.eq.s32.totalorder %s28, 1
      %p93 = por %p91, %p92
      %p95 = scmp.ne.s32.totalorder %s80, %s94
      %p96 = scmp.eq.s32.totalorder %s28, 0
      %p97 = por %p95, %p96
      %s99 = sadd.s32 %s98, 1
      %p102 = scmp.eq.s32.totalorder %s22, 1
      %p103 = scmp.ne.s32.totalorder %s98, %s100
      %p104 = scmp.eq.s32.totalorder %s22, 0
      %p105 = por %p103, %p104
      %p106 = scmp.ne.s32.totalorder %s98, %s100
      %p107 = scmp.eq.s32.totalorder %s27, 1
      %p108 = por %p106, %p107
      %p109 = scmp.ne.s32.totalorder %s100, %s101
      %p110 = scmp.eq.s32.totalorder %s27, 0
      %p111 = por %p109, %p110
      %p112 = scmp.ne.s32.totalorder %s100, %s101
      %p113 = scmp.eq.s32.totalorder %s28, 1
      %p114 = por %p112, %p113
      %p116 = scmp.ne.s32.totalorder %s101, %s115
      %p117 = scmp.eq.s32.totalorder %s28, 0
      %p118 = por %p116, %p117
      %s120 = sadd.s32 %s119, 1
      %p123 = scmp.eq.s32.totalorder %s22, 1
      %p124 = scmp.ne.s32.totalorder %s119, %s121
      %p125 = scmp.eq.s32.totalorder %s22, 0
      %p126 = por %p124, %p125
      %p127 = scmp.ne.s32.totalorder %s119, %s121
      %p128 = scmp.eq.s32.totalorder %s27, 1
      %p129 = por %p127, %p128
      %p130 = scmp.ne.s32.totalorder %s121, %s122
      %p131 = scmp.eq.s32.totalorder %s27, 0
      %p132 = por %p130, %p131
      %p133 = scmp.ne.s32.totalorder %s121, %s122
      %p134 = scmp.eq.s32.totalorder %s28, 1
      %p135 = por %p133, %p134
      %p137 = scmp.ne.s32.totalorder %s122, %s136
      %p138 = scmp.eq.s32.totalorder %s28, 0
      %p139 = por %p137, %p138
      %s141 = sadd.s32 %s140, 1
      %p144 = scmp.eq.s32.totalorder %s22, 1
      %p145 = scmp.ne.s32.totalorder %s140, %s142
      %p146 = scmp.eq.s32.totalorder %s22, 0
      %p147 = por %p145, %p146
      %p148 = scmp.ne.s32.totalorder %s140, %s142
      %p149 = scmp.eq.s32.totalorder %s27, 1
      %p150 = por %p148, %p149
      %p151 = scmp.ne.s32.totalorder %s142, %s143
      %p152 = scmp.eq.s32.totalorder %s27, 0
      %p153 = por %p151, %p152
      %p154 = scmp.ne.s32.totalorder %s142, %s143
      %p155 = scmp.eq.s32.totalorder %s28, 1
      %p156 = por %p154, %p155
      %p158 = scmp.ne.s32.totalorder %s143, %s157
      %p159 = scmp.eq.s32.totalorder %s28, 0
      %p160 = por %p158, %p159
      %s162 = sadd.s32 %s161, 1
      %p165 = scmp.eq.s32.totalorder %s22, 1
      %p166 = scmp.ne.s32.totalorder %s161, %s163
      %p167 = scmp.eq.s32.totalorder %s22, 0
      %p168 = por %p166, %p167
      %p169 = scmp.ne.s32.totalorder %s161, %s163
      %p170 = scmp.eq.s32.totalorder %s27, 1
      %p171 = por %p169, %p170
      %p172 = scmp.ne.s32.totalorder %s163, %s164
      %p173 = scmp.eq.s32.totalorder %s27, 0
      %p174 = por %p172, %p173
      %p175 = scmp.ne.s32.totalorder %s163, %s164
      %p176 = scmp.eq.s32.totalorder %s28, 1
      %p177 = por %p175, %p176
      %p179 = scmp.ne.s32.totalorder %s164, %s178
      %p180 = scmp.eq.s32.totalorder %s28, 0
      %p181 = por %p179, %p180
      %s183 = sadd.s32 %s182, 1
      %p186 = scmp.eq.s32.totalorder %s22, 1
      %p187 = scmp.ne.s32.totalorder %s182, %s184
      %p188 = scmp.eq.s32.totalorder %s22, 0
      %p189 = por %p187, %p188
      %p190 = scmp.ne.s32.totalorder %s182, %s184
      %p191 = scmp.eq.s32.totalorder %s27, 1
      %p192 = por %p190, %p191
      %p193 = scmp.ne.s32.totalorder %s184, %s185
      %p194 = scmp.eq.s32.totalorder %s27, 0
      %p195 = por %p193, %p194
      %p196 = scmp.ne.s32.totalorder %s184, %s185
      %p197 = scmp.eq.s32.totalorder %s28, 1
      %p198 = por %p196, %p197
      %p200 = scmp.ne.s32.totalorder %s185, %s199
      %p201 = scmp.eq.s32.totalorder %s28, 0
      %p202 = por %p200, %p201
      %s204 = sadd.s32 %s203, 1
      %p207 = scmp.eq.s32.totalorder %s22, 1
      %p208 = scmp.ne.s32.totalorder %s203, %s205
      %p209 = scmp.eq.s32.totalorder %s22, 0
      %p210 = por %p208, %p209
      %p211 = scmp.ne.s32.totalorder %s203, %s205
      %p212 = scmp.eq.s32.totalorder %s27, 1
      %p213 = por %p211, %p212
      %p214 = scmp.ne.s32.totalorder %s205, %s206
      %p215 = scmp.eq.s32.totalorder %s27, 0
      %p216 = por %p214, %p215
      %p217 = scmp.ne.s32.totalorder %s205, %s206
      %p218 = scmp.eq.s32.totalorder %s28, 1
      %p219 = por %p217, %p218
      %p221 = scmp.ne.s32.totalorder %s206, %s220
      %p222 = scmp.eq.s32.totalorder %s28, 0
      %p223 = por %p221, %p222
      %s225 = sadd.s32 %s224, 1
      %p228 = scmp.eq.s32.totalorder %s22, 1
      %p229 = scmp.ne.s32.totalorder %s224, %s226
      %p230 = scmp.eq.s32.totalorder %s22, 0
      %p231 = por %p229, %p230
      %p232 = scmp.ne.s32.totalorder %s224, %s226
      %p233 = scmp.eq.s32.totalorder %s27, 1
      %p234 = por %p232, %p233
      %p235 = scmp.ne.s32.totalorder %s226, %s227
      %p236 = scmp.eq.s32.totalorder %s27, 0
      %p237 = por %p235, %p236
      %p238 = scmp.ne.s32.totalorder %s226, %s227
      %p239 = scmp.eq.s32.totalorder %s28, 1
      %p240 = por %p238, %p239
      %p242 = scmp.ne.s32.totalorder %s227, %s241
      %p243 = scmp.eq.s32.totalorder %s28, 0
      %p244 = por %p242, %p243
      %s246 = sadd.s32 %s245, 1
      %p249 = scmp.eq.s32.totalorder %s22, 1
      %p250 = scmp.ne.s32.totalorder %s245, %s247
      %p251 = scmp.eq.s32.totalorder %s22, 0
      %p252 = por %p250, %p251
      %p253 = scmp.ne.s32.totalorder %s245, %s247
      %p254 = scmp.eq.s32.totalorder %s27, 1
      %p255 = por %p253, %p254
      %p256 = scmp.ne.s32.totalorder %s247, %s248
      %p257 = scmp.eq.s32.totalorder %s27, 0
      %p258 = por %p256, %p257
      %p259 = scmp.ne.s32.totalorder %s247, %s248
      %p260 = scmp.eq.s32.totalorder %s28, 1
      %p261 = por %p259, %p260
      %p263 = scmp.ne.s32.totalorder %s248, %s262
      %p264 = scmp.eq.s32.totalorder %s28, 0
      %p265 = por %p263, %p264
      %s266 = ssub.s32 %s22, %s29
      %p267 = scmp.eq.s32.totalorder %s266, 0
      %s269 = sadd.s32 %s268, 1
      %s270 = scalar_select %p267, %s268, %s269
      %p273 = pneg %p267
      %p274 = scmp.eq.s32.totalorder %s22, 1
      %p275 = por %p273, %p274
      %p276 = scmp.ne.s32.totalorder %s268, %s271
      %p277 = scmp.eq.s32.totalorder %s22, 0
      %p278 = por %p276, %p277
      %p279 = scmp.ne.s32.totalorder %s268, %s271
      %p280 = scmp.eq.s32.totalorder %s27, 1
      %p281 = por %p279, %p280
      %p282 = scmp.ne.s32.totalorder %s271, %s272
      %p283 = scmp.eq.s32.totalorder %s27, 0
      %p284 = por %p282, %p283
      %p285 = scmp.ne.s32.totalorder %s271, %s272
      %p286 = scmp.eq.s32.totalorder %s28, 1
      %p287 = por %p285, %p286
      %p289 = scmp.ne.s32.totalorder %s272, %s288
      %p290 = scmp.eq.s32.totalorder %s28, 0
      %p291 = por %p289, %p290
      %p292 = scmp.le.s32.totalorder 1, %s22
      %p293 = scmp.lt.s32.totalorder %s22, 3
      %p294 = pnand %p292, %p293
      %p295 = pneg %p294
      // Predicated region
      $region9: #{embedding_model_forward.1} parent=5 // pred_check
        _
      $region10: #{embedding_model_forward.1} parent=5 // pred_check_branch
        %297 = sbr.rel (%p294) target = $region12
      $region11: #{embedding_model_forward.1} parent=5 // pred_region
        %s298 = ssub.s32 %s22, 1
        // Predicated region
        $region13: #{embedding_model_forward.1} parent=11 // pred_check
          %p299 = pneg %p69
        $region14: #{embedding_model_forward.1} parent=11 // pred_check_branch
          %301 = sbr.rel (%p299) target = $region16
        $region15: #{embedding_model_forward.1} parent=11 // pred_region
          _
        $region16: #{embedding_model_forward.1} parent=11 // pred_fallthru
          _
        // Predicated region
        $region17: #{embedding_model_forward.1} parent=11 // pred_check
          %p302 = pneg %p90
        $region18: #{embedding_model_forward.1} parent=11 // pred_check_branch
          %304 = sbr.rel (%p302) target = $region20
        $region19: #{embedding_model_forward.1} parent=11 // pred_region
          _
        $region20: #{embedding_model_forward.1} parent=11 // pred_fallthru
          _
        // Predicated region
        $region21: #{embedding_model_forward.1} parent=11 // pred_check
          %p305 = pneg %p111
        $region22: #{embedding_model_forward.1} parent=11 // pred_check_branch
          %307 = sbr.rel (%p305) target = $region24
        $region23: #{embedding_model_forward.1} parent=11 // pred_region
          _
        $region24: #{embedding_model_forward.1} parent=11 // pred_fallthru
          _
        // Predicated region
        $region25: #{embedding_model_forward.1} parent=11 // pred_check
          %p308 = pneg %p132
        $region26: #{embedding_model_forward.1} parent=11 // pred_check_branch
          %310 = sbr.rel (%p308) target = $region28
        $region27: #{embedding_model_forward.1} parent=11 // pred_region
          _
        $region28: #{embedding_model_forward.1} parent=11 // pred_fallthru
          _
        // Predicated region
        $region29: #{embedding_model_forward.1} parent=11 // pred_check
          %p311 = pneg %p153
        $region30: #{embedding_model_forward.1} parent=11 // pred_check_branch
          %313 = sbr.rel (%p311) target = $region32
        $region31: #{embedding_model_forward.1} parent=11 // pred_region
          _
        $region32: #{embedding_model_forward.1} parent=11 // pred_fallthru
          _
        // Predicated region
        $region33: #{embedding_model_forward.1} parent=11 // pred_check
          %p314 = pneg %p174
        $region34: #{embedding_model_forward.1} parent=11 // pred_check_branch
          %316 = sbr.rel (%p314) target = $region36
        $region35: #{embedding_model_forward.1} parent=11 // pred_region
          _
        $region36: #{embedding_model_forward.1} parent=11 // pred_fallthru
          _
        // Predicated region
        $region37: #{embedding_model_forward.1} parent=11 // pred_check
          %p317 = pneg %p195
        $region38: #{embedding_model_forward.1} parent=11 // pred_check_branch
          %319 = sbr.rel (%p317) target = $region40
        $region39: #{embedding_model_forward.1} parent=11 // pred_region
          %321 = vsyncadd [#allocation12], 0
          %s322 = sshll.u32 %s7, 4
          %s323 = int_to_ptr.hbm [resolvable:$true] %s322
          %s324 = sshll.u32 [#allocation11], 4
          %s325 = int_to_ptr.vmem [resolvable:$true] %s324
          %330 = dma.hbm_to_vmem [thread:$0]  %s323, 2048, %s325, [#allocation12], 256, 256, 16
        $region40: #{embedding_model_forward.1} parent=11 // pred_fallthru
          _
        // Predicated region
        $region41: #{embedding_model_forward.1} parent=11 // pred_check
          %p331 = pneg %p216
        $region42: #{embedding_model_forward.1} parent=11 // pred_check_branch
          %333 = sbr.rel (%p331) target = $region44
        $region43: #{embedding_model_forward.1} parent=11 // pred_region
          %335 = vsyncadd [#allocation15], 0
          %s336 = sshll.u32 %s8, 4
          %s337 = int_to_ptr.hbm [resolvable:$true] %s336
          %s338 = sshll.u32 [#allocation14], 4
          %s339 = int_to_ptr.vmem [resolvable:$true] %s338
          %344 = dma.hbm_to_vmem [thread:$0]  %s337, 2048, %s339, [#allocation15], 256, 256, 16
        $region44: #{embedding_model_forward.1} parent=11 // pred_fallthru
          _
        // Predicated region
        $region45: #{embedding_model_forward.1} parent=11 // pred_check
          %p345 = pneg %p237
        $region46: #{embedding_model_forward.1} parent=11 // pred_check_branch
          %347 = sbr.rel (%p345) target = $region48
        $region47: #{embedding_model_forward.1} parent=11 // pred_region
          _
        $region48: #{embedding_model_forward.1} parent=11 // pred_fallthru
          _
        // Predicated region
        $region49: #{embedding_model_forward.1} parent=11 // pred_check
          %p348 = pneg %p258
        $region50: #{embedding_model_forward.1} parent=11 // pred_check_branch
          %350 = sbr.rel (%p348) target = $region52
        $region51: #{embedding_model_forward.1} parent=11 // pred_region
          _
        $region52: #{embedding_model_forward.1} parent=11 // pred_fallthru
          _
      $region12: #{embedding_model_forward.1} parent=5 // pred_fallthru
        _
      %p351 = scmp.lt.s32.totalorder %s22, 2
      // Predicated region
      $region53: #{embedding_model_forward.1} parent=5 // pred_check
        %p352 = pneg %p351
      $region54: #{embedding_model_forward.1} parent=5 // pred_check_branch
        %354 = sbr.rel (%p352) target = $region56
      $region55: #{embedding_model_forward.1} parent=5 // pred_region
        // Predicated region
        $region57: #{embedding_model_forward.1} parent=55 // pred_check
          %p355 = pneg %p42
        $region58: #{embedding_model_forward.1} parent=55 // pred_check_branch
          %357 = sbr.rel (%p355) target = $region60
        $region59: #{embedding_model_forward.1} parent=55 // pred_region
          %p358 = scmp.lt.s32.totalorder %s22, 1
          %s359 = scalar_select %p358, %s22, 1
          %s360 = smul.addr %s359, 32
          %s361 = smul.addr %s360, 8
          %s362 = scalar_lea.vmem %s0, %s361
        $region60: #{embedding_model_forward.1} parent=55 // pred_fallthru
          _
      $region56: #{embedding_model_forward.1} parent=5 // pred_fallthru
        _
      %p363 = scmp.le.s32.totalorder 1, %s22
      %p364 = scmp.lt.s32.totalorder %s22, 3
      %p365 = pnand %p363, %p364
      %p366 = pneg %p365
      // Predicated region
      $region61: #{embedding_model_forward.1} parent=5 // pred_check
        _
      $region62: #{embedding_model_forward.1} parent=5 // pred_check_branch
        %368 = sbr.rel (%p365) target = $region64
      $region63: #{embedding_model_forward.1} parent=5 // pred_region
        %s369 = ssub.s32 %s22, 1
        // Predicated region
        $region65: #{embedding_model_forward.1} parent=63 // pred_check
          %p370 = pneg %p195
        $region66: #{embedding_model_forward.1} parent=63 // pred_check_branch
          %372 = sbr.rel (%p370) target = $region68
        $region67: #{embedding_model_forward.1} parent=63 // pred_region
          %374 = dma.done [#allocation12], 2048
        $region68: #{embedding_model_forward.1} parent=63 // pred_fallthru
          _
        // Predicated region
        $region69: #{embedding_model_forward.1} parent=63 // pred_check
          %p375 = pneg %p216
        $region70: #{embedding_model_forward.1} parent=63 // pred_check_branch
          %377 = sbr.rel (%p375) target = $region72
        $region71: #{embedding_model_forward.1} parent=63 // pred_region
          %379 = dma.done [#allocation15], 2048
        $region72: #{embedding_model_forward.1} parent=63 // pred_fallthru
          _
        %p380 = scmp.lt.s32.totalorder %s27, 1
        %s381 = scalar_select %p380, %s27, 1
        %s382 = smul.addr %s381, 32
        %s383 = smul.addr %s382, 8
        %s384 = scalar_lea.vmem %s0, %s383
        %p385 = pneg %p48
        %p386 = pneg %p45
        %p387 = pneg %p69
        %p388 = pneg %p66
        %p389 = pneg %p90
        %p390 = pneg %p87
        %p391 = pneg %p111
        %p392 = pneg %p108
        %p393 = pneg %p132
        %p394 = pneg %p129
        %p395 = pneg %p153
        %p396 = pneg %p150
        %p397 = pneg %p174
        %p398 = pneg %p171
        %p399 = pneg %p195
        %p400 = pneg %p192
        %p401 = pneg %p216
        %p402 = pneg %p213
        %p403 = pneg %p237
        %p404 = pneg %p234
        %p405 = pneg %p258
        %p406 = pneg %p255
        %p407 = pneg %p284
        %p408 = pneg %p281
        %s409 = sand.u32 %s271, 1
        %s410 = scalar_lea.sflag [#allocation13], %s409
        %s411 = sand.u32 %s271, 1
        %s412 = scalar_lea.vmem [#allocation16], %s411
        %p413 = scmp.lt.s32.totalorder %s27, 1
        %s414 = scalar_select %p413, %s27, 1
        %s415 = smul.addr %s414, 32
        %s416 = smul.addr %s415, 8
        %s417 = scalar_lea.vmem %s0, %s416
        %vm418 = vcmask 7168
        %419 = vst.msk [vmem:[#allocation2] sm:$0xff] %vm418, 0.0
        %420 = vst.msk [vmem:[#allocation2 + $0x8] sm:$0xff] %vm418, 0.0
        %vm421 = vcmask 2048
        %422 = vst.msk [vmem:[#allocation2 + $0x10] sm:$0x7] %vm421, 0.0
        %vm423 = vcmask 1024
        %424 = vst.msk [vmem:[#allocation2 + $0x23] sm:$0x3] %vm423, 0.0
        %425 = vst.msk [vmem:[#allocation2 + $0x35] sm:$0x3] %vm423, 0.0
        %426 = vst.msk [vmem:[#allocation2 + $0x47] sm:$0x3] %vm423, 0.0
        %427 = vst.msk [vmem:[#allocation2 + $0x59] sm:$0x3] %vm423, 0.0
        %428 = vst.msk [vmem:[#allocation2 + $0x6b] sm:$0x3] %vm423, 0.0
        %429 = vst.msk [vmem:[#allocation2 + $0x7d] sm:$0x3] %vm423, 0.0
        %430 = vst.msk [vmem:[#allocation2 + $0x8f] sm:$0x3] %vm423, 0.0
        %431 = vst.msk [vmem:[#allocation2 + $0xa1] sm:$0x3] %vm423, 0.0
        %432 = vst.msk [vmem:[#allocation2 + $0xb3] sm:$0x3] %vm423, 0.0
        %433 = vst.msk [vmem:[#allocation2 + $0xc5] sm:$0x3] %vm423, 0.0
        %434 = vst.msk [vmem:[#allocation2 + $0xd7] sm:$0x3] %vm423, 0.0
        %435 = vst.msk [vmem:[#allocation2 + $0xe9] sm:$0x3] %vm423, 0.0
        %436 = vst.msk [vmem:[#allocation2 + $0xfb] sm:$0x3] %vm423, 0.0
        %437 = vst.msk [vmem:[#allocation2 + $0x10d] sm:$0x3] %vm423, 0.0
        %438 = vst.msk [vmem:[#allocation2 + $0x11f] sm:$0x3] %vm423, 0.0
        %439 = vst.msk [vmem:[#allocation2 + $0x131] sm:$0xff] %vm418, 0.0
        %440 = vst.msk [vmem:[#allocation2 + $0x139] sm:$0xff] %vm418, 0.0
        %441 = vst.msk [vmem:[#allocation2 + $0x141] sm:$0x7] %vm421, 0.0
        %vm442 = vcmask 130048
        %443 = vst.msk [vmem:[#allocation3] sm:$0xff] %vm442, 0.0
        %vm444 = vcmask 124928
        %445 = vst.msk [vmem:[#allocation3 + $0x8] sm:$0x7] %vm444, 0.0
        %vm446 = vcmask 123904
        %447 = vst.msk [vmem:[#allocation3 + $0x13] sm:$0x3] %vm446, 0.0
        %448 = vst.msk [vmem:[#allocation3 + $0x1d] sm:$0x3] %vm446, 0.0
        %449 = vst.msk [vmem:[#allocation3 + $0x27] sm:$0x3] %vm446, 0.0
        %450 = vst.msk [vmem:[#allocation3 + $0x31] sm:$0x3] %vm446, 0.0
        %451 = vst.msk [vmem:[#allocation3 + $0x3b] sm:$0x3] %vm446, 0.0
        %452 = vst.msk [vmem:[#allocation3 + $0x45] sm:$0x3] %vm446, 0.0
        %453 = vst.msk [vmem:[#allocation3 + $0x4f] sm:$0x3] %vm446, 0.0
        %454 = vst.msk [vmem:[#allocation3 + $0x59] sm:$0xff] %vm442, 0.0
        %455 = vst.msk [vmem:[#allocation3 + $0x61] sm:$0x7] %vm444, 0.0
        %vm456 = vcmask 260096
        %457 = vst.msk [vmem:[#allocation4] sm:$0x7f] %vm456, 0.0
        %vm458 = vcmask 254976
        %459 = vst.msk [vmem:[#allocation4 + $0xb] sm:$0x3] %vm458, 0.0
        %460 = vst.msk [vmem:[#allocation4 + $0x11] sm:$0x3] %vm458, 0.0
        %461 = vst.msk [vmem:[#allocation4 + $0x17] sm:$0x3] %vm458, 0.0
        %462 = vst.msk [vmem:[#allocation4 + $0x1d] sm:$0x7f] %vm456, 0.0
        %v463 = vld [vmem:[%s417] sm:$0xff]
        %v464 = vld [vmem:[%s417 + $0x8] sm:$0xff]
        %465 = vst.msk [vmem:[#allocation2 + $0x13] sm:$0xff] %vm418, %v463
        %466 = vst.msk [vmem:[#allocation2 + $0x1b] sm:$0xff] %vm418, %v464
        %v467 = vld [vmem:[%s417 + $0x10] sm:$0xff]
        %v468 = vld [vmem:[%s417 + $0x18] sm:$0xff]
        %469 = vst.msk [vmem:[#allocation2 + $0x25] sm:$0xff] %vm418, %v467
        %470 = vst.msk [vmem:[#allocation2 + $0x2d] sm:$0xff] %vm418, %v468
        %v471 = vld [vmem:[%s417 + $0x20] sm:$0xff]
        %v472 = vld [vmem:[%s417 + $0x28] sm:$0xff]
        %473 = vst.msk [vmem:[#allocation2 + $0x37] sm:$0xff] %vm418, %v471
        %474 = vst.msk [vmem:[#allocation2 + $0x3f] sm:$0xff] %vm418, %v472
        %v475 = vld [vmem:[%s417 + $0x30] sm:$0xff]
        %v476 = vld [vmem:[%s417 + $0x38] sm:$0xff]
        %477 = vst.msk [vmem:[#allocation2 + $0x49] sm:$0xff] %vm418, %v475
        %478 = vst.msk [vmem:[#allocation2 + $0x51] sm:$0xff] %vm418, %v476
        %v479 = vld [vmem:[%s417 + $0x40] sm:$0xff]
        %v480 = vld [vmem:[%s417 + $0x48] sm:$0xff]
        %481 = vst.msk [vmem:[#allocation2 + $0x5b] sm:$0xff] %vm418, %v479
        %482 = vst.msk [vmem:[#allocation2 + $0x63] sm:$0xff] %vm418, %v480
        %v483 = vld [vmem:[%s417 + $0x50] sm:$0xff]
        %v484 = vld [vmem:[%s417 + $0x58] sm:$0xff]
        %485 = vst.msk [vmem:[#allocation2 + $0x6d] sm:$0xff] %vm418, %v483
        %486 = vst.msk [vmem:[#allocation2 + $0x75] sm:$0xff] %vm418, %v484
        %v487 = vld [vmem:[%s417 + $0x60] sm:$0xff]
        %v488 = vld [vmem:[%s417 + $0x68] sm:$0xff]
        %489 = vst.msk [vmem:[#allocation2 + $0x7f] sm:$0xff] %vm418, %v487
        %490 = vst.msk [vmem:[#allocation2 + $0x87] sm:$0xff] %vm418, %v488
        %v491 = vld [vmem:[%s417 + $0x70] sm:$0xff]
        %v492 = vld [vmem:[%s417 + $0x78] sm:$0xff]
        %493 = vst.msk [vmem:[#allocation2 + $0x91] sm:$0xff] %vm418, %v491
        %494 = vst.msk [vmem:[#allocation2 + $0x99] sm:$0xff] %vm418, %v492
        %v495 = vld [vmem:[%s417 + $0x80] sm:$0xff]
        %v496 = vld [vmem:[%s417 + $0x88] sm:$0xff]
        %497 = vst.msk [vmem:[#allocation2 + $0xa3] sm:$0xff] %vm418, %v495
        %498 = vst.msk [vmem:[#allocation2 + $0xab] sm:$0xff] %vm418, %v496
        %v499 = vld [vmem:[%s417 + $0x90] sm:$0xff]
        %v500 = vld [vmem:[%s417 + $0x98] sm:$0xff]
        %501 = vst.msk [vmem:[#allocation2 + $0xb5] sm:$0xff] %vm418, %v499
        %502 = vst.msk [vmem:[#allocation2 + $0xbd] sm:$0xff] %vm418, %v500
        %v503 = vld [vmem:[%s417 + $0xa0] sm:$0xff]
        %v504 = vld [vmem:[%s417 + $0xa8] sm:$0xff]
        %505 = vst.msk [vmem:[#allocation2 + $0xc7] sm:$0xff] %vm418, %v503
        %506 = vst.msk [vmem:[#allocation2 + $0xcf] sm:$0xff] %vm418, %v504
        %v507 = vld [vmem:[%s417 + $0xb0] sm:$0xff]
        %v508 = vld [vmem:[%s417 + $0xb8] sm:$0xff]
        %509 = vst.msk [vmem:[#allocation2 + $0xd9] sm:$0xff] %vm418, %v507
        %510 = vst.msk [vmem:[#allocation2 + $0xe1] sm:$0xff] %vm418, %v508
        %v511 = vld [vmem:[%s417 + $0xc0] sm:$0xff]
        %v512 = vld [vmem:[%s417 + $0xc8] sm:$0xff]
        %513 = vst.msk [vmem:[#allocation2 + $0xeb] sm:$0xff] %vm418, %v511
        %514 = vst.msk [vmem:[#allocation2 + $0xf3] sm:$0xff] %vm418, %v512
        %v515 = vld [vmem:[%s417 + $0xd0] sm:$0xff]
        %v516 = vld [vmem:[%s417 + $0xd8] sm:$0xff]
        %517 = vst.msk [vmem:[#allocation2 + $0xfd] sm:$0xff] %vm418, %v515
        %518 = vst.msk [vmem:[#allocation2 + $0x105] sm:$0xff] %vm418, %v516
        %v519 = vld [vmem:[%s417 + $0xe0] sm:$0xff]
        %v520 = vld [vmem:[%s417 + $0xe8] sm:$0xff]
        %521 = vst.msk [vmem:[#allocation2 + $0x10f] sm:$0xff] %vm418, %v519
        %522 = vst.msk [vmem:[#allocation2 + $0x117] sm:$0xff] %vm418, %v520
        %v523 = vld [vmem:[%s417 + $0xf0] sm:$0xff]
        %v524 = vld [vmem:[%s417 + $0xf8] sm:$0xff]
        %525 = vst.msk [vmem:[#allocation2 + $0x121] sm:$0xff] %vm418, %v523
        %526 = vst.msk [vmem:[#allocation2 + $0x129] sm:$0xff] %vm418, %v524
        %v527 = vld [vmem:[#allocation2] sm:$0xff]
        %v528 = vld [vmem:[#allocation2 + $0x8] sm:$0xff]
        %v529 = vld [vmem:[#allocation2 + $0x10] sm:$0xff]
        %v530 = vld [vmem:[#allocation2 + $0x18] sm:$0xff]
        %v531 = vld [vmem:[#allocation2 + $0x20] sm:$0xff]
        %v532 = vld [vmem:[#allocation2 + $0x28] sm:$0xff]
        %v533 = vld [vmem:[#allocation2 + $0x30] sm:$0xff]
        %v534 = vld [vmem:[#allocation2 + $0x38] sm:$0xff]
        %v535 = vld [vmem:[#allocation2 + $0x40] sm:$0xff]
        %v536 = vld [vmem:[#allocation2 + $0x48] sm:$0xff]
        %v537 = vld [vmem:[#allocation2 + $0x50] sm:$0xff]
        %v538 = vld [vmem:[#allocation2 + $0x58] sm:$0xff]
        %v539 = vld [vmem:[#allocation2 + $0x60] sm:$0xff]
        %v540 = vld [vmem:[#allocation2 + $0x68] sm:$0xff]
        %v541 = vld [vmem:[#allocation2 + $0x70] sm:$0xff]
        %v542 = vld [vmem:[#allocation2 + $0x78] sm:$0xff]
        %v543 = vld [vmem:[#allocation2 + $0x80] sm:$0xff]
        %v544 = vld [vmem:[#allocation2 + $0x88] sm:$0xff]
        %v545 = vld [vmem:[#allocation2 + $0x90] sm:$0xff]
        %v546 = vld [vmem:[#allocation2 + $0x98] sm:$0xff]
        %v547 = vld [vmem:[#allocation2 + $0xa0] sm:$0xff]
        %v548 = vld [vmem:[#allocation2 + $0xa8] sm:$0xff]
        %v549 = vld [vmem:[#allocation2 + $0xb0] sm:$0xff]
        %v550 = vld [vmem:[#allocation2 + $0xb8] sm:$0xff]
        %v551 = vld [vmem:[#allocation2 + $0xc0] sm:$0xff]
        %v552 = vld [vmem:[#allocation2 + $0xc8] sm:$0xff]
        %v553 = vld [vmem:[#allocation2 + $0xd0] sm:$0xff]
        %v554 = vld [vmem:[#allocation2 + $0xd8] sm:$0xff]
        %v555 = vld [vmem:[#allocation2 + $0xe0] sm:$0xff]
        %v556 = vld [vmem:[#allocation2 + $0xe8] sm:$0xff]
        %v557 = vld [vmem:[#allocation2 + $0xf0] sm:$0xff]
        %v558 = vld [vmem:[#allocation2 + $0xf8] sm:$0xff]
        %v559 = vld [vmem:[#allocation2 + $0x100] sm:$0xff]
        %v560 = vld [vmem:[#allocation2 + $0x108] sm:$0xff]
        %v561 = vld [vmem:[#allocation2 + $0x110] sm:$0xff]
        %v562 = vld [vmem:[#allocation2 + $0x118] sm:$0x3f]
        %v563 = vld [vmem:[%s1] sm:$0x1]
        %565 = vset.pattern.permute.xlu0 0
        %566 = vperm.xlu0 %565, %v527
        %v567 = vpop.permute.xlu0 %566
        %570 = vset.pattern.permute.xlu0 0
        %571 = vperm.xlu0 %570, %v528
        %v572 = vpop.permute.xlu0 %571
        %575 = vset.pattern.permute.xlu0 0
        %576 = vperm.xlu0 %575, %v529
        %v577 = vpop.permute.xlu0 %576
        %580 = vset.pattern.permute.xlu0 0
        %581 = vperm.xlu0 %580, %v530
        %v582 = vpop.permute.xlu0 %581
        %585 = vset.pattern.permute.xlu0 0
        %586 = vperm.xlu0 %585, %v531
        %v587 = vpop.permute.xlu0 %586
        %590 = vset.pattern.permute.xlu0 0
        %591 = vperm.xlu0 %590, %v532
        %v592 = vpop.permute.xlu0 %591
        %595 = vset.pattern.permute.xlu0 0
        %596 = vperm.xlu0 %595, %v533
        %v597 = vpop.permute.xlu0 %596
        %600 = vset.pattern.permute.xlu0 0
        %601 = vperm.xlu0 %600, %v534
        %v602 = vpop.permute.xlu0 %601
        %605 = vset.pattern.permute.xlu0 0
        %606 = vperm.xlu0 %605, %v535
        %v607 = vpop.permute.xlu0 %606
        %610 = vset.pattern.permute.xlu0 0
        %611 = vperm.xlu0 %610, %v536
        %v612 = vpop.permute.xlu0 %611
        %615 = vset.pattern.permute.xlu0 0
        %616 = vperm.xlu0 %615, %v537
        %v617 = vpop.permute.xlu0 %616
        %620 = vset.pattern.permute.xlu0 0
        %621 = vperm.xlu0 %620, %v538
        %v622 = vpop.permute.xlu0 %621
        %625 = vset.pattern.permute.xlu0 0
        %626 = vperm.xlu0 %625, %v539
        %v627 = vpop.permute.xlu0 %626
        %630 = vset.pattern.permute.xlu0 0
        %631 = vperm.xlu0 %630, %v540
        %v632 = vpop.permute.xlu0 %631
        %635 = vset.pattern.permute.xlu0 0
        %636 = vperm.xlu0 %635, %v541
        %v637 = vpop.permute.xlu0 %636
        %640 = vset.pattern.permute.xlu0 0
        %641 = vperm.xlu0 %640, %v542
        %v642 = vpop.permute.xlu0 %641
        %645 = vset.pattern.permute.xlu0 0
        %646 = vperm.xlu0 %645, %v543
        %v647 = vpop.permute.xlu0 %646
        %650 = vset.pattern.permute.xlu0 0
        %651 = vperm.xlu0 %650, %v544
        %v652 = vpop.permute.xlu0 %651
        %655 = vset.pattern.permute.xlu0 0
        %656 = vperm.xlu0 %655, %v545
        %v657 = vpop.permute.xlu0 %656
        %660 = vset.pattern.permute.xlu0 0
        %661 = vperm.xlu0 %660, %v546
        %v662 = vpop.permute.xlu0 %661
        %665 = vset.pattern.permute.xlu0 0
        %666 = vperm.xlu0 %665, %v547
        %v667 = vpop.permute.xlu0 %666
        %670 = vset.pattern.permute.xlu0 0
        %671 = vperm.xlu0 %670, %v548
        %v672 = vpop.permute.xlu0 %671
        %675 = vset.pattern.permute.xlu0 0
        %676 = vperm.xlu0 %675, %v549
        %v677 = vpop.permute.xlu0 %676
        %680 = vset.pattern.permute.xlu0 0
        %681 = vperm.xlu0 %680, %v550
        %v682 = vpop.permute.xlu0 %681
        %685 = vset.pattern.permute.xlu0 0
        %686 = vperm.xlu0 %685, %v551
        %v687 = vpop.permute.xlu0 %686
        %690 = vset.pattern.permute.xlu0 0
        %691 = vperm.xlu0 %690, %v552
        %v692 = vpop.permute.xlu0 %691
        %695 = vset.pattern.permute.xlu0 0
        %696 = vperm.xlu0 %695, %v553
        %v697 = vpop.permute.xlu0 %696
        %700 = vset.pattern.permute.xlu0 0
        %701 = vperm.xlu0 %700, %v554
        %v702 = vpop.permute.xlu0 %701
        %705 = vset.pattern.permute.xlu0 0
        %706 = vperm.xlu0 %705, %v555
        %v707 = vpop.permute.xlu0 %706
        %710 = vset.pattern.permute.xlu0 0
        %711 = vperm.xlu0 %710, %v556
        %v712 = vpop.permute.xlu0 %711
        %715 = vset.pattern.permute.xlu0 0
        %716 = vperm.xlu0 %715, %v557
        %v717 = vpop.permute.xlu0 %716
        %720 = vset.pattern.permute.xlu0 0
        %721 = vperm.xlu0 %720, %v558
        %v722 = vpop.permute.xlu0 %721
        %725 = vset.pattern.permute.xlu0 0
        %726 = vperm.xlu0 %725, %v559
        %v727 = vpop.permute.xlu0 %726
        %730 = vset.pattern.permute.xlu0 0
        %731 = vperm.xlu0 %730, %v560
        %v732 = vpop.permute.xlu0 %731
        %735 = vset.pattern.permute.xlu0 0
        %736 = vperm.xlu0 %735, %v561
        %v737 = vpop.permute.xlu0 %736
        %740 = vset.pattern.permute.xlu0 0
        %741 = vperm.xlu0 %740, %v562
        %v742 = vpop.permute.xlu0 %741
        %v745 = vperm.slane %v563, 0
        %v747 = vmul.f32 %v567, %v745
        %v748 = vmul.f32 %v572, %v745
        %v749 = vmul.f32 %v577, %v745
        %v750 = vmul.f32 %v582, %v745
        %v751 = vmul.f32 %v587, %v745
        %v752 = vmul.f32 %v592, %v745
        %v753 = vmul.f32 %v597, %v745
        %v754 = vmul.f32 %v602, %v745
        %v755 = vmul.f32 %v607, %v745
        %v756 = vmul.f32 %v612, %v745
        %v757 = vmul.f32 %v617, %v745
        %v758 = vmul.f32 %v622, %v745
        %v759 = vmul.f32 %v627, %v745
        %v760 = vmul.f32 %v632, %v745
        %v761 = vmul.f32 %v637, %v745
        %v762 = vmul.f32 %v642, %v745
        %v763 = vmul.f32 %v647, %v745
        %v764 = vmul.f32 %v652, %v745
        %v765 = vmul.f32 %v657, %v745
        %v766 = vmul.f32 %v662, %v745
        %v767 = vmul.f32 %v667, %v745
        %v768 = vmul.f32 %v672, %v745
        %v769 = vmul.f32 %v677, %v745
        %v770 = vmul.f32 %v682, %v745
        %v771 = vmul.f32 %v687, %v745
        %v772 = vmul.f32 %v692, %v745
        %v773 = vmul.f32 %v697, %v745
        %v774 = vmul.f32 %v702, %v745
        %v775 = vmul.f32 %v707, %v745
        %v776 = vmul.f32 %v712, %v745
        %v777 = vmul.f32 %v717, %v745
        %v778 = vmul.f32 %v722, %v745
        %v779 = vmul.f32 %v727, %v745
        %v780 = vmul.f32 %v732, %v745
        %v781 = vmul.f32 %v737, %v745
        %v782 = vmul.f32 %v742, %v745
        %v783 = vadd.f32 %v747, 0.0
        %v784 = vadd.f32 %v748, 0.0
        %v785 = vadd.f32 %v749, 0.0
        %v786 = vadd.f32 %v750, 0.0
        %v787 = vadd.f32 %v751, 0.0
        %v788 = vadd.f32 %v752, 0.0
        %v789 = vadd.f32 %v753, 0.0
        %v790 = vadd.f32 %v754, 0.0
        %v791 = vadd.f32 %v755, 0.0
        %v792 = vadd.f32 %v756, 0.0
        %v793 = vadd.f32 %v757, 0.0
        %v794 = vadd.f32 %v758, 0.0
        %v795 = vadd.f32 %v759, 0.0
        %v796 = vadd.f32 %v760, 0.0
        %v797 = vadd.f32 %v761, 0.0
        %v798 = vadd.f32 %v762, 0.0
        %v799 = vadd.f32 %v763, 0.0
        %v800 = vadd.f32 %v764, 0.0
        %v801 = vadd.f32 %v765, 0.0
        %v802 = vadd.f32 %v766, 0.0
        %v803 = vadd.f32 %v767, 0.0
        %v804 = vadd.f32 %v768, 0.0
        %v805 = vadd.f32 %v769, 0.0
        %v806 = vadd.f32 %v770, 0.0
        %v807 = vadd.f32 %v771, 0.0
        %v808 = vadd.f32 %v772, 0.0
        %v809 = vadd.f32 %v773, 0.0
        %v810 = vadd.f32 %v774, 0.0
        %v811 = vadd.f32 %v775, 0.0
        %v812 = vadd.f32 %v776, 0.0
        %v813 = vadd.f32 %v777, 0.0
        %v814 = vadd.f32 %v778, 0.0
        %v815 = vadd.f32 %v779, 0.0
        %v816 = vadd.f32 %v780, 0.0
        %v817 = vadd.f32 %v781, 0.0
        %v818 = vadd.f32 %v782, 0.0
        %v819 = vld [vmem:[#allocation2 + $0x1] sm:$0xff]
        %v820 = vld [vmem:[#allocation2 + $0x9] sm:$0xff]
        %v821 = vld [vmem:[#allocation2 + $0x11] sm:$0xff]
        %v822 = vld [vmem:[#allocation2 + $0x19] sm:$0xff]
        %v823 = vld [vmem:[#allocation2 + $0x21] sm:$0xff]
        %v824 = vld [vmem:[#allocation2 + $0x29] sm:$0xff]
        %v825 = vld [vmem:[#allocation2 + $0x31] sm:$0xff]
        %v826 = vld [vmem:[#allocation2 + $0x39] sm:$0xff]
        %v827 = vld [vmem:[#allocation2 + $0x41] sm:$0xff]
        %v828 = vld [vmem:[#allocation2 + $0x49] sm:$0xff]
        %v829 = vld [vmem:[#allocation2 + $0x51] sm:$0xff]
        %v830 = vld [vmem:[#allocation2 + $0x59] sm:$0xff]
        %v831 = vld [vmem:[#allocation2 + $0x61] sm:$0xff]
        %v832 = vld [vmem:[#allocation2 + $0x69] sm:$0xff]
        %v833 = vld [vmem:[#allocation2 + $0x71] sm:$0xff]
        %v834 = vld [vmem:[#allocation2 + $0x79] sm:$0xff]
        %v835 = vld [vmem:[#allocation2 + $0x81] sm:$0xff]
        %v836 = vld [vmem:[#allocation2 + $0x89] sm:$0xff]
        %v837 = vld [vmem:[#allocation2 + $0x91] sm:$0xff]
        %v838 = vld [vmem:[#allocation2 + $0x99] sm:$0xff]
        %v839 = vld [vmem:[#allocation2 + $0xa1] sm:$0xff]
        %v840 = vld [vmem:[#allocation2 + $0xa9] sm:$0xff]
        %v841 = vld [vmem:[#allocation2 + $0xb1] sm:$0xff]
        %v842 = vld [vmem:[#allocation2 + $0xb9] sm:$0xff]
        %v843 = vld [vmem:[#allocation2 + $0xc1] sm:$0xff]
        %v844 = vld [vmem:[#allocation2 + $0xc9] sm:$0xff]
        %v845 = vld [vmem:[#allocation2 + $0xd1] sm:$0xff]
        %v846 = vld [vmem:[#allocation2 + $0xd9] sm:$0xff]
        %v847 = vld [vmem:[#allocation2 + $0xe1] sm:$0xff]
        %v848 = vld [vmem:[#allocation2 + $0xe9] sm:$0xff]
        %v849 = vld [vmem:[#allocation2 + $0xf1] sm:$0xff]
        %v850 = vld [vmem:[#allocation2 + $0xf9] sm:$0xff]
        %v851 = vld [vmem:[#allocation2 + $0x101] sm:$0xff]
        %v852 = vld [vmem:[#allocation2 + $0x109] sm:$0xff]
        %v853 = vld [vmem:[#allocation2 + $0x111] sm:$0xff]
        %v854 = vld [vmem:[#allocation2 + $0x119] sm:$0x3f]
        %s855 = scalar_lea.vmem %s1, 1
        %v856 = vld [vmem:[%s855] sm:$0x1]
        %858 = vset.pattern.permute.xlu0 0
        %859 = vperm.xlu0 %858, %v819
        %v860 = vpop.permute.xlu0 %859
        %863 = vset.pattern.permute.xlu0 0
        %864 = vperm.xlu0 %863, %v820
        %v865 = vpop.permute.xlu0 %864
        %868 = vset.pattern.permute.xlu0 0
        %869 = vperm.xlu0 %868, %v821
        %v870 = vpop.permute.xlu0 %869
        %873 = vset.pattern.permute.xlu0 0
        %874 = vperm.xlu0 %873, %v822
        %v875 = vpop.permute.xlu0 %874
        %878 = vset.pattern.permute.xlu0 0
        %879 = vperm.xlu0 %878, %v823
        %v880 = vpop.permute.xlu0 %879
        %883 = vset.pattern.permute.xlu0 0
        %884 = vperm.xlu0 %883, %v824
        %v885 = vpop.permute.xlu0 %884
        %888 = vset.pattern.permute.xlu0 0
        %889 = vperm.xlu0 %888, %v825
        %v890 = vpop.permute.xlu0 %889
        %893 = vset.pattern.permute.xlu0 0
        %894 = vperm.xlu0 %893, %v826
        %v895 = vpop.permute.xlu0 %894
        %898 = vset.pattern.permute.xlu0 0
        %899 = vperm.xlu0 %898, %v827
        %v900 = vpop.permute.xlu0 %899
        %903 = vset.pattern.permute.xlu0 0
        %904 = vperm.xlu0 %903, %v828
        %v905 = vpop.permute.xlu0 %904
        %908 = vset.pattern.permute.xlu0 0
        %909 = vperm.xlu0 %908, %v829
        %v910 = vpop.permute.xlu0 %909
        %913 = vset.pattern.permute.xlu0 0
        %914 = vperm.xlu0 %913, %v830
        %v915 = vpop.permute.xlu0 %914
        %918 = vset.pattern.permute.xlu0 0
        %919 = vperm.xlu0 %918, %v831
        %v920 = vpop.permute.xlu0 %919
        %923 = vset.pattern.permute.xlu0 0
        %924 = vperm.xlu0 %923, %v832
        %v925 = vpop.permute.xlu0 %924
        %928 = vset.pattern.permute.xlu0 0
        %929 = vperm.xlu0 %928, %v833
        %v930 = vpop.permute.xlu0 %929
        %933 = vset.pattern.permute.xlu0 0
        %934 = vperm.xlu0 %933, %v834
        %v935 = vpop.permute.xlu0 %934
        %938 = vset.pattern.permute.xlu0 0
        %939 = vperm.xlu0 %938, %v835
        %v940 = vpop.permute.xlu0 %939
        %943 = vset.pattern.permute.xlu0 0
        %944 = vperm.xlu0 %943, %v836
        %v945 = vpop.permute.xlu0 %944
        %948 = vset.pattern.permute.xlu0 0
        %949 = vperm.xlu0 %948, %v837
        %v950 = vpop.permute.xlu0 %949
        %953 = vset.pattern.permute.xlu0 0
        %954 = vperm.xlu0 %953, %v838
        %v955 = vpop.permute.xlu0 %954
        %958 = vset.pattern.permute.xlu0 0
        %959 = vperm.xlu0 %958, %v839
        %v960 = vpop.permute.xlu0 %959
        %963 = vset.pattern.permute.xlu0 0
        %964 = vperm.xlu0 %963, %v840
        %v965 = vpop.permute.xlu0 %964
        %968 = vset.pattern.permute.xlu0 0
        %969 = vperm.xlu0 %968, %v841
        %v970 = vpop.permute.xlu0 %969
        %973 = vset.pattern.permute.xlu0 0
        %974 = vperm.xlu0 %973, %v842
        %v975 = vpop.permute.xlu0 %974
        %978 = vset.pattern.permute.xlu0 0
        %979 = vperm.xlu0 %978, %v843
        %v980 = vpop.permute.xlu0 %979
        %983 = vset.pattern.permute.xlu0 0
        %984 = vperm.xlu0 %983, %v844
        %v985 = vpop.permute.xlu0 %984
        %988 = vset.pattern.permute.xlu0 0
        %989 = vperm.xlu0 %988, %v845
        %v990 = vpop.permute.xlu0 %989
        %993 = vset.pattern.permute.xlu0 0
        %994 = vperm.xlu0 %993, %v846
        %v995 = vpop.permute.xlu0 %994
        %998 = vset.pattern.permute.xlu0 0
        %999 = vperm.xlu0 %998, %v847
        %v1000 = vpop.permute.xlu0 %999
        %1003 = vset.pattern.permute.xlu0 0
        %1004 = vperm.xlu0 %1003, %v848
        %v1005 = vpop.permute.xlu0 %1004
        %1008 = vset.pattern.permute.xlu0 0
        %1009 = vperm.xlu0 %1008, %v849
        %v1010 = vpop.permute.xlu0 %1009
        %1013 = vset.pattern.permute.xlu0 0
        %1014 = vperm.xlu0 %1013, %v850
        %v1015 = vpop.permute.xlu0 %1014
        %1018 = vset.pattern.permute.xlu0 0
        %1019 = vperm.xlu0 %1018, %v851
        %v1020 = vpop.permute.xlu0 %1019
        %1023 = vset.pattern.permute.xlu0 0
        %1024 = vperm.xlu0 %1023, %v852
        %v1025 = vpop.permute.xlu0 %1024
        %1028 = vset.pattern.permute.xlu0 0
        %1029 = vperm.xlu0 %1028, %v853
        %v1030 = vpop.permute.xlu0 %1029
        %1033 = vset.pattern.permute.xlu0 0
        %1034 = vperm.xlu0 %1033, %v854
        %v1035 = vpop.permute.xlu0 %1034
        %v1038 = vperm.slane %v856, 0
        %v1040 = vmul.f32 %v860, %v1038
        %v1041 = vmul.f32 %v865, %v1038
        %v1042 = vmul.f32 %v870, %v1038
        %v1043 = vmul.f32 %v875, %v1038
        %v1044 = vmul.f32 %v880, %v1038
        %v1045 = vmul.f32 %v885, %v1038
        %v1046 = vmul.f32 %v890, %v1038
        %v1047 = vmul.f32 %v895, %v1038
        %v1048 = vmul.f32 %v900, %v1038
        %v1049 = vmul.f32 %v905, %v1038
        %v1050 = vmul.f32 %v910, %v1038
        %v1051 = vmul.f32 %v915, %v1038
        %v1052 = vmul.f32 %v920, %v1038
        %v1053 = vmul.f32 %v925, %v1038
        %v1054 = vmul.f32 %v930, %v1038
        %v1055 = vmul.f32 %v935, %v1038
        %v1056 = vmul.f32 %v940, %v1038
        %v1057 = vmul.f32 %v945, %v1038
        %v1058 = vmul.f32 %v950, %v1038
        %v1059 = vmul.f32 %v955, %v1038
        %v1060 = vmul.f32 %v960, %v1038
        %v1061 = vmul.f32 %v965, %v1038
        %v1062 = vmul.f32 %v970, %v1038
        %v1063 = vmul.f32 %v975, %v1038
        %v1064 = vmul.f32 %v980, %v1038
        %v1065 = vmul.f32 %v985, %v1038
        %v1066 = vmul.f32 %v990, %v1038
        %v1067 = vmul.f32 %v995, %v1038
        %v1068 = vmul.f32 %v1000, %v1038
        %v1069 = vmul.f32 %v1005, %v1038
        %v1070 = vmul.f32 %v1010, %v1038
        %v1071 = vmul.f32 %v1015, %v1038
        %v1072 = vmul.f32 %v1020, %v1038
        %v1073 = vmul.f32 %v1025, %v1038
        %v1074 = vmul.f32 %v1030, %v1038
        %v1075 = vmul.f32 %v1035, %v1038
        %v1076 = vadd.f32 %v783, %v1040
        %v1077 = vadd.f32 %v784, %v1041
        %v1078 = vadd.f32 %v785, %v1042
        %v1079 = vadd.f32 %v786, %v1043
        %v1080 = vadd.f32 %v787, %v1044
        %v1081 = vadd.f32 %v788, %v1045
        %v1082 = vadd.f32 %v789, %v1046
        %v1083 = vadd.f32 %v790, %v1047
        %v1084 = vadd.f32 %v791, %v1048
        %v1085 = vadd.f32 %v792, %v1049
        %v1086 = vadd.f32 %v793, %v1050
        %v1087 = vadd.f32 %v794, %v1051
        %v1088 = vadd.f32 %v795, %v1052
        %v1089 = vadd.f32 %v796, %v1053
        %v1090 = vadd.f32 %v797, %v1054
        %v1091 = vadd.f32 %v798, %v1055
        %v1092 = vadd.f32 %v799, %v1056
        %v1093 = vadd.f32 %v800, %v1057
        %v1094 = vadd.f32 %v801, %v1058
        %v1095 = vadd.f32 %v802, %v1059
        %v1096 = vadd.f32 %v803, %v1060
        %v1097 = vadd.f32 %v804, %v1061
        %v1098 = vadd.f32 %v805, %v1062
        %v1099 = vadd.f32 %v806, %v1063
        %v1100 = vadd.f32 %v807, %v1064
        %v1101 = vadd.f32 %v808, %v1065
        %v1102 = vadd.f32 %v809, %v1066
        %v1103 = vadd.f32 %v810, %v1067
        %v1104 = vadd.f32 %v811, %v1068
        %v1105 = vadd.f32 %v812, %v1069
        %v1106 = vadd.f32 %v813, %v1070
        %v1107 = vadd.f32 %v814, %v1071
        %v1108 = vadd.f32 %v815, %v1072
        %v1109 = vadd.f32 %v816, %v1073
        %v1110 = vadd.f32 %v817, %v1074
        %v1111 = vadd.f32 %v818, %v1075
        %v1112 = vld [vmem:[#allocation2 + $0x2] sm:$0xff]
        %v1113 = vld [vmem:[#allocation2 + $0xa] sm:$0xff]
        %v1114 = vld [vmem:[#allocation2 + $0x12] sm:$0xff]
        %v1115 = vld [vmem:[#allocation2 + $0x1a] sm:$0xff]
        %v1116 = vld [vmem:[#allocation2 + $0x22] sm:$0xff]
        %v1117 = vld [vmem:[#allocation2 + $0x2a] sm:$0xff]
        %v1118 = vld [vmem:[#allocation2 + $0x32] sm:$0xff]
        %v1119 = vld [vmem:[#allocation2 + $0x3a] sm:$0xff]
        %v1120 = vld [vmem:[#allocation2 + $0x42] sm:$0xff]
        %v1121 = vld [vmem:[#allocation2 + $0x4a] sm:$0xff]
        %v1122 = vld [vmem:[#allocation2 + $0x52] sm:$0xff]
        %v1123 = vld [vmem:[#allocation2 + $0x5a] sm:$0xff]
        %v1124 = vld [vmem:[#allocation2 + $0x62] sm:$0xff]
        %v1125 = vld [vmem:[#allocation2 + $0x6a] sm:$0xff]
        %v1126 = vld [vmem:[#allocation2 + $0x72] sm:$0xff]
        %v1127 = vld [vmem:[#allocation2 + $0x7a] sm:$0xff]
        %v1128 = vld [vmem:[#allocation2 + $0x82] sm:$0xff]
        %v1129 = vld [vmem:[#allocation2 + $0x8a] sm:$0xff]
        %v1130 = vld [vmem:[#allocation2 + $0x92] sm:$0xff]
        %v1131 = vld [vmem:[#allocation2 + $0x9a] sm:$0xff]
        %v1132 = vld [vmem:[#allocation2 + $0xa2] sm:$0xff]
        %v1133 = vld [vmem:[#allocation2 + $0xaa] sm:$0xff]
        %v1134 = vld [vmem:[#allocation2 + $0xb2] sm:$0xff]
        %v1135 = vld [vmem:[#allocation2 + $0xba] sm:$0xff]
        %v1136 = vld [vmem:[#allocation2 + $0xc2] sm:$0xff]
        %v1137 = vld [vmem:[#allocation2 + $0xca] sm:$0xff]
        %v1138 = vld [vmem:[#allocation2 + $0xd2] sm:$0xff]
        %v1139 = vld [vmem:[#allocation2 + $0xda] sm:$0xff]
        %v1140 = vld [vmem:[#allocation2 + $0xe2] sm:$0xff]
        %v1141 = vld [vmem:[#allocation2 + $0xea] sm:$0xff]
        %v1142 = vld [vmem:[#allocation2 + $0xf2] sm:$0xff]
        %v1143 = vld [vmem:[#allocation2 + $0xfa] sm:$0xff]
        %v1144 = vld [vmem:[#allocation2 + $0x102] sm:$0xff]
        %v1145 = vld [vmem:[#allocation2 + $0x10a] sm:$0xff]
        %v1146 = vld [vmem:[#allocation2 + $0x112] sm:$0xff]
        %v1147 = vld [vmem:[#allocation2 + $0x11a] sm:$0x3f]
        %s1148 = scalar_lea.vmem %s1, 2
        %v1149 = vld [vmem:[%s1148] sm:$0x1]
        %1151 = vset.pattern.permute.xlu0 0
        %1152 = vperm.xlu0 %1151, %v1112
        %v1153 = vpop.permute.xlu0 %1152
        %1156 = vset.pattern.permute.xlu0 0
        %1157 = vperm.xlu0 %1156, %v1113
        %v1158 = vpop.permute.xlu0 %1157
        %1161 = vset.pattern.permute.xlu0 0
        %1162 = vperm.xlu0 %1161, %v1114
        %v1163 = vpop.permute.xlu0 %1162
        %1166 = vset.pattern.permute.xlu0 0
        %1167 = vperm.xlu0 %1166, %v1115
        %v1168 = vpop.permute.xlu0 %1167
        %1171 = vset.pattern.permute.xlu0 0
        %1172 = vperm.xlu0 %1171, %v1116
        %v1173 = vpop.permute.xlu0 %1172
        %1176 = vset.pattern.permute.xlu0 0
        %1177 = vperm.xlu0 %1176, %v1117
        %v1178 = vpop.permute.xlu0 %1177
        %1181 = vset.pattern.permute.xlu0 0
        %1182 = vperm.xlu0 %1181, %v1118
        %v1183 = vpop.permute.xlu0 %1182
        %1186 = vset.pattern.permute.xlu0 0
        %1187 = vperm.xlu0 %1186, %v1119
        %v1188 = vpop.permute.xlu0 %1187
        %1191 = vset.pattern.permute.xlu0 0
        %1192 = vperm.xlu0 %1191, %v1120
        %v1193 = vpop.permute.xlu0 %1192
        %1196 = vset.pattern.permute.xlu0 0
        %1197 = vperm.xlu0 %1196, %v1121
        %v1198 = vpop.permute.xlu0 %1197
        %1201 = vset.pattern.permute.xlu0 0
        %1202 = vperm.xlu0 %1201, %v1122
        %v1203 = vpop.permute.xlu0 %1202
        %1206 = vset.pattern.permute.xlu0 0
        %1207 = vperm.xlu0 %1206, %v1123
        %v1208 = vpop.permute.xlu0 %1207
        %1211 = vset.pattern.permute.xlu0 0
        %1212 = vperm.xlu0 %1211, %v1124
        %v1213 = vpop.permute.xlu0 %1212
        %1216 = vset.pattern.permute.xlu0 0
        %1217 = vperm.xlu0 %1216, %v1125
        %v1218 = vpop.permute.xlu0 %1217
        %1221 = vset.pattern.permute.xlu0 0
        %1222 = vperm.xlu0 %1221, %v1126
        %v1223 = vpop.permute.xlu0 %1222
        %1226 = vset.pattern.permute.xlu0 0
        %1227 = vperm.xlu0 %1226, %v1127
        %v1228 = vpop.permute.xlu0 %1227
        %1231 = vset.pattern.permute.xlu0 0
        %1232 = vperm.xlu0 %1231, %v1128
        %v1233 = vpop.permute.xlu0 %1232
        %1236 = vset.pattern.permute.xlu0 0
        %1237 = vperm.xlu0 %1236, %v1129
        %v1238 = vpop.permute.xlu0 %1237
        %1241 = vset.pattern.permute.xlu0 0
        %1242 = vperm.xlu0 %1241, %v1130
        %v1243 = vpop.permute.xlu0 %1242
        %1246 = vset.pattern.permute.xlu0 0
        %1247 = vperm.xlu0 %1246, %v1131
        %v1248 = vpop.permute.xlu0 %1247
        %1251 = vset.pattern.permute.xlu0 0
        %1252 = vperm.xlu0 %1251, %v1132
        %v1253 = vpop.permute.xlu0 %1252
        %1256 = vset.pattern.permute.xlu0 0
        %1257 = vperm.xlu0 %1256, %v1133
        %v1258 = vpop.permute.xlu0 %1257
        %1261 = vset.pattern.permute.xlu0 0
        %1262 = vperm.xlu0 %1261, %v1134
        %v1263 = vpop.permute.xlu0 %1262
        %1266 = vset.pattern.permute.xlu0 0
        %1267 = vperm.xlu0 %1266, %v1135
        %v1268 = vpop.permute.xlu0 %1267
        %1271 = vset.pattern.permute.xlu0 0
        %1272 = vperm.xlu0 %1271, %v1136
        %v1273 = vpop.permute.xlu0 %1272
        %1276 = vset.pattern.permute.xlu0 0
        %1277 = vperm.xlu0 %1276, %v1137
        %v1278 = vpop.permute.xlu0 %1277
        %1281 = vset.pattern.permute.xlu0 0
        %1282 = vperm.xlu0 %1281, %v1138
        %v1283 = vpop.permute.xlu0 %1282
        %1286 = vset.pattern.permute.xlu0 0
        %1287 = vperm.xlu0 %1286, %v1139
        %v1288 = vpop.permute.xlu0 %1287
        %1291 = vset.pattern.permute.xlu0 0
        %1292 = vperm.xlu0 %1291, %v1140
        %v1293 = vpop.permute.xlu0 %1292
        %1296 = vset.pattern.permute.xlu0 0
        %1297 = vperm.xlu0 %1296, %v1141
        %v1298 = vpop.permute.xlu0 %1297
        %1301 = vset.pattern.permute.xlu0 0
        %1302 = vperm.xlu0 %1301, %v1142
        %v1303 = vpop.permute.xlu0 %1302
        %1306 = vset.pattern.permute.xlu0 0
        %1307 = vperm.xlu0 %1306, %v1143
        %v1308 = vpop.permute.xlu0 %1307
        %1311 = vset.pattern.permute.xlu0 0
        %1312 = vperm.xlu0 %1311, %v1144
        %v1313 = vpop.permute.xlu0 %1312
        %1316 = vset.pattern.permute.xlu0 0
        %1317 = vperm.xlu0 %1316, %v1145
        %v1318 = vpop.permute.xlu0 %1317
        %1321 = vset.pattern.permute.xlu0 0
        %1322 = vperm.xlu0 %1321, %v1146
        %v1323 = vpop.permute.xlu0 %1322
        %1326 = vset.pattern.permute.xlu0 0
        %1327 = vperm.xlu0 %1326, %v1147
        %v1328 = vpop.permute.xlu0 %1327
        %v1331 = vperm.slane %v1149, 0
        %v1333 = vmul.f32 %v1153, %v1331
        %v1334 = vmul.f32 %v1158, %v1331
        %v1335 = vmul.f32 %v1163, %v1331
        %v1336 = vmul.f32 %v1168, %v1331
        %v1337 = vmul.f32 %v1173, %v1331
        %v1338 = vmul.f32 %v1178, %v1331
        %v1339 = vmul.f32 %v1183, %v1331
        %v1340 = vmul.f32 %v1188, %v1331
        %v1341 = vmul.f32 %v1193, %v1331
        %v1342 = vmul.f32 %v1198, %v1331
        %v1343 = vmul.f32 %v1203, %v1331
        %v1344 = vmul.f32 %v1208, %v1331
        %v1345 = vmul.f32 %v1213, %v1331
        %v1346 = vmul.f32 %v1218, %v1331
        %v1347 = vmul.f32 %v1223, %v1331
        %v1348 = vmul.f32 %v1228, %v1331
        %v1349 = vmul.f32 %v1233, %v1331
        %v1350 = vmul.f32 %v1238, %v1331
        %v1351 = vmul.f32 %v1243, %v1331
        %v1352 = vmul.f32 %v1248, %v1331
        %v1353 = vmul.f32 %v1253, %v1331
        %v1354 = vmul.f32 %v1258, %v1331
        %v1355 = vmul.f32 %v1263, %v1331
        %v1356 = vmul.f32 %v1268, %v1331
        %v1357 = vmul.f32 %v1273, %v1331
        %v1358 = vmul.f32 %v1278, %v1331
        %v1359 = vmul.f32 %v1283, %v1331
        %v1360 = vmul.f32 %v1288, %v1331
        %v1361 = vmul.f32 %v1293, %v1331
        %v1362 = vmul.f32 %v1298, %v1331
        %v1363 = vmul.f32 %v1303, %v1331
        %v1364 = vmul.f32 %v1308, %v1331
        %v1365 = vmul.f32 %v1313, %v1331
        %v1366 = vmul.f32 %v1318, %v1331
        %v1367 = vmul.f32 %v1323, %v1331
        %v1368 = vmul.f32 %v1328, %v1331
        %v1369 = vadd.f32 %v1076, %v1333
        %v1370 = vadd.f32 %v1077, %v1334
        %v1371 = vadd.f32 %v1078, %v1335
        %v1372 = vadd.f32 %v1079, %v1336
        %v1373 = vadd.f32 %v1080, %v1337
        %v1374 = vadd.f32 %v1081, %v1338
        %v1375 = vadd.f32 %v1082, %v1339
        %v1376 = vadd.f32 %v1083, %v1340
        %v1377 = vadd.f32 %v1084, %v1341
        %v1378 = vadd.f32 %v1085, %v1342
        %v1379 = vadd.f32 %v1086, %v1343
        %v1380 = vadd.f32 %v1087, %v1344
        %v1381 = vadd.f32 %v1088, %v1345
        %v1382 = vadd.f32 %v1089, %v1346
        %v1383 = vadd.f32 %v1090, %v1347
        %v1384 = vadd.f32 %v1091, %v1348
        %v1385 = vadd.f32 %v1092, %v1349
        %v1386 = vadd.f32 %v1093, %v1350
        %v1387 = vadd.f32 %v1094, %v1351
        %v1388 = vadd.f32 %v1095, %v1352
        %v1389 = vadd.f32 %v1096, %v1353
        %v1390 = vadd.f32 %v1097, %v1354
        %v1391 = vadd.f32 %v1098, %v1355
        %v1392 = vadd.f32 %v1099, %v1356
        %v1393 = vadd.f32 %v1100, %v1357
        %v1394 = vadd.f32 %v1101, %v1358
        %v1395 = vadd.f32 %v1102, %v1359
        %v1396 = vadd.f32 %v1103, %v1360
        %v1397 = vadd.f32 %v1104, %v1361
        %v1398 = vadd.f32 %v1105, %v1362
        %v1399 = vadd.f32 %v1106, %v1363
        %v1400 = vadd.f32 %v1107, %v1364
        %v1401 = vadd.f32 %v1108, %v1365
        %v1402 = vadd.f32 %v1109, %v1366
        %v1403 = vadd.f32 %v1110, %v1367
        %v1404 = vadd.f32 %v1111, %v1368
        %v1405 = vld [vmem:[#allocation2 + $0x12] sm:$0xff]
        %v1406 = vld [vmem:[#allocation2 + $0x1a] sm:$0xff]
        %v1407 = vld [vmem:[#allocation2 + $0x22] sm:$0xff]
        %v1408 = vld [vmem:[#allocation2 + $0x2a] sm:$0xff]
        %v1409 = vld [vmem:[#allocation2 + $0x32] sm:$0xff]
        %v1410 = vld [vmem:[#allocation2 + $0x3a] sm:$0xff]
        %v1411 = vld [vmem:[#allocation2 + $0x42] sm:$0xff]
        %v1412 = vld [vmem:[#allocation2 + $0x4a] sm:$0xff]
        %v1413 = vld [vmem:[#allocation2 + $0x52] sm:$0xff]
        %v1414 = vld [vmem:[#allocation2 + $0x5a] sm:$0xff]
        %v1415 = vld [vmem:[#allocation2 + $0x62] sm:$0xff]
        %v1416 = vld [vmem:[#allocation2 + $0x6a] sm:$0xff]
        %v1417 = vld [vmem:[#allocation2 + $0x72] sm:$0xff]
        %v1418 = vld [vmem:[#allocation2 + $0x7a] sm:$0xff]
        %v1419 = vld [vmem:[#allocation2 + $0x82] sm:$0xff]
        %v1420 = vld [vmem:[#allocation2 + $0x8a] sm:$0xff]
        %v1421 = vld [vmem:[#allocation2 + $0x92] sm:$0xff]
        %v1422 = vld [vmem:[#allocation2 + $0x9a] sm:$0xff]
        %v1423 = vld [vmem:[#allocation2 + $0xa2] sm:$0xff]
        %v1424 = vld [vmem:[#allocation2 + $0xaa] sm:$0xff]
        %v1425 = vld [vmem:[#allocation2 + $0xb2] sm:$0xff]
        %v1426 = vld [vmem:[#allocation2 + $0xba] sm:$0xff]
        %v1427 = vld [vmem:[#allocation2 + $0xc2] sm:$0xff]
        %v1428 = vld [vmem:[#allocation2 + $0xca] sm:$0xff]
        %v1429 = vld [vmem:[#allocation2 + $0xd2] sm:$0xff]
        %v1430 = vld [vmem:[#allocation2 + $0xda] sm:$0xff]
        %v1431 = vld [vmem:[#allocation2 + $0xe2] sm:$0xff]
        %v1432 = vld [vmem:[#allocation2 + $0xea] sm:$0xff]
        %v1433 = vld [vmem:[#allocation2 + $0xf2] sm:$0xff]
        %v1434 = vld [vmem:[#allocation2 + $0xfa] sm:$0xff]
        %v1435 = vld [vmem:[#allocation2 + $0x102] sm:$0xff]
        %v1436 = vld [vmem:[#allocation2 + $0x10a] sm:$0xff]
        %v1437 = vld [vmem:[#allocation2 + $0x112] sm:$0xff]
        %v1438 = vld [vmem:[#allocation2 + $0x11a] sm:$0xff]
        %v1439 = vld [vmem:[#allocation2 + $0x122] sm:$0xff]
        %v1440 = vld [vmem:[#allocation2 + $0x12a] sm:$0x3f]
        %s1441 = scalar_lea.vmem %s1, 3
        %v1442 = vld [vmem:[%s1441] sm:$0x1]
        %1444 = vset.pattern.permute.xlu0 0
        %1445 = vperm.xlu0 %1444, %v1405
        %v1446 = vpop.permute.xlu0 %1445
        %1449 = vset.pattern.permute.xlu0 0
        %1450 = vperm.xlu0 %1449, %v1406
        %v1451 = vpop.permute.xlu0 %1450
        %1454 = vset.pattern.permute.xlu0 0
        %1455 = vperm.xlu0 %1454, %v1407
        %v1456 = vpop.permute.xlu0 %1455
        %1459 = vset.pattern.permute.xlu0 0
        %1460 = vperm.xlu0 %1459, %v1408
        %v1461 = vpop.permute.xlu0 %1460
        %1464 = vset.pattern.permute.xlu0 0
        %1465 = vperm.xlu0 %1464, %v1409
        %v1466 = vpop.permute.xlu0 %1465
        %1469 = vset.pattern.permute.xlu0 0
        %1470 = vperm.xlu0 %1469, %v1410
        %v1471 = vpop.permute.xlu0 %1470
        %1474 = vset.pattern.permute.xlu0 0
        %1475 = vperm.xlu0 %1474, %v1411
        %v1476 = vpop.permute.xlu0 %1475
        %1479 = vset.pattern.permute.xlu0 0
        %1480 = vperm.xlu0 %1479, %v1412
        %v1481 = vpop.permute.xlu0 %1480
        %1484 = vset.pattern.permute.xlu0 0
        %1485 = vperm.xlu0 %1484, %v1413
        %v1486 = vpop.permute.xlu0 %1485
        %1489 = vset.pattern.permute.xlu0 0
        %1490 = vperm.xlu0 %1489, %v1414
        %v1491 = vpop.permute.xlu0 %1490
        %1494 = vset.pattern.permute.xlu0 0
        %1495 = vperm.xlu0 %1494, %v1415
        %v1496 = vpop.permute.xlu0 %1495
        %1499 = vset.pattern.permute.xlu0 0
        %1500 = vperm.xlu0 %1499, %v1416
        %v1501 = vpop.permute.xlu0 %1500
        %1504 = vset.pattern.permute.xlu0 0
        %1505 = vperm.xlu0 %1504, %v1417
        %v1506 = vpop.permute.xlu0 %1505
        %1509 = vset.pattern.permute.xlu0 0
        %1510 = vperm.xlu0 %1509, %v1418
        %v1511 = vpop.permute.xlu0 %1510
        %1514 = vset.pattern.permute.xlu0 0
        %1515 = vperm.xlu0 %1514, %v1419
        %v1516 = vpop.permute.xlu0 %1515
        %1519 = vset.pattern.permute.xlu0 0
        %1520 = vperm.xlu0 %1519, %v1420
        %v1521 = vpop.permute.xlu0 %1520
        %1524 = vset.pattern.permute.xlu0 0
        %1525 = vperm.xlu0 %1524, %v1421
        %v1526 = vpop.permute.xlu0 %1525
        %1529 = vset.pattern.permute.xlu0 0
        %1530 = vperm.xlu0 %1529, %v1422
        %v1531 = vpop.permute.xlu0 %1530
        %1534 = vset.pattern.permute.xlu0 0
        %1535 = vperm.xlu0 %1534, %v1423
        %v1536 = vpop.permute.xlu0 %1535
        %1539 = vset.pattern.permute.xlu0 0
        %1540 = vperm.xlu0 %1539, %v1424
        %v1541 = vpop.permute.xlu0 %1540
        %1544 = vset.pattern.permute.xlu0 0
        %1545 = vperm.xlu0 %1544, %v1425
        %v1546 = vpop.permute.xlu0 %1545
        %1549 = vset.pattern.permute.xlu0 0
        %1550 = vperm.xlu0 %1549, %v1426
        %v1551 = vpop.permute.xlu0 %1550
        %1554 = vset.pattern.permute.xlu0 0
        %1555 = vperm.xlu0 %1554, %v1427
        %v1556 = vpop.permute.xlu0 %1555
        %1559 = vset.pattern.permute.xlu0 0
        %1560 = vperm.xlu0 %1559, %v1428
        %v1561 = vpop.permute.xlu0 %1560
        %1564 = vset.pattern.permute.xlu0 0
        %1565 = vperm.xlu0 %1564, %v1429
        %v1566 = vpop.permute.xlu0 %1565
        %1569 = vset.pattern.permute.xlu0 0
        %1570 = vperm.xlu0 %1569, %v1430
        %v1571 = vpop.permute.xlu0 %1570
        %1574 = vset.pattern.permute.xlu0 0
        %1575 = vperm.xlu0 %1574, %v1431
        %v1576 = vpop.permute.xlu0 %1575
        %1579 = vset.pattern.permute.xlu0 0
        %1580 = vperm.xlu0 %1579, %v1432
        %v1581 = vpop.permute.xlu0 %1580
        %1584 = vset.pattern.permute.xlu0 0
        %1585 = vperm.xlu0 %1584, %v1433
        %v1586 = vpop.permute.xlu0 %1585
        %1589 = vset.pattern.permute.xlu0 0
        %1590 = vperm.xlu0 %1589, %v1434
        %v1591 = vpop.permute.xlu0 %1590
        %1594 = vset.pattern.permute.xlu0 0
        %1595 = vperm.xlu0 %1594, %v1435
        %v1596 = vpop.permute.xlu0 %1595
        %1599 = vset.pattern.permute.xlu0 0
        %1600 = vperm.xlu0 %1599, %v1436
        %v1601 = vpop.permute.xlu0 %1600
        %1604 = vset.pattern.permute.xlu0 0
        %1605 = vperm.xlu0 %1604, %v1437
        %v1606 = vpop.permute.xlu0 %1605
        %1609 = vset.pattern.permute.xlu0 0
        %1610 = vperm.xlu0 %1609, %v1438
        %v1611 = vpop.permute.xlu0 %1610
        %1614 = vset.pattern.permute.xlu0 0
        %1615 = vperm.xlu0 %1614, %v1439
        %v1616 = vpop.permute.xlu0 %1615
        %1619 = vset.pattern.permute.xlu0 0
        %1620 = vperm.xlu0 %1619, %v1440
        %v1621 = vpop.permute.xlu0 %1620
        %v1624 = vperm.slane %v1442, 0
        %v1626 = vmul.f32 %v1446, %v1624
        %v1627 = vmul.f32 %v1451, %v1624
        %v1628 = vmul.f32 %v1456, %v1624
        %v1629 = vmul.f32 %v1461, %v1624
        %v1630 = vmul.f32 %v1466, %v1624
        %v1631 = vmul.f32 %v1471, %v1624
        %v1632 = vmul.f32 %v1476, %v1624
        %v1633 = vmul.f32 %v1481, %v1624
        %v1634 = vmul.f32 %v1486, %v1624
        %v1635 = vmul.f32 %v1491, %v1624
        %v1636 = vmul.f32 %v1496, %v1624
        %v1637 = vmul.f32 %v1501, %v1624
        %v1638 = vmul.f32 %v1506, %v1624
        %v1639 = vmul.f32 %v1511, %v1624
        %v1640 = vmul.f32 %v1516, %v1624
        %v1641 = vmul.f32 %v1521, %v1624
        %v1642 = vmul.f32 %v1526, %v1624
        %v1643 = vmul.f32 %v1531, %v1624
        %v1644 = vmul.f32 %v1536, %v1624
        %v1645 = vmul.f32 %v1541, %v1624
        %v1646 = vmul.f32 %v1546, %v1624
        %v1647 = vmul.f32 %v1551, %v1624
        %v1648 = vmul.f32 %v1556, %v1624
        %v1649 = vmul.f32 %v1561, %v1624
        %v1650 = vmul.f32 %v1566, %v1624
        %v1651 = vmul.f32 %v1571, %v1624
        %v1652 = vmul.f32 %v1576, %v1624
        %v1653 = vmul.f32 %v1581, %v1624
        %v1654 = vmul.f32 %v1586, %v1624
        %v1655 = vmul.f32 %v1591, %v1624
        %v1656 = vmul.f32 %v1596, %v1624
        %v1657 = vmul.f32 %v1601, %v1624
        %v1658 = vmul.f32 %v1606, %v1624
        %v1659 = vmul.f32 %v1611, %v1624
        %v1660 = vmul.f32 %v1616, %v1624
        %v1661 = vmul.f32 %v1621, %v1624
        %v1662 = vadd.f32 %v1369, %v1626
        %v1663 = vadd.f32 %v1370, %v1627
        %v1664 = vadd.f32 %v1371, %v1628
        %v1665 = vadd.f32 %v1372, %v1629
        %v1666 = vadd.f32 %v1373, %v1630
        %v1667 = vadd.f32 %v1374, %v1631
        %v1668 = vadd.f32 %v1375, %v1632
        %v1669 = vadd.f32 %v1376, %v1633
        %v1670 = vadd.f32 %v1377, %v1634
        %v1671 = vadd.f32 %v1378, %v1635
        %v1672 = vadd.f32 %v1379, %v1636
        %v1673 = vadd.f32 %v1380, %v1637
        %v1674 = vadd.f32 %v1381, %v1638
        %v1675 = vadd.f32 %v1382, %v1639
        %v1676 = vadd.f32 %v1383, %v1640
        %v1677 = vadd.f32 %v1384, %v1641
        %v1678 = vadd.f32 %v1385, %v1642
        %v1679 = vadd.f32 %v1386, %v1643
        %v1680 = vadd.f32 %v1387, %v1644
        %v1681 = vadd.f32 %v1388, %v1645
        %v1682 = vadd.f32 %v1389, %v1646
        %v1683 = vadd.f32 %v1390, %v1647
        %v1684 = vadd.f32 %v1391, %v1648
        %v1685 = vadd.f32 %v1392, %v1649
        %v1686 = vadd.f32 %v1393, %v1650
        %v1687 = vadd.f32 %v1394, %v1651
        %v1688 = vadd.f32 %v1395, %v1652
        %v1689 = vadd.f32 %v1396, %v1653
        %v1690 = vadd.f32 %v1397, %v1654
        %v1691 = vadd.f32 %v1398, %v1655
        %v1692 = vadd.f32 %v1399, %v1656
        %v1693 = vadd.f32 %v1400, %v1657
        %v1694 = vadd.f32 %v1401, %v1658
        %v1695 = vadd.f32 %v1402, %v1659
        %v1696 = vadd.f32 %v1403, %v1660
        %v1697 = vadd.f32 %v1404, %v1661
        %v1698 = vld [vmem:[#allocation2 + $0x13] sm:$0xff]
        %v1699 = vld [vmem:[#allocation2 + $0x1b] sm:$0xff]
        %v1700 = vld [vmem:[#allocation2 + $0x23] sm:$0xff]
        %v1701 = vld [vmem:[#allocation2 + $0x2b] sm:$0xff]
        %v1702 = vld [vmem:[#allocation2 + $0x33] sm:$0xff]
        %v1703 = vld [vmem:[#allocation2 + $0x3b] sm:$0xff]
        %v1704 = vld [vmem:[#allocation2 + $0x43] sm:$0xff]
        %v1705 = vld [vmem:[#allocation2 + $0x4b] sm:$0xff]
        %v1706 = vld [vmem:[#allocation2 + $0x53] sm:$0xff]
        %v1707 = vld [vmem:[#allocation2 + $0x5b] sm:$0xff]
        %v1708 = vld [vmem:[#allocation2 + $0x63] sm:$0xff]
        %v1709 = vld [vmem:[#allocation2 + $0x6b] sm:$0xff]
        %v1710 = vld [vmem:[#allocation2 + $0x73] sm:$0xff]
        %v1711 = vld [vmem:[#allocation2 + $0x7b] sm:$0xff]
        %v1712 = vld [vmem:[#allocation2 + $0x83] sm:$0xff]
        %v1713 = vld [vmem:[#allocation2 + $0x8b] sm:$0xff]
        %v1714 = vld [vmem:[#allocation2 + $0x93] sm:$0xff]
        %v1715 = vld [vmem:[#allocation2 + $0x9b] sm:$0xff]
        %v1716 = vld [vmem:[#allocation2 + $0xa3] sm:$0xff]
        %v1717 = vld [vmem:[#allocation2 + $0xab] sm:$0xff]
        %v1718 = vld [vmem:[#allocation2 + $0xb3] sm:$0xff]
        %v1719 = vld [vmem:[#allocation2 + $0xbb] sm:$0xff]
        %v1720 = vld [vmem:[#allocation2 + $0xc3] sm:$0xff]
        %v1721 = vld [vmem:[#allocation2 + $0xcb] sm:$0xff]
        %v1722 = vld [vmem:[#allocation2 + $0xd3] sm:$0xff]
        %v1723 = vld [vmem:[#allocation2 + $0xdb] sm:$0xff]
        %v1724 = vld [vmem:[#allocation2 + $0xe3] sm:$0xff]
        %v1725 = vld [vmem:[#allocation2 + $0xeb] sm:$0xff]
        %v1726 = vld [vmem:[#allocation2 + $0xf3] sm:$0xff]
        %v1727 = vld [vmem:[#allocation2 + $0xfb] sm:$0xff]
        %v1728 = vld [vmem:[#allocation2 + $0x103] sm:$0xff]
        %v1729 = vld [vmem:[#allocation2 + $0x10b] sm:$0xff]
        %v1730 = vld [vmem:[#allocation2 + $0x113] sm:$0xff]
        %v1731 = vld [vmem:[#allocation2 + $0x11b] sm:$0xff]
        %v1732 = vld [vmem:[#allocation2 + $0x123] sm:$0xff]
        %v1733 = vld [vmem:[#allocation2 + $0x12b] sm:$0x3f]
        %s1734 = scalar_lea.vmem %s1, 4
        %v1735 = vld [vmem:[%s1734] sm:$0x1]
        %1737 = vset.pattern.permute.xlu0 0
        %1738 = vperm.xlu0 %1737, %v1698
        %v1739 = vpop.permute.xlu0 %1738
        %1742 = vset.pattern.permute.xlu0 0
        %1743 = vperm.xlu0 %1742, %v1699
        %v1744 = vpop.permute.xlu0 %1743
        %1747 = vset.pattern.permute.xlu0 0
        %1748 = vperm.xlu0 %1747, %v1700
        %v1749 = vpop.permute.xlu0 %1748
        %1752 = vset.pattern.permute.xlu0 0
        %1753 = vperm.xlu0 %1752, %v1701
        %v1754 = vpop.permute.xlu0 %1753
        %1757 = vset.pattern.permute.xlu0 0
        %1758 = vperm.xlu0 %1757, %v1702
        %v1759 = vpop.permute.xlu0 %1758
        %1762 = vset.pattern.permute.xlu0 0
        %1763 = vperm.xlu0 %1762, %v1703
        %v1764 = vpop.permute.xlu0 %1763
        %1767 = vset.pattern.permute.xlu0 0
        %1768 = vperm.xlu0 %1767, %v1704
        %v1769 = vpop.permute.xlu0 %1768
        %1772 = vset.pattern.permute.xlu0 0
        %1773 = vperm.xlu0 %1772, %v1705
        %v1774 = vpop.permute.xlu0 %1773
        %1777 = vset.pattern.permute.xlu0 0
        %1778 = vperm.xlu0 %1777, %v1706
        %v1779 = vpop.permute.xlu0 %1778
        %1782 = vset.pattern.permute.xlu0 0
        %1783 = vperm.xlu0 %1782, %v1707
        %v1784 = vpop.permute.xlu0 %1783
        %1787 = vset.pattern.permute.xlu0 0
        %1788 = vperm.xlu0 %1787, %v1708
        %v1789 = vpop.permute.xlu0 %1788
        %1792 = vset.pattern.permute.xlu0 0
        %1793 = vperm.xlu0 %1792, %v1709
        %v1794 = vpop.permute.xlu0 %1793
        %1797 = vset.pattern.permute.xlu0 0
        %1798 = vperm.xlu0 %1797, %v1710
        %v1799 = vpop.permute.xlu0 %1798
        %1802 = vset.pattern.permute.xlu0 0
        %1803 = vperm.xlu0 %1802, %v1711
        %v1804 = vpop.permute.xlu0 %1803
        %1807 = vset.pattern.permute.xlu0 0
        %1808 = vperm.xlu0 %1807, %v1712
        %v1809 = vpop.permute.xlu0 %1808
        %1812 = vset.pattern.permute.xlu0 0
        %1813 = vperm.xlu0 %1812, %v1713
        %v1814 = vpop.permute.xlu0 %1813
        %1817 = vset.pattern.permute.xlu0 0
        %1818 = vperm.xlu0 %1817, %v1714
        %v1819 = vpop.permute.xlu0 %1818
        %1822 = vset.pattern.permute.xlu0 0
        %1823 = vperm.xlu0 %1822, %v1715
        %v1824 = vpop.permute.xlu0 %1823
        %1827 = vset.pattern.permute.xlu0 0
        %1828 = vperm.xlu0 %1827, %v1716
        %v1829 = vpop.permute.xlu0 %1828
        %1832 = vset.pattern.permute.xlu0 0
        %1833 = vperm.xlu0 %1832, %v1717
        %v1834 = vpop.permute.xlu0 %1833
        %1837 = vset.pattern.permute.xlu0 0
        %1838 = vperm.xlu0 %1837, %v1718
        %v1839 = vpop.permute.xlu0 %1838
        %1842 = vset.pattern.permute.xlu0 0
        %1843 = vperm.xlu0 %1842, %v1719
        %v1844 = vpop.permute.xlu0 %1843
        %1847 = vset.pattern.permute.xlu0 0
        %1848 = vperm.xlu0 %1847, %v1720
        %v1849 = vpop.permute.xlu0 %1848
        %1852 = vset.pattern.permute.xlu0 0
        %1853 = vperm.xlu0 %1852, %v1721
        %v1854 = vpop.permute.xlu0 %1853
        %1857 = vset.pattern.permute.xlu0 0
        %1858 = vperm.xlu0 %1857, %v1722
        %v1859 = vpop.permute.xlu0 %1858
        %1862 = vset.pattern.permute.xlu0 0
        %1863 = vperm.xlu0 %1862, %v1723
        %v1864 = vpop.permute.xlu0 %1863
        %1867 = vset.pattern.permute.xlu0 0
        %1868 = vperm.xlu0 %1867, %v1724
        %v1869 = vpop.permute.xlu0 %1868
        %1872 = vset.pattern.permute.xlu0 0
        %1873 = vperm.xlu0 %1872, %v1725
        %v1874 = vpop.permute.xlu0 %1873
        %1877 = vset.pattern.permute.xlu0 0
        %1878 = vperm.xlu0 %1877, %v1726
        %v1879 = vpop.permute.xlu0 %1878
        %1882 = vset.pattern.permute.xlu0 0
        %1883 = vperm.xlu0 %1882, %v1727
        %v1884 = vpop.permute.xlu0 %1883
        %1887 = vset.pattern.permute.xlu0 0
        %1888 = vperm.xlu0 %1887, %v1728
        %v1889 = vpop.permute.xlu0 %1888
        %1892 = vset.pattern.permute.xlu0 0
        %1893 = vperm.xlu0 %1892, %v1729
        %v1894 = vpop.permute.xlu0 %1893
        %1897 = vset.pattern.permute.xlu0 0
        %1898 = vperm.xlu0 %1897, %v1730
        %v1899 = vpop.permute.xlu0 %1898
        %1902 = vset.pattern.permute.xlu0 0
        %1903 = vperm.xlu0 %1902, %v1731
        %v1904 = vpop.permute.xlu0 %1903
        %1907 = vset.pattern.permute.xlu0 0
        %1908 = vperm.xlu0 %1907, %v1732
        %v1909 = vpop.permute.xlu0 %1908
        %1912 = vset.pattern.permute.xlu0 0
        %1913 = vperm.xlu0 %1912, %v1733
        %v1914 = vpop.permute.xlu0 %1913
        %v1917 = vperm.slane %v1735, 0
        %v1919 = vmul.f32 %v1739, %v1917
        %v1920 = vmul.f32 %v1744, %v1917
        %v1921 = vmul.f32 %v1749, %v1917
        %v1922 = vmul.f32 %v1754, %v1917
        %v1923 = vmul.f32 %v1759, %v1917
        %v1924 = vmul.f32 %v1764, %v1917
        %v1925 = vmul.f32 %v1769, %v1917
        %v1926 = vmul.f32 %v1774, %v1917
        %v1927 = vmul.f32 %v1779, %v1917
        %v1928 = vmul.f32 %v1784, %v1917
        %v1929 = vmul.f32 %v1789, %v1917
        %v1930 = vmul.f32 %v1794, %v1917
        %v1931 = vmul.f32 %v1799, %v1917
        %v1932 = vmul.f32 %v1804, %v1917
        %v1933 = vmul.f32 %v1809, %v1917
        %v1934 = vmul.f32 %v1814, %v1917
        %v1935 = vmul.f32 %v1819, %v1917
        %v1936 = vmul.f32 %v1824, %v1917
        %v1937 = vmul.f32 %v1829, %v1917
        %v1938 = vmul.f32 %v1834, %v1917
        %v1939 = vmul.f32 %v1839, %v1917
        %v1940 = vmul.f32 %v1844, %v1917
        %v1941 = vmul.f32 %v1849, %v1917
        %v1942 = vmul.f32 %v1854, %v1917
        %v1943 = vmul.f32 %v1859, %v1917
        %v1944 = vmul.f32 %v1864, %v1917
        %v1945 = vmul.f32 %v1869, %v1917
        %v1946 = vmul.f32 %v1874, %v1917
        %v1947 = vmul.f32 %v1879, %v1917
        %v1948 = vmul.f32 %v1884, %v1917
        %v1949 = vmul.f32 %v1889, %v1917
        %v1950 = vmul.f32 %v1894, %v1917
        %v1951 = vmul.f32 %v1899, %v1917
        %v1952 = vmul.f32 %v1904, %v1917
        %v1953 = vmul.f32 %v1909, %v1917
        %v1954 = vmul.f32 %v1914, %v1917
        %v1955 = vadd.f32 %v1662, %v1919
        %v1956 = vadd.f32 %v1663, %v1920
        %v1957 = vadd.f32 %v1664, %v1921
        %v1958 = vadd.f32 %v1665, %v1922
        %v1959 = vadd.f32 %v1666, %v1923
        %v1960 = vadd.f32 %v1667, %v1924
        %v1961 = vadd.f32 %v1668, %v1925
        %v1962 = vadd.f32 %v1669, %v1926
        %v1963 = vadd.f32 %v1670, %v1927
        %v1964 = vadd.f32 %v1671, %v1928
        %v1965 = vadd.f32 %v1672, %v1929
        %v1966 = vadd.f32 %v1673, %v1930
        %v1967 = vadd.f32 %v1674, %v1931
        %v1968 = vadd.f32 %v1675, %v1932
        %v1969 = vadd.f32 %v1676, %v1933
        %v1970 = vadd.f32 %v1677, %v1934
        %v1971 = vadd.f32 %v1678, %v1935
        %v1972 = vadd.f32 %v1679, %v1936
        %v1973 = vadd.f32 %v1680, %v1937
        %v1974 = vadd.f32 %v1681, %v1938
        %v1975 = vadd.f32 %v1682, %v1939
        %v1976 = vadd.f32 %v1683, %v1940
        %v1977 = vadd.f32 %v1684, %v1941
        %v1978 = vadd.f32 %v1685, %v1942
        %v1979 = vadd.f32 %v1686, %v1943
        %v1980 = vadd.f32 %v1687, %v1944
        %v1981 = vadd.f32 %v1688, %v1945
        %v1982 = vadd.f32 %v1689, %v1946
        %v1983 = vadd.f32 %v1690, %v1947
        %v1984 = vadd.f32 %v1691, %v1948
        %v1985 = vadd.f32 %v1692, %v1949
        %v1986 = vadd.f32 %v1693, %v1950
        %v1987 = vadd.f32 %v1694, %v1951
        %v1988 = vadd.f32 %v1695, %v1952
        %v1989 = vadd.f32 %v1696, %v1953
        %v1990 = vadd.f32 %v1697, %v1954
        %v1991 = vld [vmem:[#allocation2 + $0x14] sm:$0xff]
        %v1992 = vld [vmem:[#allocation2 + $0x1c] sm:$0xff]
        %v1993 = vld [vmem:[#allocation2 + $0x24] sm:$0xff]
        %v1994 = vld [vmem:[#allocation2 + $0x2c] sm:$0xff]
        %v1995 = vld [vmem:[#allocation2 + $0x34] sm:$0xff]
        %v1996 = vld [vmem:[#allocation2 + $0x3c] sm:$0xff]
        %v1997 = vld [vmem:[#allocation2 + $0x44] sm:$0xff]
        %v1998 = vld [vmem:[#allocation2 + $0x4c] sm:$0xff]
        %v1999 = vld [vmem:[#allocation2 + $0x54] sm:$0xff]
        %v2000 = vld [vmem:[#allocation2 + $0x5c] sm:$0xff]
        %v2001 = vld [vmem:[#allocation2 + $0x64] sm:$0xff]
        %v2002 = vld [vmem:[#allocation2 + $0x6c] sm:$0xff]
        %v2003 = vld [vmem:[#allocation2 + $0x74] sm:$0xff]
        %v2004 = vld [vmem:[#allocation2 + $0x7c] sm:$0xff]
        %v2005 = vld [vmem:[#allocation2 + $0x84] sm:$0xff]
        %v2006 = vld [vmem:[#allocation2 + $0x8c] sm:$0xff]
        %v2007 = vld [vmem:[#allocation2 + $0x94] sm:$0xff]
        %v2008 = vld [vmem:[#allocation2 + $0x9c] sm:$0xff]
        %v2009 = vld [vmem:[#allocation2 + $0xa4] sm:$0xff]
        %v2010 = vld [vmem:[#allocation2 + $0xac] sm:$0xff]
        %v2011 = vld [vmem:[#allocation2 + $0xb4] sm:$0xff]
        %v2012 = vld [vmem:[#allocation2 + $0xbc] sm:$0xff]
        %v2013 = vld [vmem:[#allocation2 + $0xc4] sm:$0xff]
        %v2014 = vld [vmem:[#allocation2 + $0xcc] sm:$0xff]
        %v2015 = vld [vmem:[#allocation2 + $0xd4] sm:$0xff]
        %v2016 = vld [vmem:[#allocation2 + $0xdc] sm:$0xff]
        %v2017 = vld [vmem:[#allocation2 + $0xe4] sm:$0xff]
        %v2018 = vld [vmem:[#allocation2 + $0xec] sm:$0xff]
        %v2019 = vld [vmem:[#allocation2 + $0xf4] sm:$0xff]
        %v2020 = vld [vmem:[#allocation2 + $0xfc] sm:$0xff]
        %v2021 = vld [vmem:[#allocation2 + $0x104] sm:$0xff]
        %v2022 = vld [vmem:[#allocation2 + $0x10c] sm:$0xff]
        %v2023 = vld [vmem:[#allocation2 + $0x114] sm:$0xff]
        %v2024 = vld [vmem:[#allocation2 + $0x11c] sm:$0xff]
        %v2025 = vld [vmem:[#allocation2 + $0x124] sm:$0xff]
        %v2026 = vld [vmem:[#allocation2 + $0x12c] sm:$0x3f]
        %s2027 = scalar_lea.vmem %s1, 5
        %v2028 = vld [vmem:[%s2027] sm:$0x1]
        %2030 = vset.pattern.permute.xlu0 0
        %2031 = vperm.xlu0 %2030, %v1991
        %v2032 = vpop.permute.xlu0 %2031
        %2035 = vset.pattern.permute.xlu0 0
        %2036 = vperm.xlu0 %2035, %v1992
        %v2037 = vpop.permute.xlu0 %2036
        %2040 = vset.pattern.permute.xlu0 0
        %2041 = vperm.xlu0 %2040, %v1993
        %v2042 = vpop.permute.xlu0 %2041
        %2045 = vset.pattern.permute.xlu0 0
        %2046 = vperm.xlu0 %2045, %v1994
        %v2047 = vpop.permute.xlu0 %2046
        %2050 = vset.pattern.permute.xlu0 0
        %2051 = vperm.xlu0 %2050, %v1995
        %v2052 = vpop.permute.xlu0 %2051
        %2055 = vset.pattern.permute.xlu0 0
        %2056 = vperm.xlu0 %2055, %v1996
        %v2057 = vpop.permute.xlu0 %2056
        %2060 = vset.pattern.permute.xlu0 0
        %2061 = vperm.xlu0 %2060, %v1997
        %v2062 = vpop.permute.xlu0 %2061
        %2065 = vset.pattern.permute.xlu0 0
        %2066 = vperm.xlu0 %2065, %v1998
        %v2067 = vpop.permute.xlu0 %2066
        %2070 = vset.pattern.permute.xlu0 0
        %2071 = vperm.xlu0 %2070, %v1999
        %v2072 = vpop.permute.xlu0 %2071
        %2075 = vset.pattern.permute.xlu0 0
        %2076 = vperm.xlu0 %2075, %v2000
        %v2077 = vpop.permute.xlu0 %2076
        %2080 = vset.pattern.permute.xlu0 0
        %2081 = vperm.xlu0 %2080, %v2001
        %v2082 = vpop.permute.xlu0 %2081
        %2085 = vset.pattern.permute.xlu0 0
        %2086 = vperm.xlu0 %2085, %v2002
        %v2087 = vpop.permute.xlu0 %2086
        %2090 = vset.pattern.permute.xlu0 0
        %2091 = vperm.xlu0 %2090, %v2003
        %v2092 = vpop.permute.xlu0 %2091
        %2095 = vset.pattern.permute.xlu0 0
        %2096 = vperm.xlu0 %2095, %v2004
        %v2097 = vpop.permute.xlu0 %2096
        %2100 = vset.pattern.permute.xlu0 0
        %2101 = vperm.xlu0 %2100, %v2005
        %v2102 = vpop.permute.xlu0 %2101
        %2105 = vset.pattern.permute.xlu0 0
        %2106 = vperm.xlu0 %2105, %v2006
        %v2107 = vpop.permute.xlu0 %2106
        %2110 = vset.pattern.permute.xlu0 0
        %2111 = vperm.xlu0 %2110, %v2007
        %v2112 = vpop.permute.xlu0 %2111
        %2115 = vset.pattern.permute.xlu0 0
        %2116 = vperm.xlu0 %2115, %v2008
        %v2117 = vpop.permute.xlu0 %2116
        %2120 = vset.pattern.permute.xlu0 0
        %2121 = vperm.xlu0 %2120, %v2009
        %v2122 = vpop.permute.xlu0 %2121
        %2125 = vset.pattern.permute.xlu0 0
        %2126 = vperm.xlu0 %2125, %v2010
        %v2127 = vpop.permute.xlu0 %2126
        %2130 = vset.pattern.permute.xlu0 0
        %2131 = vperm.xlu0 %2130, %v2011
        %v2132 = vpop.permute.xlu0 %2131
        %2135 = vset.pattern.permute.xlu0 0
        %2136 = vperm.xlu0 %2135, %v2012
        %v2137 = vpop.permute.xlu0 %2136
        %2140 = vset.pattern.permute.xlu0 0
        %2141 = vperm.xlu0 %2140, %v2013
        %v2142 = vpop.permute.xlu0 %2141
        %2145 = vset.pattern.permute.xlu0 0
        %2146 = vperm.xlu0 %2145, %v2014
        %v2147 = vpop.permute.xlu0 %2146
        %2150 = vset.pattern.permute.xlu0 0
        %2151 = vperm.xlu0 %2150, %v2015
        %v2152 = vpop.permute.xlu0 %2151
        %2155 = vset.pattern.permute.xlu0 0
        %2156 = vperm.xlu0 %2155, %v2016
        %v2157 = vpop.permute.xlu0 %2156
        %2160 = vset.pattern.permute.xlu0 0
        %2161 = vperm.xlu0 %2160, %v2017
        %v2162 = vpop.permute.xlu0 %2161
        %2165 = vset.pattern.permute.xlu0 0
        %2166 = vperm.xlu0 %2165, %v2018
        %v2167 = vpop.permute.xlu0 %2166
        %2170 = vset.pattern.permute.xlu0 0
        %2171 = vperm.xlu0 %2170, %v2019
        %v2172 = vpop.permute.xlu0 %2171
        %2175 = vset.pattern.permute.xlu0 0
        %2176 = vperm.xlu0 %2175, %v2020
        %v2177 = vpop.permute.xlu0 %2176
        %2180 = vset.pattern.permute.xlu0 0
        %2181 = vperm.xlu0 %2180, %v2021
        %v2182 = vpop.permute.xlu0 %2181
        %2185 = vset.pattern.permute.xlu0 0
        %2186 = vperm.xlu0 %2185, %v2022
        %v2187 = vpop.permute.xlu0 %2186
        %2190 = vset.pattern.permute.xlu0 0
        %2191 = vperm.xlu0 %2190, %v2023
        %v2192 = vpop.permute.xlu0 %2191
        %2195 = vset.pattern.permute.xlu0 0
        %2196 = vperm.xlu0 %2195, %v2024
        %v2197 = vpop.permute.xlu0 %2196
        %2200 = vset.pattern.permute.xlu0 0
        %2201 = vperm.xlu0 %2200, %v2025
        %v2202 = vpop.permute.xlu0 %2201
        %2205 = vset.pattern.permute.xlu0 0
        %2206 = vperm.xlu0 %2205, %v2026
        %v2207 = vpop.permute.xlu0 %2206
        %v2210 = vperm.slane %v2028, 0
        %v2212 = vmul.f32 %v2032, %v2210
        %v2213 = vmul.f32 %v2037, %v2210
        %v2214 = vmul.f32 %v2042, %v2210
        %v2215 = vmul.f32 %v2047, %v2210
        %v2216 = vmul.f32 %v2052, %v2210
        %v2217 = vmul.f32 %v2057, %v2210
        %v2218 = vmul.f32 %v2062, %v2210
        %v2219 = vmul.f32 %v2067, %v2210
        %v2220 = vmul.f32 %v2072, %v2210
        %v2221 = vmul.f32 %v2077, %v2210
        %v2222 = vmul.f32 %v2082, %v2210
        %v2223 = vmul.f32 %v2087, %v2210
        %v2224 = vmul.f32 %v2092, %v2210
        %v2225 = vmul.f32 %v2097, %v2210
        %v2226 = vmul.f32 %v2102, %v2210
        %v2227 = vmul.f32 %v2107, %v2210
        %v2228 = vmul.f32 %v2112, %v2210
        %v2229 = vmul.f32 %v2117, %v2210
        %v2230 = vmul.f32 %v2122, %v2210
        %v2231 = vmul.f32 %v2127, %v2210
        %v2232 = vmul.f32 %v2132, %v2210
        %v2233 = vmul.f32 %v2137, %v2210
        %v2234 = vmul.f32 %v2142, %v2210
        %v2235 = vmul.f32 %v2147, %v2210
        %v2236 = vmul.f32 %v2152, %v2210
        %v2237 = vmul.f32 %v2157, %v2210
        %v2238 = vmul.f32 %v2162, %v2210
        %v2239 = vmul.f32 %v2167, %v2210
        %v2240 = vmul.f32 %v2172, %v2210
        %v2241 = vmul.f32 %v2177, %v2210
        %v2242 = vmul.f32 %v2182, %v2210
        %v2243 = vmul.f32 %v2187, %v2210
        %v2244 = vmul.f32 %v2192, %v2210
        %v2245 = vmul.f32 %v2197, %v2210
        %v2246 = vmul.f32 %v2202, %v2210
        %v2247 = vmul.f32 %v2207, %v2210
        %v2248 = vadd.f32 %v1955, %v2212
        %v2249 = vadd.f32 %v1956, %v2213
        %v2250 = vadd.f32 %v1957, %v2214
        %v2251 = vadd.f32 %v1958, %v2215
        %v2252 = vadd.f32 %v1959, %v2216
        %v2253 = vadd.f32 %v1960, %v2217
        %v2254 = vadd.f32 %v1961, %v2218
        %v2255 = vadd.f32 %v1962, %v2219
        %v2256 = vadd.f32 %v1963, %v2220
        %v2257 = vadd.f32 %v1964, %v2221
        %v2258 = vadd.f32 %v1965, %v2222
        %v2259 = vadd.f32 %v1966, %v2223
        %v2260 = vadd.f32 %v1967, %v2224
        %v2261 = vadd.f32 %v1968, %v2225
        %v2262 = vadd.f32 %v1969, %v2226
        %v2263 = vadd.f32 %v1970, %v2227
        %v2264 = vadd.f32 %v1971, %v2228
        %v2265 = vadd.f32 %v1972, %v2229
        %v2266 = vadd.f32 %v1973, %v2230
        %v2267 = vadd.f32 %v1974, %v2231
        %v2268 = vadd.f32 %v1975, %v2232
        %v2269 = vadd.f32 %v1976, %v2233
        %v2270 = vadd.f32 %v1977, %v2234
        %v2271 = vadd.f32 %v1978, %v2235
        %v2272 = vadd.f32 %v1979, %v2236
        %v2273 = vadd.f32 %v1980, %v2237
        %v2274 = vadd.f32 %v1981, %v2238
        %v2275 = vadd.f32 %v1982, %v2239
        %v2276 = vadd.f32 %v1983, %v2240
        %v2277 = vadd.f32 %v1984, %v2241
        %v2278 = vadd.f32 %v1985, %v2242
        %v2279 = vadd.f32 %v1986, %v2243
        %v2280 = vadd.f32 %v1987, %v2244
        %v2281 = vadd.f32 %v1988, %v2245
        %v2282 = vadd.f32 %v1989, %v2246
        %v2283 = vadd.f32 %v1990, %v2247
        %v2284 = vld [vmem:[#allocation2 + $0x24] sm:$0xff]
        %v2285 = vld [vmem:[#allocation2 + $0x2c] sm:$0xff]
        %v2286 = vld [vmem:[#allocation2 + $0x34] sm:$0xff]
        %v2287 = vld [vmem:[#allocation2 + $0x3c] sm:$0xff]
        %v2288 = vld [vmem:[#allocation2 + $0x44] sm:$0xff]
        %v2289 = vld [vmem:[#allocation2 + $0x4c] sm:$0xff]
        %v2290 = vld [vmem:[#allocation2 + $0x54] sm:$0xff]
        %v2291 = vld [vmem:[#allocation2 + $0x5c] sm:$0xff]
        %v2292 = vld [vmem:[#allocation2 + $0x64] sm:$0xff]
        %v2293 = vld [vmem:[#allocation2 + $0x6c] sm:$0xff]
        %v2294 = vld [vmem:[#allocation2 + $0x74] sm:$0xff]
        %v2295 = vld [vmem:[#allocation2 + $0x7c] sm:$0xff]
        %v2296 = vld [vmem:[#allocation2 + $0x84] sm:$0xff]
        %v2297 = vld [vmem:[#allocation2 + $0x8c] sm:$0xff]
        %v2298 = vld [vmem:[#allocation2 + $0x94] sm:$0xff]
        %v2299 = vld [vmem:[#allocation2 + $0x9c] sm:$0xff]
        %v2300 = vld [vmem:[#allocation2 + $0xa4] sm:$0xff]
        %v2301 = vld [vmem:[#allocation2 + $0xac] sm:$0xff]
        %v2302 = vld [vmem:[#allocation2 + $0xb4] sm:$0xff]
        %v2303 = vld [vmem:[#allocation2 + $0xbc] sm:$0xff]
        %v2304 = vld [vmem:[#allocation2 + $0xc4] sm:$0xff]
        %v2305 = vld [vmem:[#allocation2 + $0xcc] sm:$0xff]
        %v2306 = vld [vmem:[#allocation2 + $0xd4] sm:$0xff]
        %v2307 = vld [vmem:[#allocation2 + $0xdc] sm:$0xff]
        %v2308 = vld [vmem:[#allocation2 + $0xe4] sm:$0xff]
        %v2309 = vld [vmem:[#allocation2 + $0xec] sm:$0xff]
        %v2310 = vld [vmem:[#allocation2 + $0xf4] sm:$0xff]
        %v2311 = vld [vmem:[#allocation2 + $0xfc] sm:$0xff]
        %v2312 = vld [vmem:[#allocation2 + $0x104] sm:$0xff]
        %v2313 = vld [vmem:[#allocation2 + $0x10c] sm:$0xff]
        %v2314 = vld [vmem:[#allocation2 + $0x114] sm:$0xff]
        %v2315 = vld [vmem:[#allocation2 + $0x11c] sm:$0xff]
        %v2316 = vld [vmem:[#allocation2 + $0x124] sm:$0xff]
        %v2317 = vld [vmem:[#allocation2 + $0x12c] sm:$0xff]
        %v2318 = vld [vmem:[#allocation2 + $0x134] sm:$0xff]
        %v2319 = vld [vmem:[#allocation2 + $0x13c] sm:$0x3f]
        %s2320 = scalar_lea.vmem %s1, 6
        %v2321 = vld [vmem:[%s2320] sm:$0x1]
        %2323 = vset.pattern.permute.xlu0 0
        %2324 = vperm.xlu0 %2323, %v2284
        %v2325 = vpop.permute.xlu0 %2324
        %2328 = vset.pattern.permute.xlu0 0
        %2329 = vperm.xlu0 %2328, %v2285
        %v2330 = vpop.permute.xlu0 %2329
        %2333 = vset.pattern.permute.xlu0 0
        %2334 = vperm.xlu0 %2333, %v2286
        %v2335 = vpop.permute.xlu0 %2334
        %2338 = vset.pattern.permute.xlu0 0
        %2339 = vperm.xlu0 %2338, %v2287
        %v2340 = vpop.permute.xlu0 %2339
        %2343 = vset.pattern.permute.xlu0 0
        %2344 = vperm.xlu0 %2343, %v2288
        %v2345 = vpop.permute.xlu0 %2344
        %2348 = vset.pattern.permute.xlu0 0
        %2349 = vperm.xlu0 %2348, %v2289
        %v2350 = vpop.permute.xlu0 %2349
        %2353 = vset.pattern.permute.xlu0 0
        %2354 = vperm.xlu0 %2353, %v2290
        %v2355 = vpop.permute.xlu0 %2354
        %2358 = vset.pattern.permute.xlu0 0
        %2359 = vperm.xlu0 %2358, %v2291
        %v2360 = vpop.permute.xlu0 %2359
        %2363 = vset.pattern.permute.xlu0 0
        %2364 = vperm.xlu0 %2363, %v2292
        %v2365 = vpop.permute.xlu0 %2364
        %2368 = vset.pattern.permute.xlu0 0
        %2369 = vperm.xlu0 %2368, %v2293
        %v2370 = vpop.permute.xlu0 %2369
        %2373 = vset.pattern.permute.xlu0 0
        %2374 = vperm.xlu0 %2373, %v2294
        %v2375 = vpop.permute.xlu0 %2374
        %2378 = vset.pattern.permute.xlu0 0
        %2379 = vperm.xlu0 %2378, %v2295
        %v2380 = vpop.permute.xlu0 %2379
        %2383 = vset.pattern.permute.xlu0 0
        %2384 = vperm.xlu0 %2383, %v2296
        %v2385 = vpop.permute.xlu0 %2384
        %2388 = vset.pattern.permute.xlu0 0
        %2389 = vperm.xlu0 %2388, %v2297
        %v2390 = vpop.permute.xlu0 %2389
        %2393 = vset.pattern.permute.xlu0 0
        %2394 = vperm.xlu0 %2393, %v2298
        %v2395 = vpop.permute.xlu0 %2394
        %2398 = vset.pattern.permute.xlu0 0
        %2399 = vperm.xlu0 %2398, %v2299
        %v2400 = vpop.permute.xlu0 %2399
        %2403 = vset.pattern.permute.xlu0 0
        %2404 = vperm.xlu0 %2403, %v2300
        %v2405 = vpop.permute.xlu0 %2404
        %2408 = vset.pattern.permute.xlu0 0
        %2409 = vperm.xlu0 %2408, %v2301
        %v2410 = vpop.permute.xlu0 %2409
        %2413 = vset.pattern.permute.xlu0 0
        %2414 = vperm.xlu0 %2413, %v2302
        %v2415 = vpop.permute.xlu0 %2414
        %2418 = vset.pattern.permute.xlu0 0
        %2419 = vperm.xlu0 %2418, %v2303
        %v2420 = vpop.permute.xlu0 %2419
        %2423 = vset.pattern.permute.xlu0 0
        %2424 = vperm.xlu0 %2423, %v2304
        %v2425 = vpop.permute.xlu0 %2424
        %2428 = vset.pattern.permute.xlu0 0
        %2429 = vperm.xlu0 %2428, %v2305
        %v2430 = vpop.permute.xlu0 %2429
        %2433 = vset.pattern.permute.xlu0 0
        %2434 = vperm.xlu0 %2433, %v2306
        %v2435 = vpop.permute.xlu0 %2434
        %2438 = vset.pattern.permute.xlu0 0
        %2439 = vperm.xlu0 %2438, %v2307
        %v2440 = vpop.permute.xlu0 %2439
        %2443 = vset.pattern.permute.xlu0 0
        %2444 = vperm.xlu0 %2443, %v2308
        %v2445 = vpop.permute.xlu0 %2444
        %2448 = vset.pattern.permute.xlu0 0
        %2449 = vperm.xlu0 %2448, %v2309
        %v2450 = vpop.permute.xlu0 %2449
        %2453 = vset.pattern.permute.xlu0 0
        %2454 = vperm.xlu0 %2453, %v2310
        %v2455 = vpop.permute.xlu0 %2454
        %2458 = vset.pattern.permute.xlu0 0
        %2459 = vperm.xlu0 %2458, %v2311
        %v2460 = vpop.permute.xlu0 %2459
        %2463 = vset.pattern.permute.xlu0 0
        %2464 = vperm.xlu0 %2463, %v2312
        %v2465 = vpop.permute.xlu0 %2464
        %2468 = vset.pattern.permute.xlu0 0
        %2469 = vperm.xlu0 %2468, %v2313
        %v2470 = vpop.permute.xlu0 %2469
        %2473 = vset.pattern.permute.xlu0 0
        %2474 = vperm.xlu0 %2473, %v2314
        %v2475 = vpop.permute.xlu0 %2474
        %2478 = vset.pattern.permute.xlu0 0
        %2479 = vperm.xlu0 %2478, %v2315
        %v2480 = vpop.permute.xlu0 %2479
        %2483 = vset.pattern.permute.xlu0 0
        %2484 = vperm.xlu0 %2483, %v2316
        %v2485 = vpop.permute.xlu0 %2484
        %2488 = vset.pattern.permute.xlu0 0
        %2489 = vperm.xlu0 %2488, %v2317
        %v2490 = vpop.permute.xlu0 %2489
        %2493 = vset.pattern.permute.xlu0 0
        %2494 = vperm.xlu0 %2493, %v2318
        %v2495 = vpop.permute.xlu0 %2494
        %2498 = vset.pattern.permute.xlu0 0
        %2499 = vperm.xlu0 %2498, %v2319
        %v2500 = vpop.permute.xlu0 %2499
        %v2503 = vperm.slane %v2321, 0
        %v2505 = vmul.f32 %v2325, %v2503
        %v2506 = vmul.f32 %v2330, %v2503
        %v2507 = vmul.f32 %v2335, %v2503
        %v2508 = vmul.f32 %v2340, %v2503
        %v2509 = vmul.f32 %v2345, %v2503
        %v2510 = vmul.f32 %v2350, %v2503
        %v2511 = vmul.f32 %v2355, %v2503
        %v2512 = vmul.f32 %v2360, %v2503
        %v2513 = vmul.f32 %v2365, %v2503
        %v2514 = vmul.f32 %v2370, %v2503
        %v2515 = vmul.f32 %v2375, %v2503
        %v2516 = vmul.f32 %v2380, %v2503
        %v2517 = vmul.f32 %v2385, %v2503
        %v2518 = vmul.f32 %v2390, %v2503
        %v2519 = vmul.f32 %v2395, %v2503
        %v2520 = vmul.f32 %v2400, %v2503
        %v2521 = vmul.f32 %v2405, %v2503
        %v2522 = vmul.f32 %v2410, %v2503
        %v2523 = vmul.f32 %v2415, %v2503
        %v2524 = vmul.f32 %v2420, %v2503
        %v2525 = vmul.f32 %v2425, %v2503
        %v2526 = vmul.f32 %v2430, %v2503
        %v2527 = vmul.f32 %v2435, %v2503
        %v2528 = vmul.f32 %v2440, %v2503
        %v2529 = vmul.f32 %v2445, %v2503
        %v2530 = vmul.f32 %v2450, %v2503
        %v2531 = vmul.f32 %v2455, %v2503
        %v2532 = vmul.f32 %v2460, %v2503
        %v2533 = vmul.f32 %v2465, %v2503
        %v2534 = vmul.f32 %v2470, %v2503
        %v2535 = vmul.f32 %v2475, %v2503
        %v2536 = vmul.f32 %v2480, %v2503
        %v2537 = vmul.f32 %v2485, %v2503
        %v2538 = vmul.f32 %v2490, %v2503
        %v2539 = vmul.f32 %v2495, %v2503
        %v2540 = vmul.f32 %v2500, %v2503
        %v2541 = vadd.f32 %v2248, %v2505
        %v2542 = vadd.f32 %v2249, %v2506
        %v2543 = vadd.f32 %v2250, %v2507
        %v2544 = vadd.f32 %v2251, %v2508
        %v2545 = vadd.f32 %v2252, %v2509
        %v2546 = vadd.f32 %v2253, %v2510
        %v2547 = vadd.f32 %v2254, %v2511
        %v2548 = vadd.f32 %v2255, %v2512
        %v2549 = vadd.f32 %v2256, %v2513
        %v2550 = vadd.f32 %v2257, %v2514
        %v2551 = vadd.f32 %v2258, %v2515
        %v2552 = vadd.f32 %v2259, %v2516
        %v2553 = vadd.f32 %v2260, %v2517
        %v2554 = vadd.f32 %v2261, %v2518
        %v2555 = vadd.f32 %v2262, %v2519
        %v2556 = vadd.f32 %v2263, %v2520
        %v2557 = vadd.f32 %v2264, %v2521
        %v2558 = vadd.f32 %v2265, %v2522
        %v2559 = vadd.f32 %v2266, %v2523
        %v2560 = vadd.f32 %v2267, %v2524
        %v2561 = vadd.f32 %v2268, %v2525
        %v2562 = vadd.f32 %v2269, %v2526
        %v2563 = vadd.f32 %v2270, %v2527
        %v2564 = vadd.f32 %v2271, %v2528
        %v2565 = vadd.f32 %v2272, %v2529
        %v2566 = vadd.f32 %v2273, %v2530
        %v2567 = vadd.f32 %v2274, %v2531
        %v2568 = vadd.f32 %v2275, %v2532
        %v2569 = vadd.f32 %v2276, %v2533
        %v2570 = vadd.f32 %v2277, %v2534
        %v2571 = vadd.f32 %v2278, %v2535
        %v2572 = vadd.f32 %v2279, %v2536
        %v2573 = vadd.f32 %v2280, %v2537
        %v2574 = vadd.f32 %v2281, %v2538
        %v2575 = vadd.f32 %v2282, %v2539
        %v2576 = vadd.f32 %v2283, %v2540
        %v2577 = vld [vmem:[#allocation2 + $0x25] sm:$0xff]
        %v2578 = vld [vmem:[#allocation2 + $0x2d] sm:$0xff]
        %v2579 = vld [vmem:[#allocation2 + $0x35] sm:$0xff]
        %v2580 = vld [vmem:[#allocation2 + $0x3d] sm:$0xff]
        %v2581 = vld [vmem:[#allocation2 + $0x45] sm:$0xff]
        %v2582 = vld [vmem:[#allocation2 + $0x4d] sm:$0xff]
        %v2583 = vld [vmem:[#allocation2 + $0x55] sm:$0xff]
        %v2584 = vld [vmem:[#allocation2 + $0x5d] sm:$0xff]
        %v2585 = vld [vmem:[#allocation2 + $0x65] sm:$0xff]
        %v2586 = vld [vmem:[#allocation2 + $0x6d] sm:$0xff]
        %v2587 = vld [vmem:[#allocation2 + $0x75] sm:$0xff]
        %v2588 = vld [vmem:[#allocation2 + $0x7d] sm:$0xff]
        %v2589 = vld [vmem:[#allocation2 + $0x85] sm:$0xff]
        %v2590 = vld [vmem:[#allocation2 + $0x8d] sm:$0xff]
        %v2591 = vld [vmem:[#allocation2 + $0x95] sm:$0xff]
        %v2592 = vld [vmem:[#allocation2 + $0x9d] sm:$0xff]
        %v2593 = vld [vmem:[#allocation2 + $0xa5] sm:$0xff]
        %v2594 = vld [vmem:[#allocation2 + $0xad] sm:$0xff]
        %v2595 = vld [vmem:[#allocation2 + $0xb5] sm:$0xff]
        %v2596 = vld [vmem:[#allocation2 + $0xbd] sm:$0xff]
        %v2597 = vld [vmem:[#allocation2 + $0xc5] sm:$0xff]
        %v2598 = vld [vmem:[#allocation2 + $0xcd] sm:$0xff]
        %v2599 = vld [vmem:[#allocation2 + $0xd5] sm:$0xff]
        %v2600 = vld [vmem:[#allocation2 + $0xdd] sm:$0xff]
        %v2601 = vld [vmem:[#allocation2 + $0xe5] sm:$0xff]
        %v2602 = vld [vmem:[#allocation2 + $0xed] sm:$0xff]
        %v2603 = vld [vmem:[#allocation2 + $0xf5] sm:$0xff]
        %v2604 = vld [vmem:[#allocation2 + $0xfd] sm:$0xff]
        %v2605 = vld [vmem:[#allocation2 + $0x105] sm:$0xff]
        %v2606 = vld [vmem:[#allocation2 + $0x10d] sm:$0xff]
        %v2607 = vld [vmem:[#allocation2 + $0x115] sm:$0xff]
        %v2608 = vld [vmem:[#allocation2 + $0x11d] sm:$0xff]
        %v2609 = vld [vmem:[#allocation2 + $0x125] sm:$0xff]
        %v2610 = vld [vmem:[#allocation2 + $0x12d] sm:$0xff]
        %v2611 = vld [vmem:[#allocation2 + $0x135] sm:$0xff]
        %v2612 = vld [vmem:[#allocation2 + $0x13d] sm:$0x3f]
        %s2613 = scalar_lea.vmem %s1, 7
        %v2614 = vld [vmem:[%s2613] sm:$0x1]
        %2616 = vset.pattern.permute.xlu0 0
        %2617 = vperm.xlu0 %2616, %v2577
        %v2618 = vpop.permute.xlu0 %2617
        %2621 = vset.pattern.permute.xlu0 0
        %2622 = vperm.xlu0 %2621, %v2578
        %v2623 = vpop.permute.xlu0 %2622
        %2626 = vset.pattern.permute.xlu0 0
        %2627 = vperm.xlu0 %2626, %v2579
        %v2628 = vpop.permute.xlu0 %2627
        %2631 = vset.pattern.permute.xlu0 0
        %2632 = vperm.xlu0 %2631, %v2580
        %v2633 = vpop.permute.xlu0 %2632
        %2636 = vset.pattern.permute.xlu0 0
        %2637 = vperm.xlu0 %2636, %v2581
        %v2638 = vpop.permute.xlu0 %2637
        %2641 = vset.pattern.permute.xlu0 0
        %2642 = vperm.xlu0 %2641, %v2582
        %v2643 = vpop.permute.xlu0 %2642
        %2646 = vset.pattern.permute.xlu0 0
        %2647 = vperm.xlu0 %2646, %v2583
        %v2648 = vpop.permute.xlu0 %2647
        %2651 = vset.pattern.permute.xlu0 0
        %2652 = vperm.xlu0 %2651, %v2584
        %v2653 = vpop.permute.xlu0 %2652
        %2656 = vset.pattern.permute.xlu0 0
        %2657 = vperm.xlu0 %2656, %v2585
        %v2658 = vpop.permute.xlu0 %2657
        %2661 = vset.pattern.permute.xlu0 0
        %2662 = vperm.xlu0 %2661, %v2586
        %v2663 = vpop.permute.xlu0 %2662
        %2666 = vset.pattern.permute.xlu0 0
        %2667 = vperm.xlu0 %2666, %v2587
        %v2668 = vpop.permute.xlu0 %2667
        %2671 = vset.pattern.permute.xlu0 0
        %2672 = vperm.xlu0 %2671, %v2588
        %v2673 = vpop.permute.xlu0 %2672
        %2676 = vset.pattern.permute.xlu0 0
        %2677 = vperm.xlu0 %2676, %v2589
        %v2678 = vpop.permute.xlu0 %2677
        %2681 = vset.pattern.permute.xlu0 0
        %2682 = vperm.xlu0 %2681, %v2590
        %v2683 = vpop.permute.xlu0 %2682
        %2686 = vset.pattern.permute.xlu0 0
        %2687 = vperm.xlu0 %2686, %v2591
        %v2688 = vpop.permute.xlu0 %2687
        %2691 = vset.pattern.permute.xlu0 0
        %2692 = vperm.xlu0 %2691, %v2592
        %v2693 = vpop.permute.xlu0 %2692
        %2696 = vset.pattern.permute.xlu0 0
        %2697 = vperm.xlu0 %2696, %v2593
        %v2698 = vpop.permute.xlu0 %2697
        %2701 = vset.pattern.permute.xlu0 0
        %2702 = vperm.xlu0 %2701, %v2594
        %v2703 = vpop.permute.xlu0 %2702
        %2706 = vset.pattern.permute.xlu0 0
        %2707 = vperm.xlu0 %2706, %v2595
        %v2708 = vpop.permute.xlu0 %2707
        %2711 = vset.pattern.permute.xlu0 0
        %2712 = vperm.xlu0 %2711, %v2596
        %v2713 = vpop.permute.xlu0 %2712
        %2716 = vset.pattern.permute.xlu0 0
        %2717 = vperm.xlu0 %2716, %v2597
        %v2718 = vpop.permute.xlu0 %2717
        %2721 = vset.pattern.permute.xlu0 0
        %2722 = vperm.xlu0 %2721, %v2598
        %v2723 = vpop.permute.xlu0 %2722
        %2726 = vset.pattern.permute.xlu0 0
        %2727 = vperm.xlu0 %2726, %v2599
        %v2728 = vpop.permute.xlu0 %2727
        %2731 = vset.pattern.permute.xlu0 0
        %2732 = vperm.xlu0 %2731, %v2600
        %v2733 = vpop.permute.xlu0 %2732
        %2736 = vset.pattern.permute.xlu0 0
        %2737 = vperm.xlu0 %2736, %v2601
        %v2738 = vpop.permute.xlu0 %2737
        %2741 = vset.pattern.permute.xlu0 0
        %2742 = vperm.xlu0 %2741, %v2602
        %v2743 = vpop.permute.xlu0 %2742
        %2746 = vset.pattern.permute.xlu0 0
        %2747 = vperm.xlu0 %2746, %v2603
        %v2748 = vpop.permute.xlu0 %2747
        %2751 = vset.pattern.permute.xlu0 0
        %2752 = vperm.xlu0 %2751, %v2604
        %v2753 = vpop.permute.xlu0 %2752
        %2756 = vset.pattern.permute.xlu0 0
        %2757 = vperm.xlu0 %2756, %v2605
        %v2758 = vpop.permute.xlu0 %2757
        %2761 = vset.pattern.permute.xlu0 0
        %2762 = vperm.xlu0 %2761, %v2606
        %v2763 = vpop.permute.xlu0 %2762
        %2766 = vset.pattern.permute.xlu0 0
        %2767 = vperm.xlu0 %2766, %v2607
        %v2768 = vpop.permute.xlu0 %2767
        %2771 = vset.pattern.permute.xlu0 0
        %2772 = vperm.xlu0 %2771, %v2608
        %v2773 = vpop.permute.xlu0 %2772
        %2776 = vset.pattern.permute.xlu0 0
        %2777 = vperm.xlu0 %2776, %v2609
        %v2778 = vpop.permute.xlu0 %2777
        %2781 = vset.pattern.permute.xlu0 0
        %2782 = vperm.xlu0 %2781, %v2610
        %v2783 = vpop.permute.xlu0 %2782
        %2786 = vset.pattern.permute.xlu0 0
        %2787 = vperm.xlu0 %2786, %v2611
        %v2788 = vpop.permute.xlu0 %2787
        %2791 = vset.pattern.permute.xlu0 0
        %2792 = vperm.xlu0 %2791, %v2612
        %v2793 = vpop.permute.xlu0 %2792
        %v2796 = vperm.slane %v2614, 0
        %v2798 = vmul.f32 %v2618, %v2796
        %v2799 = vmul.f32 %v2623, %v2796
        %v2800 = vmul.f32 %v2628, %v2796
        %v2801 = vmul.f32 %v2633, %v2796
        %v2802 = vmul.f32 %v2638, %v2796
        %v2803 = vmul.f32 %v2643, %v2796
        %v2804 = vmul.f32 %v2648, %v2796
        %v2805 = vmul.f32 %v2653, %v2796
        %v2806 = vmul.f32 %v2658, %v2796
        %v2807 = vmul.f32 %v2663, %v2796
        %v2808 = vmul.f32 %v2668, %v2796
        %v2809 = vmul.f32 %v2673, %v2796
        %v2810 = vmul.f32 %v2678, %v2796
        %v2811 = vmul.f32 %v2683, %v2796
        %v2812 = vmul.f32 %v2688, %v2796
        %v2813 = vmul.f32 %v2693, %v2796
        %v2814 = vmul.f32 %v2698, %v2796
        %v2815 = vmul.f32 %v2703, %v2796
        %v2816 = vmul.f32 %v2708, %v2796
        %v2817 = vmul.f32 %v2713, %v2796
        %v2818 = vmul.f32 %v2718, %v2796
        %v2819 = vmul.f32 %v2723, %v2796
        %v2820 = vmul.f32 %v2728, %v2796
        %v2821 = vmul.f32 %v2733, %v2796
        %v2822 = vmul.f32 %v2738, %v2796
        %v2823 = vmul.f32 %v2743, %v2796
        %v2824 = vmul.f32 %v2748, %v2796
        %v2825 = vmul.f32 %v2753, %v2796
        %v2826 = vmul.f32 %v2758, %v2796
        %v2827 = vmul.f32 %v2763, %v2796
        %v2828 = vmul.f32 %v2768, %v2796
        %v2829 = vmul.f32 %v2773, %v2796
        %v2830 = vmul.f32 %v2778, %v2796
        %v2831 = vmul.f32 %v2783, %v2796
        %v2832 = vmul.f32 %v2788, %v2796
        %v2833 = vmul.f32 %v2793, %v2796
        %v2834 = vadd.f32 %v2541, %v2798
        %v2835 = vadd.f32 %v2542, %v2799
        %v2836 = vadd.f32 %v2543, %v2800
        %v2837 = vadd.f32 %v2544, %v2801
        %v2838 = vadd.f32 %v2545, %v2802
        %v2839 = vadd.f32 %v2546, %v2803
        %v2840 = vadd.f32 %v2547, %v2804
        %v2841 = vadd.f32 %v2548, %v2805
        %v2842 = vadd.f32 %v2549, %v2806
        %v2843 = vadd.f32 %v2550, %v2807
        %v2844 = vadd.f32 %v2551, %v2808
        %v2845 = vadd.f32 %v2552, %v2809
        %v2846 = vadd.f32 %v2553, %v2810
        %v2847 = vadd.f32 %v2554, %v2811
        %v2848 = vadd.f32 %v2555, %v2812
        %v2849 = vadd.f32 %v2556, %v2813
        %v2850 = vadd.f32 %v2557, %v2814
        %v2851 = vadd.f32 %v2558, %v2815
        %v2852 = vadd.f32 %v2559, %v2816
        %v2853 = vadd.f32 %v2560, %v2817
        %v2854 = vadd.f32 %v2561, %v2818
        %v2855 = vadd.f32 %v2562, %v2819
        %v2856 = vadd.f32 %v2563, %v2820
        %v2857 = vadd.f32 %v2564, %v2821
        %v2858 = vadd.f32 %v2565, %v2822
        %v2859 = vadd.f32 %v2566, %v2823
        %v2860 = vadd.f32 %v2567, %v2824
        %v2861 = vadd.f32 %v2568, %v2825
        %v2862 = vadd.f32 %v2569, %v2826
        %v2863 = vadd.f32 %v2570, %v2827
        %v2864 = vadd.f32 %v2571, %v2828
        %v2865 = vadd.f32 %v2572, %v2829
        %v2866 = vadd.f32 %v2573, %v2830
        %v2867 = vadd.f32 %v2574, %v2831
        %v2868 = vadd.f32 %v2575, %v2832
        %v2869 = vadd.f32 %v2576, %v2833
        %v2870 = vld [vmem:[#allocation2 + $0x26] sm:$0xff]
        %v2871 = vld [vmem:[#allocation2 + $0x2e] sm:$0xff]
        %v2872 = vld [vmem:[#allocation2 + $0x36] sm:$0xff]
        %v2873 = vld [vmem:[#allocation2 + $0x3e] sm:$0xff]
        %v2874 = vld [vmem:[#allocation2 + $0x46] sm:$0xff]
        %v2875 = vld [vmem:[#allocation2 + $0x4e] sm:$0xff]
        %v2876 = vld [vmem:[#allocation2 + $0x56] sm:$0xff]
        %v2877 = vld [vmem:[#allocation2 + $0x5e] sm:$0xff]
        %v2878 = vld [vmem:[#allocation2 + $0x66] sm:$0xff]
        %v2879 = vld [vmem:[#allocation2 + $0x6e] sm:$0xff]
        %v2880 = vld [vmem:[#allocation2 + $0x76] sm:$0xff]
        %v2881 = vld [vmem:[#allocation2 + $0x7e] sm:$0xff]
        %v2882 = vld [vmem:[#allocation2 + $0x86] sm:$0xff]
        %v2883 = vld [vmem:[#allocation2 + $0x8e] sm:$0xff]
        %v2884 = vld [vmem:[#allocation2 + $0x96] sm:$0xff]
        %v2885 = vld [vmem:[#allocation2 + $0x9e] sm:$0xff]
        %v2886 = vld [vmem:[#allocation2 + $0xa6] sm:$0xff]
        %v2887 = vld [vmem:[#allocation2 + $0xae] sm:$0xff]
        %v2888 = vld [vmem:[#allocation2 + $0xb6] sm:$0xff]
        %v2889 = vld [vmem:[#allocation2 + $0xbe] sm:$0xff]
        %v2890 = vld [vmem:[#allocation2 + $0xc6] sm:$0xff]
        %v2891 = vld [vmem:[#allocation2 + $0xce] sm:$0xff]
        %v2892 = vld [vmem:[#allocation2 + $0xd6] sm:$0xff]
        %v2893 = vld [vmem:[#allocation2 + $0xde] sm:$0xff]
        %v2894 = vld [vmem:[#allocation2 + $0xe6] sm:$0xff]
        %v2895 = vld [vmem:[#allocation2 + $0xee] sm:$0xff]
        %v2896 = vld [vmem:[#allocation2 + $0xf6] sm:$0xff]
        %v2897 = vld [vmem:[#allocation2 + $0xfe] sm:$0xff]
        %v2898 = vld [vmem:[#allocation2 + $0x106] sm:$0xff]
        %v2899 = vld [vmem:[#allocation2 + $0x10e] sm:$0xff]
        %v2900 = vld [vmem:[#allocation2 + $0x116] sm:$0xff]
        %v2901 = vld [vmem:[#allocation2 + $0x11e] sm:$0xff]
        %v2902 = vld [vmem:[#allocation2 + $0x126] sm:$0xff]
        %v2903 = vld [vmem:[#allocation2 + $0x12e] sm:$0xff]
        %v2904 = vld [vmem:[#allocation2 + $0x136] sm:$0xff]
        %v2905 = vld [vmem:[#allocation2 + $0x13e] sm:$0x3f]
        %s2906 = scalar_lea.vmem %s1, 8
        %v2907 = vld [vmem:[%s2906] sm:$0x1]
        %2909 = vset.pattern.permute.xlu0 0
        %2910 = vperm.xlu0 %2909, %v2870
        %v2911 = vpop.permute.xlu0 %2910
        %2914 = vset.pattern.permute.xlu0 0
        %2915 = vperm.xlu0 %2914, %v2871
        %v2916 = vpop.permute.xlu0 %2915
        %2919 = vset.pattern.permute.xlu0 0
        %2920 = vperm.xlu0 %2919, %v2872
        %v2921 = vpop.permute.xlu0 %2920
        %2924 = vset.pattern.permute.xlu0 0
        %2925 = vperm.xlu0 %2924, %v2873
        %v2926 = vpop.permute.xlu0 %2925
        %2929 = vset.pattern.permute.xlu0 0
        %2930 = vperm.xlu0 %2929, %v2874
        %v2931 = vpop.permute.xlu0 %2930
        %2934 = vset.pattern.permute.xlu0 0
        %2935 = vperm.xlu0 %2934, %v2875
        %v2936 = vpop.permute.xlu0 %2935
        %2939 = vset.pattern.permute.xlu0 0
        %2940 = vperm.xlu0 %2939, %v2876
        %v2941 = vpop.permute.xlu0 %2940
        %2944 = vset.pattern.permute.xlu0 0
        %2945 = vperm.xlu0 %2944, %v2877
        %v2946 = vpop.permute.xlu0 %2945
        %2949 = vset.pattern.permute.xlu0 0
        %2950 = vperm.xlu0 %2949, %v2878
        %v2951 = vpop.permute.xlu0 %2950
        %2954 = vset.pattern.permute.xlu0 0
        %2955 = vperm.xlu0 %2954, %v2879
        %v2956 = vpop.permute.xlu0 %2955
        %2959 = vset.pattern.permute.xlu0 0
        %2960 = vperm.xlu0 %2959, %v2880
        %v2961 = vpop.permute.xlu0 %2960
        %2964 = vset.pattern.permute.xlu0 0
        %2965 = vperm.xlu0 %2964, %v2881
        %v2966 = vpop.permute.xlu0 %2965
        %2969 = vset.pattern.permute.xlu0 0
        %2970 = vperm.xlu0 %2969, %v2882
        %v2971 = vpop.permute.xlu0 %2970
        %2974 = vset.pattern.permute.xlu0 0
        %2975 = vperm.xlu0 %2974, %v2883
        %v2976 = vpop.permute.xlu0 %2975
        %2979 = vset.pattern.permute.xlu0 0
        %2980 = vperm.xlu0 %2979, %v2884
        %v2981 = vpop.permute.xlu0 %2980
        %2984 = vset.pattern.permute.xlu0 0
        %2985 = vperm.xlu0 %2984, %v2885
        %v2986 = vpop.permute.xlu0 %2985
        %2989 = vset.pattern.permute.xlu0 0
        %2990 = vperm.xlu0 %2989, %v2886
        %v2991 = vpop.permute.xlu0 %2990
        %2994 = vset.pattern.permute.xlu0 0
        %2995 = vperm.xlu0 %2994, %v2887
        %v2996 = vpop.permute.xlu0 %2995
        %2999 = vset.pattern.permute.xlu0 0
        %3000 = vperm.xlu0 %2999, %v2888
        %v3001 = vpop.permute.xlu0 %3000
        %3004 = vset.pattern.permute.xlu0 0
        %3005 = vperm.xlu0 %3004, %v2889
        %v3006 = vpop.permute.xlu0 %3005
        %3009 = vset.pattern.permute.xlu0 0
        %3010 = vperm.xlu0 %3009, %v2890
        %v3011 = vpop.permute.xlu0 %3010
        %3014 = vset.pattern.permute.xlu0 0
        %3015 = vperm.xlu0 %3014, %v2891
        %v3016 = vpop.permute.xlu0 %3015
        %3019 = vset.pattern.permute.xlu0 0
        %3020 = vperm.xlu0 %3019, %v2892
        %v3021 = vpop.permute.xlu0 %3020
        %3024 = vset.pattern.permute.xlu0 0
        %3025 = vperm.xlu0 %3024, %v2893
        %v3026 = vpop.permute.xlu0 %3025
        %3029 = vset.pattern.permute.xlu0 0
        %3030 = vperm.xlu0 %3029, %v2894
        %v3031 = vpop.permute.xlu0 %3030
        %3034 = vset.pattern.permute.xlu0 0
        %3035 = vperm.xlu0 %3034, %v2895
        %v3036 = vpop.permute.xlu0 %3035
        %3039 = vset.pattern.permute.xlu0 0
        %3040 = vperm.xlu0 %3039, %v2896
        %v3041 = vpop.permute.xlu0 %3040
        %3044 = vset.pattern.permute.xlu0 0
        %3045 = vperm.xlu0 %3044, %v2897
        %v3046 = vpop.permute.xlu0 %3045
        %3049 = vset.pattern.permute.xlu0 0
        %3050 = vperm.xlu0 %3049, %v2898
        %v3051 = vpop.permute.xlu0 %3050
        %3054 = vset.pattern.permute.xlu0 0
        %3055 = vperm.xlu0 %3054, %v2899
        %v3056 = vpop.permute.xlu0 %3055
        %3059 = vset.pattern.permute.xlu0 0
        %3060 = vperm.xlu0 %3059, %v2900
        %v3061 = vpop.permute.xlu0 %3060
        %3064 = vset.pattern.permute.xlu0 0
        %3065 = vperm.xlu0 %3064, %v2901
        %v3066 = vpop.permute.xlu0 %3065
        %3069 = vset.pattern.permute.xlu0 0
        %3070 = vperm.xlu0 %3069, %v2902
        %v3071 = vpop.permute.xlu0 %3070
        %3074 = vset.pattern.permute.xlu0 0
        %3075 = vperm.xlu0 %3074, %v2903
        %v3076 = vpop.permute.xlu0 %3075
        %3079 = vset.pattern.permute.xlu0 0
        %3080 = vperm.xlu0 %3079, %v2904
        %v3081 = vpop.permute.xlu0 %3080
        %3084 = vset.pattern.permute.xlu0 0
        %3085 = vperm.xlu0 %3084, %v2905
        %v3086 = vpop.permute.xlu0 %3085
        %v3089 = vperm.slane %v2907, 0
        %v3091 = vmul.f32 %v2911, %v3089
        %v3092 = vmul.f32 %v2916, %v3089
        %v3093 = vmul.f32 %v2921, %v3089
        %v3094 = vmul.f32 %v2926, %v3089
        %v3095 = vmul.f32 %v2931, %v3089
        %v3096 = vmul.f32 %v2936, %v3089
        %v3097 = vmul.f32 %v2941, %v3089
        %v3098 = vmul.f32 %v2946, %v3089
        %v3099 = vmul.f32 %v2951, %v3089
        %v3100 = vmul.f32 %v2956, %v3089
        %v3101 = vmul.f32 %v2961, %v3089
        %v3102 = vmul.f32 %v2966, %v3089
        %v3103 = vmul.f32 %v2971, %v3089
        %v3104 = vmul.f32 %v2976, %v3089
        %v3105 = vmul.f32 %v2981, %v3089
        %v3106 = vmul.f32 %v2986, %v3089
        %v3107 = vmul.f32 %v2991, %v3089
        %v3108 = vmul.f32 %v2996, %v3089
        %v3109 = vmul.f32 %v3001, %v3089
        %v3110 = vmul.f32 %v3006, %v3089
        %v3111 = vmul.f32 %v3011, %v3089
        %v3112 = vmul.f32 %v3016, %v3089
        %v3113 = vmul.f32 %v3021, %v3089
        %v3114 = vmul.f32 %v3026, %v3089
        %v3115 = vmul.f32 %v3031, %v3089
        %v3116 = vmul.f32 %v3036, %v3089
        %v3117 = vmul.f32 %v3041, %v3089
        %v3118 = vmul.f32 %v3046, %v3089
        %v3119 = vmul.f32 %v3051, %v3089
        %v3120 = vmul.f32 %v3056, %v3089
        %v3121 = vmul.f32 %v3061, %v3089
        %v3122 = vmul.f32 %v3066, %v3089
        %v3123 = vmul.f32 %v3071, %v3089
        %v3124 = vmul.f32 %v3076, %v3089
        %v3125 = vmul.f32 %v3081, %v3089
        %v3126 = vmul.f32 %v3086, %v3089
        %v3127 = vadd.f32 %v2834, %v3091
        %v3128 = vadd.f32 %v2835, %v3092
        %v3129 = vadd.f32 %v2836, %v3093
        %v3130 = vadd.f32 %v2837, %v3094
        %v3131 = vadd.f32 %v2838, %v3095
        %v3132 = vadd.f32 %v2839, %v3096
        %v3133 = vadd.f32 %v2840, %v3097
        %v3134 = vadd.f32 %v2841, %v3098
        %v3135 = vadd.f32 %v2842, %v3099
        %v3136 = vadd.f32 %v2843, %v3100
        %v3137 = vadd.f32 %v2844, %v3101
        %v3138 = vadd.f32 %v2845, %v3102
        %v3139 = vadd.f32 %v2846, %v3103
        %v3140 = vadd.f32 %v2847, %v3104
        %v3141 = vadd.f32 %v2848, %v3105
        %v3142 = vadd.f32 %v2849, %v3106
        %v3143 = vadd.f32 %v2850, %v3107
        %v3144 = vadd.f32 %v2851, %v3108
        %v3145 = vadd.f32 %v2852, %v3109
        %v3146 = vadd.f32 %v2853, %v3110
        %v3147 = vadd.f32 %v2854, %v3111
        %v3148 = vadd.f32 %v2855, %v3112
        %v3149 = vadd.f32 %v2856, %v3113
        %v3150 = vadd.f32 %v2857, %v3114
        %v3151 = vadd.f32 %v2858, %v3115
        %v3152 = vadd.f32 %v2859, %v3116
        %v3153 = vadd.f32 %v2860, %v3117
        %v3154 = vadd.f32 %v2861, %v3118
        %v3155 = vadd.f32 %v2862, %v3119
        %v3156 = vadd.f32 %v2863, %v3120
        %v3157 = vadd.f32 %v2864, %v3121
        %v3158 = vadd.f32 %v2865, %v3122
        %v3159 = vadd.f32 %v2866, %v3123
        %v3160 = vadd.f32 %v2867, %v3124
        %v3161 = vadd.f32 %v2868, %v3125
        %v3162 = vadd.f32 %v2869, %v3126
        %v3163 = vld [vmem:[%s2] sm:$0x1]
        %v3165 = vperm.slane %v3163, 0
        %v3167 = vadd.f32 %v3127, %v3165
        %v3168 = vadd.f32 %v3128, %v3165
        %v3169 = vadd.f32 %v3129, %v3165
        %v3170 = vadd.f32 %v3130, %v3165
        %v3171 = vadd.f32 %v3131, %v3165
        %v3172 = vadd.f32 %v3132, %v3165
        %v3173 = vadd.f32 %v3133, %v3165
        %v3174 = vadd.f32 %v3134, %v3165
        %v3175 = vadd.f32 %v3135, %v3165
        %v3176 = vadd.f32 %v3136, %v3165
        %v3177 = vadd.f32 %v3137, %v3165
        %v3178 = vadd.f32 %v3138, %v3165
        %v3179 = vadd.f32 %v3139, %v3165
        %v3180 = vadd.f32 %v3140, %v3165
        %v3181 = vadd.f32 %v3141, %v3165
        %v3182 = vadd.f32 %v3142, %v3165
        %v3183 = vadd.f32 %v3143, %v3165
        %v3184 = vadd.f32 %v3144, %v3165
        %v3185 = vadd.f32 %v3145, %v3165
        %v3186 = vadd.f32 %v3146, %v3165
        %v3187 = vadd.f32 %v3147, %v3165
        %v3188 = vadd.f32 %v3148, %v3165
        %v3189 = vadd.f32 %v3149, %v3165
        %v3190 = vadd.f32 %v3150, %v3165
        %v3191 = vadd.f32 %v3151, %v3165
        %v3192 = vadd.f32 %v3152, %v3165
        %v3193 = vadd.f32 %v3153, %v3165
        %v3194 = vadd.f32 %v3154, %v3165
        %v3195 = vadd.f32 %v3155, %v3165
        %v3196 = vadd.f32 %v3156, %v3165
        %v3197 = vadd.f32 %v3157, %v3165
        %v3198 = vadd.f32 %v3158, %v3165
        %v3199 = vadd.f32 %v3159, %v3165
        %v3200 = vadd.f32 %v3160, %v3165
        %v3201 = vadd.f32 %v3161, %v3165
        %v3202 = vadd.f32 %v3162, %v3165
        %v3203 = vmax.f32 %v3167, 0.0
        %v3204 = vmax.f32 %v3168, 0.0
        %v3205 = vmax.f32 %v3169, 0.0
        %v3206 = vmax.f32 %v3170, 0.0
        %v3207 = vmax.f32 %v3171, 0.0
        %v3208 = vmax.f32 %v3172, 0.0
        %v3209 = vmax.f32 %v3173, 0.0
        %v3210 = vmax.f32 %v3174, 0.0
        %v3211 = vmax.f32 %v3175, 0.0
        %v3212 = vmax.f32 %v3176, 0.0
        %v3213 = vmax.f32 %v3177, 0.0
        %v3214 = vmax.f32 %v3178, 0.0
        %v3215 = vmax.f32 %v3179, 0.0
        %v3216 = vmax.f32 %v3180, 0.0
        %v3217 = vmax.f32 %v3181, 0.0
        %v3218 = vmax.f32 %v3182, 0.0
        %v3219 = vmax.f32 %v3183, 0.0
        %v3220 = vmax.f32 %v3184, 0.0
        %v3221 = vmax.f32 %v3185, 0.0
        %v3222 = vmax.f32 %v3186, 0.0
        %v3223 = vmax.f32 %v3187, 0.0
        %v3224 = vmax.f32 %v3188, 0.0
        %v3225 = vmax.f32 %v3189, 0.0
        %v3226 = vmax.f32 %v3190, 0.0
        %v3227 = vmax.f32 %v3191, 0.0
        %v3228 = vmax.f32 %v3192, 0.0
        %v3229 = vmax.f32 %v3193, 0.0
        %v3230 = vmax.f32 %v3194, 0.0
        %v3231 = vmax.f32 %v3195, 0.0
        %v3232 = vmax.f32 %v3196, 0.0
        %v3233 = vmax.f32 %v3197, 0.0
        %v3234 = vmax.f32 %v3198, 0.0
        %v3235 = vmax.f32 %v3199, 0.0
        %v3236 = vmax.f32 %v3200, 0.0
        %v3237 = vmax.f32 %v3201, 0.0
        %v3238 = vmax.f32 %v3202, 0.0
        %3239 = vst.msk [vmem:[#allocation5] sm:$0xff] %vm442, %v3203
        %3240 = vst.msk [vmem:[#allocation5 + $0x8] sm:$0xff] %vm442, %v3204
        %3241 = vst.msk [vmem:[#allocation5 + $0x10] sm:$0xff] %vm442, %v3205
        %3242 = vst.msk [vmem:[#allocation5 + $0x18] sm:$0xff] %vm442, %v3206
        %3243 = vst.msk [vmem:[#allocation5 + $0x20] sm:$0xff] %vm442, %v3207
        %3244 = vst.msk [vmem:[#allocation5 + $0x28] sm:$0xff] %vm442, %v3208
        %3245 = vst.msk [vmem:[#allocation5 + $0x30] sm:$0xff] %vm442, %v3209
        %3246 = vst.msk [vmem:[#allocation5 + $0x38] sm:$0xff] %vm442, %v3210
        %3247 = vst.msk [vmem:[#allocation5 + $0x40] sm:$0xff] %vm442, %v3211
        %3248 = vst.msk [vmem:[#allocation5 + $0x48] sm:$0xff] %vm442, %v3212
        %3249 = vst.msk [vmem:[#allocation5 + $0x50] sm:$0xff] %vm442, %v3213
        %3250 = vst.msk [vmem:[#allocation5 + $0x58] sm:$0xff] %vm442, %v3214
        %3251 = vst.msk [vmem:[#allocation5 + $0x60] sm:$0xff] %vm442, %v3215
        %3252 = vst.msk [vmem:[#allocation5 + $0x68] sm:$0xff] %vm442, %v3216
        %3253 = vst.msk [vmem:[#allocation5 + $0x70] sm:$0xff] %vm442, %v3217
        %3254 = vst.msk [vmem:[#allocation5 + $0x78] sm:$0xff] %vm442, %v3218
        %3255 = vst.msk [vmem:[#allocation5 + $0x80] sm:$0xff] %vm442, %v3219
        %3256 = vst.msk [vmem:[#allocation5 + $0x88] sm:$0xff] %vm442, %v3220
        %3257 = vst.msk [vmem:[#allocation5 + $0x90] sm:$0xff] %vm442, %v3221
        %3258 = vst.msk [vmem:[#allocation5 + $0x98] sm:$0xff] %vm442, %v3222
        %3259 = vst.msk [vmem:[#allocation5 + $0xa0] sm:$0xff] %vm442, %v3223
        %3260 = vst.msk [vmem:[#allocation5 + $0xa8] sm:$0xff] %vm442, %v3224
        %3261 = vst.msk [vmem:[#allocation5 + $0xb0] sm:$0xff] %vm442, %v3225
        %3262 = vst.msk [vmem:[#allocation5 + $0xb8] sm:$0xff] %vm442, %v3226
        %3263 = vst.msk [vmem:[#allocation5 + $0xc0] sm:$0xff] %vm442, %v3227
        %3264 = vst.msk [vmem:[#allocation5 + $0xc8] sm:$0xff] %vm442, %v3228
        %3265 = vst.msk [vmem:[#allocation5 + $0xd0] sm:$0xff] %vm442, %v3229
        %3266 = vst.msk [vmem:[#allocation5 + $0xd8] sm:$0xff] %vm442, %v3230
        %3267 = vst.msk [vmem:[#allocation5 + $0xe0] sm:$0xff] %vm442, %v3231
        %3268 = vst.msk [vmem:[#allocation5 + $0xe8] sm:$0xff] %vm442, %v3232
        %3269 = vst.msk [vmem:[#allocation5 + $0xf0] sm:$0xff] %vm442, %v3233
        %3270 = vst.msk [vmem:[#allocation5 + $0xf8] sm:$0xff] %vm442, %v3234
        %3271 = vst.msk [vmem:[#allocation5 + $0x100] sm:$0xff] %vm442, %v3235
        %3272 = vst.msk [vmem:[#allocation5 + $0x108] sm:$0xff] %vm442, %v3236
        %3273 = vst.msk [vmem:[#allocation5 + $0x110] sm:$0xff] %vm442, %v3237
        %vm3274 = vcmask 128000
        %3275 = vst.msk [vmem:[#allocation5 + $0x118] sm:$0x3f] %vm3274, %v3238
        %v3276 = vld [vmem:[#allocation5] sm:$0xff]
        %v3277 = vld [vmem:[#allocation5 + $0x8] sm:$0xff]
        %v3278 = vld [vmem:[#allocation5 + $0x12] sm:$0xff]
        %v3279 = vld [vmem:[#allocation5 + $0x1a] sm:$0xff]
        %v3280 = vmax.f32 %v3276, %v3278
        %v3281 = vmax.f32 %v3277, %v3279
        %3282 = vst.msk [vmem:[#allocation8] sm:$0xff] %vm442, %v3280
        %3283 = vst.msk [vmem:[#allocation8 + $0x8] sm:$0xff] %vm442, %v3281
        %v3284 = vld [vmem:[#allocation5 + $0x24] sm:$0xff]
        %v3285 = vld [vmem:[#allocation5 + $0x2c] sm:$0xff]
        %v3286 = vld [vmem:[#allocation5 + $0x36] sm:$0xff]
        %v3287 = vld [vmem:[#allocation5 + $0x3e] sm:$0xff]
        %v3288 = vmax.f32 %v3284, %v3286
        %v3289 = vmax.f32 %v3285, %v3287
        %3290 = vst.msk [vmem:[#allocation8 + $0x10] sm:$0xff] %vm442, %v3288
        %3291 = vst.msk [vmem:[#allocation8 + $0x18] sm:$0xff] %vm442, %v3289
        %v3292 = vld [vmem:[#allocation5 + $0x48] sm:$0xff]
        %v3293 = vld [vmem:[#allocation5 + $0x50] sm:$0xff]
        %v3294 = vld [vmem:[#allocation5 + $0x5a] sm:$0xff]
        %v3295 = vld [vmem:[#allocation5 + $0x62] sm:$0xff]
        %v3296 = vmax.f32 %v3292, %v3294
        %v3297 = vmax.f32 %v3293, %v3295
        %3298 = vst.msk [vmem:[#allocation8 + $0x20] sm:$0xff] %vm442, %v3296
        %3299 = vst.msk [vmem:[#allocation8 + $0x28] sm:$0xff] %vm442, %v3297
        %v3300 = vld [vmem:[#allocation5 + $0x6c] sm:$0xff]
        %v3301 = vld [vmem:[#allocation5 + $0x74] sm:$0xff]
        %v3302 = vld [vmem:[#allocation5 + $0x7e] sm:$0xff]
        %v3303 = vld [vmem:[#allocation5 + $0x86] sm:$0xff]
        %v3304 = vmax.f32 %v3300, %v3302
        %v3305 = vmax.f32 %v3301, %v3303
        %3306 = vst.msk [vmem:[#allocation8 + $0x30] sm:$0xff] %vm442, %v3304
        %3307 = vst.msk [vmem:[#allocation8 + $0x38] sm:$0xff] %vm442, %v3305
        %v3308 = vld [vmem:[#allocation5 + $0x90] sm:$0xff]
        %v3309 = vld [vmem:[#allocation5 + $0x98] sm:$0xff]
        %v3310 = vld [vmem:[#allocation5 + $0xa2] sm:$0xff]
        %v3311 = vld [vmem:[#allocation5 + $0xaa] sm:$0xff]
        %v3312 = vmax.f32 %v3308, %v3310
        %v3313 = vmax.f32 %v3309, %v3311
        %3314 = vst.msk [vmem:[#allocation8 + $0x40] sm:$0xff] %vm442, %v3312
        %3315 = vst.msk [vmem:[#allocation8 + $0x48] sm:$0xff] %vm442, %v3313
        %v3316 = vld [vmem:[#allocation5 + $0xb4] sm:$0xff]
        %v3317 = vld [vmem:[#allocation5 + $0xbc] sm:$0xff]
        %v3318 = vld [vmem:[#allocation5 + $0xc6] sm:$0xff]
        %v3319 = vld [vmem:[#allocation5 + $0xce] sm:$0xff]
        %v3320 = vmax.f32 %v3316, %v3318
        %v3321 = vmax.f32 %v3317, %v3319
        %3322 = vst.msk [vmem:[#allocation8 + $0x50] sm:$0xff] %vm442, %v3320
        %3323 = vst.msk [vmem:[#allocation8 + $0x58] sm:$0xff] %vm442, %v3321
        %v3324 = vld [vmem:[#allocation5 + $0xd8] sm:$0xff]
        %v3325 = vld [vmem:[#allocation5 + $0xe0] sm:$0xff]
        %v3326 = vld [vmem:[#allocation5 + $0xea] sm:$0xff]
        %v3327 = vld [vmem:[#allocation5 + $0xf2] sm:$0xff]
        %v3328 = vmax.f32 %v3324, %v3326
        %v3329 = vmax.f32 %v3325, %v3327
        %3330 = vst.msk [vmem:[#allocation8 + $0x60] sm:$0xff] %vm442, %v3328
        %3331 = vst.msk [vmem:[#allocation8 + $0x68] sm:$0xff] %vm442, %v3329
        %v3332 = vld [vmem:[#allocation5 + $0xfc] sm:$0xff]
        %v3333 = vld [vmem:[#allocation5 + $0x104] sm:$0xff]
        %v3334 = vld [vmem:[#allocation5 + $0x10e] sm:$0xff]
        %v3335 = vld [vmem:[#allocation5 + $0x116] sm:$0xff]
        %v3336 = vmax.f32 %v3332, %v3334
        %v3337 = vmax.f32 %v3333, %v3335
        %3338 = vst.msk [vmem:[#allocation8 + $0x70] sm:$0xff] %vm442, %v3336
        %3339 = vst.msk [vmem:[#allocation8 + $0x78] sm:$0xff] %vm442, %v3337
        %v3340 = vld [vmem:[#allocation8] ss:$2 sm:$0xff]
        %s3341 = scalar_lea.vmem [#allocation8], 16
        %v3342 = vld [vmem:[%s3341] ss:$2 sm:$0xff]
        %s3343 = scalar_lea.vmem [#allocation8], 32
        %v3344 = vld [vmem:[%s3343] ss:$2 sm:$0xff]
        %s3345 = scalar_lea.vmem [#allocation8], 48
        %v3346 = vld [vmem:[%s3345] ss:$2 sm:$0xff]
        %s3347 = scalar_lea.vmem [#allocation8], 64
        %v3348 = vld [vmem:[%s3347] ss:$2 sm:$0xff]
        %s3349 = scalar_lea.vmem [#allocation8], 80
        %v3350 = vld [vmem:[%s3349] ss:$2 sm:$0xff]
        %s3351 = scalar_lea.vmem [#allocation8], 96
        %v3352 = vld [vmem:[%s3351] ss:$2 sm:$0xff]
        %s3353 = scalar_lea.vmem [#allocation8], 112
        %v3354 = vld [vmem:[%s3353] ss:$2 sm:$0xff]
        %s3355 = scalar_lea.vmem [#allocation8], 1
        %v3356 = vld [vmem:[%s3355] ss:$2 sm:$0xff]
        %s3357 = scalar_lea.vmem [#allocation8], 17
        %v3358 = vld [vmem:[%s3357] ss:$2 sm:$0xff]
        %s3359 = scalar_lea.vmem [#allocation8], 33
        %v3360 = vld [vmem:[%s3359] ss:$2 sm:$0xff]
        %s3361 = scalar_lea.vmem [#allocation8], 49
        %v3362 = vld [vmem:[%s3361] ss:$2 sm:$0xff]
        %s3363 = scalar_lea.vmem [#allocation8], 65
        %v3364 = vld [vmem:[%s3363] ss:$2 sm:$0xff]
        %s3365 = scalar_lea.vmem [#allocation8], 81
        %v3366 = vld [vmem:[%s3365] ss:$2 sm:$0xff]
        %s3367 = scalar_lea.vmem [#allocation8], 97
        %v3368 = vld [vmem:[%s3367] ss:$2 sm:$0xff]
        %s3369 = scalar_lea.vmem [#allocation8], 113
        %v3370 = vld [vmem:[%s3369] ss:$2 sm:$0xff]
        %v3371 = vmax.f32 %v3340, %v3356
        %v3372 = vmax.f32 %v3342, %v3358
        %v3373 = vmax.f32 %v3344, %v3360
        %v3374 = vmax.f32 %v3346, %v3362
        %v3375 = vmax.f32 %v3348, %v3364
        %v3376 = vmax.f32 %v3350, %v3366
        %v3377 = vmax.f32 %v3352, %v3368
        %v3378 = vmax.f32 %v3354, %v3370
        %3379 = vst.msk [vmem:[#allocation3 + $0xb] sm:$0xff] %vm442, %v3371
        %3380 = vst.msk [vmem:[#allocation3 + $0x15] sm:$0xff] %vm442, %v3372
        %3381 = vst.msk [vmem:[#allocation3 + $0x1f] sm:$0xff] %vm442, %v3373
        %3382 = vst.msk [vmem:[#allocation3 + $0x29] sm:$0xff] %vm442, %v3374
        %3383 = vst.msk [vmem:[#allocation3 + $0x33] sm:$0xff] %vm442, %v3375
        %3384 = vst.msk [vmem:[#allocation3 + $0x3d] sm:$0xff] %vm442, %v3376
        %3385 = vst.msk [vmem:[#allocation3 + $0x47] sm:$0xff] %vm442, %v3377
        %3386 = vst.msk [vmem:[#allocation3 + $0x51] sm:$0xff] %vm442, %v3378
        %v3387 = vld [vmem:[#allocation3] sm:$0xff]
        %v3388 = vld [vmem:[#allocation3 + $0x8] sm:$0xff]
        %v3389 = vld [vmem:[#allocation3 + $0x10] sm:$0xff]
        %v3390 = vld [vmem:[#allocation3 + $0x18] sm:$0xff]
        %v3391 = vld [vmem:[#allocation3 + $0x20] sm:$0xff]
        %v3392 = vld [vmem:[#allocation3 + $0x28] sm:$0xff]
        %v3393 = vld [vmem:[#allocation3 + $0x30] sm:$0xff]
        %v3394 = vld [vmem:[#allocation3 + $0x38] sm:$0xff]
        %v3395 = vld [vmem:[#allocation3 + $0x40] sm:$0xff]
        %v3396 = vld [vmem:[#allocation3 + $0x48] sm:$0x3f]
        %v3397 = vld [vmem:[%s3] sm:$0xff]
        %v3398 = vld [vmem:[%s3 + $0x8] sm:$0xff]
        %v3399 = vld [vmem:[#allocation3 + $0x1] sm:$0xff]
        %v3400 = vld [vmem:[#allocation3 + $0x9] sm:$0xff]
        %v3401 = vld [vmem:[#allocation3 + $0x11] sm:$0xff]
        %v3402 = vld [vmem:[#allocation3 + $0x19] sm:$0xff]
        %v3403 = vld [vmem:[#allocation3 + $0x21] sm:$0xff]
        %v3404 = vld [vmem:[#allocation3 + $0x29] sm:$0xff]
        %v3405 = vld [vmem:[#allocation3 + $0x31] sm:$0xff]
        %v3406 = vld [vmem:[#allocation3 + $0x39] sm:$0xff]
        %v3407 = vld [vmem:[#allocation3 + $0x41] sm:$0xff]
        %v3408 = vld [vmem:[#allocation3 + $0x49] sm:$0x3f]
        %s3409 = scalar_lea.vmem %s3, 16
        %v3410 = vld [vmem:[%s3409] sm:$0xff]
        %v3411 = vld [vmem:[%s3409 + $0x8] sm:$0xff]
        %v3413 = vsel %vm442, %v3399, 0
        %v3416 = vsel %vm442, %v3400, 0
        %v3419 = vsel %vm442, %v3401, 0
        %v3422 = vsel %vm442, %v3402, 0
        %v3425 = vsel %vm442, %v3403, 0
        %v3428 = vsel %vm442, %v3404, 0
        %v3431 = vsel %vm442, %v3405, 0
        %v3434 = vsel %vm442, %v3406, 0
        %v3437 = vsel %vm442, %v3407, 0
        %v3440 = vsel %vm442, %v3408, 0
        %3442 = vmatpush.msra.mxu0 0.0
        %3443 = vmatpush.msra.mxu0 0.0
        %3444 = vmatpush.msra.mxu0 0.0
        %3445 = vmatpush.msra.mxu0 0.0
        %3446 = vmatpush.msra.mxu0 0.0
        %3447 = vmatpush.msra.mxu0 0.0
        %3448 = vmatpush.msra.mxu0 0.0
        %3449 = vmatpush.msra.mxu0 0.0
        %3450 = vmatpush.msra.mxu0 0.0
        %3451 = vmatpush.msra.mxu0 0.0
        %3452 = vmatpush.msra.mxu0 0.0
        %3453 = vmatpush.msra.mxu0 0.0
        %3454 = vmatpush.msra.mxu0 0.0
        %3455 = vmatpush.msra.mxu0 0.0
        %3456 = vmatpush.msra.mxu0 %v3411
        %3457 = vmatpush.msra.mxu0 %v3410
        %3458 = vmatmul.f32.gmra.mxu0 %v3413
        %v3459 = vpop.f32.mrf.mxu0
        %v3460 = vadd.f32 0.0, %v3459
        %3461 = vmatmul.f32.gmra.mxu0 %v3416
        %v3462 = vpop.f32.mrf.mxu0
        %v3463 = vadd.f32 0.0, %v3462
        %3464 = vmatmul.f32.gmra.mxu0 %v3419
        %v3465 = vpop.f32.mrf.mxu0
        %v3466 = vadd.f32 0.0, %v3465
        %3467 = vmatmul.f32.gmra.mxu0 %v3422
        %v3468 = vpop.f32.mrf.mxu0
        %v3469 = vadd.f32 0.0, %v3468
        %3470 = vmatmul.f32.gmra.mxu0 %v3425
        %v3471 = vpop.f32.mrf.mxu0
        %v3472 = vadd.f32 0.0, %v3471
        %3473 = vmatmul.f32.gmra.mxu0 %v3428
        %v3474 = vpop.f32.mrf.mxu0
        %v3475 = vadd.f32 0.0, %v3474
        %3476 = vmatmul.f32.gmra.mxu0 %v3431
        %v3477 = vpop.f32.mrf.mxu0
        %v3478 = vadd.f32 0.0, %v3477
        %3479 = vmatmul.f32.gmra.mxu0 %v3434
        %v3480 = vpop.f32.mrf.mxu0
        %v3481 = vadd.f32 0.0, %v3480
        %3482 = vmatmul.f32.gmra.mxu0 %v3437
        %v3483 = vpop.f32.mrf.mxu0
        %v3484 = vadd.f32 0.0, %v3483
        %3485 = vmatmul.f32.gmra.mxu0 %v3440
        %v3486 = vpop.f32.mrf.mxu0
        %v3487 = vadd.f32 0.0, %v3486
        %3488 = vdwg.mxu0
        %v3490 = vsel %vm442, %v3387, 0
        %v3493 = vsel %vm442, %v3388, 0
        %v3496 = vsel %vm442, %v3389, 0
        %v3499 = vsel %vm442, %v3390, 0
        %v3502 = vsel %vm442, %v3391, 0
        %v3505 = vsel %vm442, %v3392, 0
        %v3508 = vsel %vm442, %v3393, 0
        %v3511 = vsel %vm442, %v3394, 0
        %v3514 = vsel %vm442, %v3395, 0
        %v3517 = vsel %vm442, %v3396, 0
        %3519 = vmatpush.msra.mxu0 0.0
        %3520 = vmatpush.msra.mxu0 0.0
        %3521 = vmatpush.msra.mxu0 0.0
        %3522 = vmatpush.msra.mxu0 0.0
        %3523 = vmatpush.msra.mxu0 0.0
        %3524 = vmatpush.msra.mxu0 0.0
        %3525 = vmatpush.msra.mxu0 0.0
        %3526 = vmatpush.msra.mxu0 0.0
        %3527 = vmatpush.msra.mxu0 0.0
        %3528 = vmatpush.msra.mxu0 0.0
        %3529 = vmatpush.msra.mxu0 0.0
        %3530 = vmatpush.msra.mxu0 0.0
        %3531 = vmatpush.msra.mxu0 0.0
        %3532 = vmatpush.msra.mxu0 0.0
        %3533 = vmatpush.msra.mxu0 %v3398
        %3534 = vmatpush.msra.mxu0 %v3397
        %3535 = vmatmul.f32.gmra.mxu0 %v3490
        %v3536 = vpop.f32.mrf.mxu0
        %v3537 = vadd.f32 %v3460, %v3536
        %3538 = vmatmul.f32.gmra.mxu0 %v3493
        %v3539 = vpop.f32.mrf.mxu0
        %v3540 = vadd.f32 %v3463, %v3539
        %3541 = vmatmul.f32.gmra.mxu0 %v3496
        %v3542 = vpop.f32.mrf.mxu0
        %v3543 = vadd.f32 %v3466, %v3542
        %3544 = vmatmul.f32.gmra.mxu0 %v3499
        %v3545 = vpop.f32.mrf.mxu0
        %v3546 = vadd.f32 %v3469, %v3545
        %3547 = vmatmul.f32.gmra.mxu0 %v3502
        %v3548 = vpop.f32.mrf.mxu0
        %v3549 = vadd.f32 %v3472, %v3548
        %3550 = vmatmul.f32.gmra.mxu0 %v3505
        %v3551 = vpop.f32.mrf.mxu0
        %v3552 = vadd.f32 %v3475, %v3551
        %3553 = vmatmul.f32.gmra.mxu0 %v3508
        %v3554 = vpop.f32.mrf.mxu0
        %v3555 = vadd.f32 %v3478, %v3554
        %3556 = vmatmul.f32.gmra.mxu0 %v3511
        %v3557 = vpop.f32.mrf.mxu0
        %v3558 = vadd.f32 %v3481, %v3557
        %3559 = vmatmul.f32.gmra.mxu0 %v3514
        %v3560 = vpop.f32.mrf.mxu0
        %v3561 = vadd.f32 %v3484, %v3560
        %3562 = vmatmul.f32.gmra.mxu0 %v3517
        %v3563 = vpop.f32.mrf.mxu0
        %v3564 = vadd.f32 %v3487, %v3563
        %3565 = vdwg.mxu0
        %v3566 = vld [vmem:[#allocation3 + $0x2] sm:$0xff]
        %v3567 = vld [vmem:[#allocation3 + $0xa] sm:$0xff]
        %v3568 = vld [vmem:[#allocation3 + $0x12] sm:$0xff]
        %v3569 = vld [vmem:[#allocation3 + $0x1a] sm:$0xff]
        %v3570 = vld [vmem:[#allocation3 + $0x22] sm:$0xff]
        %v3571 = vld [vmem:[#allocation3 + $0x2a] sm:$0xff]
        %v3572 = vld [vmem:[#allocation3 + $0x32] sm:$0xff]
        %v3573 = vld [vmem:[#allocation3 + $0x3a] sm:$0xff]
        %v3574 = vld [vmem:[#allocation3 + $0x42] sm:$0xff]
        %v3575 = vld [vmem:[#allocation3 + $0x4a] sm:$0x3f]
        %s3576 = scalar_lea.vmem %s3, 32
        %v3577 = vld [vmem:[%s3576] sm:$0xff]
        %v3578 = vld [vmem:[%s3576 + $0x8] sm:$0xff]
        %v3580 = vsel %vm442, %v3566, 0
        %v3583 = vsel %vm442, %v3567, 0
        %v3586 = vsel %vm442, %v3568, 0
        %v3589 = vsel %vm442, %v3569, 0
        %v3592 = vsel %vm442, %v3570, 0
        %v3595 = vsel %vm442, %v3571, 0
        %v3598 = vsel %vm442, %v3572, 0
        %v3601 = vsel %vm442, %v3573, 0
        %v3604 = vsel %vm442, %v3574, 0
        %v3607 = vsel %vm442, %v3575, 0
        %3609 = vmatpush.msra.mxu0 0.0
        %3610 = vmatpush.msra.mxu0 0.0
        %3611 = vmatpush.msra.mxu0 0.0
        %3612 = vmatpush.msra.mxu0 0.0
        %3613 = vmatpush.msra.mxu0 0.0
        %3614 = vmatpush.msra.mxu0 0.0
        %3615 = vmatpush.msra.mxu0 0.0
        %3616 = vmatpush.msra.mxu0 0.0
        %3617 = vmatpush.msra.mxu0 0.0
        %3618 = vmatpush.msra.mxu0 0.0
        %3619 = vmatpush.msra.mxu0 0.0
        %3620 = vmatpush.msra.mxu0 0.0
        %3621 = vmatpush.msra.mxu0 0.0
        %3622 = vmatpush.msra.mxu0 0.0
        %3623 = vmatpush.msra.mxu0 %v3578
        %3624 = vmatpush.msra.mxu0 %v3577
        %3625 = vmatmul.f32.gmra.mxu0 %v3580
        %v3626 = vpop.f32.mrf.mxu0
        %v3627 = vadd.f32 0.0, %v3626
        %3628 = vmatmul.f32.gmra.mxu0 %v3583
        %v3629 = vpop.f32.mrf.mxu0
        %v3630 = vadd.f32 0.0, %v3629
        %3631 = vmatmul.f32.gmra.mxu0 %v3586
        %v3632 = vpop.f32.mrf.mxu0
        %v3633 = vadd.f32 0.0, %v3632
        %3634 = vmatmul.f32.gmra.mxu0 %v3589
        %v3635 = vpop.f32.mrf.mxu0
        %v3636 = vadd.f32 0.0, %v3635
        %3637 = vmatmul.f32.gmra.mxu0 %v3592
        %v3638 = vpop.f32.mrf.mxu0
        %v3639 = vadd.f32 0.0, %v3638
        %3640 = vmatmul.f32.gmra.mxu0 %v3595
        %v3641 = vpop.f32.mrf.mxu0
        %v3642 = vadd.f32 0.0, %v3641
        %3643 = vmatmul.f32.gmra.mxu0 %v3598
        %v3644 = vpop.f32.mrf.mxu0
        %v3645 = vadd.f32 0.0, %v3644
        %3646 = vmatmul.f32.gmra.mxu0 %v3601
        %v3647 = vpop.f32.mrf.mxu0
        %v3648 = vadd.f32 0.0, %v3647
        %3649 = vmatmul.f32.gmra.mxu0 %v3604
        %v3650 = vpop.f32.mrf.mxu0
        %v3651 = vadd.f32 0.0, %v3650
        %3652 = vmatmul.f32.gmra.mxu0 %v3607
        %v3653 = vpop.f32.mrf.mxu0
        %v3654 = vadd.f32 0.0, %v3653
        %3655 = vdwg.mxu0
        %v3656 = vadd.f32 %v3537, %v3627
        %v3657 = vadd.f32 %v3540, %v3630
        %v3658 = vadd.f32 %v3543, %v3633
        %v3659 = vadd.f32 %v3546, %v3636
        %v3660 = vadd.f32 %v3549, %v3639
        %v3661 = vadd.f32 %v3552, %v3642
        %v3662 = vadd.f32 %v3555, %v3645
        %v3663 = vadd.f32 %v3558, %v3648
        %v3664 = vadd.f32 %v3561, %v3651
        %v3665 = vadd.f32 %v3564, %v3654
        %v3666 = vld [vmem:[#allocation3 + $0xa] sm:$0xff]
        %v3667 = vld [vmem:[#allocation3 + $0x12] sm:$0xff]
        %v3668 = vld [vmem:[#allocation3 + $0x1a] sm:$0xff]
        %v3669 = vld [vmem:[#allocation3 + $0x22] sm:$0xff]
        %v3670 = vld [vmem:[#allocation3 + $0x2a] sm:$0xff]
        %v3671 = vld [vmem:[#allocation3 + $0x32] sm:$0xff]
        %v3672 = vld [vmem:[#allocation3 + $0x3a] sm:$0xff]
        %v3673 = vld [vmem:[#allocation3 + $0x42] sm:$0xff]
        %v3674 = vld [vmem:[#allocation3 + $0x4a] sm:$0xff]
        %v3675 = vld [vmem:[#allocation3 + $0x52] sm:$0x3f]
        %s3676 = scalar_lea.vmem %s3, 48
        %v3677 = vld [vmem:[%s3676] sm:$0xff]
        %v3678 = vld [vmem:[%s3676 + $0x8] sm:$0xff]
        %v3680 = vsel %vm442, %v3666, 0
        %v3683 = vsel %vm442, %v3667, 0
        %v3686 = vsel %vm442, %v3668, 0
        %v3689 = vsel %vm442, %v3669, 0
        %v3692 = vsel %vm442, %v3670, 0
        %v3695 = vsel %vm442, %v3671, 0
        %v3698 = vsel %vm442, %v3672, 0
        %v3701 = vsel %vm442, %v3673, 0
        %v3704 = vsel %vm442, %v3674, 0
        %v3707 = vsel %vm442, %v3675, 0
        %3709 = vmatpush.msra.mxu0 0.0
        %3710 = vmatpush.msra.mxu0 0.0
        %3711 = vmatpush.msra.mxu0 0.0
        %3712 = vmatpush.msra.mxu0 0.0
        %3713 = vmatpush.msra.mxu0 0.0
        %3714 = vmatpush.msra.mxu0 0.0
        %3715 = vmatpush.msra.mxu0 0.0
        %3716 = vmatpush.msra.mxu0 0.0
        %3717 = vmatpush.msra.mxu0 0.0
        %3718 = vmatpush.msra.mxu0 0.0
        %3719 = vmatpush.msra.mxu0 0.0
        %3720 = vmatpush.msra.mxu0 0.0
        %3721 = vmatpush.msra.mxu0 0.0
        %3722 = vmatpush.msra.mxu0 0.0
        %3723 = vmatpush.msra.mxu0 %v3678
        %3724 = vmatpush.msra.mxu0 %v3677
        %3725 = vmatmul.f32.gmra.mxu0 %v3680
        %v3726 = vpop.f32.mrf.mxu0
        %v3727 = vadd.f32 0.0, %v3726
        %3728 = vmatmul.f32.gmra.mxu0 %v3683
        %v3729 = vpop.f32.mrf.mxu0
        %v3730 = vadd.f32 0.0, %v3729
        %3731 = vmatmul.f32.gmra.mxu0 %v3686
        %v3732 = vpop.f32.mrf.mxu0
        %v3733 = vadd.f32 0.0, %v3732
        %3734 = vmatmul.f32.gmra.mxu0 %v3689
        %v3735 = vpop.f32.mrf.mxu0
        %v3736 = vadd.f32 0.0, %v3735
        %3737 = vmatmul.f32.gmra.mxu0 %v3692
        %v3738 = vpop.f32.mrf.mxu0
        %v3739 = vadd.f32 0.0, %v3738
        %3740 = vmatmul.f32.gmra.mxu0 %v3695
        %v3741 = vpop.f32.mrf.mxu0
        %v3742 = vadd.f32 0.0, %v3741
        %3743 = vmatmul.f32.gmra.mxu0 %v3698
        %v3744 = vpop.f32.mrf.mxu0
        %v3745 = vadd.f32 0.0, %v3744
        %3746 = vmatmul.f32.gmra.mxu0 %v3701
        %v3747 = vpop.f32.mrf.mxu0
        %v3748 = vadd.f32 0.0, %v3747
        %3749 = vmatmul.f32.gmra.mxu0 %v3704
        %v3750 = vpop.f32.mrf.mxu0
        %v3751 = vadd.f32 0.0, %v3750
        %3752 = vmatmul.f32.gmra.mxu0 %v3707
        %v3753 = vpop.f32.mrf.mxu0
        %v3754 = vadd.f32 0.0, %v3753
        %3755 = vdwg.mxu0
        %v3756 = vadd.f32 %v3656, %v3727
        %v3757 = vadd.f32 %v3657, %v3730
        %v3758 = vadd.f32 %v3658, %v3733
        %v3759 = vadd.f32 %v3659, %v3736
        %v3760 = vadd.f32 %v3660, %v3739
        %v3761 = vadd.f32 %v3661, %v3742
        %v3762 = vadd.f32 %v3662, %v3745
        %v3763 = vadd.f32 %v3663, %v3748
        %v3764 = vadd.f32 %v3664, %v3751
        %v3765 = vadd.f32 %v3665, %v3754
        %v3766 = vld [vmem:[#allocation3 + $0xb] sm:$0xff]
        %v3767 = vld [vmem:[#allocation3 + $0x13] sm:$0xff]
        %v3768 = vld [vmem:[#allocation3 + $0x1b] sm:$0xff]
        %v3769 = vld [vmem:[#allocation3 + $0x23] sm:$0xff]
        %v3770 = vld [vmem:[#allocation3 + $0x2b] sm:$0xff]
        %v3771 = vld [vmem:[#allocation3 + $0x33] sm:$0xff]
        %v3772 = vld [vmem:[#allocation3 + $0x3b] sm:$0xff]
        %v3773 = vld [vmem:[#allocation3 + $0x43] sm:$0xff]
        %v3774 = vld [vmem:[#allocation3 + $0x4b] sm:$0xff]
        %v3775 = vld [vmem:[#allocation3 + $0x53] sm:$0x3f]
        %s3776 = scalar_lea.vmem %s3, 64
        %v3777 = vld [vmem:[%s3776] sm:$0xff]
        %v3778 = vld [vmem:[%s3776 + $0x8] sm:$0xff]
        %v3780 = vsel %vm442, %v3766, 0
        %v3783 = vsel %vm442, %v3767, 0
        %v3786 = vsel %vm442, %v3768, 0
        %v3789 = vsel %vm442, %v3769, 0
        %v3792 = vsel %vm442, %v3770, 0
        %v3795 = vsel %vm442, %v3771, 0
        %v3798 = vsel %vm442, %v3772, 0
        %v3801 = vsel %vm442, %v3773, 0
        %v3804 = vsel %vm442, %v3774, 0
        %v3807 = vsel %vm442, %v3775, 0
        %3809 = vmatpush.msra.mxu0 0.0
        %3810 = vmatpush.msra.mxu0 0.0
        %3811 = vmatpush.msra.mxu0 0.0
        %3812 = vmatpush.msra.mxu0 0.0
        %3813 = vmatpush.msra.mxu0 0.0
        %3814 = vmatpush.msra.mxu0 0.0
        %3815 = vmatpush.msra.mxu0 0.0
        %3816 = vmatpush.msra.mxu0 0.0
        %3817 = vmatpush.msra.mxu0 0.0
        %3818 = vmatpush.msra.mxu0 0.0
        %3819 = vmatpush.msra.mxu0 0.0
        %3820 = vmatpush.msra.mxu0 0.0
        %3821 = vmatpush.msra.mxu0 0.0
        %3822 = vmatpush.msra.mxu0 0.0
        %3823 = vmatpush.msra.mxu0 %v3778
        %3824 = vmatpush.msra.mxu0 %v3777
        %3825 = vmatmul.f32.gmra.mxu0 %v3780
        %v3826 = vpop.f32.mrf.mxu0
        %v3827 = vadd.f32 0.0, %v3826
        %3828 = vmatmul.f32.gmra.mxu0 %v3783
        %v3829 = vpop.f32.mrf.mxu0
        %v3830 = vadd.f32 0.0, %v3829
        %3831 = vmatmul.f32.gmra.mxu0 %v3786
        %v3832 = vpop.f32.mrf.mxu0
        %v3833 = vadd.f32 0.0, %v3832
        %3834 = vmatmul.f32.gmra.mxu0 %v3789
        %v3835 = vpop.f32.mrf.mxu0
        %v3836 = vadd.f32 0.0, %v3835
        %3837 = vmatmul.f32.gmra.mxu0 %v3792
        %v3838 = vpop.f32.mrf.mxu0
        %v3839 = vadd.f32 0.0, %v3838
        %3840 = vmatmul.f32.gmra.mxu0 %v3795
        %v3841 = vpop.f32.mrf.mxu0
        %v3842 = vadd.f32 0.0, %v3841
        %3843 = vmatmul.f32.gmra.mxu0 %v3798
        %v3844 = vpop.f32.mrf.mxu0
        %v3845 = vadd.f32 0.0, %v3844
        %3846 = vmatmul.f32.gmra.mxu0 %v3801
        %v3847 = vpop.f32.mrf.mxu0
        %v3848 = vadd.f32 0.0, %v3847
        %3849 = vmatmul.f32.gmra.mxu0 %v3804
        %v3850 = vpop.f32.mrf.mxu0
        %v3851 = vadd.f32 0.0, %v3850
        %3852 = vmatmul.f32.gmra.mxu0 %v3807
        %v3853 = vpop.f32.mrf.mxu0
        %v3854 = vadd.f32 0.0, %v3853
        %3855 = vdwg.mxu0
        %v3856 = vadd.f32 %v3756, %v3827
        %v3857 = vadd.f32 %v3757, %v3830
        %v3858 = vadd.f32 %v3758, %v3833
        %v3859 = vadd.f32 %v3759, %v3836
        %v3860 = vadd.f32 %v3760, %v3839
        %v3861 = vadd.f32 %v3761, %v3842
        %v3862 = vadd.f32 %v3762, %v3845
        %v3863 = vadd.f32 %v3763, %v3848
        %v3864 = vadd.f32 %v3764, %v3851
        %v3865 = vadd.f32 %v3765, %v3854
        %v3866 = vld [vmem:[#allocation3 + $0xc] sm:$0xff]
        %v3867 = vld [vmem:[#allocation3 + $0x14] sm:$0xff]
        %v3868 = vld [vmem:[#allocation3 + $0x1c] sm:$0xff]
        %v3869 = vld [vmem:[#allocation3 + $0x24] sm:$0xff]
        %v3870 = vld [vmem:[#allocation3 + $0x2c] sm:$0xff]
        %v3871 = vld [vmem:[#allocation3 + $0x34] sm:$0xff]
        %v3872 = vld [vmem:[#allocation3 + $0x3c] sm:$0xff]
        %v3873 = vld [vmem:[#allocation3 + $0x44] sm:$0xff]
        %v3874 = vld [vmem:[#allocation3 + $0x4c] sm:$0xff]
        %v3875 = vld [vmem:[#allocation3 + $0x54] sm:$0x3f]
        %s3876 = scalar_lea.vmem %s3, 80
        %v3877 = vld [vmem:[%s3876] sm:$0xff]
        %v3878 = vld [vmem:[%s3876 + $0x8] sm:$0xff]
        %v3880 = vsel %vm442, %v3866, 0
        %v3883 = vsel %vm442, %v3867, 0
        %v3886 = vsel %vm442, %v3868, 0
        %v3889 = vsel %vm442, %v3869, 0
        %v3892 = vsel %vm442, %v3870, 0
        %v3895 = vsel %vm442, %v3871, 0
        %v3898 = vsel %vm442, %v3872, 0
        %v3901 = vsel %vm442, %v3873, 0
        %v3904 = vsel %vm442, %v3874, 0
        %v3907 = vsel %vm442, %v3875, 0
        %3909 = vmatpush.msra.mxu0 0.0
        %3910 = vmatpush.msra.mxu0 0.0
        %3911 = vmatpush.msra.mxu0 0.0
        %3912 = vmatpush.msra.mxu0 0.0
        %3913 = vmatpush.msra.mxu0 0.0
        %3914 = vmatpush.msra.mxu0 0.0
        %3915 = vmatpush.msra.mxu0 0.0
        %3916 = vmatpush.msra.mxu0 0.0
        %3917 = vmatpush.msra.mxu0 0.0
        %3918 = vmatpush.msra.mxu0 0.0
        %3919 = vmatpush.msra.mxu0 0.0
        %3920 = vmatpush.msra.mxu0 0.0
        %3921 = vmatpush.msra.mxu0 0.0
        %3922 = vmatpush.msra.mxu0 0.0
        %3923 = vmatpush.msra.mxu0 %v3878
        %3924 = vmatpush.msra.mxu0 %v3877
        %3925 = vmatmul.f32.gmra.mxu0 %v3880
        %v3926 = vpop.f32.mrf.mxu0
        %v3927 = vadd.f32 0.0, %v3926
        %3928 = vmatmul.f32.gmra.mxu0 %v3883
        %v3929 = vpop.f32.mrf.mxu0
        %v3930 = vadd.f32 0.0, %v3929
        %3931 = vmatmul.f32.gmra.mxu0 %v3886
        %v3932 = vpop.f32.mrf.mxu0
        %v3933 = vadd.f32 0.0, %v3932
        %3934 = vmatmul.f32.gmra.mxu0 %v3889
        %v3935 = vpop.f32.mrf.mxu0
        %v3936 = vadd.f32 0.0, %v3935
        %3937 = vmatmul.f32.gmra.mxu0 %v3892
        %v3938 = vpop.f32.mrf.mxu0
        %v3939 = vadd.f32 0.0, %v3938
        %3940 = vmatmul.f32.gmra.mxu0 %v3895
        %v3941 = vpop.f32.mrf.mxu0
        %v3942 = vadd.f32 0.0, %v3941
        %3943 = vmatmul.f32.gmra.mxu0 %v3898
        %v3944 = vpop.f32.mrf.mxu0
        %v3945 = vadd.f32 0.0, %v3944
        %3946 = vmatmul.f32.gmra.mxu0 %v3901
        %v3947 = vpop.f32.mrf.mxu0
        %v3948 = vadd.f32 0.0, %v3947
        %3949 = vmatmul.f32.gmra.mxu0 %v3904
        %v3950 = vpop.f32.mrf.mxu0
        %v3951 = vadd.f32 0.0, %v3950
        %3952 = vmatmul.f32.gmra.mxu0 %v3907
        %v3953 = vpop.f32.mrf.mxu0
        %v3954 = vadd.f32 0.0, %v3953
        %3955 = vdwg.mxu0
        %v3956 = vadd.f32 %v3856, %v3927
        %v3957 = vadd.f32 %v3857, %v3930
        %v3958 = vadd.f32 %v3858, %v3933
        %v3959 = vadd.f32 %v3859, %v3936
        %v3960 = vadd.f32 %v3860, %v3939
        %v3961 = vadd.f32 %v3861, %v3942
        %v3962 = vadd.f32 %v3862, %v3945
        %v3963 = vadd.f32 %v3863, %v3948
        %v3964 = vadd.f32 %v3864, %v3951
        %v3965 = vadd.f32 %v3865, %v3954
        %v3966 = vld [vmem:[#allocation3 + $0x14] sm:$0xff]
        %v3967 = vld [vmem:[#allocation3 + $0x1c] sm:$0xff]
        %v3968 = vld [vmem:[#allocation3 + $0x24] sm:$0xff]
        %v3969 = vld [vmem:[#allocation3 + $0x2c] sm:$0xff]
        %v3970 = vld [vmem:[#allocation3 + $0x34] sm:$0xff]
        %v3971 = vld [vmem:[#allocation3 + $0x3c] sm:$0xff]
        %v3972 = vld [vmem:[#allocation3 + $0x44] sm:$0xff]
        %v3973 = vld [vmem:[#allocation3 + $0x4c] sm:$0xff]
        %v3974 = vld [vmem:[#allocation3 + $0x54] sm:$0xff]
        %v3975 = vld [vmem:[#allocation3 + $0x5c] sm:$0x3f]
        %s3976 = scalar_lea.vmem %s3, 96
        %v3977 = vld [vmem:[%s3976] sm:$0xff]
        %v3978 = vld [vmem:[%s3976 + $0x8] sm:$0xff]
        %v3980 = vsel %vm442, %v3966, 0
        %v3983 = vsel %vm442, %v3967, 0
        %v3986 = vsel %vm442, %v3968, 0
        %v3989 = vsel %vm442, %v3969, 0
        %v3992 = vsel %vm442, %v3970, 0
        %v3995 = vsel %vm442, %v3971, 0
        %v3998 = vsel %vm442, %v3972, 0
        %v4001 = vsel %vm442, %v3973, 0
        %v4004 = vsel %vm442, %v3974, 0
        %v4007 = vsel %vm442, %v3975, 0
        %4009 = vmatpush.msra.mxu0 0.0
        %4010 = vmatpush.msra.mxu0 0.0
        %4011 = vmatpush.msra.mxu0 0.0
        %4012 = vmatpush.msra.mxu0 0.0
        %4013 = vmatpush.msra.mxu0 0.0
        %4014 = vmatpush.msra.mxu0 0.0
        %4015 = vmatpush.msra.mxu0 0.0
        %4016 = vmatpush.msra.mxu0 0.0
        %4017 = vmatpush.msra.mxu0 0.0
        %4018 = vmatpush.msra.mxu0 0.0
        %4019 = vmatpush.msra.mxu0 0.0
        %4020 = vmatpush.msra.mxu0 0.0
        %4021 = vmatpush.msra.mxu0 0.0
        %4022 = vmatpush.msra.mxu0 0.0
        %4023 = vmatpush.msra.mxu0 %v3978
        %4024 = vmatpush.msra.mxu0 %v3977
        %4025 = vmatmul.f32.gmra.mxu0 %v3980
        %v4026 = vpop.f32.mrf.mxu0
        %v4027 = vadd.f32 0.0, %v4026
        %4028 = vmatmul.f32.gmra.mxu0 %v3983
        %v4029 = vpop.f32.mrf.mxu0
        %v4030 = vadd.f32 0.0, %v4029
        %4031 = vmatmul.f32.gmra.mxu0 %v3986
        %v4032 = vpop.f32.mrf.mxu0
        %v4033 = vadd.f32 0.0, %v4032
        %4034 = vmatmul.f32.gmra.mxu0 %v3989
        %v4035 = vpop.f32.mrf.mxu0
        %v4036 = vadd.f32 0.0, %v4035
        %4037 = vmatmul.f32.gmra.mxu0 %v3992
        %v4038 = vpop.f32.mrf.mxu0
        %v4039 = vadd.f32 0.0, %v4038
        %4040 = vmatmul.f32.gmra.mxu0 %v3995
        %v4041 = vpop.f32.mrf.mxu0
        %v4042 = vadd.f32 0.0, %v4041
        %4043 = vmatmul.f32.gmra.mxu0 %v3998
        %v4044 = vpop.f32.mrf.mxu0
        %v4045 = vadd.f32 0.0, %v4044
        %4046 = vmatmul.f32.gmra.mxu0 %v4001
        %v4047 = vpop.f32.mrf.mxu0
        %v4048 = vadd.f32 0.0, %v4047
        %4049 = vmatmul.f32.gmra.mxu0 %v4004
        %v4050 = vpop.f32.mrf.mxu0
        %v4051 = vadd.f32 0.0, %v4050
        %4052 = vmatmul.f32.gmra.mxu0 %v4007
        %v4053 = vpop.f32.mrf.mxu0
        %v4054 = vadd.f32 0.0, %v4053
        %4055 = vdwg.mxu0
        %v4056 = vadd.f32 %v3956, %v4027
        %v4057 = vadd.f32 %v3957, %v4030
        %v4058 = vadd.f32 %v3958, %v4033
        %v4059 = vadd.f32 %v3959, %v4036
        %v4060 = vadd.f32 %v3960, %v4039
        %v4061 = vadd.f32 %v3961, %v4042
        %v4062 = vadd.f32 %v3962, %v4045
        %v4063 = vadd.f32 %v3963, %v4048
        %v4064 = vadd.f32 %v3964, %v4051
        %v4065 = vadd.f32 %v3965, %v4054
        %v4066 = vld [vmem:[#allocation3 + $0x15] sm:$0xff]
        %v4067 = vld [vmem:[#allocation3 + $0x1d] sm:$0xff]
        %v4068 = vld [vmem:[#allocation3 + $0x25] sm:$0xff]
        %v4069 = vld [vmem:[#allocation3 + $0x2d] sm:$0xff]
        %v4070 = vld [vmem:[#allocation3 + $0x35] sm:$0xff]
        %v4071 = vld [vmem:[#allocation3 + $0x3d] sm:$0xff]
        %v4072 = vld [vmem:[#allocation3 + $0x45] sm:$0xff]
        %v4073 = vld [vmem:[#allocation3 + $0x4d] sm:$0xff]
        %v4074 = vld [vmem:[#allocation3 + $0x55] sm:$0xff]
        %v4075 = vld [vmem:[#allocation3 + $0x5d] sm:$0x3f]
        %s4076 = scalar_lea.vmem %s3, 112
        %v4077 = vld [vmem:[%s4076] sm:$0xff]
        %v4078 = vld [vmem:[%s4076 + $0x8] sm:$0xff]
        %v4080 = vsel %vm442, %v4066, 0
        %v4083 = vsel %vm442, %v4067, 0
        %v4086 = vsel %vm442, %v4068, 0
        %v4089 = vsel %vm442, %v4069, 0
        %v4092 = vsel %vm442, %v4070, 0
        %v4095 = vsel %vm442, %v4071, 0
        %v4098 = vsel %vm442, %v4072, 0
        %v4101 = vsel %vm442, %v4073, 0
        %v4104 = vsel %vm442, %v4074, 0
        %v4107 = vsel %vm442, %v4075, 0
        %4109 = vmatpush.msra.mxu0 0.0
        %4110 = vmatpush.msra.mxu0 0.0
        %4111 = vmatpush.msra.mxu0 0.0
        %4112 = vmatpush.msra.mxu0 0.0
        %4113 = vmatpush.msra.mxu0 0.0
        %4114 = vmatpush.msra.mxu0 0.0
        %4115 = vmatpush.msra.mxu0 0.0
        %4116 = vmatpush.msra.mxu0 0.0
        %4117 = vmatpush.msra.mxu0 0.0
        %4118 = vmatpush.msra.mxu0 0.0
        %4119 = vmatpush.msra.mxu0 0.0
        %4120 = vmatpush.msra.mxu0 0.0
        %4121 = vmatpush.msra.mxu0 0.0
        %4122 = vmatpush.msra.mxu0 0.0
        %4123 = vmatpush.msra.mxu0 %v4078
        %4124 = vmatpush.msra.mxu0 %v4077
        %4125 = vmatmul.f32.gmra.mxu0 %v4080
        %v4126 = vpop.f32.mrf.mxu0
        %v4127 = vadd.f32 0.0, %v4126
        %4128 = vmatmul.f32.gmra.mxu0 %v4083
        %v4129 = vpop.f32.mrf.mxu0
        %v4130 = vadd.f32 0.0, %v4129
        %4131 = vmatmul.f32.gmra.mxu0 %v4086
        %v4132 = vpop.f32.mrf.mxu0
        %v4133 = vadd.f32 0.0, %v4132
        %4134 = vmatmul.f32.gmra.mxu0 %v4089
        %v4135 = vpop.f32.mrf.mxu0
        %v4136 = vadd.f32 0.0, %v4135
        %4137 = vmatmul.f32.gmra.mxu0 %v4092
        %v4138 = vpop.f32.mrf.mxu0
        %v4139 = vadd.f32 0.0, %v4138
        %4140 = vmatmul.f32.gmra.mxu0 %v4095
        %v4141 = vpop.f32.mrf.mxu0
        %v4142 = vadd.f32 0.0, %v4141
        %4143 = vmatmul.f32.gmra.mxu0 %v4098
        %v4144 = vpop.f32.mrf.mxu0
        %v4145 = vadd.f32 0.0, %v4144
        %4146 = vmatmul.f32.gmra.mxu0 %v4101
        %v4147 = vpop.f32.mrf.mxu0
        %v4148 = vadd.f32 0.0, %v4147
        %4149 = vmatmul.f32.gmra.mxu0 %v4104
        %v4150 = vpop.f32.mrf.mxu0
        %v4151 = vadd.f32 0.0, %v4150
        %4152 = vmatmul.f32.gmra.mxu0 %v4107
        %v4153 = vpop.f32.mrf.mxu0
        %v4154 = vadd.f32 0.0, %v4153
        %4155 = vdwg.mxu0
        %v4156 = vadd.f32 %v4056, %v4127
        %v4157 = vadd.f32 %v4057, %v4130
        %v4158 = vadd.f32 %v4058, %v4133
        %v4159 = vadd.f32 %v4059, %v4136
        %v4160 = vadd.f32 %v4060, %v4139
        %v4161 = vadd.f32 %v4061, %v4142
        %v4162 = vadd.f32 %v4062, %v4145
        %v4163 = vadd.f32 %v4063, %v4148
        %v4164 = vadd.f32 %v4064, %v4151
        %v4165 = vadd.f32 %v4065, %v4154
        %v4166 = vld [vmem:[#allocation3 + $0x16] sm:$0xff]
        %v4167 = vld [vmem:[#allocation3 + $0x1e] sm:$0xff]
        %v4168 = vld [vmem:[#allocation3 + $0x26] sm:$0xff]
        %v4169 = vld [vmem:[#allocation3 + $0x2e] sm:$0xff]
        %v4170 = vld [vmem:[#allocation3 + $0x36] sm:$0xff]
        %v4171 = vld [vmem:[#allocation3 + $0x3e] sm:$0xff]
        %v4172 = vld [vmem:[#allocation3 + $0x46] sm:$0xff]
        %v4173 = vld [vmem:[#allocation3 + $0x4e] sm:$0xff]
        %v4174 = vld [vmem:[#allocation3 + $0x56] sm:$0xff]
        %v4175 = vld [vmem:[#allocation3 + $0x5e] sm:$0x3f]
        %s4176 = scalar_lea.vmem %s3, 128
        %v4177 = vld [vmem:[%s4176] sm:$0xff]
        %v4178 = vld [vmem:[%s4176 + $0x8] sm:$0xff]
        %v4180 = vsel %vm442, %v4166, 0
        %v4183 = vsel %vm442, %v4167, 0
        %v4186 = vsel %vm442, %v4168, 0
        %v4189 = vsel %vm442, %v4169, 0
        %v4192 = vsel %vm442, %v4170, 0
        %v4195 = vsel %vm442, %v4171, 0
        %v4198 = vsel %vm442, %v4172, 0
        %v4201 = vsel %vm442, %v4173, 0
        %v4204 = vsel %vm442, %v4174, 0
        %v4207 = vsel %vm442, %v4175, 0
        %4209 = vmatpush.msra.mxu0 0.0
        %4210 = vmatpush.msra.mxu0 0.0
        %4211 = vmatpush.msra.mxu0 0.0
        %4212 = vmatpush.msra.mxu0 0.0
        %4213 = vmatpush.msra.mxu0 0.0
        %4214 = vmatpush.msra.mxu0 0.0
        %4215 = vmatpush.msra.mxu0 0.0
        %4216 = vmatpush.msra.mxu0 0.0
        %4217 = vmatpush.msra.mxu0 0.0
        %4218 = vmatpush.msra.mxu0 0.0
        %4219 = vmatpush.msra.mxu0 0.0
        %4220 = vmatpush.msra.mxu0 0.0
        %4221 = vmatpush.msra.mxu0 0.0
        %4222 = vmatpush.msra.mxu0 0.0
        %4223 = vmatpush.msra.mxu0 %v4178
        %4224 = vmatpush.msra.mxu0 %v4177
        %4225 = vmatmul.f32.gmra.mxu0 %v4180
        %v4226 = vpop.f32.mrf.mxu0
        %v4227 = vadd.f32 0.0, %v4226
        %4228 = vmatmul.f32.gmra.mxu0 %v4183
        %v4229 = vpop.f32.mrf.mxu0
        %v4230 = vadd.f32 0.0, %v4229
        %4231 = vmatmul.f32.gmra.mxu0 %v4186
        %v4232 = vpop.f32.mrf.mxu0
        %v4233 = vadd.f32 0.0, %v4232
        %4234 = vmatmul.f32.gmra.mxu0 %v4189
        %v4235 = vpop.f32.mrf.mxu0
        %v4236 = vadd.f32 0.0, %v4235
        %4237 = vmatmul.f32.gmra.mxu0 %v4192
        %v4238 = vpop.f32.mrf.mxu0
        %v4239 = vadd.f32 0.0, %v4238
        %4240 = vmatmul.f32.gmra.mxu0 %v4195
        %v4241 = vpop.f32.mrf.mxu0
        %v4242 = vadd.f32 0.0, %v4241
        %4243 = vmatmul.f32.gmra.mxu0 %v4198
        %v4244 = vpop.f32.mrf.mxu0
        %v4245 = vadd.f32 0.0, %v4244
        %4246 = vmatmul.f32.gmra.mxu0 %v4201
        %v4247 = vpop.f32.mrf.mxu0
        %v4248 = vadd.f32 0.0, %v4247
        %4249 = vmatmul.f32.gmra.mxu0 %v4204
        %v4250 = vpop.f32.mrf.mxu0
        %v4251 = vadd.f32 0.0, %v4250
        %4252 = vmatmul.f32.gmra.mxu0 %v4207
        %v4253 = vpop.f32.mrf.mxu0
        %v4254 = vadd.f32 0.0, %v4253
        %4255 = vdwg.mxu0
        %v4256 = vadd.f32 %v4156, %v4227
        %v4257 = vadd.f32 %v4157, %v4230
        %v4258 = vadd.f32 %v4158, %v4233
        %v4259 = vadd.f32 %v4159, %v4236
        %v4260 = vadd.f32 %v4160, %v4239
        %v4261 = vadd.f32 %v4161, %v4242
        %v4262 = vadd.f32 %v4162, %v4245
        %v4263 = vadd.f32 %v4163, %v4248
        %v4264 = vadd.f32 %v4164, %v4251
        %v4265 = vadd.f32 %v4165, %v4254
        %v4266 = vld [vmem:[%s4] sm:$0x1]
        %v4268 = vperm.slane %v4266, 0
        %v4270 = vadd.f32 %v4256, %v4268
        %v4271 = vadd.f32 %v4257, %v4268
        %v4272 = vadd.f32 %v4258, %v4268
        %v4273 = vadd.f32 %v4259, %v4268
        %v4274 = vadd.f32 %v4260, %v4268
        %v4275 = vadd.f32 %v4261, %v4268
        %v4276 = vadd.f32 %v4262, %v4268
        %v4277 = vadd.f32 %v4263, %v4268
        %v4278 = vadd.f32 %v4264, %v4268
        %v4279 = vadd.f32 %v4265, %v4268
        %v4280 = vmax.f32 %v4270, 0.0
        %v4281 = vmax.f32 %v4271, 0.0
        %v4282 = vmax.f32 %v4272, 0.0
        %v4283 = vmax.f32 %v4273, 0.0
        %v4284 = vmax.f32 %v4274, 0.0
        %v4285 = vmax.f32 %v4275, 0.0
        %v4286 = vmax.f32 %v4276, 0.0
        %v4287 = vmax.f32 %v4277, 0.0
        %v4288 = vmax.f32 %v4278, 0.0
        %v4289 = vmax.f32 %v4279, 0.0
        %vm4290 = vcmask 261120
        %4291 = vst.msk [vmem:[#allocation6] sm:$0xff] %vm4290, %v4280
        %4292 = vst.msk [vmem:[#allocation6 + $0x8] sm:$0xff] %vm4290, %v4281
        %4293 = vst.msk [vmem:[#allocation6 + $0x10] sm:$0xff] %vm4290, %v4282
        %4294 = vst.msk [vmem:[#allocation6 + $0x18] sm:$0xff] %vm4290, %v4283
        %4295 = vst.msk [vmem:[#allocation6 + $0x20] sm:$0xff] %vm4290, %v4284
        %4296 = vst.msk [vmem:[#allocation6 + $0x28] sm:$0xff] %vm4290, %v4285
        %4297 = vst.msk [vmem:[#allocation6 + $0x30] sm:$0xff] %vm4290, %v4286
        %4298 = vst.msk [vmem:[#allocation6 + $0x38] sm:$0xff] %vm4290, %v4287
        %4299 = vst.msk [vmem:[#allocation6 + $0x40] sm:$0xff] %vm4290, %v4288
        %vm4300 = vcmask 259072
        %4301 = vst.msk [vmem:[#allocation6 + $0x48] sm:$0x3f] %vm4300, %v4289
        %v4302 = vld [vmem:[#allocation6] sm:$0xff]
        %v4303 = vld [vmem:[#allocation6 + $0xa] sm:$0xff]
        %v4304 = vmax.f32 %v4302, %v4303
        %4305 = vst.msk [vmem:[#allocation9] sm:$0xff] %vm4290, %v4304
        %v4306 = vld [vmem:[#allocation6 + $0x14] sm:$0xff]
        %v4307 = vld [vmem:[#allocation6 + $0x1e] sm:$0xff]
        %v4308 = vmax.f32 %v4306, %v4307
        %4309 = vst.msk [vmem:[#allocation9 + $0x8] sm:$0xff] %vm4290, %v4308
        %v4310 = vld [vmem:[#allocation6 + $0x28] sm:$0xff]
        %v4311 = vld [vmem:[#allocation6 + $0x32] sm:$0xff]
        %v4312 = vmax.f32 %v4310, %v4311
        %4313 = vst.msk [vmem:[#allocation9 + $0x10] sm:$0xff] %vm4290, %v4312
        %v4314 = vld [vmem:[#allocation6 + $0x3c] sm:$0xff]
        %v4315 = vld [vmem:[#allocation6 + $0x46] sm:$0xff]
        %v4316 = vmax.f32 %v4314, %v4315
        %4317 = vst.msk [vmem:[#allocation9 + $0x18] sm:$0xff] %vm4290, %v4316
        %v4318 = vld [vmem:[#allocation9] ss:$2 sm:$0xff]
        %s4319 = scalar_lea.vmem [#allocation9], 16
        %v4320 = vld [vmem:[%s4319] ss:$2 sm:$0xff]
        %s4321 = scalar_lea.vmem [#allocation9], 1
        %v4322 = vld [vmem:[%s4321] ss:$2 sm:$0xff]
        %s4323 = scalar_lea.vmem [#allocation9], 17
        %v4324 = vld [vmem:[%s4323] ss:$2 sm:$0xff]
        %v4325 = vmax.f32 %v4318, %v4322
        %v4326 = vmax.f32 %v4320, %v4324
        %vm4327 = vcmask 257024
        %4328 = vst.msk [vmem:[#allocation4 + $0x7] sm:$0xf] %vm4327, %v4325
        %vm4329 = vcmask 261124
        %4330 = vst.msk [vmem:[#allocation4 + $0x9] sm:$0xf0] %vm4329, %v4325
        %4331 = vst.msk [vmem:[#allocation4 + $0x13] sm:$0xf] %vm4327, %v4326
        %4332 = vst.msk [vmem:[#allocation4 + $0x15] sm:$0xf0] %vm4329, %v4326
        %v4333 = vld [vmem:[#allocation4] sm:$0xff]
        %v4334 = vld [vmem:[#allocation4 + $0x8] sm:$0xff]
        %v4335 = vld [vmem:[#allocation4 + $0x10] sm:$0x3f]
        %v4336 = vld [vmem:[%s5] sm:$0xff]
        %v4337 = vld [vmem:[%s5 + $0x8] sm:$0xff]
        %v4338 = vld [vmem:[%s5 + $0x10] sm:$0xff]
        %v4339 = vld [vmem:[%s5 + $0x18] sm:$0xff]
        %v4340 = vld [vmem:[#allocation4 + $0x1] sm:$0xff]
        %v4341 = vld [vmem:[#allocation4 + $0x9] sm:$0xff]
        %v4342 = vld [vmem:[#allocation4 + $0x11] sm:$0x3f]
        %s4343 = scalar_lea.vmem %s5, 32
        %v4344 = vld [vmem:[%s4343] sm:$0xff]
        %v4345 = vld [vmem:[%s4343 + $0x8] sm:$0xff]
        %v4346 = vld [vmem:[%s4343 + $0x10] sm:$0xff]
        %v4347 = vld [vmem:[%s4343 + $0x18] sm:$0xff]
        %v4349 = vsel %vm4290, %v4340, 0
        %v4352 = vsel %vm4290, %v4341, 0
        %v4355 = vsel %vm4290, %v4342, 0
        %4357 = vmatpush.msra.mxu0 0.0
        %4358 = vmatpush.msra.mxu0 0.0
        %4359 = vmatpush.msra.mxu0 0.0
        %4360 = vmatpush.msra.mxu0 0.0
        %4361 = vmatpush.msra.mxu0 0.0
        %4362 = vmatpush.msra.mxu0 0.0
        %4363 = vmatpush.msra.mxu0 0.0
        %4364 = vmatpush.msra.mxu0 0.0
        %4365 = vmatpush.msra.mxu0 0.0
        %4366 = vmatpush.msra.mxu0 0.0
        %4367 = vmatpush.msra.mxu0 0.0
        %4368 = vmatpush.msra.mxu0 0.0
        %4369 = vmatpush.msra.mxu0 %v4347
        %4370 = vmatpush.msra.mxu0 %v4346
        %4371 = vmatpush.msra.mxu0 %v4345
        %4372 = vmatpush.msra.mxu0 %v4344
        %4373 = vmatmul.f32.gmra.mxu0 %v4349
        %v4374 = vpop.f32.mrf.mxu0
        %v4375 = vadd.f32 0.0, %v4374
        %4376 = vmatmul.f32.gmra.mxu0 %v4352
        %v4377 = vpop.f32.mrf.mxu0
        %v4378 = vadd.f32 0.0, %v4377
        %4379 = vmatmul.f32.gmra.mxu0 %v4355
        %v4380 = vpop.f32.mrf.mxu0
        %v4381 = vadd.f32 0.0, %v4380
        %4382 = vdwg.mxu0
        %v4384 = vsel %vm4290, %v4333, 0
        %v4387 = vsel %vm4290, %v4334, 0
        %v4390 = vsel %vm4290, %v4335, 0
        %4392 = vmatpush.msra.mxu0 0.0
        %4393 = vmatpush.msra.mxu0 0.0
        %4394 = vmatpush.msra.mxu0 0.0
        %4395 = vmatpush.msra.mxu0 0.0
        %4396 = vmatpush.msra.mxu0 0.0
        %4397 = vmatpush.msra.mxu0 0.0
        %4398 = vmatpush.msra.mxu0 0.0
        %4399 = vmatpush.msra.mxu0 0.0
        %4400 = vmatpush.msra.mxu0 0.0
        %4401 = vmatpush.msra.mxu0 0.0
        %4402 = vmatpush.msra.mxu0 0.0
        %4403 = vmatpush.msra.mxu0 0.0
        %4404 = vmatpush.msra.mxu0 %v4339
        %4405 = vmatpush.msra.mxu0 %v4338
        %4406 = vmatpush.msra.mxu0 %v4337
        %4407 = vmatpush.msra.mxu0 %v4336
        %4408 = vmatmul.f32.gmra.mxu0 %v4384
        %v4409 = vpop.f32.mrf.mxu0
        %v4410 = vadd.f32 %v4375, %v4409
        %4411 = vmatmul.f32.gmra.mxu0 %v4387
        %v4412 = vpop.f32.mrf.mxu0
        %v4413 = vadd.f32 %v4378, %v4412
        %4414 = vmatmul.f32.gmra.mxu0 %v4390
        %v4415 = vpop.f32.mrf.mxu0
        %v4416 = vadd.f32 %v4381, %v4415
        %4417 = vdwg.mxu0
        %v4418 = vld [vmem:[#allocation4 + $0x2] sm:$0xff]
        %v4419 = vld [vmem:[#allocation4 + $0xa] sm:$0xff]
        %v4420 = vld [vmem:[#allocation4 + $0x12] sm:$0x3f]
        %s4421 = scalar_lea.vmem %s5, 64
        %v4422 = vld [vmem:[%s4421] sm:$0xff]
        %v4423 = vld [vmem:[%s4421 + $0x8] sm:$0xff]
        %v4424 = vld [vmem:[%s4421 + $0x10] sm:$0xff]
        %v4425 = vld [vmem:[%s4421 + $0x18] sm:$0xff]
        %v4427 = vsel %vm4290, %v4418, 0
        %v4430 = vsel %vm4290, %v4419, 0
        %v4433 = vsel %vm4290, %v4420, 0
        %4435 = vmatpush.msra.mxu0 0.0
        %4436 = vmatpush.msra.mxu0 0.0
        %4437 = vmatpush.msra.mxu0 0.0
        %4438 = vmatpush.msra.mxu0 0.0
        %4439 = vmatpush.msra.mxu0 0.0
        %4440 = vmatpush.msra.mxu0 0.0
        %4441 = vmatpush.msra.mxu0 0.0
        %4442 = vmatpush.msra.mxu0 0.0
        %4443 = vmatpush.msra.mxu0 0.0
        %4444 = vmatpush.msra.mxu0 0.0
        %4445 = vmatpush.msra.mxu0 0.0
        %4446 = vmatpush.msra.mxu0 0.0
        %4447 = vmatpush.msra.mxu0 %v4425
        %4448 = vmatpush.msra.mxu0 %v4424
        %4449 = vmatpush.msra.mxu0 %v4423
        %4450 = vmatpush.msra.mxu0 %v4422
        %4451 = vmatmul.f32.gmra.mxu0 %v4427
        %v4452 = vpop.f32.mrf.mxu0
        %v4453 = vadd.f32 0.0, %v4452
        %4454 = vmatmul.f32.gmra.mxu0 %v4430
        %v4455 = vpop.f32.mrf.mxu0
        %v4456 = vadd.f32 0.0, %v4455
        %4457 = vmatmul.f32.gmra.mxu0 %v4433
        %v4458 = vpop.f32.mrf.mxu0
        %v4459 = vadd.f32 0.0, %v4458
        %4460 = vdwg.mxu0
        %v4461 = vadd.f32 %v4410, %v4453
        %v4462 = vadd.f32 %v4413, %v4456
        %v4463 = vadd.f32 %v4416, %v4459
        %v4464 = vld [vmem:[#allocation4 + $0x6] sm:$0xff]
        %v4465 = vld [vmem:[#allocation4 + $0xe] sm:$0xff]
        %v4466 = vld [vmem:[#allocation4 + $0x16] sm:$0x3f]
        %s4467 = scalar_lea.vmem %s5, 96
        %v4468 = vld [vmem:[%s4467] sm:$0xff]
        %v4469 = vld [vmem:[%s4467 + $0x8] sm:$0xff]
        %v4470 = vld [vmem:[%s4467 + $0x10] sm:$0xff]
        %v4471 = vld [vmem:[%s4467 + $0x18] sm:$0xff]
        %v4473 = vsel %vm4290, %v4464, 0
        %v4476 = vsel %vm4290, %v4465, 0
        %v4479 = vsel %vm4290, %v4466, 0
        %4481 = vmatpush.msra.mxu0 0.0
        %4482 = vmatpush.msra.mxu0 0.0
        %4483 = vmatpush.msra.mxu0 0.0
        %4484 = vmatpush.msra.mxu0 0.0
        %4485 = vmatpush.msra.mxu0 0.0
        %4486 = vmatpush.msra.mxu0 0.0
        %4487 = vmatpush.msra.mxu0 0.0
        %4488 = vmatpush.msra.mxu0 0.0
        %4489 = vmatpush.msra.mxu0 0.0
        %4490 = vmatpush.msra.mxu0 0.0
        %4491 = vmatpush.msra.mxu0 0.0
        %4492 = vmatpush.msra.mxu0 0.0
        %4493 = vmatpush.msra.mxu0 %v4471
        %4494 = vmatpush.msra.mxu0 %v4470
        %4495 = vmatpush.msra.mxu0 %v4469
        %4496 = vmatpush.msra.mxu0 %v4468
        %4497 = vmatmul.f32.gmra.mxu0 %v4473
        %v4498 = vpop.f32.mrf.mxu0
        %v4499 = vadd.f32 0.0, %v4498
        %4500 = vmatmul.f32.gmra.mxu0 %v4476
        %v4501 = vpop.f32.mrf.mxu0
        %v4502 = vadd.f32 0.0, %v4501
        %4503 = vmatmul.f32.gmra.mxu0 %v4479
        %v4504 = vpop.f32.mrf.mxu0
        %v4505 = vadd.f32 0.0, %v4504
        %4506 = vdwg.mxu0
        %v4507 = vadd.f32 %v4461, %v4499
        %v4508 = vadd.f32 %v4462, %v4502
        %v4509 = vadd.f32 %v4463, %v4505
        %v4510 = vld [vmem:[#allocation4 + $0x7] sm:$0xff]
        %v4511 = vld [vmem:[#allocation4 + $0xf] sm:$0xff]
        %v4512 = vld [vmem:[#allocation4 + $0x17] sm:$0x3f]
        %s4513 = scalar_lea.vmem %s5, 128
        %v4514 = vld [vmem:[%s4513] sm:$0xff]
        %v4515 = vld [vmem:[%s4513 + $0x8] sm:$0xff]
        %v4516 = vld [vmem:[%s4513 + $0x10] sm:$0xff]
        %v4517 = vld [vmem:[%s4513 + $0x18] sm:$0xff]
        %v4519 = vsel %vm4290, %v4510, 0
        %v4522 = vsel %vm4290, %v4511, 0
        %v4525 = vsel %vm4290, %v4512, 0
        %4527 = vmatpush.msra.mxu0 0.0
        %4528 = vmatpush.msra.mxu0 0.0
        %4529 = vmatpush.msra.mxu0 0.0
        %4530 = vmatpush.msra.mxu0 0.0
        %4531 = vmatpush.msra.mxu0 0.0
        %4532 = vmatpush.msra.mxu0 0.0
        %4533 = vmatpush.msra.mxu0 0.0
        %4534 = vmatpush.msra.mxu0 0.0
        %4535 = vmatpush.msra.mxu0 0.0
        %4536 = vmatpush.msra.mxu0 0.0
        %4537 = vmatpush.msra.mxu0 0.0
        %4538 = vmatpush.msra.mxu0 0.0
        %4539 = vmatpush.msra.mxu0 %v4517
        %4540 = vmatpush.msra.mxu0 %v4516
        %4541 = vmatpush.msra.mxu0 %v4515
        %4542 = vmatpush.msra.mxu0 %v4514
        %4543 = vmatmul.f32.gmra.mxu0 %v4519
        %v4544 = vpop.f32.mrf.mxu0
        %v4545 = vadd.f32 0.0, %v4544
        %4546 = vmatmul.f32.gmra.mxu0 %v4522
        %v4547 = vpop.f32.mrf.mxu0
        %v4548 = vadd.f32 0.0, %v4547
        %4549 = vmatmul.f32.gmra.mxu0 %v4525
        %v4550 = vpop.f32.mrf.mxu0
        %v4551 = vadd.f32 0.0, %v4550
        %4552 = vdwg.mxu0
        %v4553 = vadd.f32 %v4507, %v4545
        %v4554 = vadd.f32 %v4508, %v4548
        %v4555 = vadd.f32 %v4509, %v4551
        %v4556 = vld [vmem:[#allocation4 + $0x8] sm:$0xff]
        %v4557 = vld [vmem:[#allocation4 + $0x10] sm:$0xff]
        %v4558 = vld [vmem:[#allocation4 + $0x18] sm:$0x3f]
        %s4559 = scalar_lea.vmem %s5, 160
        %v4560 = vld [vmem:[%s4559] sm:$0xff]
        %v4561 = vld [vmem:[%s4559 + $0x8] sm:$0xff]
        %v4562 = vld [vmem:[%s4559 + $0x10] sm:$0xff]
        %v4563 = vld [vmem:[%s4559 + $0x18] sm:$0xff]
        %v4565 = vsel %vm4290, %v4556, 0
        %v4568 = vsel %vm4290, %v4557, 0
        %v4571 = vsel %vm4290, %v4558, 0
        %4573 = vmatpush.msra.mxu0 0.0
        %4574 = vmatpush.msra.mxu0 0.0
        %4575 = vmatpush.msra.mxu0 0.0
        %4576 = vmatpush.msra.mxu0 0.0
        %4577 = vmatpush.msra.mxu0 0.0
        %4578 = vmatpush.msra.mxu0 0.0
        %4579 = vmatpush.msra.mxu0 0.0
        %4580 = vmatpush.msra.mxu0 0.0
        %4581 = vmatpush.msra.mxu0 0.0
        %4582 = vmatpush.msra.mxu0 0.0
        %4583 = vmatpush.msra.mxu0 0.0
        %4584 = vmatpush.msra.mxu0 0.0
        %4585 = vmatpush.msra.mxu0 %v4563
        %4586 = vmatpush.msra.mxu0 %v4562
        %4587 = vmatpush.msra.mxu0 %v4561
        %4588 = vmatpush.msra.mxu0 %v4560
        %4589 = vmatmul.f32.gmra.mxu0 %v4565
        %v4590 = vpop.f32.mrf.mxu0
        %v4591 = vadd.f32 0.0, %v4590
        %4592 = vmatmul.f32.gmra.mxu0 %v4568
        %v4593 = vpop.f32.mrf.mxu0
        %v4594 = vadd.f32 0.0, %v4593
        %4595 = vmatmul.f32.gmra.mxu0 %v4571
        %v4596 = vpop.f32.mrf.mxu0
        %v4597 = vadd.f32 0.0, %v4596
        %4598 = vdwg.mxu0
        %v4599 = vadd.f32 %v4553, %v4591
        %v4600 = vadd.f32 %v4554, %v4594
        %v4601 = vadd.f32 %v4555, %v4597
        %v4602 = vld [vmem:[#allocation4 + $0xc] sm:$0xff]
        %v4603 = vld [vmem:[#allocation4 + $0x14] sm:$0xff]
        %v4604 = vld [vmem:[#allocation4 + $0x1c] sm:$0x3f]
        %s4605 = scalar_lea.vmem %s5, 192
        %v4606 = vld [vmem:[%s4605] sm:$0xff]
        %v4607 = vld [vmem:[%s4605 + $0x8] sm:$0xff]
        %v4608 = vld [vmem:[%s4605 + $0x10] sm:$0xff]
        %v4609 = vld [vmem:[%s4605 + $0x18] sm:$0xff]
        %v4611 = vsel %vm4290, %v4602, 0
        %v4614 = vsel %vm4290, %v4603, 0
        %v4617 = vsel %vm4290, %v4604, 0
        %4619 = vmatpush.msra.mxu0 0.0
        %4620 = vmatpush.msra.mxu0 0.0
        %4621 = vmatpush.msra.mxu0 0.0
        %4622 = vmatpush.msra.mxu0 0.0
        %4623 = vmatpush.msra.mxu0 0.0
        %4624 = vmatpush.msra.mxu0 0.0
        %4625 = vmatpush.msra.mxu0 0.0
        %4626 = vmatpush.msra.mxu0 0.0
        %4627 = vmatpush.msra.mxu0 0.0
        %4628 = vmatpush.msra.mxu0 0.0
        %4629 = vmatpush.msra.mxu0 0.0
        %4630 = vmatpush.msra.mxu0 0.0
        %4631 = vmatpush.msra.mxu0 %v4609
        %4632 = vmatpush.msra.mxu0 %v4608
        %4633 = vmatpush.msra.mxu0 %v4607
        %4634 = vmatpush.msra.mxu0 %v4606
        %4635 = vmatmul.f32.gmra.mxu0 %v4611
        %v4636 = vpop.f32.mrf.mxu0
        %v4637 = vadd.f32 0.0, %v4636
        %4638 = vmatmul.f32.gmra.mxu0 %v4614
        %v4639 = vpop.f32.mrf.mxu0
        %v4640 = vadd.f32 0.0, %v4639
        %4641 = vmatmul.f32.gmra.mxu0 %v4617
        %v4642 = vpop.f32.mrf.mxu0
        %v4643 = vadd.f32 0.0, %v4642
        %4644 = vdwg.mxu0
        %v4645 = vadd.f32 %v4599, %v4637
        %v4646 = vadd.f32 %v4600, %v4640
        %v4647 = vadd.f32 %v4601, %v4643
        %v4648 = vld [vmem:[#allocation4 + $0xd] sm:$0xff]
        %v4649 = vld [vmem:[#allocation4 + $0x15] sm:$0xff]
        %v4650 = vld [vmem:[#allocation4 + $0x1d] sm:$0x3f]
        %s4651 = scalar_lea.vmem %s5, 224
        %v4652 = vld [vmem:[%s4651] sm:$0xff]
        %v4653 = vld [vmem:[%s4651 + $0x8] sm:$0xff]
        %v4654 = vld [vmem:[%s4651 + $0x10] sm:$0xff]
        %v4655 = vld [vmem:[%s4651 + $0x18] sm:$0xff]
        %v4657 = vsel %vm4290, %v4648, 0
        %v4660 = vsel %vm4290, %v4649, 0
        %v4663 = vsel %vm4290, %v4650, 0
        %4665 = vmatpush.msra.mxu0 0.0
        %4666 = vmatpush.msra.mxu0 0.0
        %4667 = vmatpush.msra.mxu0 0.0
        %4668 = vmatpush.msra.mxu0 0.0
        %4669 = vmatpush.msra.mxu0 0.0
        %4670 = vmatpush.msra.mxu0 0.0
        %4671 = vmatpush.msra.mxu0 0.0
        %4672 = vmatpush.msra.mxu0 0.0
        %4673 = vmatpush.msra.mxu0 0.0
        %4674 = vmatpush.msra.mxu0 0.0
        %4675 = vmatpush.msra.mxu0 0.0
        %4676 = vmatpush.msra.mxu0 0.0
        %4677 = vmatpush.msra.mxu0 %v4655
        %4678 = vmatpush.msra.mxu0 %v4654
        %4679 = vmatpush.msra.mxu0 %v4653
        %4680 = vmatpush.msra.mxu0 %v4652
        %4681 = vmatmul.f32.gmra.mxu0 %v4657
        %v4682 = vpop.f32.mrf.mxu0
        %v4683 = vadd.f32 0.0, %v4682
        %4684 = vmatmul.f32.gmra.mxu0 %v4660
        %v4685 = vpop.f32.mrf.mxu0
        %v4686 = vadd.f32 0.0, %v4685
        %4687 = vmatmul.f32.gmra.mxu0 %v4663
        %v4688 = vpop.f32.mrf.mxu0
        %v4689 = vadd.f32 0.0, %v4688
        %4690 = vdwg.mxu0
        %v4691 = vadd.f32 %v4645, %v4683
        %v4692 = vadd.f32 %v4646, %v4686
        %v4693 = vadd.f32 %v4647, %v4689
        %v4694 = vld [vmem:[#allocation4 + $0xe] sm:$0xff]
        %v4695 = vld [vmem:[#allocation4 + $0x16] sm:$0xff]
        %v4696 = vld [vmem:[#allocation4 + $0x1e] sm:$0x3f]
        %s4697 = scalar_lea.vmem %s5, 256
        %v4698 = vld [vmem:[%s4697] sm:$0xff]
        %v4699 = vld [vmem:[%s4697 + $0x8] sm:$0xff]
        %v4700 = vld [vmem:[%s4697 + $0x10] sm:$0xff]
        %v4701 = vld [vmem:[%s4697 + $0x18] sm:$0xff]
        %v4703 = vsel %vm4290, %v4694, 0
        %v4706 = vsel %vm4290, %v4695, 0
        %v4709 = vsel %vm4290, %v4696, 0
        %4711 = vmatpush.msra.mxu0 0.0
        %4712 = vmatpush.msra.mxu0 0.0
        %4713 = vmatpush.msra.mxu0 0.0
        %4714 = vmatpush.msra.mxu0 0.0
        %4715 = vmatpush.msra.mxu0 0.0
        %4716 = vmatpush.msra.mxu0 0.0
        %4717 = vmatpush.msra.mxu0 0.0
        %4718 = vmatpush.msra.mxu0 0.0
        %4719 = vmatpush.msra.mxu0 0.0
        %4720 = vmatpush.msra.mxu0 0.0
        %4721 = vmatpush.msra.mxu0 0.0
        %4722 = vmatpush.msra.mxu0 0.0
        %4723 = vmatpush.msra.mxu0 %v4701
        %4724 = vmatpush.msra.mxu0 %v4700
        %4725 = vmatpush.msra.mxu0 %v4699
        %4726 = vmatpush.msra.mxu0 %v4698
        %4727 = vmatmul.f32.gmra.mxu0 %v4703
        %v4728 = vpop.f32.mrf.mxu0
        %v4729 = vadd.f32 0.0, %v4728
        %4730 = vmatmul.f32.gmra.mxu0 %v4706
        %v4731 = vpop.f32.mrf.mxu0
        %v4732 = vadd.f32 0.0, %v4731
        %4733 = vmatmul.f32.gmra.mxu0 %v4709
        %v4734 = vpop.f32.mrf.mxu0
        %v4735 = vadd.f32 0.0, %v4734
        %4736 = vdwg.mxu0
        %v4737 = vadd.f32 %v4691, %v4729
        %v4738 = vadd.f32 %v4692, %v4732
        %v4739 = vadd.f32 %v4693, %v4735
        %v4740 = vld [vmem:[%s6] sm:$0x1]
        %v4742 = vperm.slane %v4740, 0
        %v4744 = vadd.f32 %v4737, %v4742
        %v4745 = vadd.f32 %v4738, %v4742
        %v4746 = vadd.f32 %v4739, %v4742
        %v4747 = vmax.f32 %v4744, 0.0
        %v4748 = vmax.f32 %v4745, 0.0
        %v4749 = vmax.f32 %v4746, 0.0
        %vm4750 = vcmask 523264
        %4751 = vst.msk [vmem:[#allocation7] sm:$0xff] %vm4750, %v4747
        %4752 = vst.msk [vmem:[#allocation7 + $0x8] sm:$0xff] %vm4750, %v4748
        %vm4753 = vcmask 521216
        %4754 = vst.msk [vmem:[#allocation7 + $0x10] sm:$0x3f] %vm4753, %v4749
        %v4755 = vld [vmem:[#allocation7] sm:$0xf]
        %v4756 = vld [vmem:[#allocation7 + $0x6] sm:$0xf]
        %v4757 = vmax.f32 %v4755, %v4756
        %vm4758 = vcmask 519168
        %4759 = vst.msk [vmem:[#allocation10] sm:$0xf] %vm4758, %v4757
        %v4760 = vld [vmem:[#allocation7 + $0xc] sm:$0xf]
        %v4761 = vld [vmem:[#allocation7 + $0x12] sm:$0xf]
        %v4762 = vmax.f32 %v4760, %v4761
        %4763 = vst.msk [vmem:[#allocation10 + $0x4] sm:$0xf] %vm4758, %v4762
        %v4764 = vld [vmem:[#allocation10] ss:$2 sm:$0xf]
        %s4765 = scalar_lea.vmem [#allocation10], 1
        %v4766 = vld [vmem:[%s4765] ss:$2 sm:$0xf]
        %v4767 = vmax.f32 %v4764, %v4766
        %v4768 = vadd.f32 %v4767, 0.0
        %v4770 = vrot.slane %v4767, 2
        %v4772 = vadd.f32 %v4768, %v4770
        %v4773 = vmul.f32 %v4772, 0.5
        %v4774 = vadd.f32 %v4773, 0.0
        %v4776 = vrot.slane %v4773, 1
        %v4778 = vadd.f32 %v4774, %v4776
        %v4779 = vmul.f32 %v4778, 0.5
        %v4780 = vperm.slane %v4779, 0
        %v4781 = vsub.f32 %v4780, %v4773
        %v4782 = vld [vmem:[#allocation11] sm:$0xff]
        %v4783 = vld [vmem:[#allocation11 + $0x8] sm:$0xff]
        %v4784 = vld [vmem:[#allocation11 + $0x10] sm:$0xff]
        %v4785 = vld [vmem:[#allocation11 + $0x18] sm:$0xff]
        %v4786 = vld [vmem:[#allocation11 + $0x20] sm:$0xff]
        %v4787 = vld [vmem:[#allocation11 + $0x28] sm:$0xff]
        %v4788 = vld [vmem:[#allocation11 + $0x30] sm:$0xff]
        %v4789 = vld [vmem:[#allocation11 + $0x38] sm:$0xff]
        %v4790 = vld [vmem:[#allocation11 + $0x40] sm:$0xff]
        %v4791 = vld [vmem:[#allocation11 + $0x48] sm:$0xff]
        %v4792 = vld [vmem:[#allocation11 + $0x50] sm:$0xff]
        %v4793 = vld [vmem:[#allocation11 + $0x58] sm:$0xff]
        %v4794 = vld [vmem:[#allocation11 + $0x60] sm:$0xff]
        %v4795 = vld [vmem:[#allocation11 + $0x68] sm:$0xff]
        %v4796 = vld [vmem:[#allocation11 + $0x70] sm:$0xff]
        %v4797 = vld [vmem:[#allocation11 + $0x78] sm:$0xff]
        %v4798 = vld [vmem:[%s9] sm:$0x3]
        %v4800 = vperm.slane %v4798, 0
        %v4801 = vperm.slane %v4798, 1
        %v4805 = vsel %vm4750, %v4781, 0
        %4807 = vmatpush.msra.mxu0 0.0
        %4808 = vmatpush.msra.mxu0 0.0
        %4809 = vmatpush.msra.mxu0 0.0
        %4810 = vmatpush.msra.mxu0 0.0
        %4811 = vmatpush.msra.mxu0 0.0
        %4812 = vmatpush.msra.mxu0 0.0
        %4813 = vmatpush.msra.mxu0 0.0
        %4814 = vmatpush.msra.mxu0 0.0
        %4815 = vmatpush.msra.mxu0 %v4796
        %4816 = vmatpush.msra.mxu0 %v4794
        %4817 = vmatpush.msra.mxu0 %v4792
        %4818 = vmatpush.msra.mxu0 %v4790
        %4819 = vmatpush.msra.mxu0 %v4788
        %4820 = vmatpush.msra.mxu0 %v4786
        %4821 = vmatpush.msra.mxu0 %v4784
        %4822 = vmatpush.msra.mxu0 %v4782
        %4823 = vmatmul.f32.gmra.mxu0 %v4805
        %v4824 = vpop.f32.mrf.mxu0
        %v4825 = vadd.f32 %v4800, %v4824
        %4826 = vdwg.mxu0
        %4827 = vmatpush.msra.mxu0 0.0
        %4828 = vmatpush.msra.mxu0 0.0
        %4829 = vmatpush.msra.mxu0 0.0
        %4830 = vmatpush.msra.mxu0 0.0
        %4831 = vmatpush.msra.mxu0 0.0
        %4832 = vmatpush.msra.mxu0 0.0
        %4833 = vmatpush.msra.mxu0 0.0
        %4834 = vmatpush.msra.mxu0 0.0
        %4835 = vmatpush.msra.mxu0 %v4797
        %4836 = vmatpush.msra.mxu0 %v4795
        %4837 = vmatpush.msra.mxu0 %v4793
        %4838 = vmatpush.msra.mxu0 %v4791
        %4839 = vmatpush.msra.mxu0 %v4789
        %4840 = vmatpush.msra.mxu0 %v4787
        %4841 = vmatpush.msra.mxu0 %v4785
        %4842 = vmatpush.msra.mxu0 %v4783
        %4843 = vmatmul.f32.gmra.mxu0 %v4805
        %v4844 = vpop.f32.mrf.mxu0
        %v4845 = vadd.f32 %v4801, %v4844
        %4846 = vdwg.mxu0
        %v4847 = vld [vmem:[#allocation14] sm:$0xff]
        %v4848 = vld [vmem:[#allocation14 + $0x8] sm:$0xff]
        %v4849 = vld [vmem:[#allocation14 + $0x10] sm:$0xff]
        %v4850 = vld [vmem:[#allocation14 + $0x18] sm:$0xff]
        %v4851 = vld [vmem:[#allocation14 + $0x20] sm:$0xff]
        %v4852 = vld [vmem:[#allocation14 + $0x28] sm:$0xff]
        %v4853 = vld [vmem:[#allocation14 + $0x30] sm:$0xff]
        %v4854 = vld [vmem:[#allocation14 + $0x38] sm:$0xff]
        %v4855 = vld [vmem:[#allocation14 + $0x40] sm:$0xff]
        %v4856 = vld [vmem:[#allocation14 + $0x48] sm:$0xff]
        %v4857 = vld [vmem:[#allocation14 + $0x50] sm:$0xff]
        %v4858 = vld [vmem:[#allocation14 + $0x58] sm:$0xff]
        %v4859 = vld [vmem:[#allocation14 + $0x60] sm:$0xff]
        %v4860 = vld [vmem:[#allocation14 + $0x68] sm:$0xff]
        %v4861 = vld [vmem:[#allocation14 + $0x70] sm:$0xff]
        %v4862 = vld [vmem:[#allocation14 + $0x78] sm:$0xff]
        %v4863 = vld [vmem:[%s10] sm:$0x3]
        %v4865 = vperm.slane %v4863, 0
        %v4866 = vperm.slane %v4863, 1
        %v4870 = vsel %vm4750, 0.0, 0
        %4872 = vmatpush.msra.mxu0 0.0
        %4873 = vmatpush.msra.mxu0 0.0
        %4874 = vmatpush.msra.mxu0 0.0
        %4875 = vmatpush.msra.mxu0 0.0
        %4876 = vmatpush.msra.mxu0 0.0
        %4877 = vmatpush.msra.mxu0 0.0
        %4878 = vmatpush.msra.mxu0 0.0
        %4879 = vmatpush.msra.mxu0 0.0
        %4880 = vmatpush.msra.mxu0 %v4861
        %4881 = vmatpush.msra.mxu0 %v4859
        %4882 = vmatpush.msra.mxu0 %v4857
        %4883 = vmatpush.msra.mxu0 %v4855
        %4884 = vmatpush.msra.mxu0 %v4853
        %4885 = vmatpush.msra.mxu0 %v4851
        %4886 = vmatpush.msra.mxu0 %v4849
        %4887 = vmatpush.msra.mxu0 %v4847
        %4888 = vmatmul.f32.gmra.mxu0 %v4870
        %v4889 = vpop.f32.mrf.mxu0
        %v4890 = vadd.f32 %v4865, %v4889
        %4891 = vdwg.mxu0
        %4892 = vmatpush.msra.mxu0 0.0
        %4893 = vmatpush.msra.mxu0 0.0
        %4894 = vmatpush.msra.mxu0 0.0
        %4895 = vmatpush.msra.mxu0 0.0
        %4896 = vmatpush.msra.mxu0 0.0
        %4897 = vmatpush.msra.mxu0 0.0
        %4898 = vmatpush.msra.mxu0 0.0
        %4899 = vmatpush.msra.mxu0 0.0
        %4900 = vmatpush.msra.mxu0 %v4862
        %4901 = vmatpush.msra.mxu0 %v4860
        %4902 = vmatpush.msra.mxu0 %v4858
        %4903 = vmatpush.msra.mxu0 %v4856
        %4904 = vmatpush.msra.mxu0 %v4854
        %4905 = vmatpush.msra.mxu0 %v4852
        %4906 = vmatpush.msra.mxu0 %v4850
        %4907 = vmatpush.msra.mxu0 %v4848
        %4908 = vmatmul.f32.gmra.mxu0 %v4870
        %v4909 = vpop.f32.mrf.mxu0
        %v4910 = vadd.f32 %v4866, %v4909
        %4911 = vdwg.mxu0
        %v4912 = vadd.f32 %v4825, %v4890
        %v4913 = vxor.u32 %v4912, 2147483648
        %v4914 = vmul.f32 %v4913, 1.442695
        %v4915 = vpow.pop %v4914
        %v4916 = vadd.f32 %v4915, 1.0
        %v4917 = vrcp.pop %v4916
        %v4918 = vmul.f32 %v4916, %v4917
        %v4919 = vsub.f32 1.0, %v4918
        %v4920 = vmul.f32 %v4917, %v4919
        %v4921 = vadd.f32 %v4917, %v4920
        %vm4922 = vweird.f32 %v4916
        %vm4923 = vweird.f32 %v4917
        %vm4924 = vmor %vm4922, %vm4923
        %v4925 = vsel %vm4924, %v4917, %v4921
        %v4926 = vand.u32 2147483647, %v4916
        %vm4927 = vcmp.eq.f32.partialorder %v4926, 8.507059e+37
        %v4928 = vand.u32 %v4916, 2147483648
        %v4929 = vor.u32 1.1754944e-38, %v4928
        %v4930 = vsel %vm4927, %v4929, %v4925
        %v4931 = vmul.f32 1.0, %v4930
        %v4932 = vmul.f32 %v4931, %v4910
        %v4933 = vadd.f32 %v4845, %v4932
        %v4934 = vtanh.pop %v4933
        %v4935 = vsub.f32 1.0, %v4931
        %4937 = vrot.lane.b32.xlu0 %v4934, 64
        %v4938 = vpop.permute.xlu0 %4937
        %v4940 = vmul.f32 %v4935, %v4938
        %v4941 = vmul.f32 %v4931, 0.0
        %v4942 = vadd.f32 %v4940, %v4941
        %4944 = vrot.lane.b32.xlu0 %v4942, 64
        %v4945 = vpop.permute.xlu0 %4944
        %v4946 = vsel %vm4750, %v4945, 0
        %4948 = vmatpush.msra.mxu0 0.0
        %4949 = vmatpush.msra.mxu0 0.0
        %4950 = vmatpush.msra.mxu0 0.0
        %4951 = vmatpush.msra.mxu0 0.0
        %4952 = vmatpush.msra.mxu0 0.0
        %4953 = vmatpush.msra.mxu0 0.0
        %4954 = vmatpush.msra.mxu0 0.0
        %4955 = vmatpush.msra.mxu0 0.0
        %4956 = vmatpush.msra.mxu0 %v4861
        %4957 = vmatpush.msra.mxu0 %v4859
        %4958 = vmatpush.msra.mxu0 %v4857
        %4959 = vmatpush.msra.mxu0 %v4855
        %4960 = vmatpush.msra.mxu0 %v4853
        %4961 = vmatpush.msra.mxu0 %v4851
        %4962 = vmatpush.msra.mxu0 %v4849
        %4963 = vmatpush.msra.mxu0 %v4847
        %4964 = vmatmul.f32.gmra.mxu0 %v4946
        %v4965 = vpop.f32.mrf.mxu0
        %v4966 = vadd.f32 %v4865, %v4965
        %4967 = vdwg.mxu0
        %4968 = vmatpush.msra.mxu0 0.0
        %4969 = vmatpush.msra.mxu0 0.0
        %4970 = vmatpush.msra.mxu0 0.0
        %4971 = vmatpush.msra.mxu0 0.0
        %4972 = vmatpush.msra.mxu0 0.0
        %4973 = vmatpush.msra.mxu0 0.0
        %4974 = vmatpush.msra.mxu0 0.0
        %4975 = vmatpush.msra.mxu0 0.0
        %4976 = vmatpush.msra.mxu0 %v4862
        %4977 = vmatpush.msra.mxu0 %v4860
        %4978 = vmatpush.msra.mxu0 %v4858
        %4979 = vmatpush.msra.mxu0 %v4856
        %4980 = vmatpush.msra.mxu0 %v4854
        %4981 = vmatpush.msra.mxu0 %v4852
        %4982 = vmatpush.msra.mxu0 %v4850
        %4983 = vmatpush.msra.mxu0 %v4848
        %4984 = vmatmul.f32.gmra.mxu0 %v4946
        %v4985 = vpop.f32.mrf.mxu0
        %v4986 = vadd.f32 %v4866, %v4985
        %4987 = vdwg.mxu0
        %v4989 = vrot.slane %v4966, 7
        %v4991 = vadd.f32 %v4825, %v4989
        %v4992 = vxor.u32 %v4991, 2147483648
        %v4993 = vmul.f32 %v4992, 1.442695
        %v4994 = vpow.pop %v4993
        %v4995 = vadd.f32 %v4994, 1.0
        %v4996 = vrcp.pop %v4995
        %v4997 = vmul.f32 %v4995, %v4996
        %v4998 = vsub.f32 1.0, %v4997
        %v4999 = vmul.f32 %v4996, %v4998
        %v5000 = vadd.f32 %v4996, %v4999
        %vm5001 = vweird.f32 %v4995
        %vm5002 = vweird.f32 %v4996
        %vm5003 = vmor %vm5001, %vm5002
        %v5004 = vsel %vm5003, %v4996, %v5000
        %v5005 = vand.u32 2147483647, %v4995
        %vm5006 = vcmp.eq.f32.partialorder %v5005, 8.507059e+37
        %v5007 = vand.u32 %v4995, 2147483648
        %v5008 = vor.u32 1.1754944e-38, %v5007
        %v5009 = vsel %vm5006, %v5008, %v5004
        %v5010 = vmul.f32 1.0, %v5009
        %v5012 = vrot.slane %v4986, 7
        %v5014 = vmul.f32 %v5010, %v5012
        %v5015 = vadd.f32 %v4845, %v5014
        %v5016 = vtanh.pop %v5015
        %v5017 = vsub.f32 1.0, %v5010
        %5019 = vrot.lane.b32.xlu0 %v5016, 64
        %v5020 = vpop.permute.xlu0 %5019
        %v5022 = vmul.f32 %v5017, %v5020
        %v5023 = vrot.slane %v4942, 7
        %v5025 = vmul.f32 %v5010, %v5023
        %v5026 = vadd.f32 %v5022, %v5025
        %5028 = vrot.lane.b32.xlu0 %v5026, 64
        %v5029 = vpop.permute.xlu0 %5028
        %vm5031 = vcmask 517121
        %5032 = vst.msk [vmem:[%s412 - $0x1] sm:$0x2] %vm5031, %v5029
        %s5033 = sand.u32 %s271, 1
        %s5034 = scalar_lea.sflag [#allocation13], %s5033
        %s5035 = sand.u32 %s271, 1
        %s5036 = scalar_lea.vmem [#allocation16], %s5035
        // Predicated region
        $region73: #{embedding_model_forward.1} parent=63 // pred_check
          %p5037 = pneg %p281
        $region74: #{embedding_model_forward.1} parent=63 // pred_check_branch
          %5039 = sbr.rel (%p5037) target = $region76
        $region75: #{embedding_model_forward.1} parent=63 // pred_region
          %5041 = vsyncadd %s5034, 0
          %s5042 = scalar_lea.hbm %s11, %s27
          %s5044 = sshll.u32 %s5036, 4
          %s5045 = int_to_ptr.vmem [resolvable:$true] %s5044
          %s5046 = sshll.u32 %s5042, 4
          %s5047 = int_to_ptr.hbm [resolvable:$true] %s5046
          %5049 = dma.vmem_to_hbm [thread:$0]  %s5045, 16, %s5047, %s5034
        $region76: #{embedding_model_forward.1} parent=63 // pred_fallthru
          _
      $region64: #{embedding_model_forward.1} parent=5 // pred_fallthru
        _
      %p5050 = scmp.le.s32.totalorder 2, %s22
      // Predicated region
      $region77: #{embedding_model_forward.1} parent=5 // pred_check
        %p5051 = pneg %p5050
      $region78: #{embedding_model_forward.1} parent=5 // pred_check_branch
        %5053 = sbr.rel (%p5051) target = $region80
      $region79: #{embedding_model_forward.1} parent=5 // pred_region
        %s5054 = ssub.s32 %s22, 2
        // Predicated region
        $region81: #{embedding_model_forward.1} parent=79 // pred_check
          %p5055 = pneg %p287
        $region82: #{embedding_model_forward.1} parent=79 // pred_check_branch
          %5057 = sbr.rel (%p5055) target = $region84
        $region83: #{embedding_model_forward.1} parent=79 // pred_region
          %s5058 = sand.u32 %s272, 1
          %s5059 = scalar_lea.sflag [#allocation13], %s5058
          %s5060 = sand.u32 %s272, 1
          %s5061 = scalar_lea.vmem [#allocation16], %s5060
          %5063 = dma.done %s5059, 16
        $region84: #{embedding_model_forward.1} parent=79 // pred_fallthru
          _
      $region80: #{embedding_model_forward.1} parent=5 // pred_fallthru
        _
    $region6: #{embedding_model_forward.1} parent=1 // loop_footer
      %s26 = sadd.s32 1, %s22
    $region7: #{embedding_model_forward.1} parent=1 // loop_footer_branch
      %21 = sbr.rel target = $region3
    $region8: #{embedding_model_forward.1} parent=1 // loop_exit
      _
    %5064 = vsyncpa [#allocation12], 1
    %s5065 = scalar_lea.sflag [#allocation12], 1
    %5066 = vsyncpa %s5065, 1
    %5067 = vsyncpa [#allocation15], 1
    %5068 = vsyncpa [#allocation13], 1
    %s5069 = scalar_lea.sflag [#allocation13], 1
    %5070 = vsyncpa %s5069, 1

</llo_original>
